<compile_context>
chip_gen: v5e
topology: v5e:2x2
jax: 0.10.0
libtpu: 0.0.40
codegen_flags: <defaults>
</compile_context>

<pallas_src>
import math

import jax
import jax.numpy as jnp
from jax import lax
from jax.experimental import pallas as pl
from jax.experimental.pallas import tpu as pltpu

EXPANSION = 4
BN_EPS = 1e-5
LANE = 128
SUBLANE_BF16 = 16


def _round_up(x, m):
    return (x + m - 1) // m * m


def _vmem_limit_bytes():
    # ~96 MB on v5e/v6e (128 MiB physical), ~48 MB on v7x (64 MiB physical).
    try:
        cap = int(pltpu.get_tpu_info().vmem_capacity_bytes)
    except Exception:
        cap = 64 * 1024 * 1024
    return min(96 * 1024 * 1024, (cap * 3) // 4)


# ----------------------------------------------------------------------------
# Fused kernel.  One grid step = one (batch, temporal-tile) block of
# M = t_tile*H*W output rows.
# ----------------------------------------------------------------------------
def _make_kernel(t_tile, H, W, Wp, Cpp):
    HW = H * W
    M = t_tile * HW

    def kernel(x_ref, xprev_ref, xnext_ref,
               w1_ref, b1_ref, w2_ref, b2_ref, w3_ref, b3_ref,
               o_ref, acc_ref, y1pad_ref):
        bt = pl.program_id(1)
        n_bt = pl.num_programs(1)

        # ------------- conv1 (3,1,1): accumulating tap dots on ref slices ---
        # BN1 scale already folded into w1.  acc_ref is an (M, Cpp) f32 scratch.
        acc_ref[...] = jnp.dot(x_ref[0], w1_ref[1],
                               preferred_element_type=jnp.float32)
        if t_tile > 1:
            # taps t-1 / t+1 for the tile-interior frames
            acc_ref[HW:M, :] += jnp.dot(
                x_ref[0, 0:M - HW, :], w1_ref[0],
                preferred_element_type=jnp.float32)
            acc_ref[0:M - HW, :] += jnp.dot(
                x_ref[0, HW:M, :], w1_ref[2],
                preferred_element_type=jnp.float32)

        # boundary taps: neighbour frames fetched by their own BlockSpecs;
        # skipped at the sequence edges (temporal zero padding => zero term).
        @pl.when(bt > 0)
        def _():
            acc_ref[0:HW, :] += jnp.dot(
                xprev_ref[0], w1_ref[0], preferred_element_type=jnp.float32)

        @pl.when(bt < n_bt - 1)
        def _():
            acc_ref[M - HW:M, :] += jnp.dot(
                xnext_ref[0], w1_ref[2], preferred_element_type=jnp.float32)

        y1 = jnp.maximum(acc_ref[...] + b1_ref[...], 0.0)       # BN1 bias + ReLU (f32)

        # ------------- conv2 (1,3,3): padded scratch + 9 accumulating dots --
        # Only the spatial halo is re-zeroed each step (scratch is per-core,
        # so a program_id()==0 guard would not be megacore-safe).
        y1pad_ref[:, 0:1, :, :] = jnp.zeros((t_tile, 1, Wp, Cpp), jnp.bfloat16)
        y1pad_ref[:, H + 1:H + 2, :, :] = jnp.zeros((t_tile, 1, Wp, Cpp), jnp.bfloat16)
        y1pad_ref[:, :, 0:1, :] = jnp.zeros((t_tile, H + 2, 1, Cpp), jnp.bfloat16)
        y1pad_ref[:, :, W + 1:Wp, :] = jnp.zeros(
            (t_tile, H + 2, Wp - W - 1, Cpp), jnp.bfloat16)
        y1pad_ref[:, 1:H + 1, 1:W + 1, :] = (
            y1.reshape(t_tile, H, W, Cpp).astype(jnp.bfloat16))

        acc2 = None
        for dh in range(3):
            for dw in range(3):
                lhs = y1pad_ref[:, dh:dh + H, dw:dw + W, :].reshape(M, Cpp)
                part = jnp.dot(lhs, w2_ref[dh, dw],
                               preferred_element_type=jnp.float32)
                acc2 = part if acc2 is None else acc2 + part
        y2 = jnp.maximum(acc2 + b2_ref[...], 0.0)                # BN2 bias + ReLU (f32)

        # ------------- conv3 (1,1,1) + BN3 (no activation) -------------------
        y3 = jnp.dot(y2.astype(jnp.bfloat16), w3_ref[...],
                     preferred_element_type=jnp.float32) + b3_ref[...]

        # ------------- identity residual + final ReLU ------------------------
        identity = x_ref[0].astype(jnp.float32)
        o_ref[0] = jnp.maximum(y3 + identity, 0.0).astype(o_ref.dtype)

    return kernel


# ----------------------------------------------------------------------------
# Wrapper: layout plumbing (NCDHW <-> flat rows x channels), BN-scale folding,
# channel padding to lane multiples, pallas_call.
# ----------------------------------------------------------------------------
def bottleneck3d_pallas(x_ncdhw, params, *, t_tile=None, out_dtype=jnp.float32):
    """x_ncdhw: (N, C, T, H, W) float32.  Returns (N, C, T, H, W) out_dtype."""
    N, Cin, T, H, W = x_ncdhw.shape
    w1, w2, w3 = params["w1"], params["w2"], params["w3"]   # (3,Cin,Cp), (3,3,Cp,Cp), (Cp,Cexp)
    Cp = w1.shape[-1]
    Cexp = w3.shape[-1]
    assert Cexp == Cin, "identity residual requires inplanes == planes * expansion"
    assert Cin % LANE == 0, "TODO(synk): pad Cin/Cexp for non-lane-multiple channels"

    if t_tile is None:
        t_tile = T
    assert T % t_tile == 0
    nT = T // t_tile
    HW = H * W
    M = t_tile * HW

    Cpp = _round_up(Cp, LANE)
    pc = Cpp - Cp
    Wp = _round_up(W + 2, SUBLANE_BF16)

    # Fold eval-mode BN scales into the conv weights (exact in f32), pad the
    # bottleneck width to a lane multiple (exact zero padding), cast to bf16.
    w1p = jnp.pad(w1 * params["g1"][None, None, :],
                  ((0, 0), (0, 0), (0, pc))).astype(jnp.bfloat16)           # (3,Cin,Cpp)
    w2p = jnp.pad(w2 * params["g2"][None, None, None, :],
                  ((0, 0), (0, 0), (0, pc), (0, pc))).astype(jnp.bfloat16)  # (3,3,Cpp,Cpp)
    w3p = jnp.pad(w3 * params["g3"][None, :],
                  ((0, pc), (0, 0))).astype(jnp.bfloat16)                   # (Cpp,Cexp)
    b1p = jnp.pad(params["b1"], (0, pc)).reshape(1, Cpp).astype(jnp.float32)
    b2p = jnp.pad(params["b2"], (0, pc)).reshape(1, Cpp).astype(jnp.float32)
    b3p = params["b3"].reshape(1, Cexp).astype(jnp.float32)

    # Channels-last bf16, flattened to (N, T*H*W, C).  No halo materialization,
    # no overlapping-tile duplication in HBM.
    x_flat = (jnp.transpose(x_ncdhw, (0, 2, 3, 4, 1))
              .astype(jnp.bfloat16).reshape(N, T * HW, Cin))

    kernel = _make_kernel(t_tile, H, W, Wp, Cpp)

    def _full(a):
        nd = a.ndim
        return pl.BlockSpec(a.shape, lambda b, bt, _n=nd: (0,) * _n)

    grid_spec = pltpu.PrefetchScalarGridSpec(
        num_scalar_prefetch=0,
        grid=(N, nT),
        in_specs=[
            # tile frames (non-overlapping)
            pl.BlockSpec((1, M, Cin), lambda b, bt: (b, bt, 0)),
            # frame just before / just after the tile (same HBM array, clamped
            # at the sequence edges and masked out in-kernel via pl.when)
            pl.BlockSpec((1, HW, Cin),
                         lambda b, bt: (b, jnp.maximum(bt * t_tile - 1, 0), 0)),
            pl.BlockSpec((1, HW, Cin),
                         lambda b, bt: (b, jnp.minimum((bt + 1) * t_tile, T - 1), 0)),
            _full(w1p), _full(b1p),
            _full(w2p), _full(b2p),
            _full(w3p), _full(b3p),
        ],
        out_specs=pl.BlockSpec((1, M, Cexp), lambda b, bt: (b, bt, 0)),
        scratch_shapes=[
            pltpu.VMEM((M, Cpp), jnp.float32),                   # conv1 accumulator
            pltpu.VMEM((t_tile, H + 2, Wp, Cpp), jnp.bfloat16),  # conv2 padded input
        ],
    )

    out = pl.pallas_call(
        kernel,
        out_shape=jax.ShapeDtypeStruct((N, T * HW, Cexp), out_dtype),
        grid_spec=grid_spec,
        compiler_params=pltpu.CompilerParams(
            dimension_semantics=("parallel", "parallel"),
            vmem_limit_bytes=_vmem_limit_bytes()),
    )(x_flat, x_flat, x_flat, w1p, b1p, w2p, b2p, w3p, b3p)

    out = out.reshape(N, T, H, W, Cexp)
    return jnp.transpose(out, (0, 4, 1, 2, 3))                   # -> NCDHW


# ----------------------------------------------------------------------------
# Pure-JAX reference (lax.conv_general_dilated) with the same BN-scale folding
# and the same bf16 casting points (bf16 operands, f32 accumulation/epilogue).
# ----------------------------------------------------------------------------
def bottleneck3d_reference(x_ncdhw, params):
    x = jnp.transpose(x_ncdhw, (0, 2, 3, 4, 1)).astype(jnp.bfloat16)   # NDHWC
    dn = ("NDHWC", "DHWIO", "NDHWC")
    Cin = x.shape[-1]
    w1 = (params["w1"] * params["g1"][None, None, :]).astype(jnp.bfloat16)
    w2 = (params["w2"] * params["g2"][None, None, None, :]).astype(jnp.bfloat16)
    w3 = (params["w3"] * params["g3"][None, :]).astype(jnp.bfloat16)
    Cp = w1.shape[-1]
    Cexp = w3.shape[-1]

    def bias(y, b):
        return y + b.reshape(1, 1, 1, 1, -1)

    y = lax.conv_general_dilated(
        x, w1.reshape(3, 1, 1, Cin, Cp), (1, 1, 1),
        [(1, 1), (0, 0), (0, 0)], dimension_numbers=dn,
        preferred_element_type=jnp.float32)
    y = jax.nn.relu(bias(y, params["b1"])).astype(jnp.bfloat16)

    y = lax.conv_general_dilated(
        y, w2.reshape(1, 3, 3, Cp, Cp), (1, 1, 1),
        [(0, 0), (1, 1), (1, 1)], dimension_numbers=dn,
        preferred_element_type=jnp.float32)
    y = jax.nn.relu(bias(y, params["b2"])).astype(jnp.bfloat16)

    y = lax.conv_general_dilated(
        y, w3.reshape(1, 1, 1, Cp, Cexp), (1, 1, 1),
        [(0, 0), (0, 0), (0, 0)], dimension_numbers=dn,
        preferred_element_type=jnp.float32)
    y = bias(y, params["b3"])

    out = jax.nn.relu(y + x.astype(jnp.float32))
    return jnp.transpose(out, (0, 4, 1, 2, 3))


# ----------------------------------------------------------------------------
# Deterministic synthetic parameters (eval-mode BN folded to scale/bias).
# ----------------------------------------------------------------------------
def make_params(key, inplanes, planes):
    cexp = planes * EXPANSION
    assert cexp == inplanes
    ks = jax.random.split(key, 15)

    def conv_w(k, shape, fan_in):
        return jax.random.normal(k, shape, jnp.float32) / math.sqrt(fan_in)

    def bn_fold(k0, k1, k2, k3, c):
        gamma = 1.0 + 0.1 * jax.random.normal(k0, (c,), jnp.float32)
        beta = 0.1 * jax.random.normal(k1, (c,), jnp.float32)
        mean = 0.1 * jax.random.normal(k2, (c,), jnp.float32)
        var = 0.5 + jax.random.uniform(k3, (c,), jnp.float32)
        scale = gamma / jnp.sqrt(var + BN_EPS)
        bias = beta - mean * scale
        return scale, bias

    g1, b1 = bn_fold(ks[3], ks[4], ks[5], ks[6], planes)
    g2, b2 = bn_fold(ks[7], ks[8], ks[9], ks[10], planes)
    g3, b3 = bn_fold(ks[11], ks[12], ks[13], ks[14], cexp)

    return dict(
        # conv1 (3x1x1): PyTorch (planes, inplanes, 3, 1, 1) -> (3, inplanes, planes)
        w1=conv_w(ks[0], (3, inplanes, planes), 3 * inplanes), g1=g1, b1=b1,
        # conv2 (1x3x3): PyTorch (planes, planes, 1, 3, 3) -> (3, 3, planes, planes)
        w2=conv_w(ks[1], (3, 3, planes, planes), 9 * planes), g2=g2, b2=b2,
        # conv3 (1x1x1): PyTorch (4*planes, planes, 1, 1, 1) -> (planes, 4*planes)
        w3=conv_w(ks[2], (planes, cexp), planes), g3=g3, b3=b3,
    )


if __name__ == "__main__":
    key = jax.random.PRNGKey(0)
    planes = 32
    inplanes = planes * EXPANSION        # 128 — lane-aligned identity residual
    N, T, H, W = 2, 8, 8, 8              # t_tile=4 -> M=256 rows/step, grid (2,2)

    kx, kp = jax.random.split(key)
    x = jax.random.normal(kx, (N, inplanes, T, H, W), jnp.float32)  # NCDHW
    params = make_params(kp, inplanes, planes)

    out = jax.block_until_ready(bottleneck3d_pallas(x, params, t_tile=4))
    ref = jax.block_until_ready(bottleneck3d_reference(x, params))

    assert out.shape == (N, inplanes, T, H, W)
    max_err = jnp.max(jnp.abs(out - ref))
    # Tolerance covers rare bf16 rounding-boundary flips caused by the
    # (intentionally) different f32 accumulation order vs the XLA convs.
    assert jnp.allclose(out, ref, atol=5e-3, rtol=5e-3), \
        f"max abs diff = {max_err}"

    print("KERNEL_OK")
</pallas_src>

<mosaic_0001>
module attributes {stable_mosaic.version = 11 : i64} {
  func.func @kernel(%arg0: i32, %arg1: i32, %arg2: memref<1x256x128xbf16, #tpu.memory_space<vmem>>, %arg3: memref<1x64x128xbf16, #tpu.memory_space<vmem>>, %arg4: memref<1x64x128xbf16, #tpu.memory_space<vmem>>, %arg5: memref<3x128x128xbf16, #tpu.memory_space<vmem>>, %arg6: memref<1x128xf32, #tpu.memory_space<vmem>>, %arg7: memref<3x3x128x128xbf16, #tpu.memory_space<vmem>>, %arg8: memref<1x128xf32, #tpu.memory_space<vmem>>, %arg9: memref<128x128xbf16, #tpu.memory_space<vmem>>, %arg10: memref<1x128xf32, #tpu.memory_space<vmem>>, %arg11: memref<1x256x128xf32, #tpu.memory_space<vmem>>, %arg12: memref<256x128xf32, #tpu.memory_space<vmem>>, %arg13: memref<4x10x16x128xbf16, #tpu.memory_space<vmem>>) attributes {dimension_semantics = [#tpu.dimension_semantics<parallel>, #tpu.dimension_semantics<parallel>], iteration_bounds = array<i64: 2, 2>, scalar_prefetch = 0 : i64, scratch_operands = 2 : i64, tpu.core_type = #tpu.core_type<tc>, window_params = [{transform_indices = @transform_0, window_bounds = array<i64: 1, 256, 128>}, {transform_indices = @transform_1, window_bounds = array<i64: 1, 64, 128>}, {transform_indices = @transform_2, window_bounds = array<i64: 1, 64, 128>}, {pipeline_mode = #tpu.pipeline_mode<synchronous>, transform_indices = @transform_3, window_bounds = array<i64: 3, 128, 128>}, {pipeline_mode = #tpu.pipeline_mode<synchronous>, transform_indices = @transform_4, window_bounds = array<i64: 1, 128>}, {pipeline_mode = #tpu.pipeline_mode<synchronous>, transform_indices = @transform_5, window_bounds = array<i64: 3, 3, 128, 128>}, {pipeline_mode = #tpu.pipeline_mode<synchronous>, transform_indices = @transform_6, window_bounds = array<i64: 1, 128>}, {pipeline_mode = #tpu.pipeline_mode<synchronous>, transform_indices = @transform_7, window_bounds = array<i64: 128, 128>}, {pipeline_mode = #tpu.pipeline_mode<synchronous>, transform_indices = @transform_8, window_bounds = array<i64: 1, 128>}, {transform_indices = @transform_9, window_bounds = array<i64: 1, 256, 128>}]} {
    %c0 = arith.constant 0 : index
    %c0_0 = arith.constant 0 : index
    %c0_1 = arith.constant 0 : index
    %0 = vector.load %arg2[%c0, %c0_0, %c0_1] : memref<1x256x128xbf16, #tpu.memory_space<vmem>>, vector<1x256x128xbf16>
    %1 = vector.shape_cast %0 : vector<1x256x128xbf16> to vector<256x128xbf16>
    %c1 = arith.constant 1 : index
    %c0_2 = arith.constant 0 : index
    %c0_3 = arith.constant 0 : index
    %2 = vector.load %arg5[%c1, %c0_2, %c0_3] : memref<3x128x128xbf16, #tpu.memory_space<vmem>>, vector<1x128x128xbf16>
    %3 = vector.shape_cast %2 : vector<1x128x128xbf16> to vector<128x128xbf16>
    %cst = arith.constant dense<0.000000e+00> : vector<256x128xf32>
    %4 = tpu.matmul %1, %3, %cst {dimension_numbers = #tpu.dot_dimension_numbers<[1], [0], [0], [1], [0, 0, 1, 1], [], []>} : vector<256x128xbf16>, vector<128x128xbf16>, vector<256x128xf32> -> vector<256x128xf32>
    %c0_4 = arith.constant 0 : index
    %c0_5 = arith.constant 0 : index
    %5 = vector.load %arg12[%c0_4, %c0_5] : memref<256x128xf32, #tpu.memory_space<vmem>>, vector<256x128xf32>
    tpu.vector_store %arg12[%c0_4, %c0_5], %4 {strides = array<i32>} : memref<256x128xf32, #tpu.memory_space<vmem>>, vector<256x128xf32>,
    %c64 = arith.constant 64 : index
    %c0_6 = arith.constant 0 : index
    %6 = vector.load %arg12[%c64, %c0_6] : memref<256x128xf32, #tpu.memory_space<vmem>>, vector<192x128xf32>
    %c0_7 = arith.constant 0 : index
    %c0_8 = arith.constant 0 : index
    %c0_9 = arith.constant 0 : index
    %7 = vector.load %arg2[%c0_7, %c0_8, %c0_9] : memref<1x256x128xbf16, #tpu.memory_space<vmem>>, vector<1x192x128xbf16>
    %8 = vector.shape_cast %7 : vector<1x192x128xbf16> to vector<192x128xbf16>
    %c0_10 = arith.constant 0 : index
    %c0_11 = arith.constant 0 : index
    %c0_12 = arith.constant 0 : index
    %9 = vector.load %arg5[%c0_10, %c0_11, %c0_12] : memref<3x128x128xbf16, #tpu.memory_space<vmem>>, vector<1x128x128xbf16>
    %10 = vector.shape_cast %9 : vector<1x128x128xbf16> to vector<128x128xbf16>
    %cst_13 = arith.constant dense<0.000000e+00> : vector<192x128xf32>
    %11 = tpu.matmul %8, %10, %cst_13 {dimension_numbers = #tpu.dot_dimension_numbers<[1], [0], [0], [1], [0, 0, 1, 1], [], []>} : vector<192x128xbf16>, vector<128x128xbf16>, vector<192x128xf32> -> vector<192x128xf32>
    %12 = arith.addf %6, %11 : vector<192x128xf32>
    %c64_14 = arith.constant 64 : index
    %c0_15 = arith.constant 0 : index
    %13 = vector.load %arg12[%c64_14, %c0_15] : memref<256x128xf32, #tpu.memory_space<vmem>>, vector<192x128xf32>
    tpu.vector_store %arg12[%c64_14, %c0_15], %12 {strides = array<i32>} : memref<256x128xf32, #tpu.memory_space<vmem>>, vector<192x128xf32>,
    %c0_16 = arith.constant 0 : index
    %c0_17 = arith.constant 0 : index
    %14 = vector.load %arg12[%c0_16, %c0_17] : memref<256x128xf32, #tpu.memory_space<vmem>>, vector<192x128xf32>
    %c0_18 = arith.constant 0 : index
    %c64_19 = arith.constant 64 : index
    %c0_20 = arith.constant 0 : index
    %15 = vector.load %arg2[%c0_18, %c64_19, %c0_20] : memref<1x256x128xbf16, #tpu.memory_space<vmem>>, vector<1x192x128xbf16>
    %16 = vector.shape_cast %15 : vector<1x192x128xbf16> to vector<192x128xbf16>
    %c2 = arith.constant 2 : index
    %c0_21 = arith.constant 0 : index
    %c0_22 = arith.constant 0 : index
    %17 = vector.load %arg5[%c2, %c0_21, %c0_22] : memref<3x128x128xbf16, #tpu.memory_space<vmem>>, vector<1x128x128xbf16>
    %18 = vector.shape_cast %17 : vector<1x128x128xbf16> to vector<128x128xbf16>
    %cst_23 = arith.constant dense<0.000000e+00> : vector<192x128xf32>
    %19 = tpu.matmul %16, %18, %cst_23 {dimension_numbers = #tpu.dot_dimension_numbers<[1], [0], [0], [1], [0, 0, 1, 1], [], []>} : vector<192x128xbf16>, vector<128x128xbf16>, vector<192x128xf32> -> vector<192x128xf32>
    %20 = arith.addf %14, %19 : vector<192x128xf32>
    %c0_24 = arith.constant 0 : index
    %c0_25 = arith.constant 0 : index
    %21 = vector.load %arg12[%c0_24, %c0_25] : memref<256x128xf32, #tpu.memory_space<vmem>>, vector<192x128xf32>
    tpu.vector_store %arg12[%c0_24, %c0_25], %20 {strides = array<i32>} : memref<256x128xf32, #tpu.memory_space<vmem>>, vector<192x128xf32>,
    %c0_i32 = arith.constant 0 : i32
    %22 = arith.cmpi sgt, %arg1, %c0_i32 : i32
    %23 = arith.extui %22 : i1 to i32
    %c0_i32_26 = arith.constant 0 : i32
    %24 = arith.cmpi ne, %23, %c0_i32_26 : i32
    scf.if %24 {
      %c0_152 = arith.constant 0 : index
      %c0_153 = arith.constant 0 : index
      %118 = vector.load %arg12[%c0_152, %c0_153] : memref<256x128xf32, #tpu.memory_space<vmem>>, vector<64x128xf32>
      %c0_154 = arith.constant 0 : index
      %c0_155 = arith.constant 0 : index
      %c0_156 = arith.constant 0 : index
      %119 = vector.load %arg3[%c0_154, %c0_155, %c0_156] : memref<1x64x128xbf16, #tpu.memory_space<vmem>>, vector<1x64x128xbf16>
      %120 = vector.shape_cast %119 : vector<1x64x128xbf16> to vector<64x128xbf16>
      %c0_157 = arith.constant 0 : index
      %c0_158 = arith.constant 0 : index
      %c0_159 = arith.constant 0 : index
      %121 = vector.load %arg5[%c0_157, %c0_158, %c0_159] : memref<3x128x128xbf16, #tpu.memory_space<vmem>>, vector<1x128x128xbf16>
      %122 = vector.shape_cast %121 : vector<1x128x128xbf16> to vector<128x128xbf16>
      %cst_160 = arith.constant dense<0.000000e+00> : vector<64x128xf32>
      %123 = tpu.matmul %120, %122, %cst_160 {dimension_numbers = #tpu.dot_dimension_numbers<[1], [0], [0], [1], [0, 0, 1, 1], [], []>} : vector<64x128xbf16>, vector<128x128xbf16>, vector<64x128xf32> -> vector<64x128xf32>
      %124 = arith.addf %118, %123 : vector<64x128xf32>
      %c0_161 = arith.constant 0 : index
      %c0_162 = arith.constant 0 : index
      %125 = vector.load %arg12[%c0_161, %c0_162] : memref<256x128xf32, #tpu.memory_space<vmem>>, vector<64x128xf32>
      tpu.vector_store %arg12[%c0_161, %c0_162], %124 {strides = array<i32>} : memref<256x128xf32, #tpu.memory_space<vmem>>, vector<64x128xf32>,
    } else {
    }
    %c1_i32 = arith.constant 1 : i32
    %25 = arith.cmpi slt, %arg1, %c1_i32 : i32
    %26 = arith.extui %25 : i1 to i32
    %c0_i32_27 = arith.constant 0 : i32
    %27 = arith.cmpi ne, %26, %c0_i32_27 : i32
    scf.if %27 {
      %c192 = arith.constant 192 : index
      %c0_152 = arith.constant 0 : index
      %118 = vector.load %arg12[%c192, %c0_152] : memref<256x128xf32, #tpu.memory_space<vmem>>, vector<64x128xf32>
      %c0_153 = arith.constant 0 : index
      %c0_154 = arith.constant 0 : index
      %c0_155 = arith.constant 0 : index
      %119 = vector.load %arg4[%c0_153, %c0_154, %c0_155] : memref<1x64x128xbf16, #tpu.memory_space<vmem>>, vector<1x64x128xbf16>
      %120 = vector.shape_cast %119 : vector<1x64x128xbf16> to vector<64x128xbf16>
      %c2_156 = arith.constant 2 : index
      %c0_157 = arith.constant 0 : index
      %c0_158 = arith.constant 0 : index
      %121 = vector.load %arg5[%c2_156, %c0_157, %c0_158] : memref<3x128x128xbf16, #tpu.memory_space<vmem>>, vector<1x128x128xbf16>
      %122 = vector.shape_cast %121 : vector<1x128x128xbf16> to vector<128x128xbf16>
      %cst_159 = arith.constant dense<0.000000e+00> : vector<64x128xf32>
      %123 = tpu.matmul %120, %122, %cst_159 {dimension_numbers = #tpu.dot_dimension_numbers<[1], [0], [0], [1], [0, 0, 1, 1], [], []>} : vector<64x128xbf16>, vector<128x128xbf16>, vector<64x128xf32> -> vector<64x128xf32>
      %124 = arith.addf %118, %123 : vector<64x128xf32>
      %c192_160 = arith.constant 192 : index
      %c0_161 = arith.constant 0 : index
      %125 = vector.load %arg12[%c192_160, %c0_161] : memref<256x128xf32, #tpu.memory_space<vmem>>, vector<64x128xf32>
      tpu.vector_store %arg12[%c192_160, %c0_161], %124 {strides = array<i32>} : memref<256x128xf32, #tpu.memory_space<vmem>>, vector<64x128xf32>,
    } else {
    }
    %c0_28 = arith.constant 0 : index
    %c0_29 = arith.constant 0 : index
    %28 = vector.load %arg12[%c0_28, %c0_29] : memref<256x128xf32, #tpu.memory_space<vmem>>, vector<256x128xf32>
    %c0_30 = arith.constant 0 : index
    %c0_31 = arith.constant 0 : index
    %29 = vector.load %arg6[%c0_30, %c0_31] : memref<1x128xf32, #tpu.memory_space<vmem>>, vector<1x128xf32>
    %30 = vector.broadcast %29 : vector<1x128xf32> to vector<256x128xf32>
    %31 = arith.addf %28, %30 : vector<256x128xf32>
    %cst_32 = arith.constant 0.000000e+00 : f32
    %32 = vector.broadcast %cst_32 : f32 to vector<256x128xf32>
    %33 = arith.maximumf %31, %32 : vector<256x128xf32>
    %cst_33 = arith.constant 0.000000e+00 : bf16
    %34 = vector.broadcast %cst_33 : bf16 to vector<4x1x16x128xbf16>
    %c0_34 = arith.constant 0 : index
    %c0_35 = arith.constant 0 : index
    %c0_36 = arith.constant 0 : index
    %c0_37 = arith.constant 0 : index
    %35 = vector.load %arg13[%c0_34, %c0_35, %c0_36, %c0_37] : memref<4x10x16x128xbf16, #tpu.memory_space<vmem>>, vector<4x1x16x128xbf16>
    tpu.vector_store %arg13[%c0_34, %c0_35, %c0_36, %c0_37], %34 {strides = array<i32>} : memref<4x10x16x128xbf16, #tpu.memory_space<vmem>>, vector<4x1x16x128xbf16>,
    %cst_38 = arith.constant 0.000000e+00 : bf16
    %36 = vector.broadcast %cst_38 : bf16 to vector<4x1x16x128xbf16>
    %c0_39 = arith.constant 0 : index
    %c9 = arith.constant 9 : index
    %c0_40 = arith.constant 0 : index
    %c0_41 = arith.constant 0 : index
    %37 = vector.load %arg13[%c0_39, %c9, %c0_40, %c0_41] : memref<4x10x16x128xbf16, #tpu.memory_space<vmem>>, vector<4x1x16x128xbf16>
    tpu.vector_store %arg13[%c0_39, %c9, %c0_40, %c0_41], %36 {strides = array<i32>} : memref<4x10x16x128xbf16, #tpu.memory_space<vmem>>, vector<4x1x16x128xbf16>,
    %cst_42 = arith.constant 0.000000e+00 : bf16
    %38 = vector.broadcast %cst_42 : bf16 to vector<4x10x1x128xbf16>
    %c0_43 = arith.constant 0 : index
    %c0_44 = arith.constant 0 : index
    %c0_45 = arith.constant 0 : index
    %c0_46 = arith.constant 0 : index
    %39 = vector.load %arg13[%c0_43, %c0_44, %c0_45, %c0_46] : memref<4x10x16x128xbf16, #tpu.memory_space<vmem>>, vector<4x10x1x128xbf16>
    tpu.vector_store %arg13[%c0_43, %c0_44, %c0_45, %c0_46], %38 {strides = array<i32>} : memref<4x10x16x128xbf16, #tpu.memory_space<vmem>>, vector<4x10x1x128xbf16>,
    %cst_47 = arith.constant 0.000000e+00 : bf16
    %40 = vector.broadcast %cst_47 : bf16 to vector<4x10x7x128xbf16>
    %c0_48 = arith.constant 0 : index
    %c0_49 = arith.constant 0 : index
    %c9_50 = arith.constant 9 : index
    %c0_51 = arith.constant 0 : index
    %41 = vector.load %arg13[%c0_48, %c0_49, %c9_50, %c0_51] : memref<4x10x16x128xbf16, #tpu.memory_space<vmem>>, vector<4x10x7x128xbf16>
    tpu.vector_store %arg13[%c0_48, %c0_49, %c9_50, %c0_51], %40 {strides = array<i32>} : memref<4x10x16x128xbf16, #tpu.memory_space<vmem>>, vector<4x10x7x128xbf16>,
    %42 = vector.shape_cast %33 : vector<256x128xf32> to vector<4x8x8x128xf32>
    %43 = arith.truncf %42 : vector<4x8x8x128xf32> to vector<4x8x8x128xbf16>
    %c0_52 = arith.constant 0 : index
    %c1_53 = arith.constant 1 : index
    %c1_54 = arith.constant 1 : index
    %c0_55 = arith.constant 0 : index
    %44 = vector.load %arg13[%c0_52, %c1_53, %c1_54, %c0_55] : memref<4x10x16x128xbf16, #tpu.memory_space<vmem>>, vector<4x8x8x128xbf16>
    tpu.vector_store %arg13[%c0_52, %c1_53, %c1_54, %c0_55], %43 {strides = array<i32>} : memref<4x10x16x128xbf16, #tpu.memory_space<vmem>>, vector<4x8x8x128xbf16>,
    %c0_56 = arith.constant 0 : index
    %c0_57 = arith.constant 0 : index
    %c0_58 = arith.constant 0 : index
    %c0_59 = arith.constant 0 : index
    %45 = vector.load %arg13[%c0_56, %c0_57, %c0_58, %c0_59] : memref<4x10x16x128xbf16, #tpu.memory_space<vmem>>, vector<4x8x8x128xbf16>
    %46 = vector.shape_cast %45 : vector<4x8x8x128xbf16> to vector<256x128xbf16>
    %c0_60 = arith.constant 0 : index
    %c0_61 = arith.constant 0 : index
    %c0_62 = arith.constant 0 : index
    %c0_63 = arith.constant 0 : index
    %47 = vector.load %arg7[%c0_60, %c0_61, %c0_62, %c0_63] : memref<3x3x128x128xbf16, #tpu.memory_space<vmem>>, vector<1x1x128x128xbf16>
    %48 = vector.shape_cast %47 : vector<1x1x128x128xbf16> to vector<128x128xbf16>
    %cst_64 = arith.constant dense<0.000000e+00> : vector<256x128xf32>
    %49 = tpu.matmul %46, %48, %cst_64 {dimension_numbers = #tpu.dot_dimension_numbers<[1], [0], [0], [1], [0, 0, 1, 1], [], []>} : vector<256x128xbf16>, vector<128x128xbf16>, vector<256x128xf32> -> vector<256x128xf32>
    %c0_65 = arith.constant 0 : index
    %c0_66 = arith.constant 0 : index
    %c1_67 = arith.constant 1 : index
    %c0_68 = arith.constant 0 : index
    %50 = vector.load %arg13[%c0_65, %c0_66, %c1_67, %c0_68] : memref<4x10x16x128xbf16, #tpu.memory_space<vmem>>, vector<4x8x8x128xbf16>
    %51 = vector.shape_cast %50 : vector<4x8x8x128xbf16> to vector<256x128xbf16>
    %c0_69 = arith.constant 0 : index
    %c1_70 = arith.constant 1 : index
    %c0_71 = arith.constant 0 : index
    %c0_72 = arith.constant 0 : index
    %52 = vector.load %arg7[%c0_69, %c1_70, %c0_71, %c0_72] : memref<3x3x128x128xbf16, #tpu.memory_space<vmem>>, vector<1x1x128x128xbf16>
    %53 = vector.shape_cast %52 : vector<1x1x128x128xbf16> to vector<128x128xbf16>
    %cst_73 = arith.constant dense<0.000000e+00> : vector<256x128xf32>
    %54 = tpu.matmul %51, %53, %cst_73 {dimension_numbers = #tpu.dot_dimension_numbers<[1], [0], [0], [1], [0, 0, 1, 1], [], []>} : vector<256x128xbf16>, vector<128x128xbf16>, vector<256x128xf32> -> vector<256x128xf32>
    %55 = arith.addf %49, %54 : vector<256x128xf32>
    %c0_74 = arith.constant 0 : index
    %c0_75 = arith.constant 0 : index
    %c2_76 = arith.constant 2 : index
    %c0_77 = arith.constant 0 : index
    %56 = vector.load %arg13[%c0_74, %c0_75, %c2_76, %c0_77] : memref<4x10x16x128xbf16, #tpu.memory_space<vmem>>, vector<4x8x8x128xbf16>
    %57 = vector.shape_cast %56 : vector<4x8x8x128xbf16> to vector<256x128xbf16>
    %c0_78 = arith.constant 0 : index
    %c2_79 = arith.constant 2 : index
    %c0_80 = arith.constant 0 : index
    %c0_81 = arith.constant 0 : index
    %58 = vector.load %arg7[%c0_78, %c2_79, %c0_80, %c0_81] : memref<3x3x128x128xbf16, #tpu.memory_space<vmem>>, vector<1x1x128x128xbf16>
    %59 = vector.shape_cast %58 : vector<1x1x128x128xbf16> to vector<128x128xbf16>
    %cst_82 = arith.constant dense<0.000000e+00> : vector<256x128xf32>
    %60 = tpu.matmul %57, %59, %cst_82 {dimension_numbers = #tpu.dot_dimension_numbers<[1], [0], [0], [1], [0, 0, 1, 1], [], []>} : vector<256x128xbf16>, vector<128x128xbf16>, vector<256x128xf32> -> vector<256x128xf32>
    %61 = arith.addf %55, %60 : vector<256x128xf32>
    %c0_83 = arith.constant 0 : index
    %c1_84 = arith.constant 1 : index
    %c0_85 = arith.constant 0 : index
    %c0_86 = arith.constant 0 : index
    %62 = vector.load %arg13[%c0_83, %c1_84, %c0_85, %c0_86] : memref<4x10x16x128xbf16, #tpu.memory_space<vmem>>, vector<4x8x8x128xbf16>
    %63 = vector.shape_cast %62 : vector<4x8x8x128xbf16> to vector<256x128xbf16>
    %c1_87 = arith.constant 1 : index
    %c0_88 = arith.constant 0 : index
    %c0_89 = arith.constant 0 : index
    %c0_90 = arith.constant 0 : index
    %64 = vector.load %arg7[%c1_87, %c0_88, %c0_89, %c0_90] : memref<3x3x128x128xbf16, #tpu.memory_space<vmem>>, vector<1x1x128x128xbf16>
    %65 = vector.shape_cast %64 : vector<1x1x128x128xbf16> to vector<128x128xbf16>
    %cst_91 = arith.constant dense<0.000000e+00> : vector<256x128xf32>
    %66 = tpu.matmul %63, %65, %cst_91 {dimension_numbers = #tpu.dot_dimension_numbers<[1], [0], [0], [1], [0, 0, 1, 1], [], []>} : vector<256x128xbf16>, vector<128x128xbf16>, vector<256x128xf32> -> vector<256x128xf32>
    %67 = arith.addf %61, %66 : vector<256x128xf32>
    %c0_92 = arith.constant 0 : index
    %c1_93 = arith.constant 1 : index
    %c1_94 = arith.constant 1 : index
    %c0_95 = arith.constant 0 : index
    %68 = vector.load %arg13[%c0_92, %c1_93, %c1_94, %c0_95] : memref<4x10x16x128xbf16, #tpu.memory_space<vmem>>, vector<4x8x8x128xbf16>
    %69 = vector.shape_cast %68 : vector<4x8x8x128xbf16> to vector<256x128xbf16>
    %c1_96 = arith.constant 1 : index
    %c1_97 = arith.constant 1 : index
    %c0_98 = arith.constant 0 : index
    %c0_99 = arith.constant 0 : index
    %70 = vector.load %arg7[%c1_96, %c1_97, %c0_98, %c0_99] : memref<3x3x128x128xbf16, #tpu.memory_space<vmem>>, vector<1x1x128x128xbf16>
    %71 = vector.shape_cast %70 : vector<1x1x128x128xbf16> to vector<128x128xbf16>
    %cst_100 = arith.constant dense<0.000000e+00> : vector<256x128xf32>
    %72 = tpu.matmul %69, %71, %cst_100 {dimension_numbers = #tpu.dot_dimension_numbers<[1], [0], [0], [1], [0, 0, 1, 1], [], []>} : vector<256x128xbf16>, vector<128x128xbf16>, vector<256x128xf32> -> vector<256x128xf32>
    %73 = arith.addf %67, %72 : vector<256x128xf32>
    %c0_101 = arith.constant 0 : index
    %c1_102 = arith.constant 1 : index
    %c2_103 = arith.constant 2 : index
    %c0_104 = arith.constant 0 : index
    %74 = vector.load %arg13[%c0_101, %c1_102, %c2_103, %c0_104] : memref<4x10x16x128xbf16, #tpu.memory_space<vmem>>, vector<4x8x8x128xbf16>
    %75 = vector.shape_cast %74 : vector<4x8x8x128xbf16> to vector<256x128xbf16>
    %c1_105 = arith.constant 1 : index
    %c2_106 = arith.constant 2 : index
    %c0_107 = arith.constant 0 : index
    %c0_108 = arith.constant 0 : index
    %76 = vector.load %arg7[%c1_105, %c2_106, %c0_107, %c0_108] : memref<3x3x128x128xbf16, #tpu.memory_space<vmem>>, vector<1x1x128x128xbf16>
    %77 = vector.shape_cast %76 : vector<1x1x128x128xbf16> to vector<128x128xbf16>
    %cst_109 = arith.constant dense<0.000000e+00> : vector<256x128xf32>
    %78 = tpu.matmul %75, %77, %cst_109 {dimension_numbers = #tpu.dot_dimension_numbers<[1], [0], [0], [1], [0, 0, 1, 1], [], []>} : vector<256x128xbf16>, vector<128x128xbf16>, vector<256x128xf32> -> vector<256x128xf32>
    %79 = arith.addf %73, %78 : vector<256x128xf32>
    %c0_110 = arith.constant 0 : index
    %c2_111 = arith.constant 2 : index
    %c0_112 = arith.constant 0 : index
    %c0_113 = arith.constant 0 : index
    %80 = vector.load %arg13[%c0_110, %c2_111, %c0_112, %c0_113] : memref<4x10x16x128xbf16, #tpu.memory_space<vmem>>, vector<4x8x8x128xbf16>
    %81 = vector.shape_cast %80 : vector<4x8x8x128xbf16> to vector<256x128xbf16>
    %c2_114 = arith.constant 2 : index
    %c0_115 = arith.constant 0 : index
    %c0_116 = arith.constant 0 : index
    %c0_117 = arith.constant 0 : index
    %82 = vector.load %arg7[%c2_114, %c0_115, %c0_116, %c0_117] : memref<3x3x128x128xbf16, #tpu.memory_space<vmem>>, vector<1x1x128x128xbf16>
    %83 = vector.shape_cast %82 : vector<1x1x128x128xbf16> to vector<128x128xbf16>
    %cst_118 = arith.constant dense<0.000000e+00> : vector<256x128xf32>
    %84 = tpu.matmul %81, %83, %cst_118 {dimension_numbers = #tpu.dot_dimension_numbers<[1], [0], [0], [1], [0, 0, 1, 1], [], []>} : vector<256x128xbf16>, vector<128x128xbf16>, vector<256x128xf32> -> vector<256x128xf32>
    %85 = arith.addf %79, %84 : vector<256x128xf32>
    %c0_119 = arith.constant 0 : index
    %c2_120 = arith.constant 2 : index
    %c1_121 = arith.constant 1 : index
    %c0_122 = arith.constant 0 : index
    %86 = vector.load %arg13[%c0_119, %c2_120, %c1_121, %c0_122] : memref<4x10x16x128xbf16, #tpu.memory_space<vmem>>, vector<4x8x8x128xbf16>
    %87 = vector.shape_cast %86 : vector<4x8x8x128xbf16> to vector<256x128xbf16>
    %c2_123 = arith.constant 2 : index
    %c1_124 = arith.constant 1 : index
    %c0_125 = arith.constant 0 : index
    %c0_126 = arith.constant 0 : index
    %88 = vector.load %arg7[%c2_123, %c1_124, %c0_125, %c0_126] : memref<3x3x128x128xbf16, #tpu.memory_space<vmem>>, vector<1x1x128x128xbf16>
    %89 = vector.shape_cast %88 : vector<1x1x128x128xbf16> to vector<128x128xbf16>
    %cst_127 = arith.constant dense<0.000000e+00> : vector<256x128xf32>
    %90 = tpu.matmul %87, %89, %cst_127 {dimension_numbers = #tpu.dot_dimension_numbers<[1], [0], [0], [1], [0, 0, 1, 1], [], []>} : vector<256x128xbf16>, vector<128x128xbf16>, vector<256x128xf32> -> vector<256x128xf32>
    %91 = arith.addf %85, %90 : vector<256x128xf32>
    %c0_128 = arith.constant 0 : index
    %c2_129 = arith.constant 2 : index
    %c2_130 = arith.constant 2 : index
    %c0_131 = arith.constant 0 : index
    %92 = vector.load %arg13[%c0_128, %c2_129, %c2_130, %c0_131] : memref<4x10x16x128xbf16, #tpu.memory_space<vmem>>, vector<4x8x8x128xbf16>
    %93 = vector.shape_cast %92 : vector<4x8x8x128xbf16> to vector<256x128xbf16>
    %c2_132 = arith.constant 2 : index
    %c2_133 = arith.constant 2 : index
    %c0_134 = arith.constant 0 : index
    %c0_135 = arith.constant 0 : index
    %94 = vector.load %arg7[%c2_132, %c2_133, %c0_134, %c0_135] : memref<3x3x128x128xbf16, #tpu.memory_space<vmem>>, vector<1x1x128x128xbf16>
    %95 = vector.shape_cast %94 : vector<1x1x128x128xbf16> to vector<128x128xbf16>
    %cst_136 = arith.constant dense<0.000000e+00> : vector<256x128xf32>
    %96 = tpu.matmul %93, %95, %cst_136 {dimension_numbers = #tpu.dot_dimension_numbers<[1], [0], [0], [1], [0, 0, 1, 1], [], []>} : vector<256x128xbf16>, vector<128x128xbf16>, vector<256x128xf32> -> vector<256x128xf32>
    %97 = arith.addf %91, %96 : vector<256x128xf32>
    %c0_137 = arith.constant 0 : index
    %c0_138 = arith.constant 0 : index
    %98 = vector.load %arg8[%c0_137, %c0_138] : memref<1x128xf32, #tpu.memory_space<vmem>>, vector<1x128xf32>
    %99 = vector.broadcast %98 : vector<1x128xf32> to vector<256x128xf32>
    %100 = arith.addf %97, %99 : vector<256x128xf32>
    %cst_139 = arith.constant 0.000000e+00 : f32
    %101 = vector.broadcast %cst_139 : f32 to vector<256x128xf32>
    %102 = arith.maximumf %100, %101 : vector<256x128xf32>
    %103 = arith.truncf %102 : vector<256x128xf32> to vector<256x128xbf16>
    %c0_140 = arith.constant 0 : index
    %c0_141 = arith.constant 0 : index
    %104 = vector.load %arg9[%c0_140, %c0_141] : memref<128x128xbf16, #tpu.memory_space<vmem>>, vector<128x128xbf16>
    %cst_142 = arith.constant dense<0.000000e+00> : vector<256x128xf32>
    %105 = tpu.matmul %103, %104, %cst_142 {dimension_numbers = #tpu.dot_dimension_numbers<[1], [0], [0], [1], [0, 0, 1, 1], [], []>} : vector<256x128xbf16>, vector<128x128xbf16>, vector<256x128xf32> -> vector<256x128xf32>
    %c0_143 = arith.constant 0 : index
    %c0_144 = arith.constant 0 : index
    %106 = vector.load %arg10[%c0_143, %c0_144] : memref<1x128xf32, #tpu.memory_space<vmem>>, vector<1x128xf32>
    %107 = vector.broadcast %106 : vector<1x128xf32> to vector<256x128xf32>
    %108 = arith.addf %105, %107 : vector<256x128xf32>
    %c0_145 = arith.constant 0 : index
    %c0_146 = arith.constant 0 : index
    %c0_147 = arith.constant 0 : index
    %109 = vector.load %arg2[%c0_145, %c0_146, %c0_147] : memref<1x256x128xbf16, #tpu.memory_space<vmem>>, vector<1x256x128xbf16>
    %110 = vector.shape_cast %109 : vector<1x256x128xbf16> to vector<256x128xbf16>
    %111 = arith.extf %110 : vector<256x128xbf16> to vector<256x128xf32>
    %112 = arith.addf %108, %111 : vector<256x128xf32>
    %cst_148 = arith.constant 0.000000e+00 : f32
    %113 = vector.broadcast %cst_148 : f32 to vector<256x128xf32>
    %114 = arith.maximumf %112, %113 : vector<256x128xf32>
    %c0_149 = arith.constant 0 : index
    %c0_150 = arith.constant 0 : index
    %c0_151 = arith.constant 0 : index
    %115 = vector.load %arg11[%c0_149, %c0_150, %c0_151] : memref<1x256x128xf32, #tpu.memory_space<vmem>>, vector<1x256x128xf32>
    %116 = vector.shape_cast %115 : vector<1x256x128xf32> to vector<256x128xf32>
    %117 = vector.shape_cast %114 : vector<256x128xf32> to vector<1x256x128xf32>
    tpu.vector_store %arg11[%c0_149, %c0_150, %c0_151], %117 {strides = array<i32>} : memref<1x256x128xf32, #tpu.memory_space<vmem>>, vector<1x256x128xf32>,
    return
  }
  func.func @transform_0(%arg0: i32, %arg1: i32) -> (i32, i32, i32) {
    %c0_i32 = arith.constant 0 : i32
    %c0_i32_0 = arith.constant 0 : i32
    return %arg0, %arg1, %c0_i32 : i32, i32, i32
  }
  func.func @transform_1(%arg0: i32, %arg1: i32) -> (i32, i32, i32) {
    %c4_i32 = arith.constant 4 : i32
    %0 = arith.muli %arg1, %c4_i32 : i32
    %c1_i32 = arith.constant 1 : i32
    %1 = arith.subi %0, %c1_i32 : i32
    %c0_i32 = arith.constant 0 : i32
    %2 = arith.maxsi %1, %c0_i32 : i32
    %c0_i32_0 = arith.constant 0 : i32
    %c0_i32_1 = arith.constant 0 : i32
    return %arg0, %2, %c0_i32_0 : i32, i32, i32
  }
  func.func @transform_2(%arg0: i32, %arg1: i32) -> (i32, i32, i32) {
    %c1_i32 = arith.constant 1 : i32
    %0 = arith.addi %arg1, %c1_i32 : i32
    %c4_i32 = arith.constant 4 : i32
    %1 = arith.muli %0, %c4_i32 : i32
    %c7_i32 = arith.constant 7 : i32
    %2 = arith.minsi %1, %c7_i32 : i32
    %c0_i32 = arith.constant 0 : i32
    %c0_i32_0 = arith.constant 0 : i32
    return %arg0, %2, %c0_i32 : i32, i32, i32
  }
  func.func @transform_3(%arg0: i32, %arg1: i32) -> (i32, i32, i32) {
    %c0_i32 = arith.constant 0 : i32
    %c0_i32_0 = arith.constant 0 : i32
    %c0_i32_1 = arith.constant 0 : i32
    %c0_i32_2 = arith.constant 0 : i32
    return %c0_i32, %c0_i32_0, %c0_i32_1 : i32, i32, i32
  }
  func.func @transform_4(%arg0: i32, %arg1: i32) -> (i32, i32) {
    %c0_i32 = arith.constant 0 : i32
    %c0_i32_0 = arith.constant 0 : i32
    %c0_i32_1 = arith.constant 0 : i32
    return %c0_i32, %c0_i32_0 : i32, i32
  }
  func.func @transform_5(%arg0: i32, %arg1: i32) -> (i32, i32, i32, i32) {
    %c0_i32 = arith.constant 0 : i32
    %c0_i32_0 = arith.constant 0 : i32
    %c0_i32_1 = arith.constant 0 : i32
    %c0_i32_2 = arith.constant 0 : i32
    %c0_i32_3 = arith.constant 0 : i32
    return %c0_i32, %c0_i32_0, %c0_i32_1, %c0_i32_2 : i32, i32, i32, i32
  }
  func.func @transform_6(%arg0: i32, %arg1: i32) -> (i32, i32) {
    %c0_i32 = arith.constant 0 : i32
    %c0_i32_0 = arith.constant 0 : i32
    %c0_i32_1 = arith.constant 0 : i32
    return %c0_i32, %c0_i32_0 : i32, i32
  }
  func.func @transform_7(%arg0: i32, %arg1: i32) -> (i32, i32) {
    %c0_i32 = arith.constant 0 : i32
    %c0_i32_0 = arith.constant 0 : i32
    %c0_i32_1 = arith.constant 0 : i32
    return %c0_i32, %c0_i32_0 : i32, i32
  }
  func.func @transform_8(%arg0: i32, %arg1: i32) -> (i32, i32) {
    %c0_i32 = arith.constant 0 : i32
    %c0_i32_0 = arith.constant 0 : i32
    %c0_i32_1 = arith.constant 0 : i32
    return %c0_i32, %c0_i32_0 : i32, i32
  }
  func.func @transform_9(%arg0: i32, %arg1: i32) -> (i32, i32, i32) {
    %c0_i32 = arith.constant 0 : i32
    %c0_i32_0 = arith.constant 0 : i32
    return %arg0, %arg1, %c0_i32 : i32, i32, i32
  }
}

</mosaic_0001>

<llo_original>
// kernel: tpu_custom_call.1
$region0: #{tpu_custom_call.1}
  #allocation0 [shape = 'u32[]', space=smem, size = 0x4, offset = 0x4, fixed_abs, tag = 'smem constant byte address 0x4 - core index']
  #allocation1 [shape = 'u32[72,128]{1,0:T(1,128)}', space=vmem, size = 0x9000, scoped, tag = 'internal scratch']
  #allocation2 [shape = 'f32[256,128]{1,0:T(8,128)}', space=vmem, size = 0x20000, scoped, tag = 'scratch operand']
  #allocation3 [shape = 'bf16[4,10,16,128]{3,2,1,0:T(8,128)(2,1)}', space=vmem, size = 0x28000, scoped, tag = 'scratch operand']
  %s0 = inlined_call_operand.hbm [shape: bf16[2,512,128], index: 0, kind: input, shape index: {}]
  %s1 = inlined_call_operand.hbm [shape: bf16[2,512,128], index: 1, kind: input, shape index: {}]
  %s2 = inlined_call_operand.hbm [shape: bf16[2,512,128], index: 2, kind: input, shape index: {}]
  %s3 = inlined_call_operand.hbm [shape: bf16[3,128,128], index: 3, kind: input, shape index: {}]
  %s4 = inlined_call_operand.vmem [shape: f32[1,128], index: 4, kind: input, shape index: {}]
  %s5 = inlined_call_operand.hbm [shape: bf16[3,3,128,128], index: 5, kind: input, shape index: {}]
  %s6 = inlined_call_operand.vmem [shape: f32[1,128], index: 6, kind: input, shape index: {}]
  %s7 = inlined_call_operand.hbm [shape: bf16[128,128], index: 7, kind: input, shape index: {}]
  %s8 = inlined_call_operand.vmem [shape: f32[1,128], index: 8, kind: input, shape index: {}]
  %s9 = inlined_call_operand.hbm [shape: f32[2,512,128], index: 9, kind: output, shape index: {}]
  %s10 = sld [smem:[#allocation0]]
  $region101: #{tpu_custom_call.1} parent=0
    _
  %s12 = ssub.s32 1, %s10
  %s13 = scalar_select 0, %s12, %s10
  $region1: #{tpu_custom_call.1} parent=0
    #allocation4 [shape = 'u8[131072]{0}', space=vmem, size = 0x20000, scoped, tag = 'input window, operand 0']
    #allocation5 [shape = 's32[2]{0}', space=sflag, size = 0x8, scoped, tag = 'scoped memory for tpu_custom_call.1']
    #allocation6 [shape = 's32[2]{0}', space=sflag, size = 0x8, scoped, tag = 'scoped memory for tpu_custom_call.1']
    #allocation7 [shape = 'u8[32768]{0}', space=vmem, size = 0x8000, scoped, tag = 'input window, operand 1']
    #allocation8 [shape = 's32[2]{0}', space=sflag, size = 0x8, scoped, tag = 'scoped memory for tpu_custom_call.1']
    #allocation9 [shape = 'u8[32768]{0}', space=vmem, size = 0x8000, scoped, tag = 'input window, operand 2']
    #allocation10 [shape = 'u8[98304]{0}', space=vmem, size = 0x18000, scoped, tag = 'input window, operand 3, single buffered']
    #allocation11 [shape = 's32[1]{0}', space=sflag, size = 0x4, scoped, tag = 'scoped memory for tpu_custom_call.1']
    #allocation12 [shape = 'u8[294912]{0}', space=vmem, size = 0x48000, scoped, tag = 'input window, operand 5, single buffered']
    #allocation13 [shape = 'u8[32768]{0}', space=vmem, size = 0x8000, scoped, tag = 'input window, operand 7, single buffered']
    #allocation14 [shape = 's32[1]{0}', space=sflag, size = 0x4, scoped, tag = 'scoped memory for tpu_custom_call.1']
    #allocation15 [shape = 'u8[262144]{0}', space=vmem, size = 0x40000, scoped, tag = 'output window, operand 0']
    %14 = vsyncpa [#allocation5], 0
    %s15 = scalar_lea.sflag [#allocation5], 1
    %16 = vsyncpa %s15, 0
    %17 = vsyncpa [#allocation8], 0
    %s18 = scalar_lea.sflag [#allocation8], 1
    %19 = vsyncpa %s18, 0
    %20 = vsyncpa [#allocation11], 0
    %21 = vsyncpa [#allocation14], 0
    %22 = vsyncpa [#allocation6], 0
    %s23 = scalar_lea.sflag [#allocation6], 1
    %24 = vsyncpa %s23, 0
    loop: start=0, step=1, limit=6
    $region2: #{tpu_custom_call.1} parent=1 // loop_pre_header
      _
    $region3: #{tpu_custom_call.1} parent=1 // loop_header
      %s26 = sphi 0, %s30
      %p27 = scmp.ge.s32.totalorder %s26, 6
      %s33 = sphi 0, %s45
      %s34 = sphi 0, %s41
      %s35 = sphi 0, %s33
      %s36 = sphi 0, %s34
      %s37 = sphi 0, %s35
      %s38 = sphi 0, %s36
      %s50 = sphi 0, %s52
      %s53 = sphi 0, %s50
      %s54 = sphi 0, %s53
      %s70 = sphi 0, %s54
      %s86 = sphi 0, %s88
      %s89 = sphi 0, %s86
      %s90 = sphi 0, %s89
      %s106 = sphi 0, %s90
      %s122 = sphi 0, %s124
      %s125 = sphi 0, %s122
      %s126 = sphi 0, %s125
      %s142 = sphi 0, %s126
      %s146 = sphi 0, %s146
      %s148 = sphi 0, %s146
      %s149 = sphi 0, %s148
      %s163 = sphi 0, %s149
      %s167 = sphi 0, %s167
      %s169 = sphi 0, %s167
      %s170 = sphi 0, %s169
      %s184 = sphi 0, %s170
      %s188 = sphi 0, %s188
      %s190 = sphi 0, %s188
      %s191 = sphi 0, %s190
      %s205 = sphi 0, %s191
      %s209 = sphi 0, %s209
      %s211 = sphi 0, %s209
      %s212 = sphi 0, %s211
      %s226 = sphi 0, %s212
      %s230 = sphi 0, %s230
      %s232 = sphi 0, %s230
      %s233 = sphi 0, %s232
      %s247 = sphi 0, %s233
      %s251 = sphi 0, %s251
      %s253 = sphi 0, %s251
      %s254 = sphi 0, %s253
      %s268 = sphi 0, %s254
      %s276 = sphi 0, %s278
      %s279 = sphi 0, %s276
      %s280 = sphi 0, %s279
      %s296 = sphi 0, %s280
    $region4: #{tpu_custom_call.1} parent=1 // loop_header_branch
      %29 = sbr.rel (%p27) target = $region8
    $region5: #{tpu_custom_call.1} parent=1 // loop_body
      %s31 = ssub.s32 %s26, 1
      %s32 = ssub.s32 %s26, 2
      %s39 = sadd.s32 1, %s34
      %p40 = scmp.ge.s32.totalorder %s39, 2
      %s41 = scalar_select %p40, 0, %s39
      %s42 = sadd.s32 1, %s33
      %s43 = scalar_select %p40, %s42, %s33
      %p44 = scmp.ge.s32.totalorder %s43, 2
      %s45 = scalar_select %p44, 0, %s43
      %s46 = ssub.s32 %s33, %s45
      %s47 = ssub.s32 %s34, %s41
      %s48 = sor.u32 %s46, %s47
      %p49 = scmp.eq.s32.totalorder %s48, 0
      %s51 = sadd.s32 %s50, 1
      %s52 = scalar_select %p49, %s50, %s51
      %p55 = pneg %p49
      %p56 = scmp.eq.s32.totalorder %s26, 3
      %p57 = por %p55, %p56
      %p58 = scmp.ne.s32.totalorder %s50, %s53
      %p59 = scmp.eq.s32.totalorder %s26, 0
      %p60 = por %p58, %p59
      %p61 = scmp.ne.s32.totalorder %s50, %s53
      %p62 = scmp.eq.s32.totalorder %s31, 3
      %p63 = por %p61, %p62
      %p64 = scmp.ne.s32.totalorder %s53, %s54
      %p65 = scmp.eq.s32.totalorder %s31, 0
      %p66 = por %p64, %p65
      %p67 = scmp.ne.s32.totalorder %s53, %s54
      %p68 = scmp.eq.s32.totalorder %s32, 3
      %p69 = por %p67, %p68
      %p71 = scmp.ne.s32.totalorder %s54, %s70
      %p72 = scmp.eq.s32.totalorder %s32, 0
      %p73 = por %p71, %p72
      %s74 = smul.u32 %s34, 4
      %s75 = ssub.s32 %s74, 1
      %p76 = scmp.gt.s32.totalorder %s75, 0
      %s77 = scalar_select %p76, %s75, 0
      %s78 = smul.u32 %s41, 4
      %s79 = ssub.s32 %s78, 1
      %p80 = scmp.gt.s32.totalorder %s79, 0
      %s81 = scalar_select %p80, %s79, 0
      %s82 = ssub.s32 %s33, %s45
      %s83 = ssub.s32 %s77, %s81
      %s84 = sor.u32 %s82, %s83
      %p85 = scmp.eq.s32.totalorder %s84, 0
      %s87 = sadd.s32 %s86, 1
      %s88 = scalar_select %p85, %s86, %s87
      %p91 = pneg %p85
      %p92 = scmp.eq.s32.totalorder %s26, 3
      %p93 = por %p91, %p92
      %p94 = scmp.ne.s32.totalorder %s86, %s89
      %p95 = scmp.eq.s32.totalorder %s26, 0
      %p96 = por %p94, %p95
      %p97 = scmp.ne.s32.totalorder %s86, %s89
      %p98 = scmp.eq.s32.totalorder %s31, 3
      %p99 = por %p97, %p98
      %p100 = scmp.ne.s32.totalorder %s89, %s90
      %p101 = scmp.eq.s32.totalorder %s31, 0
      %p102 = por %p100, %p101
      %p103 = scmp.ne.s32.totalorder %s89, %s90
      %p104 = scmp.eq.s32.totalorder %s32, 3
      %p105 = por %p103, %p104
      %p107 = scmp.ne.s32.totalorder %s90, %s106
      %p108 = scmp.eq.s32.totalorder %s32, 0
      %p109 = por %p107, %p108
      %s110 = sadd.s32 %s34, 1
      %s111 = smul.u32 %s110, 4
      %p112 = scmp.lt.s32.totalorder %s111, 7
      %s113 = scalar_select %p112, %s111, 7
      %s114 = sadd.s32 %s41, 1
      %s115 = smul.u32 %s114, 4
      %p116 = scmp.lt.s32.totalorder %s115, 7
      %s117 = scalar_select %p116, %s115, 7
      %s118 = ssub.s32 %s33, %s45
      %s119 = ssub.s32 %s113, %s117
      %s120 = sor.u32 %s118, %s119
      %p121 = scmp.eq.s32.totalorder %s120, 0
      %s123 = sadd.s32 %s122, 1
      %s124 = scalar_select %p121, %s122, %s123
      %p127 = pneg %p121
      %p128 = scmp.eq.s32.totalorder %s26, 3
      %p129 = por %p127, %p128
      %p130 = scmp.ne.s32.totalorder %s122, %s125
      %p131 = scmp.eq.s32.totalorder %s26, 0
      %p132 = por %p130, %p131
      %p133 = scmp.ne.s32.totalorder %s122, %s125
      %p134 = scmp.eq.s32.totalorder %s31, 3
      %p135 = por %p133, %p134
      %p136 = scmp.ne.s32.totalorder %s125, %s126
      %p137 = scmp.eq.s32.totalorder %s31, 0
      %p138 = por %p136, %p137
      %p139 = scmp.ne.s32.totalorder %s125, %s126
      %p140 = scmp.eq.s32.totalorder %s32, 3
      %p141 = por %p139, %p140
      %p143 = scmp.ne.s32.totalorder %s126, %s142
      %p144 = scmp.eq.s32.totalorder %s32, 0
      %p145 = por %p143, %p144
      %s147 = sadd.s32 %s146, 1
      %p150 = scmp.eq.s32.totalorder %s26, 3
      %p151 = scmp.ne.s32.totalorder %s146, %s148
      %p152 = scmp.eq.s32.totalorder %s26, 0
      %p153 = por %p151, %p152
      %p154 = scmp.ne.s32.totalorder %s146, %s148
      %p155 = scmp.eq.s32.totalorder %s31, 3
      %p156 = por %p154, %p155
      %p157 = scmp.ne.s32.totalorder %s148, %s149
      %p158 = scmp.eq.s32.totalorder %s31, 0
      %p159 = por %p157, %p158
      %p160 = scmp.ne.s32.totalorder %s148, %s149
      %p161 = scmp.eq.s32.totalorder %s32, 3
      %p162 = por %p160, %p161
      %p164 = scmp.ne.s32.totalorder %s149, %s163
      %p165 = scmp.eq.s32.totalorder %s32, 0
      %p166 = por %p164, %p165
      %s168 = sadd.s32 %s167, 1
      %p171 = scmp.eq.s32.totalorder %s26, 3
      %p172 = scmp.ne.s32.totalorder %s167, %s169
      %p173 = scmp.eq.s32.totalorder %s26, 0
      %p174 = por %p172, %p173
      %p175 = scmp.ne.s32.totalorder %s167, %s169
      %p176 = scmp.eq.s32.totalorder %s31, 3
      %p177 = por %p175, %p176
      %p178 = scmp.ne.s32.totalorder %s169, %s170
      %p179 = scmp.eq.s32.totalorder %s31, 0
      %p180 = por %p178, %p179
      %p181 = scmp.ne.s32.totalorder %s169, %s170
      %p182 = scmp.eq.s32.totalorder %s32, 3
      %p183 = por %p181, %p182
      %p185 = scmp.ne.s32.totalorder %s170, %s184
      %p186 = scmp.eq.s32.totalorder %s32, 0
      %p187 = por %p185, %p186
      %s189 = sadd.s32 %s188, 1
      %p192 = scmp.eq.s32.totalorder %s26, 3
      %p193 = scmp.ne.s32.totalorder %s188, %s190
      %p194 = scmp.eq.s32.totalorder %s26, 0
      %p195 = por %p193, %p194
      %p196 = scmp.ne.s32.totalorder %s188, %s190
      %p197 = scmp.eq.s32.totalorder %s31, 3
      %p198 = por %p196, %p197
      %p199 = scmp.ne.s32.totalorder %s190, %s191
      %p200 = scmp.eq.s32.totalorder %s31, 0
      %p201 = por %p199, %p200
      %p202 = scmp.ne.s32.totalorder %s190, %s191
      %p203 = scmp.eq.s32.totalorder %s32, 3
      %p204 = por %p202, %p203
      %p206 = scmp.ne.s32.totalorder %s191, %s205
      %p207 = scmp.eq.s32.totalorder %s32, 0
      %p208 = por %p206, %p207
      %s210 = sadd.s32 %s209, 1
      %p213 = scmp.eq.s32.totalorder %s26, 3
      %p214 = scmp.ne.s32.totalorder %s209, %s211
      %p215 = scmp.eq.s32.totalorder %s26, 0
      %p216 = por %p214, %p215
      %p217 = scmp.ne.s32.totalorder %s209, %s211
      %p218 = scmp.eq.s32.totalorder %s31, 3
      %p219 = por %p217, %p218
      %p220 = scmp.ne.s32.totalorder %s211, %s212
      %p221 = scmp.eq.s32.totalorder %s31, 0
      %p222 = por %p220, %p221
      %p223 = scmp.ne.s32.totalorder %s211, %s212
      %p224 = scmp.eq.s32.totalorder %s32, 3
      %p225 = por %p223, %p224
      %p227 = scmp.ne.s32.totalorder %s212, %s226
      %p228 = scmp.eq.s32.totalorder %s32, 0
      %p229 = por %p227, %p228
      %s231 = sadd.s32 %s230, 1
      %p234 = scmp.eq.s32.totalorder %s26, 3
      %p235 = scmp.ne.s32.totalorder %s230, %s232
      %p236 = scmp.eq.s32.totalorder %s26, 0
      %p237 = por %p235, %p236
      %p238 = scmp.ne.s32.totalorder %s230, %s232
      %p239 = scmp.eq.s32.totalorder %s31, 3
      %p240 = por %p238, %p239
      %p241 = scmp.ne.s32.totalorder %s232, %s233
      %p242 = scmp.eq.s32.totalorder %s31, 0
      %p243 = por %p241, %p242
      %p244 = scmp.ne.s32.totalorder %s232, %s233
      %p245 = scmp.eq.s32.totalorder %s32, 3
      %p246 = por %p244, %p245
      %p248 = scmp.ne.s32.totalorder %s233, %s247
      %p249 = scmp.eq.s32.totalorder %s32, 0
      %p250 = por %p248, %p249
      %s252 = sadd.s32 %s251, 1
      %p255 = scmp.eq.s32.totalorder %s26, 3
      %p256 = scmp.ne.s32.totalorder %s251, %s253
      %p257 = scmp.eq.s32.totalorder %s26, 0
      %p258 = por %p256, %p257
      %p259 = scmp.ne.s32.totalorder %s251, %s253
      %p260 = scmp.eq.s32.totalorder %s31, 3
      %p261 = por %p259, %p260
      %p262 = scmp.ne.s32.totalorder %s253, %s254
      %p263 = scmp.eq.s32.totalorder %s31, 0
      %p264 = por %p262, %p263
      %p265 = scmp.ne.s32.totalorder %s253, %s254
      %p266 = scmp.eq.s32.totalorder %s32, 3
      %p267 = por %p265, %p266
      %p269 = scmp.ne.s32.totalorder %s254, %s268
      %p270 = scmp.eq.s32.totalorder %s32, 0
      %p271 = por %p269, %p270
      %s272 = ssub.s32 %s33, %s45
      %s273 = ssub.s32 %s34, %s41
      %s274 = sor.u32 %s272, %s273
      %p275 = scmp.eq.s32.totalorder %s274, 0
      %s277 = sadd.s32 %s276, 1
      %s278 = scalar_select %p275, %s276, %s277
      %p281 = pneg %p275
      %p282 = scmp.eq.s32.totalorder %s26, 3
      %p283 = por %p281, %p282
      %p284 = scmp.ne.s32.totalorder %s276, %s279
      %p285 = scmp.eq.s32.totalorder %s26, 0
      %p286 = por %p284, %p285
      %p287 = scmp.ne.s32.totalorder %s276, %s279
      %p288 = scmp.eq.s32.totalorder %s31, 3
      %p289 = por %p287, %p288
      %p290 = scmp.ne.s32.totalorder %s279, %s280
      %p291 = scmp.eq.s32.totalorder %s31, 0
      %p292 = por %p290, %p291
      %p293 = scmp.ne.s32.totalorder %s279, %s280
      %p294 = scmp.eq.s32.totalorder %s32, 3
      %p295 = por %p293, %p294
      %p297 = scmp.ne.s32.totalorder %s280, %s296
      %p298 = scmp.eq.s32.totalorder %s32, 0
      %p299 = por %p297, %p298
      %p300 = scmp.le.s32.totalorder 1, %s26
      %p301 = scmp.lt.s32.totalorder %s26, 5
      %p302 = pnand %p300, %p301
      %p303 = pneg %p302
      // Predicated region
      $region9: #{tpu_custom_call.1} parent=5 // pred_check
        _
      $region10: #{tpu_custom_call.1} parent=5 // pred_check_branch
        %305 = sbr.rel (%p302) target = $region12
      $region11: #{tpu_custom_call.1} parent=5 // pred_region
        %s306 = ssub.s32 %s26, 1
        // Predicated region
        $region13: #{tpu_custom_call.1} parent=11 // pred_check
          %p307 = pneg %p159
        $region14: #{tpu_custom_call.1} parent=11 // pred_check_branch
          %309 = sbr.rel (%p307) target = $region16
        $region15: #{tpu_custom_call.1} parent=11 // pred_region
          %311 = vsyncadd [#allocation11], 0
          %s312 = sshll.u32 %s3, 4
          %s313 = int_to_ptr.hbm [resolvable:$true] %s312
          %s314 = sshll.u32 [#allocation10], 4
          %s315 = int_to_ptr.vmem [resolvable:$true] %s314
          %320 = dma.hbm_to_vmem [thread:$0]  %s313, 3072, %s315, [#allocation11], 64, 64, 4
        $region16: #{tpu_custom_call.1} parent=11 // pred_fallthru
          _
        // Predicated region
        $region17: #{tpu_custom_call.1} parent=11 // pred_check
          %p321 = pneg %p180
        $region18: #{tpu_custom_call.1} parent=11 // pred_check_branch
          %323 = sbr.rel (%p321) target = $region20
        $region19: #{tpu_custom_call.1} parent=11 // pred_region
          _
        $region20: #{tpu_custom_call.1} parent=11 // pred_fallthru
          _
        // Predicated region
        $region21: #{tpu_custom_call.1} parent=11 // pred_check
          %p324 = pneg %p201
        $region22: #{tpu_custom_call.1} parent=11 // pred_check_branch
          %326 = sbr.rel (%p324) target = $region24
        $region23: #{tpu_custom_call.1} parent=11 // pred_region
          %328 = vsyncadd [#allocation11], 0
          %s329 = sshll.u32 %s5, 4
          %s330 = int_to_ptr.hbm [resolvable:$true] %s329
          %s331 = sshll.u32 [#allocation12], 4
          %s332 = int_to_ptr.vmem [resolvable:$true] %s331
          %337 = dma.hbm_to_vmem [thread:$0]  %s330, 9216, %s332, [#allocation11], 64, 64, 4
        $region24: #{tpu_custom_call.1} parent=11 // pred_fallthru
          _
        // Predicated region
        $region25: #{tpu_custom_call.1} parent=11 // pred_check
          %p338 = pneg %p222
        $region26: #{tpu_custom_call.1} parent=11 // pred_check_branch
          %340 = sbr.rel (%p338) target = $region28
        $region27: #{tpu_custom_call.1} parent=11 // pred_region
          _
        $region28: #{tpu_custom_call.1} parent=11 // pred_fallthru
          _
        // Predicated region
        $region29: #{tpu_custom_call.1} parent=11 // pred_check
          %p341 = pneg %p243
        $region30: #{tpu_custom_call.1} parent=11 // pred_check_branch
          %343 = sbr.rel (%p341) target = $region32
        $region31: #{tpu_custom_call.1} parent=11 // pred_region
          %345 = vsyncadd [#allocation14], 0
          %s346 = sshll.u32 %s7, 4
          %s347 = int_to_ptr.hbm [resolvable:$true] %s346
          %s348 = sshll.u32 [#allocation13], 4
          %s349 = int_to_ptr.vmem [resolvable:$true] %s348
          %354 = dma.hbm_to_vmem [thread:$0]  %s347, 1024, %s349, [#allocation14], 64, 64, 4
        $region32: #{tpu_custom_call.1} parent=11 // pred_fallthru
          _
        // Predicated region
        $region33: #{tpu_custom_call.1} parent=11 // pred_check
          %p355 = pneg %p264
        $region34: #{tpu_custom_call.1} parent=11 // pred_check_branch
          %357 = sbr.rel (%p355) target = $region36
        $region35: #{tpu_custom_call.1} parent=11 // pred_region
          _
        $region36: #{tpu_custom_call.1} parent=11 // pred_fallthru
          _
      $region12: #{tpu_custom_call.1} parent=5 // pred_fallthru
        _
      %p358 = scmp.lt.s32.totalorder %s26, 4
      // Predicated region
      $region37: #{tpu_custom_call.1} parent=5 // pred_check
        %p359 = pneg %p358
      $region38: #{tpu_custom_call.1} parent=5 // pred_check_branch
        %361 = sbr.rel (%p359) target = $region40
      $region39: #{tpu_custom_call.1} parent=5 // pred_region
        // Predicated region
        $region41: #{tpu_custom_call.1} parent=39 // pred_check
          %p362 = pneg %p60
        $region42: #{tpu_custom_call.1} parent=39 // pred_check_branch
          %364 = sbr.rel (%p362) target = $region44
        $region43: #{tpu_custom_call.1} parent=39 // pred_region
          %s365 = sand.u32 %s50, 1
          %s366 = scalar_lea.sflag [#allocation5], %s365
          %s367 = sand.u32 %s50, 1
          %s368 = smul.addr %s367, 128
          %s369 = scalar_lea.vmem [#allocation4], %s368
          %s370 = smul.u32 32, %s34
          %372 = vsyncadd %s366, 0
          %s373 = smul.addr %s33, 64
          %s374 = sadd.s32 %s370, %s373
          %s375 = smul.addr %s374, 4
          %s376 = scalar_lea.hbm %s0, %s375
          %s377 = sshll.u32 %s376, 4
          %s378 = int_to_ptr.hbm [resolvable:$true] %s377
          %s379 = sshll.u32 %s369, 4
          %s380 = int_to_ptr.vmem [resolvable:$true] %s379
          %385 = dma.hbm_to_vmem [thread:$0]  %s378, 2048, %s380, %s366, 64, 64, 4
        $region44: #{tpu_custom_call.1} parent=39 // pred_fallthru
          _
        // Predicated region
        $region45: #{tpu_custom_call.1} parent=39 // pred_check
          %p386 = pneg %p96
        $region46: #{tpu_custom_call.1} parent=39 // pred_check_branch
          %388 = sbr.rel (%p386) target = $region48
        $region47: #{tpu_custom_call.1} parent=39 // pred_region
          %s389 = sand.u32 %s26, 1
          %s390 = scalar_lea.sflag [#allocation8], %s389
          %s391 = sand.u32 %s86, 1
          %s392 = smul.addr %s391, 32
          %s393 = scalar_lea.vmem [#allocation7], %s392
          %s394 = smul.u32 %s34, 4
          %s395 = ssub.s32 %s394, 1
          %p396 = scmp.gt.s32.totalorder %s395, 0
          %s397 = scalar_select %p396, %s395, 0
          %s398 = smul.u32 8, %s397
          %400 = vsyncadd %s390, 0
          %s401 = smul.addr %s33, 64
          %s402 = sadd.s32 %s398, %s401
          %s403 = smul.addr %s402, 4
          %s404 = scalar_lea.hbm %s1, %s403
          %s405 = sshll.u32 %s404, 4
          %s406 = int_to_ptr.hbm [resolvable:$true] %s405
          %s407 = sshll.u32 %s393, 4
          %s408 = int_to_ptr.vmem [resolvable:$true] %s407
          %413 = dma.hbm_to_vmem [thread:$0]  %s406, 512, %s408, %s390, 64, 64, 4
        $region48: #{tpu_custom_call.1} parent=39 // pred_fallthru
          _
        // Predicated region
        $region49: #{tpu_custom_call.1} parent=39 // pred_check
          %p414 = pneg %p132
        $region50: #{tpu_custom_call.1} parent=39 // pred_check_branch
          %416 = sbr.rel (%p414) target = $region52
        $region51: #{tpu_custom_call.1} parent=39 // pred_region
          %s417 = sand.u32 %s26, 1
          %s418 = scalar_lea.sflag [#allocation8], %s417
          %s419 = sand.u32 %s122, 1
          %s420 = smul.addr %s419, 32
          %s421 = scalar_lea.vmem [#allocation9], %s420
          %s422 = sadd.s32 %s34, 1
          %s423 = smul.u32 %s422, 4
          %p424 = scmp.lt.s32.totalorder %s423, 7
          %s425 = scalar_select %p424, %s423, 7
          %s426 = smul.u32 8, %s425
          %428 = vsyncadd %s418, 0
          %s429 = smul.addr %s33, 64
          %s430 = sadd.s32 %s426, %s429
          %s431 = smul.addr %s430, 4
          %s432 = scalar_lea.hbm %s2, %s431
          %s433 = sshll.u32 %s432, 4
          %s434 = int_to_ptr.hbm [resolvable:$true] %s433
          %s435 = sshll.u32 %s421, 4
          %s436 = int_to_ptr.vmem [resolvable:$true] %s435
          %441 = dma.hbm_to_vmem [thread:$0]  %s434, 512, %s436, %s418, 64, 64, 4
        $region52: #{tpu_custom_call.1} parent=39 // pred_fallthru
          _
      $region40: #{tpu_custom_call.1} parent=5 // pred_fallthru
        _
      %p442 = scmp.le.s32.totalorder 1, %s26
      %p443 = scmp.lt.s32.totalorder %s26, 5
      %p444 = pnand %p442, %p443
      %p445 = pneg %p444
      // Predicated region
      $region53: #{tpu_custom_call.1} parent=5 // pred_check
        _
      $region54: #{tpu_custom_call.1} parent=5 // pred_check_branch
        %447 = sbr.rel (%p444) target = $region56
      $region55: #{tpu_custom_call.1} parent=5 // pred_region
        %s448 = ssub.s32 %s26, 1
        %s449 = sand.u32 %s53, 1
        %s450 = scalar_lea.sflag [#allocation5], %s449
        %s451 = sand.u32 %s53, 1
        %s452 = smul.addr %s451, 128
        %s453 = scalar_lea.vmem [#allocation4], %s452
        // Predicated region
        $region57: #{tpu_custom_call.1} parent=55 // pred_check
          %p454 = pneg %p66
        $region58: #{tpu_custom_call.1} parent=55 // pred_check_branch
          %456 = sbr.rel (%p454) target = $region60
        $region59: #{tpu_custom_call.1} parent=55 // pred_region
          %458 = dma.done %s450, 2048
        $region60: #{tpu_custom_call.1} parent=55 // pred_fallthru
          _
        %s459 = sand.u32 %s31, 1
        %s460 = scalar_lea.sflag [#allocation8], %s459
        %s461 = sand.u32 %s89, 1
        %s462 = smul.addr %s461, 32
        %s463 = scalar_lea.vmem [#allocation7], %s462
        // Predicated region
        $region61: #{tpu_custom_call.1} parent=55 // pred_check
          %p464 = pneg %p102
        $region62: #{tpu_custom_call.1} parent=55 // pred_check_branch
          %466 = sbr.rel (%p464) target = $region64
        $region63: #{tpu_custom_call.1} parent=55 // pred_region
          %468 = dma.done %s460, 512
        $region64: #{tpu_custom_call.1} parent=55 // pred_fallthru
          _
        %s469 = sand.u32 %s31, 1
        %s470 = scalar_lea.sflag [#allocation8], %s469
        %s471 = sand.u32 %s125, 1
        %s472 = smul.addr %s471, 32
        %s473 = scalar_lea.vmem [#allocation9], %s472
        // Predicated region
        $region65: #{tpu_custom_call.1} parent=55 // pred_check
          %p474 = pneg %p138
        $region66: #{tpu_custom_call.1} parent=55 // pred_check_branch
          %476 = sbr.rel (%p474) target = $region68
        $region67: #{tpu_custom_call.1} parent=55 // pred_region
          %478 = dma.done %s470, 512
        $region68: #{tpu_custom_call.1} parent=55 // pred_fallthru
          _
        // Predicated region
        $region69: #{tpu_custom_call.1} parent=55 // pred_check
          %p479 = pneg %p159
        $region70: #{tpu_custom_call.1} parent=55 // pred_check_branch
          %481 = sbr.rel (%p479) target = $region72
        $region71: #{tpu_custom_call.1} parent=55 // pred_region
          %483 = dma.done [#allocation11], 3072
        $region72: #{tpu_custom_call.1} parent=55 // pred_fallthru
          _
        // Predicated region
        $region73: #{tpu_custom_call.1} parent=55 // pred_check
          %p484 = pneg %p201
        $region74: #{tpu_custom_call.1} parent=55 // pred_check_branch
          %486 = sbr.rel (%p484) target = $region76
        $region75: #{tpu_custom_call.1} parent=55 // pred_region
          %488 = dma.done [#allocation11], 9216
        $region76: #{tpu_custom_call.1} parent=55 // pred_fallthru
          _
        // Predicated region
        $region77: #{tpu_custom_call.1} parent=55 // pred_check
          %p489 = pneg %p243
        $region78: #{tpu_custom_call.1} parent=55 // pred_check_branch
          %491 = sbr.rel (%p489) target = $region80
        $region79: #{tpu_custom_call.1} parent=55 // pred_region
          %493 = dma.done [#allocation14], 1024
        $region80: #{tpu_custom_call.1} parent=55 // pred_fallthru
          _
        %s494 = sand.u32 %s53, 1
        %s495 = scalar_lea.sflag [#allocation5], %s494
        %s496 = sand.u32 %s53, 1
        %s497 = smul.addr %s496, 128
        %s498 = scalar_lea.vmem [#allocation4], %s497
        %p499 = pneg %p66
        %p500 = pneg %p63
        %s501 = sand.u32 %s31, 1
        %s502 = scalar_lea.sflag [#allocation8], %s501
        %s503 = sand.u32 %s89, 1
        %s504 = smul.addr %s503, 32
        %s505 = scalar_lea.vmem [#allocation7], %s504
        %p506 = pneg %p102
        %p507 = pneg %p99
        %s508 = sand.u32 %s31, 1
        %s509 = scalar_lea.sflag [#allocation8], %s508
        %s510 = sand.u32 %s125, 1
        %s511 = smul.addr %s510, 32
        %s512 = scalar_lea.vmem [#allocation9], %s511
        %p513 = pneg %p138
        %p514 = pneg %p135
        %p515 = pneg %p159
        %p516 = pneg %p156
        %p517 = pneg %p180
        %p518 = pneg %p177
        %p519 = pneg %p201
        %p520 = pneg %p198
        %p521 = pneg %p222
        %p522 = pneg %p219
        %p523 = pneg %p243
        %p524 = pneg %p240
        %p525 = pneg %p264
        %p526 = pneg %p261
        %p527 = pneg %p292
        %p528 = pneg %p289
        %s529 = sand.u32 %s279, 1
        %s530 = scalar_lea.sflag [#allocation6], %s529
        %s531 = sand.u32 %s279, 1
        %s532 = smul.addr %s531, 256
        %s533 = scalar_lea.vmem [#allocation15], %s532
        %s534 = smul.u32 32, %s36
        %s535 = smul.u32 %s36, 4
        %s536 = ssub.s32 %s535, 1
        %p537 = scmp.gt.s32.totalorder %s536, 0
        %s538 = scalar_select %p537, %s536, 0
        %s539 = smul.u32 8, %s538
        %s540 = sadd.s32 %s36, 1
        %s541 = smul.u32 %s540, 4
        %p542 = scmp.lt.s32.totalorder %s541, 7
        %s543 = scalar_select %p542, %s541, 7
        %s544 = smul.u32 8, %s543
        %s545 = smul.u32 32, %s36
        %v547 = vld [vmem:[%s453] sm:$0xf]
        %v548 = vld [vmem:[%s453 + $0x4] sm:$0xf]
        %v549 = vld [vmem:[%s453 + $0x8] sm:$0xf]
        %v550 = vld [vmem:[%s453 + $0xc] sm:$0xf]
        %v551 = vld [vmem:[%s453 + $0x10] sm:$0xf]
        %v552 = vld [vmem:[%s453 + $0x14] sm:$0xf]
        %v553 = vld [vmem:[%s453 + $0x18] sm:$0xf]
        %v554 = vld [vmem:[%s453 + $0x1c] sm:$0xf]
        %v555 = vld [vmem:[%s453 + $0x20] sm:$0xf]
        %v556 = vld [vmem:[%s453 + $0x24] sm:$0xf]
        %v557 = vld [vmem:[%s453 + $0x28] sm:$0xf]
        %v558 = vld [vmem:[%s453 + $0x2c] sm:$0xf]
        %v559 = vld [vmem:[%s453 + $0x30] sm:$0xf]
        %v560 = vld [vmem:[%s453 + $0x34] sm:$0xf]
        %v561 = vld [vmem:[%s453 + $0x38] sm:$0xf]
        %v562 = vld [vmem:[%s453 + $0x3c] sm:$0xf]
        %v563 = vld [vmem:[%s453 + $0x40] sm:$0xf]
        %v564 = vld [vmem:[%s453 + $0x44] sm:$0xf]
        %v565 = vld [vmem:[%s453 + $0x48] sm:$0xf]
        %v566 = vld [vmem:[%s453 + $0x4c] sm:$0xf]
        %v567 = vld [vmem:[%s453 + $0x50] sm:$0xf]
        %v568 = vld [vmem:[%s453 + $0x54] sm:$0xf]
        %v569 = vld [vmem:[%s453 + $0x58] sm:$0xf]
        %v570 = vld [vmem:[%s453 + $0x5c] sm:$0xf]
        %v571 = vld [vmem:[%s453 + $0x60] sm:$0xf]
        %v572 = vld [vmem:[%s453 + $0x64] sm:$0xf]
        %v573 = vld [vmem:[%s453 + $0x68] sm:$0xf]
        %v574 = vld [vmem:[%s453 + $0x6c] sm:$0xf]
        %v575 = vld [vmem:[%s453 + $0x70] sm:$0xf]
        %v576 = vld [vmem:[%s453 + $0x74] sm:$0xf]
        %v577 = vld [vmem:[%s453 + $0x78] sm:$0xf]
        %v578 = vld [vmem:[%s453 + $0x7c] sm:$0xf]
        %s579 = scalar_lea.vmem [#allocation10], 64
        %v580 = vld [vmem:[%s579] sm:$0xf]
        %v581 = vld [vmem:[%s579 + $0x4] sm:$0xf]
        %v582 = vld [vmem:[%s579 + $0x8] sm:$0xf]
        %v583 = vld [vmem:[%s579 + $0xc] sm:$0xf]
        %v584 = vld [vmem:[%s579 + $0x10] sm:$0xf]
        %v585 = vld [vmem:[%s579 + $0x14] sm:$0xf]
        %v586 = vld [vmem:[%s579 + $0x18] sm:$0xf]
        %v587 = vld [vmem:[%s579 + $0x1c] sm:$0xf]
        %v588 = vld [vmem:[%s579 + $0x20] sm:$0xf]
        %v589 = vld [vmem:[%s579 + $0x24] sm:$0xf]
        %v590 = vld [vmem:[%s579 + $0x28] sm:$0xf]
        %v591 = vld [vmem:[%s579 + $0x2c] sm:$0xf]
        %v592 = vld [vmem:[%s579 + $0x30] sm:$0xf]
        %v593 = vld [vmem:[%s579 + $0x34] sm:$0xf]
        %v594 = vld [vmem:[%s579 + $0x38] sm:$0xf]
        %v595 = vld [vmem:[%s579 + $0x3c] sm:$0xf]
        %v628 = vunpack.c.l.b16 %v547
        %v629 = vunpack.c.l.b16 %v548
        %v630 = vunpack.c.l.b16 %v549
        %v631 = vunpack.c.l.b16 %v550
        %v632 = vunpack.c.l.b16 %v551
        %v633 = vunpack.c.l.b16 %v552
        %v634 = vunpack.c.l.b16 %v553
        %v635 = vunpack.c.l.b16 %v554
        %v636 = vunpack.c.l.b16 %v555
        %v637 = vunpack.c.l.b16 %v556
        %v638 = vunpack.c.l.b16 %v557
        %v639 = vunpack.c.l.b16 %v558
        %v640 = vunpack.c.l.b16 %v559
        %v641 = vunpack.c.l.b16 %v560
        %v642 = vunpack.c.l.b16 %v561
        %v643 = vunpack.c.l.b16 %v562
        %v644 = vunpack.c.l.b16 %v563
        %v645 = vunpack.c.l.b16 %v564
        %v646 = vunpack.c.l.b16 %v565
        %v647 = vunpack.c.l.b16 %v566
        %v648 = vunpack.c.l.b16 %v567
        %v649 = vunpack.c.l.b16 %v568
        %v650 = vunpack.c.l.b16 %v569
        %v651 = vunpack.c.l.b16 %v570
        %v652 = vunpack.c.l.b16 %v571
        %v653 = vunpack.c.l.b16 %v572
        %v654 = vunpack.c.l.b16 %v573
        %v655 = vunpack.c.l.b16 %v574
        %v656 = vunpack.c.l.b16 %v575
        %v657 = vunpack.c.l.b16 %v576
        %v658 = vunpack.c.l.b16 %v577
        %v659 = vunpack.c.l.b16 %v578
        %v660 = vpack.c.b16 %v629, %v628
        %v661 = vpack.c.b16 %v631, %v630
        %v662 = vpack.c.b16 %v633, %v632
        %v663 = vpack.c.b16 %v635, %v634
        %v664 = vpack.c.b16 %v637, %v636
        %v665 = vpack.c.b16 %v639, %v638
        %v666 = vpack.c.b16 %v641, %v640
        %v667 = vpack.c.b16 %v643, %v642
        %v668 = vpack.c.b16 %v645, %v644
        %v669 = vpack.c.b16 %v647, %v646
        %v670 = vpack.c.b16 %v649, %v648
        %v671 = vpack.c.b16 %v651, %v650
        %v672 = vpack.c.b16 %v653, %v652
        %v673 = vpack.c.b16 %v655, %v654
        %v674 = vpack.c.b16 %v657, %v656
        %v675 = vpack.c.b16 %v659, %v658
        %v708 = vunpack.c.l.b16 %v580
        %v709 = vunpack.c.l.b16 %v581
        %v710 = vunpack.c.l.b16 %v582
        %v711 = vunpack.c.l.b16 %v583
        %v712 = vunpack.c.l.b16 %v584
        %v713 = vunpack.c.l.b16 %v585
        %v714 = vunpack.c.l.b16 %v586
        %v715 = vunpack.c.l.b16 %v587
        %v716 = vunpack.c.l.b16 %v588
        %v717 = vunpack.c.l.b16 %v589
        %v718 = vunpack.c.l.b16 %v590
        %v719 = vunpack.c.l.b16 %v591
        %v720 = vunpack.c.l.b16 %v592
        %v721 = vunpack.c.l.b16 %v593
        %v722 = vunpack.c.l.b16 %v594
        %v723 = vunpack.c.l.b16 %v595
        %v724 = vpack.c.b16 %v709, %v708
        %v725 = vpack.c.b16 %v711, %v710
        %v726 = vpack.c.b16 %v713, %v712
        %v727 = vpack.c.b16 %v715, %v714
        %v728 = vpack.c.b16 %v717, %v716
        %v729 = vpack.c.b16 %v719, %v718
        %v730 = vpack.c.b16 %v721, %v720
        %v731 = vpack.c.b16 %v723, %v722
        %740 = vmatpush.bf16.msra.mxu0 %v731
        %741 = vmatpush.bf16.msra.mxu0 %v730
        %742 = vmatpush.bf16.msra.mxu0 %v729
        %743 = vmatpush.bf16.msra.mxu0 %v728
        %744 = vmatpush.bf16.msra.mxu0 %v727
        %745 = vmatpush.bf16.msra.mxu0 %v726
        %746 = vmatpush.bf16.msra.mxu0 %v725
        %747 = vmatpush.bf16.msra.mxu0 %v724
        %748 = vmatmul.bf16.gmra.mxu0 %v660
        %v749 = vpop.f32.mrf.mxu0
        %v750 = vadd.f32 0.0, %v749
        %v751 = vpop.f32.mrf.mxu0
        %v752 = vadd.f32 0.0, %v751
        %753 = vmatmul.bf16.gmra.mxu0 %v661
        %v754 = vpop.f32.mrf.mxu0
        %v755 = vadd.f32 0.0, %v754
        %v756 = vpop.f32.mrf.mxu0
        %v757 = vadd.f32 0.0, %v756
        %758 = vmatmul.bf16.gmra.mxu0 %v662
        %v759 = vpop.f32.mrf.mxu0
        %v760 = vadd.f32 0.0, %v759
        %v761 = vpop.f32.mrf.mxu0
        %v762 = vadd.f32 0.0, %v761
        %763 = vmatmul.bf16.gmra.mxu0 %v663
        %v764 = vpop.f32.mrf.mxu0
        %v765 = vadd.f32 0.0, %v764
        %v766 = vpop.f32.mrf.mxu0
        %v767 = vadd.f32 0.0, %v766
        %768 = vmatmul.bf16.gmra.mxu0 %v664
        %v769 = vpop.f32.mrf.mxu0
        %v770 = vadd.f32 0.0, %v769
        %v771 = vpop.f32.mrf.mxu0
        %v772 = vadd.f32 0.0, %v771
        %773 = vmatmul.bf16.gmra.mxu0 %v665
        %v774 = vpop.f32.mrf.mxu0
        %v775 = vadd.f32 0.0, %v774
        %v776 = vpop.f32.mrf.mxu0
        %v777 = vadd.f32 0.0, %v776
        %778 = vmatmul.bf16.gmra.mxu0 %v666
        %v779 = vpop.f32.mrf.mxu0
        %v780 = vadd.f32 0.0, %v779
        %v781 = vpop.f32.mrf.mxu0
        %v782 = vadd.f32 0.0, %v781
        %783 = vmatmul.bf16.gmra.mxu0 %v667
        %v784 = vpop.f32.mrf.mxu0
        %v785 = vadd.f32 0.0, %v784
        %v786 = vpop.f32.mrf.mxu0
        %v787 = vadd.f32 0.0, %v786
        %788 = vmatmul.bf16.gmra.mxu0 %v668
        %v789 = vpop.f32.mrf.mxu0
        %v790 = vadd.f32 0.0, %v789
        %v791 = vpop.f32.mrf.mxu0
        %v792 = vadd.f32 0.0, %v791
        %793 = vmatmul.bf16.gmra.mxu0 %v669
        %v794 = vpop.f32.mrf.mxu0
        %v795 = vadd.f32 0.0, %v794
        %v796 = vpop.f32.mrf.mxu0
        %v797 = vadd.f32 0.0, %v796
        %798 = vmatmul.bf16.gmra.mxu0 %v670
        %v799 = vpop.f32.mrf.mxu0
        %v800 = vadd.f32 0.0, %v799
        %v801 = vpop.f32.mrf.mxu0
        %v802 = vadd.f32 0.0, %v801
        %803 = vmatmul.bf16.gmra.mxu0 %v671
        %v804 = vpop.f32.mrf.mxu0
        %v805 = vadd.f32 0.0, %v804
        %v806 = vpop.f32.mrf.mxu0
        %v807 = vadd.f32 0.0, %v806
        %808 = vmatmul.bf16.gmra.mxu0 %v672
        %v809 = vpop.f32.mrf.mxu0
        %v810 = vadd.f32 0.0, %v809
        %v811 = vpop.f32.mrf.mxu0
        %v812 = vadd.f32 0.0, %v811
        %813 = vmatmul.bf16.gmra.mxu0 %v673
        %v814 = vpop.f32.mrf.mxu0
        %v815 = vadd.f32 0.0, %v814
        %v816 = vpop.f32.mrf.mxu0
        %v817 = vadd.f32 0.0, %v816
        %818 = vmatmul.bf16.gmra.mxu0 %v674
        %v819 = vpop.f32.mrf.mxu0
        %v820 = vadd.f32 0.0, %v819
        %v821 = vpop.f32.mrf.mxu0
        %v822 = vadd.f32 0.0, %v821
        %823 = vmatmul.bf16.gmra.mxu0 %v675
        %v824 = vpop.f32.mrf.mxu0
        %v825 = vadd.f32 0.0, %v824
        %v826 = vpop.f32.mrf.mxu0
        %v827 = vadd.f32 0.0, %v826
        %828 = vdwg.mxu0
        %829 = vst [vmem:[#allocation2] sm:$0xff] %v750
        %830 = vst [vmem:[#allocation2 + $0x8] sm:$0xff] %v752
        %831 = vst [vmem:[#allocation2 + $0x10] sm:$0xff] %v755
        %832 = vst [vmem:[#allocation2 + $0x18] sm:$0xff] %v757
        %833 = vst [vmem:[#allocation2 + $0x20] sm:$0xff] %v760
        %834 = vst [vmem:[#allocation2 + $0x28] sm:$0xff] %v762
        %835 = vst [vmem:[#allocation2 + $0x30] sm:$0xff] %v765
        %836 = vst [vmem:[#allocation2 + $0x38] sm:$0xff] %v767
        %837 = vst [vmem:[#allocation2 + $0x40] sm:$0xff] %v770
        %838 = vst [vmem:[#allocation2 + $0x48] sm:$0xff] %v772
        %839 = vst [vmem:[#allocation2 + $0x50] sm:$0xff] %v775
        %840 = vst [vmem:[#allocation2 + $0x58] sm:$0xff] %v777
        %841 = vst [vmem:[#allocation2 + $0x60] sm:$0xff] %v780
        %842 = vst [vmem:[#allocation2 + $0x68] sm:$0xff] %v782
        %843 = vst [vmem:[#allocation2 + $0x70] sm:$0xff] %v785
        %844 = vst [vmem:[#allocation2 + $0x78] sm:$0xff] %v787
        %845 = vst [vmem:[#allocation2 + $0x80] sm:$0xff] %v790
        %846 = vst [vmem:[#allocation2 + $0x88] sm:$0xff] %v792
        %847 = vst [vmem:[#allocation2 + $0x90] sm:$0xff] %v795
        %848 = vst [vmem:[#allocation2 + $0x98] sm:$0xff] %v797
        %849 = vst [vmem:[#allocation2 + $0xa0] sm:$0xff] %v800
        %850 = vst [vmem:[#allocation2 + $0xa8] sm:$0xff] %v802
        %851 = vst [vmem:[#allocation2 + $0xb0] sm:$0xff] %v805
        %852 = vst [vmem:[#allocation2 + $0xb8] sm:$0xff] %v807
        %853 = vst [vmem:[#allocation2 + $0xc0] sm:$0xff] %v810
        %854 = vst [vmem:[#allocation2 + $0xc8] sm:$0xff] %v812
        %855 = vst [vmem:[#allocation2 + $0xd0] sm:$0xff] %v815
        %856 = vst [vmem:[#allocation2 + $0xd8] sm:$0xff] %v817
        %857 = vst [vmem:[#allocation2 + $0xe0] sm:$0xff] %v820
        %858 = vst [vmem:[#allocation2 + $0xe8] sm:$0xff] %v822
        %859 = vst [vmem:[#allocation2 + $0xf0] sm:$0xff] %v825
        %860 = vst [vmem:[#allocation2 + $0xf8] sm:$0xff] %v827
        %v861 = vld [vmem:[#allocation2 + $0x40] sm:$0xff]
        %v862 = vld [vmem:[#allocation2 + $0x48] sm:$0xff]
        %v863 = vld [vmem:[#allocation2 + $0x50] sm:$0xff]
        %v864 = vld [vmem:[#allocation2 + $0x58] sm:$0xff]
        %v865 = vld [vmem:[#allocation2 + $0x60] sm:$0xff]
        %v866 = vld [vmem:[#allocation2 + $0x68] sm:$0xff]
        %v867 = vld [vmem:[#allocation2 + $0x70] sm:$0xff]
        %v868 = vld [vmem:[#allocation2 + $0x78] sm:$0xff]
        %v869 = vld [vmem:[#allocation2 + $0x80] sm:$0xff]
        %v870 = vld [vmem:[#allocation2 + $0x88] sm:$0xff]
        %v871 = vld [vmem:[#allocation2 + $0x90] sm:$0xff]
        %v872 = vld [vmem:[#allocation2 + $0x98] sm:$0xff]
        %v873 = vld [vmem:[#allocation2 + $0xa0] sm:$0xff]
        %v874 = vld [vmem:[#allocation2 + $0xa8] sm:$0xff]
        %v875 = vld [vmem:[#allocation2 + $0xb0] sm:$0xff]
        %v876 = vld [vmem:[#allocation2 + $0xb8] sm:$0xff]
        %v877 = vld [vmem:[#allocation2 + $0xc0] sm:$0xff]
        %v878 = vld [vmem:[#allocation2 + $0xc8] sm:$0xff]
        %v879 = vld [vmem:[#allocation2 + $0xd0] sm:$0xff]
        %v880 = vld [vmem:[#allocation2 + $0xd8] sm:$0xff]
        %v881 = vld [vmem:[#allocation2 + $0xe0] sm:$0xff]
        %v882 = vld [vmem:[#allocation2 + $0xe8] sm:$0xff]
        %v883 = vld [vmem:[#allocation2 + $0xf0] sm:$0xff]
        %v884 = vld [vmem:[#allocation2 + $0xf8] sm:$0xff]
        %v885 = vld [vmem:[%s453] sm:$0xf]
        %v886 = vld [vmem:[%s453 + $0x4] sm:$0xf]
        %v887 = vld [vmem:[%s453 + $0x8] sm:$0xf]
        %v888 = vld [vmem:[%s453 + $0xc] sm:$0xf]
        %v889 = vld [vmem:[%s453 + $0x10] sm:$0xf]
        %v890 = vld [vmem:[%s453 + $0x14] sm:$0xf]
        %v891 = vld [vmem:[%s453 + $0x18] sm:$0xf]
        %v892 = vld [vmem:[%s453 + $0x1c] sm:$0xf]
        %v893 = vld [vmem:[%s453 + $0x20] sm:$0xf]
        %v894 = vld [vmem:[%s453 + $0x24] sm:$0xf]
        %v895 = vld [vmem:[%s453 + $0x28] sm:$0xf]
        %v896 = vld [vmem:[%s453 + $0x2c] sm:$0xf]
        %v897 = vld [vmem:[%s453 + $0x30] sm:$0xf]
        %v898 = vld [vmem:[%s453 + $0x34] sm:$0xf]
        %v899 = vld [vmem:[%s453 + $0x38] sm:$0xf]
        %v900 = vld [vmem:[%s453 + $0x3c] sm:$0xf]
        %v901 = vld [vmem:[%s453 + $0x40] sm:$0xf]
        %v902 = vld [vmem:[%s453 + $0x44] sm:$0xf]
        %v903 = vld [vmem:[%s453 + $0x48] sm:$0xf]
        %v904 = vld [vmem:[%s453 + $0x4c] sm:$0xf]
        %v905 = vld [vmem:[%s453 + $0x50] sm:$0xf]
        %v906 = vld [vmem:[%s453 + $0x54] sm:$0xf]
        %v907 = vld [vmem:[%s453 + $0x58] sm:$0xf]
        %v908 = vld [vmem:[%s453 + $0x5c] sm:$0xf]
        %v909 = vld [vmem:[#allocation10] sm:$0xf]
        %v910 = vld [vmem:[#allocation10 + $0x4] sm:$0xf]
        %v911 = vld [vmem:[#allocation10 + $0x8] sm:$0xf]
        %v912 = vld [vmem:[#allocation10 + $0xc] sm:$0xf]
        %v913 = vld [vmem:[#allocation10 + $0x10] sm:$0xf]
        %v914 = vld [vmem:[#allocation10 + $0x14] sm:$0xf]
        %v915 = vld [vmem:[#allocation10 + $0x18] sm:$0xf]
        %v916 = vld [vmem:[#allocation10 + $0x1c] sm:$0xf]
        %v917 = vld [vmem:[#allocation10 + $0x20] sm:$0xf]
        %v918 = vld [vmem:[#allocation10 + $0x24] sm:$0xf]
        %v919 = vld [vmem:[#allocation10 + $0x28] sm:$0xf]
        %v920 = vld [vmem:[#allocation10 + $0x2c] sm:$0xf]
        %v921 = vld [vmem:[#allocation10 + $0x30] sm:$0xf]
        %v922 = vld [vmem:[#allocation10 + $0x34] sm:$0xf]
        %v923 = vld [vmem:[#allocation10 + $0x38] sm:$0xf]
        %v924 = vld [vmem:[#allocation10 + $0x3c] sm:$0xf]
        %v949 = vunpack.c.l.b16 %v885
        %v950 = vunpack.c.l.b16 %v886
        %v951 = vunpack.c.l.b16 %v887
        %v952 = vunpack.c.l.b16 %v888
        %v953 = vunpack.c.l.b16 %v889
        %v954 = vunpack.c.l.b16 %v890
        %v955 = vunpack.c.l.b16 %v891
        %v956 = vunpack.c.l.b16 %v892
        %v957 = vunpack.c.l.b16 %v893
        %v958 = vunpack.c.l.b16 %v894
        %v959 = vunpack.c.l.b16 %v895
        %v960 = vunpack.c.l.b16 %v896
        %v961 = vunpack.c.l.b16 %v897
        %v962 = vunpack.c.l.b16 %v898
        %v963 = vunpack.c.l.b16 %v899
        %v964 = vunpack.c.l.b16 %v900
        %v965 = vunpack.c.l.b16 %v901
        %v966 = vunpack.c.l.b16 %v902
        %v967 = vunpack.c.l.b16 %v903
        %v968 = vunpack.c.l.b16 %v904
        %v969 = vunpack.c.l.b16 %v905
        %v970 = vunpack.c.l.b16 %v906
        %v971 = vunpack.c.l.b16 %v907
        %v972 = vunpack.c.l.b16 %v908
        %v973 = vpack.c.b16 %v950, %v949
        %v974 = vpack.c.b16 %v952, %v951
        %v975 = vpack.c.b16 %v954, %v953
        %v976 = vpack.c.b16 %v956, %v955
        %v977 = vpack.c.b16 %v958, %v957
        %v978 = vpack.c.b16 %v960, %v959
        %v979 = vpack.c.b16 %v962, %v961
        %v980 = vpack.c.b16 %v964, %v963
        %v981 = vpack.c.b16 %v966, %v965
        %v982 = vpack.c.b16 %v968, %v967
        %v983 = vpack.c.b16 %v970, %v969
        %v984 = vpack.c.b16 %v972, %v971
        %v1013 = vunpack.c.l.b16 %v909
        %v1014 = vunpack.c.l.b16 %v910
        %v1015 = vunpack.c.l.b16 %v911
        %v1016 = vunpack.c.l.b16 %v912
        %v1017 = vunpack.c.l.b16 %v913
        %v1018 = vunpack.c.l.b16 %v914
        %v1019 = vunpack.c.l.b16 %v915
        %v1020 = vunpack.c.l.b16 %v916
        %v1021 = vunpack.c.l.b16 %v917
        %v1022 = vunpack.c.l.b16 %v918
        %v1023 = vunpack.c.l.b16 %v919
        %v1024 = vunpack.c.l.b16 %v920
        %v1025 = vunpack.c.l.b16 %v921
        %v1026 = vunpack.c.l.b16 %v922
        %v1027 = vunpack.c.l.b16 %v923
        %v1028 = vunpack.c.l.b16 %v924
        %v1029 = vpack.c.b16 %v1014, %v1013
        %v1030 = vpack.c.b16 %v1016, %v1015
        %v1031 = vpack.c.b16 %v1018, %v1017
        %v1032 = vpack.c.b16 %v1020, %v1019
        %v1033 = vpack.c.b16 %v1022, %v1021
        %v1034 = vpack.c.b16 %v1024, %v1023
        %v1035 = vpack.c.b16 %v1026, %v1025
        %v1036 = vpack.c.b16 %v1028, %v1027
        %1045 = vmatpush.bf16.msra.mxu0 %v1036
        %1046 = vmatpush.bf16.msra.mxu0 %v1035
        %1047 = vmatpush.bf16.msra.mxu0 %v1034
        %1048 = vmatpush.bf16.msra.mxu0 %v1033
        %1049 = vmatpush.bf16.msra.mxu0 %v1032
        %1050 = vmatpush.bf16.msra.mxu0 %v1031
        %1051 = vmatpush.bf16.msra.mxu0 %v1030
        %1052 = vmatpush.bf16.msra.mxu0 %v1029
        %1053 = vmatmul.bf16.gmra.mxu0 %v973
        %v1054 = vpop.f32.mrf.mxu0
        %v1055 = vadd.f32 0.0, %v1054
        %v1056 = vpop.f32.mrf.mxu0
        %v1057 = vadd.f32 0.0, %v1056
        %1058 = vmatmul.bf16.gmra.mxu0 %v974
        %v1059 = vpop.f32.mrf.mxu0
        %v1060 = vadd.f32 0.0, %v1059
        %v1061 = vpop.f32.mrf.mxu0
        %v1062 = vadd.f32 0.0, %v1061
        %1063 = vmatmul.bf16.gmra.mxu0 %v975
        %v1064 = vpop.f32.mrf.mxu0
        %v1065 = vadd.f32 0.0, %v1064
        %v1066 = vpop.f32.mrf.mxu0
        %v1067 = vadd.f32 0.0, %v1066
        %1068 = vmatmul.bf16.gmra.mxu0 %v976
        %v1069 = vpop.f32.mrf.mxu0
        %v1070 = vadd.f32 0.0, %v1069
        %v1071 = vpop.f32.mrf.mxu0
        %v1072 = vadd.f32 0.0, %v1071
        %1073 = vmatmul.bf16.gmra.mxu0 %v977
        %v1074 = vpop.f32.mrf.mxu0
        %v1075 = vadd.f32 0.0, %v1074
        %v1076 = vpop.f32.mrf.mxu0
        %v1077 = vadd.f32 0.0, %v1076
        %1078 = vmatmul.bf16.gmra.mxu0 %v978
        %v1079 = vpop.f32.mrf.mxu0
        %v1080 = vadd.f32 0.0, %v1079
        %v1081 = vpop.f32.mrf.mxu0
        %v1082 = vadd.f32 0.0, %v1081
        %1083 = vmatmul.bf16.gmra.mxu0 %v979
        %v1084 = vpop.f32.mrf.mxu0
        %v1085 = vadd.f32 0.0, %v1084
        %v1086 = vpop.f32.mrf.mxu0
        %v1087 = vadd.f32 0.0, %v1086
        %1088 = vmatmul.bf16.gmra.mxu0 %v980
        %v1089 = vpop.f32.mrf.mxu0
        %v1090 = vadd.f32 0.0, %v1089
        %v1091 = vpop.f32.mrf.mxu0
        %v1092 = vadd.f32 0.0, %v1091
        %1093 = vmatmul.bf16.gmra.mxu0 %v981
        %v1094 = vpop.f32.mrf.mxu0
        %v1095 = vadd.f32 0.0, %v1094
        %v1096 = vpop.f32.mrf.mxu0
        %v1097 = vadd.f32 0.0, %v1096
        %1098 = vmatmul.bf16.gmra.mxu0 %v982
        %v1099 = vpop.f32.mrf.mxu0
        %v1100 = vadd.f32 0.0, %v1099
        %v1101 = vpop.f32.mrf.mxu0
        %v1102 = vadd.f32 0.0, %v1101
        %1103 = vmatmul.bf16.gmra.mxu0 %v983
        %v1104 = vpop.f32.mrf.mxu0
        %v1105 = vadd.f32 0.0, %v1104
        %v1106 = vpop.f32.mrf.mxu0
        %v1107 = vadd.f32 0.0, %v1106
        %1108 = vmatmul.bf16.gmra.mxu0 %v984
        %v1109 = vpop.f32.mrf.mxu0
        %v1110 = vadd.f32 0.0, %v1109
        %v1111 = vpop.f32.mrf.mxu0
        %v1112 = vadd.f32 0.0, %v1111
        %1113 = vdwg.mxu0
        %v1114 = vadd.f32 %v861, %v1055
        %v1115 = vadd.f32 %v862, %v1057
        %v1116 = vadd.f32 %v863, %v1060
        %v1117 = vadd.f32 %v864, %v1062
        %v1118 = vadd.f32 %v865, %v1065
        %v1119 = vadd.f32 %v866, %v1067
        %v1120 = vadd.f32 %v867, %v1070
        %v1121 = vadd.f32 %v868, %v1072
        %v1122 = vadd.f32 %v869, %v1075
        %v1123 = vadd.f32 %v870, %v1077
        %v1124 = vadd.f32 %v871, %v1080
        %v1125 = vadd.f32 %v872, %v1082
        %v1126 = vadd.f32 %v873, %v1085
        %v1127 = vadd.f32 %v874, %v1087
        %v1128 = vadd.f32 %v875, %v1090
        %v1129 = vadd.f32 %v876, %v1092
        %v1130 = vadd.f32 %v877, %v1095
        %v1131 = vadd.f32 %v878, %v1097
        %v1132 = vadd.f32 %v879, %v1100
        %v1133 = vadd.f32 %v880, %v1102
        %v1134 = vadd.f32 %v881, %v1105
        %v1135 = vadd.f32 %v882, %v1107
        %v1136 = vadd.f32 %v883, %v1110
        %v1137 = vadd.f32 %v884, %v1112
        %1138 = vst [vmem:[#allocation2 + $0x40] sm:$0xff] %v1114
        %1139 = vst [vmem:[#allocation2 + $0x48] sm:$0xff] %v1115
        %1140 = vst [vmem:[#allocation2 + $0x50] sm:$0xff] %v1116
        %1141 = vst [vmem:[#allocation2 + $0x58] sm:$0xff] %v1117
        %1142 = vst [vmem:[#allocation2 + $0x60] sm:$0xff] %v1118
        %1143 = vst [vmem:[#allocation2 + $0x68] sm:$0xff] %v1119
        %1144 = vst [vmem:[#allocation2 + $0x70] sm:$0xff] %v1120
        %1145 = vst [vmem:[#allocation2 + $0x78] sm:$0xff] %v1121
        %1146 = vst [vmem:[#allocation2 + $0x80] sm:$0xff] %v1122
        %1147 = vst [vmem:[#allocation2 + $0x88] sm:$0xff] %v1123
        %1148 = vst [vmem:[#allocation2 + $0x90] sm:$0xff] %v1124
        %1149 = vst [vmem:[#allocation2 + $0x98] sm:$0xff] %v1125
        %1150 = vst [vmem:[#allocation2 + $0xa0] sm:$0xff] %v1126
        %1151 = vst [vmem:[#allocation2 + $0xa8] sm:$0xff] %v1127
        %1152 = vst [vmem:[#allocation2 + $0xb0] sm:$0xff] %v1128
        %1153 = vst [vmem:[#allocation2 + $0xb8] sm:$0xff] %v1129
        %1154 = vst [vmem:[#allocation2 + $0xc0] sm:$0xff] %v1130
        %1155 = vst [vmem:[#allocation2 + $0xc8] sm:$0xff] %v1131
        %1156 = vst [vmem:[#allocation2 + $0xd0] sm:$0xff] %v1132
        %1157 = vst [vmem:[#allocation2 + $0xd8] sm:$0xff] %v1133
        %1158 = vst [vmem:[#allocation2 + $0xe0] sm:$0xff] %v1134
        %1159 = vst [vmem:[#allocation2 + $0xe8] sm:$0xff] %v1135
        %1160 = vst [vmem:[#allocation2 + $0xf0] sm:$0xff] %v1136
        %1161 = vst [vmem:[#allocation2 + $0xf8] sm:$0xff] %v1137
        %v1162 = vld [vmem:[#allocation2] sm:$0xff]
        %v1163 = vld [vmem:[#allocation2 + $0x8] sm:$0xff]
        %v1164 = vld [vmem:[#allocation2 + $0x10] sm:$0xff]
        %v1165 = vld [vmem:[#allocation2 + $0x18] sm:$0xff]
        %v1166 = vld [vmem:[#allocation2 + $0x20] sm:$0xff]
        %v1167 = vld [vmem:[#allocation2 + $0x28] sm:$0xff]
        %v1168 = vld [vmem:[#allocation2 + $0x30] sm:$0xff]
        %v1169 = vld [vmem:[#allocation2 + $0x38] sm:$0xff]
        %v1170 = vld [vmem:[#allocation2 + $0x40] sm:$0xff]
        %v1171 = vld [vmem:[#allocation2 + $0x48] sm:$0xff]
        %v1172 = vld [vmem:[#allocation2 + $0x50] sm:$0xff]
        %v1173 = vld [vmem:[#allocation2 + $0x58] sm:$0xff]
        %v1174 = vld [vmem:[#allocation2 + $0x60] sm:$0xff]
        %v1175 = vld [vmem:[#allocation2 + $0x68] sm:$0xff]
        %v1176 = vld [vmem:[#allocation2 + $0x70] sm:$0xff]
        %v1177 = vld [vmem:[#allocation2 + $0x78] sm:$0xff]
        %v1178 = vld [vmem:[#allocation2 + $0x80] sm:$0xff]
        %v1179 = vld [vmem:[#allocation2 + $0x88] sm:$0xff]
        %v1180 = vld [vmem:[#allocation2 + $0x90] sm:$0xff]
        %v1181 = vld [vmem:[#allocation2 + $0x98] sm:$0xff]
        %v1182 = vld [vmem:[#allocation2 + $0xa0] sm:$0xff]
        %v1183 = vld [vmem:[#allocation2 + $0xa8] sm:$0xff]
        %v1184 = vld [vmem:[#allocation2 + $0xb0] sm:$0xff]
        %v1185 = vld [vmem:[#allocation2 + $0xb8] sm:$0xff]
        %v1186 = vld [vmem:[%s453 + $0x20] sm:$0xf]
        %v1187 = vld [vmem:[%s453 + $0x24] sm:$0xf]
        %v1188 = vld [vmem:[%s453 + $0x28] sm:$0xf]
        %v1189 = vld [vmem:[%s453 + $0x2c] sm:$0xf]
        %v1190 = vld [vmem:[%s453 + $0x30] sm:$0xf]
        %v1191 = vld [vmem:[%s453 + $0x34] sm:$0xf]
        %v1192 = vld [vmem:[%s453 + $0x38] sm:$0xf]
        %v1193 = vld [vmem:[%s453 + $0x3c] sm:$0xf]
        %v1194 = vld [vmem:[%s453 + $0x40] sm:$0xf]
        %v1195 = vld [vmem:[%s453 + $0x44] sm:$0xf]
        %v1196 = vld [vmem:[%s453 + $0x48] sm:$0xf]
        %v1197 = vld [vmem:[%s453 + $0x4c] sm:$0xf]
        %v1198 = vld [vmem:[%s453 + $0x50] sm:$0xf]
        %v1199 = vld [vmem:[%s453 + $0x54] sm:$0xf]
        %v1200 = vld [vmem:[%s453 + $0x58] sm:$0xf]
        %v1201 = vld [vmem:[%s453 + $0x5c] sm:$0xf]
        %v1202 = vld [vmem:[%s453 + $0x60] sm:$0xf]
        %v1203 = vld [vmem:[%s453 + $0x64] sm:$0xf]
        %v1204 = vld [vmem:[%s453 + $0x68] sm:$0xf]
        %v1205 = vld [vmem:[%s453 + $0x6c] sm:$0xf]
        %v1206 = vld [vmem:[%s453 + $0x70] sm:$0xf]
        %v1207 = vld [vmem:[%s453 + $0x74] sm:$0xf]
        %v1208 = vld [vmem:[%s453 + $0x78] sm:$0xf]
        %v1209 = vld [vmem:[%s453 + $0x7c] sm:$0xf]
        %s1210 = scalar_lea.vmem [#allocation10], 128
        %v1211 = vld [vmem:[%s1210] sm:$0xf]
        %v1212 = vld [vmem:[%s1210 + $0x4] sm:$0xf]
        %v1213 = vld [vmem:[%s1210 + $0x8] sm:$0xf]
        %v1214 = vld [vmem:[%s1210 + $0xc] sm:$0xf]
        %v1215 = vld [vmem:[%s1210 + $0x10] sm:$0xf]
        %v1216 = vld [vmem:[%s1210 + $0x14] sm:$0xf]
        %v1217 = vld [vmem:[%s1210 + $0x18] sm:$0xf]
        %v1218 = vld [vmem:[%s1210 + $0x1c] sm:$0xf]
        %v1219 = vld [vmem:[%s1210 + $0x20] sm:$0xf]
        %v1220 = vld [vmem:[%s1210 + $0x24] sm:$0xf]
        %v1221 = vld [vmem:[%s1210 + $0x28] sm:$0xf]
        %v1222 = vld [vmem:[%s1210 + $0x2c] sm:$0xf]
        %v1223 = vld [vmem:[%s1210 + $0x30] sm:$0xf]
        %v1224 = vld [vmem:[%s1210 + $0x34] sm:$0xf]
        %v1225 = vld [vmem:[%s1210 + $0x38] sm:$0xf]
        %v1226 = vld [vmem:[%s1210 + $0x3c] sm:$0xf]
        %v1251 = vunpack.c.l.b16 %v1186
        %v1252 = vunpack.c.l.b16 %v1187
        %v1253 = vunpack.c.l.b16 %v1188
        %v1254 = vunpack.c.l.b16 %v1189
        %v1255 = vunpack.c.l.b16 %v1190
        %v1256 = vunpack.c.l.b16 %v1191
        %v1257 = vunpack.c.l.b16 %v1192
        %v1258 = vunpack.c.l.b16 %v1193
        %v1259 = vunpack.c.l.b16 %v1194
        %v1260 = vunpack.c.l.b16 %v1195
        %v1261 = vunpack.c.l.b16 %v1196
        %v1262 = vunpack.c.l.b16 %v1197
        %v1263 = vunpack.c.l.b16 %v1198
        %v1264 = vunpack.c.l.b16 %v1199
        %v1265 = vunpack.c.l.b16 %v1200
        %v1266 = vunpack.c.l.b16 %v1201
        %v1267 = vunpack.c.l.b16 %v1202
        %v1268 = vunpack.c.l.b16 %v1203
        %v1269 = vunpack.c.l.b16 %v1204
        %v1270 = vunpack.c.l.b16 %v1205
        %v1271 = vunpack.c.l.b16 %v1206
        %v1272 = vunpack.c.l.b16 %v1207
        %v1273 = vunpack.c.l.b16 %v1208
        %v1274 = vunpack.c.l.b16 %v1209
        %v1275 = vpack.c.b16 %v1252, %v1251
        %v1276 = vpack.c.b16 %v1254, %v1253
        %v1277 = vpack.c.b16 %v1256, %v1255
        %v1278 = vpack.c.b16 %v1258, %v1257
        %v1279 = vpack.c.b16 %v1260, %v1259
        %v1280 = vpack.c.b16 %v1262, %v1261
        %v1281 = vpack.c.b16 %v1264, %v1263
        %v1282 = vpack.c.b16 %v1266, %v1265
        %v1283 = vpack.c.b16 %v1268, %v1267
        %v1284 = vpack.c.b16 %v1270, %v1269
        %v1285 = vpack.c.b16 %v1272, %v1271
        %v1286 = vpack.c.b16 %v1274, %v1273
        %v1315 = vunpack.c.l.b16 %v1211
        %v1316 = vunpack.c.l.b16 %v1212
        %v1317 = vunpack.c.l.b16 %v1213
        %v1318 = vunpack.c.l.b16 %v1214
        %v1319 = vunpack.c.l.b16 %v1215
        %v1320 = vunpack.c.l.b16 %v1216
        %v1321 = vunpack.c.l.b16 %v1217
        %v1322 = vunpack.c.l.b16 %v1218
        %v1323 = vunpack.c.l.b16 %v1219
        %v1324 = vunpack.c.l.b16 %v1220
        %v1325 = vunpack.c.l.b16 %v1221
        %v1326 = vunpack.c.l.b16 %v1222
        %v1327 = vunpack.c.l.b16 %v1223
        %v1328 = vunpack.c.l.b16 %v1224
        %v1329 = vunpack.c.l.b16 %v1225
        %v1330 = vunpack.c.l.b16 %v1226
        %v1331 = vpack.c.b16 %v1316, %v1315
        %v1332 = vpack.c.b16 %v1318, %v1317
        %v1333 = vpack.c.b16 %v1320, %v1319
        %v1334 = vpack.c.b16 %v1322, %v1321
        %v1335 = vpack.c.b16 %v1324, %v1323
        %v1336 = vpack.c.b16 %v1326, %v1325
        %v1337 = vpack.c.b16 %v1328, %v1327
        %v1338 = vpack.c.b16 %v1330, %v1329
        %1347 = vmatpush.bf16.msra.mxu0 %v1338
        %1348 = vmatpush.bf16.msra.mxu0 %v1337
        %1349 = vmatpush.bf16.msra.mxu0 %v1336
        %1350 = vmatpush.bf16.msra.mxu0 %v1335
        %1351 = vmatpush.bf16.msra.mxu0 %v1334
        %1352 = vmatpush.bf16.msra.mxu0 %v1333
        %1353 = vmatpush.bf16.msra.mxu0 %v1332
        %1354 = vmatpush.bf16.msra.mxu0 %v1331
        %1355 = vmatmul.bf16.gmra.mxu0 %v1275
        %v1356 = vpop.f32.mrf.mxu0
        %v1357 = vadd.f32 0.0, %v1356
        %v1358 = vpop.f32.mrf.mxu0
        %v1359 = vadd.f32 0.0, %v1358
        %1360 = vmatmul.bf16.gmra.mxu0 %v1276
        %v1361 = vpop.f32.mrf.mxu0
        %v1362 = vadd.f32 0.0, %v1361
        %v1363 = vpop.f32.mrf.mxu0
        %v1364 = vadd.f32 0.0, %v1363
        %1365 = vmatmul.bf16.gmra.mxu0 %v1277
        %v1366 = vpop.f32.mrf.mxu0
        %v1367 = vadd.f32 0.0, %v1366
        %v1368 = vpop.f32.mrf.mxu0
        %v1369 = vadd.f32 0.0, %v1368
        %1370 = vmatmul.bf16.gmra.mxu0 %v1278
        %v1371 = vpop.f32.mrf.mxu0
        %v1372 = vadd.f32 0.0, %v1371
        %v1373 = vpop.f32.mrf.mxu0
        %v1374 = vadd.f32 0.0, %v1373
        %1375 = vmatmul.bf16.gmra.mxu0 %v1279
        %v1376 = vpop.f32.mrf.mxu0
        %v1377 = vadd.f32 0.0, %v1376
        %v1378 = vpop.f32.mrf.mxu0
        %v1379 = vadd.f32 0.0, %v1378
        %1380 = vmatmul.bf16.gmra.mxu0 %v1280
        %v1381 = vpop.f32.mrf.mxu0
        %v1382 = vadd.f32 0.0, %v1381
        %v1383 = vpop.f32.mrf.mxu0
        %v1384 = vadd.f32 0.0, %v1383
        %1385 = vmatmul.bf16.gmra.mxu0 %v1281
        %v1386 = vpop.f32.mrf.mxu0
        %v1387 = vadd.f32 0.0, %v1386
        %v1388 = vpop.f32.mrf.mxu0
        %v1389 = vadd.f32 0.0, %v1388
        %1390 = vmatmul.bf16.gmra.mxu0 %v1282
        %v1391 = vpop.f32.mrf.mxu0
        %v1392 = vadd.f32 0.0, %v1391
        %v1393 = vpop.f32.mrf.mxu0
        %v1394 = vadd.f32 0.0, %v1393
        %1395 = vmatmul.bf16.gmra.mxu0 %v1283
        %v1396 = vpop.f32.mrf.mxu0
        %v1397 = vadd.f32 0.0, %v1396
        %v1398 = vpop.f32.mrf.mxu0
        %v1399 = vadd.f32 0.0, %v1398
        %1400 = vmatmul.bf16.gmra.mxu0 %v1284
        %v1401 = vpop.f32.mrf.mxu0
        %v1402 = vadd.f32 0.0, %v1401
        %v1403 = vpop.f32.mrf.mxu0
        %v1404 = vadd.f32 0.0, %v1403
        %1405 = vmatmul.bf16.gmra.mxu0 %v1285
        %v1406 = vpop.f32.mrf.mxu0
        %v1407 = vadd.f32 0.0, %v1406
        %v1408 = vpop.f32.mrf.mxu0
        %v1409 = vadd.f32 0.0, %v1408
        %1410 = vmatmul.bf16.gmra.mxu0 %v1286
        %v1411 = vpop.f32.mrf.mxu0
        %v1412 = vadd.f32 0.0, %v1411
        %v1413 = vpop.f32.mrf.mxu0
        %v1414 = vadd.f32 0.0, %v1413
        %1415 = vdwg.mxu0
        %v1416 = vadd.f32 %v1162, %v1357
        %v1417 = vadd.f32 %v1163, %v1359
        %v1418 = vadd.f32 %v1164, %v1362
        %v1419 = vadd.f32 %v1165, %v1364
        %v1420 = vadd.f32 %v1166, %v1367
        %v1421 = vadd.f32 %v1167, %v1369
        %v1422 = vadd.f32 %v1168, %v1372
        %v1423 = vadd.f32 %v1169, %v1374
        %v1424 = vadd.f32 %v1170, %v1377
        %v1425 = vadd.f32 %v1171, %v1379
        %v1426 = vadd.f32 %v1172, %v1382
        %v1427 = vadd.f32 %v1173, %v1384
        %v1428 = vadd.f32 %v1174, %v1387
        %v1429 = vadd.f32 %v1175, %v1389
        %v1430 = vadd.f32 %v1176, %v1392
        %v1431 = vadd.f32 %v1177, %v1394
        %v1432 = vadd.f32 %v1178, %v1397
        %v1433 = vadd.f32 %v1179, %v1399
        %v1434 = vadd.f32 %v1180, %v1402
        %v1435 = vadd.f32 %v1181, %v1404
        %v1436 = vadd.f32 %v1182, %v1407
        %v1437 = vadd.f32 %v1183, %v1409
        %v1438 = vadd.f32 %v1184, %v1412
        %v1439 = vadd.f32 %v1185, %v1414
        %1440 = vst [vmem:[#allocation2] sm:$0xff] %v1416
        %1441 = vst [vmem:[#allocation2 + $0x8] sm:$0xff] %v1417
        %1442 = vst [vmem:[#allocation2 + $0x10] sm:$0xff] %v1418
        %1443 = vst [vmem:[#allocation2 + $0x18] sm:$0xff] %v1419
        %1444 = vst [vmem:[#allocation2 + $0x20] sm:$0xff] %v1420
        %1445 = vst [vmem:[#allocation2 + $0x28] sm:$0xff] %v1421
        %1446 = vst [vmem:[#allocation2 + $0x30] sm:$0xff] %v1422
        %1447 = vst [vmem:[#allocation2 + $0x38] sm:$0xff] %v1423
        %1448 = vst [vmem:[#allocation2 + $0x40] sm:$0xff] %v1424
        %1449 = vst [vmem:[#allocation2 + $0x48] sm:$0xff] %v1425
        %1450 = vst [vmem:[#allocation2 + $0x50] sm:$0xff] %v1426
        %1451 = vst [vmem:[#allocation2 + $0x58] sm:$0xff] %v1427
        %1452 = vst [vmem:[#allocation2 + $0x60] sm:$0xff] %v1428
        %1453 = vst [vmem:[#allocation2 + $0x68] sm:$0xff] %v1429
        %1454 = vst [vmem:[#allocation2 + $0x70] sm:$0xff] %v1430
        %1455 = vst [vmem:[#allocation2 + $0x78] sm:$0xff] %v1431
        %1456 = vst [vmem:[#allocation2 + $0x80] sm:$0xff] %v1432
        %1457 = vst [vmem:[#allocation2 + $0x88] sm:$0xff] %v1433
        %1458 = vst [vmem:[#allocation2 + $0x90] sm:$0xff] %v1434
        %1459 = vst [vmem:[#allocation2 + $0x98] sm:$0xff] %v1435
        %1460 = vst [vmem:[#allocation2 + $0xa0] sm:$0xff] %v1436
        %1461 = vst [vmem:[#allocation2 + $0xa8] sm:$0xff] %v1437
        %1462 = vst [vmem:[#allocation2 + $0xb0] sm:$0xff] %v1438
        %1463 = vst [vmem:[#allocation2 + $0xb8] sm:$0xff] %v1439
        %p1464 = scmp.gt.s32.totalorder %s36, 0
        // Predicated region
        $region81: #{tpu_custom_call.1} parent=55 // pred_check
          %p1465 = pneg %p1464
        $region82: #{tpu_custom_call.1} parent=55 // pred_check_branch
          %1467 = sbr.rel (%p1465) target = $region84
        $region83: #{tpu_custom_call.1} parent=55 // pred_region
          %v1468 = vld [vmem:[#allocation2] sm:$0xff]
          %v1469 = vld [vmem:[#allocation2 + $0x8] sm:$0xff]
          %v1470 = vld [vmem:[#allocation2 + $0x10] sm:$0xff]
          %v1471 = vld [vmem:[#allocation2 + $0x18] sm:$0xff]
          %v1472 = vld [vmem:[#allocation2 + $0x20] sm:$0xff]
          %v1473 = vld [vmem:[#allocation2 + $0x28] sm:$0xff]
          %v1474 = vld [vmem:[#allocation2 + $0x30] sm:$0xff]
          %v1475 = vld [vmem:[#allocation2 + $0x38] sm:$0xff]
          %v1476 = vld [vmem:[%s463] sm:$0xf]
          %v1477 = vld [vmem:[%s463 + $0x4] sm:$0xf]
          %v1478 = vld [vmem:[%s463 + $0x8] sm:$0xf]
          %v1479 = vld [vmem:[%s463 + $0xc] sm:$0xf]
          %v1480 = vld [vmem:[%s463 + $0x10] sm:$0xf]
          %v1481 = vld [vmem:[%s463 + $0x14] sm:$0xf]
          %v1482 = vld [vmem:[%s463 + $0x18] sm:$0xf]
          %v1483 = vld [vmem:[%s463 + $0x1c] sm:$0xf]
          %v1484 = vld [vmem:[#allocation10] sm:$0xf]
          %v1485 = vld [vmem:[#allocation10 + $0x4] sm:$0xf]
          %v1486 = vld [vmem:[#allocation10 + $0x8] sm:$0xf]
          %v1487 = vld [vmem:[#allocation10 + $0xc] sm:$0xf]
          %v1488 = vld [vmem:[#allocation10 + $0x10] sm:$0xf]
          %v1489 = vld [vmem:[#allocation10 + $0x14] sm:$0xf]
          %v1490 = vld [vmem:[#allocation10 + $0x18] sm:$0xf]
          %v1491 = vld [vmem:[#allocation10 + $0x1c] sm:$0xf]
          %v1492 = vld [vmem:[#allocation10 + $0x20] sm:$0xf]
          %v1493 = vld [vmem:[#allocation10 + $0x24] sm:$0xf]
          %v1494 = vld [vmem:[#allocation10 + $0x28] sm:$0xf]
          %v1495 = vld [vmem:[#allocation10 + $0x2c] sm:$0xf]
          %v1496 = vld [vmem:[#allocation10 + $0x30] sm:$0xf]
          %v1497 = vld [vmem:[#allocation10 + $0x34] sm:$0xf]
          %v1498 = vld [vmem:[#allocation10 + $0x38] sm:$0xf]
          %v1499 = vld [vmem:[#allocation10 + $0x3c] sm:$0xf]
          %v1508 = vunpack.c.l.b16 %v1476
          %v1509 = vunpack.c.l.b16 %v1477
          %v1510 = vunpack.c.l.b16 %v1478
          %v1511 = vunpack.c.l.b16 %v1479
          %v1512 = vunpack.c.l.b16 %v1480
          %v1513 = vunpack.c.l.b16 %v1481
          %v1514 = vunpack.c.l.b16 %v1482
          %v1515 = vunpack.c.l.b16 %v1483
          %v1516 = vpack.c.b16 %v1509, %v1508
          %v1517 = vpack.c.b16 %v1511, %v1510
          %v1518 = vpack.c.b16 %v1513, %v1512
          %v1519 = vpack.c.b16 %v1515, %v1514
          %v1540 = vunpack.c.l.b16 %v1484
          %v1541 = vunpack.c.l.b16 %v1485
          %v1542 = vunpack.c.l.b16 %v1486
          %v1543 = vunpack.c.l.b16 %v1487
          %v1544 = vunpack.c.l.b16 %v1488
          %v1545 = vunpack.c.l.b16 %v1489
          %v1546 = vunpack.c.l.b16 %v1490
          %v1547 = vunpack.c.l.b16 %v1491
          %v1548 = vunpack.c.l.b16 %v1492
          %v1549 = vunpack.c.l.b16 %v1493
          %v1550 = vunpack.c.l.b16 %v1494
          %v1551 = vunpack.c.l.b16 %v1495
          %v1552 = vunpack.c.l.b16 %v1496
          %v1553 = vunpack.c.l.b16 %v1497
          %v1554 = vunpack.c.l.b16 %v1498
          %v1555 = vunpack.c.l.b16 %v1499
          %v1556 = vpack.c.b16 %v1541, %v1540
          %v1557 = vpack.c.b16 %v1543, %v1542
          %v1558 = vpack.c.b16 %v1545, %v1544
          %v1559 = vpack.c.b16 %v1547, %v1546
          %v1560 = vpack.c.b16 %v1549, %v1548
          %v1561 = vpack.c.b16 %v1551, %v1550
          %v1562 = vpack.c.b16 %v1553, %v1552
          %v1563 = vpack.c.b16 %v1555, %v1554
          %1572 = vmatpush.bf16.msra.mxu0 %v1563
          %1573 = vmatpush.bf16.msra.mxu0 %v1562
          %1574 = vmatpush.bf16.msra.mxu0 %v1561
          %1575 = vmatpush.bf16.msra.mxu0 %v1560
          %1576 = vmatpush.bf16.msra.mxu0 %v1559
          %1577 = vmatpush.bf16.msra.mxu0 %v1558
          %1578 = vmatpush.bf16.msra.mxu0 %v1557
          %1579 = vmatpush.bf16.msra.mxu0 %v1556
          %1580 = vmatmul.bf16.gmra.mxu0 %v1516
          %v1581 = vpop.f32.mrf.mxu0
          %v1582 = vadd.f32 0.0, %v1581
          %v1583 = vpop.f32.mrf.mxu0
          %v1584 = vadd.f32 0.0, %v1583
          %1585 = vmatmul.bf16.gmra.mxu0 %v1517
          %v1586 = vpop.f32.mrf.mxu0
          %v1587 = vadd.f32 0.0, %v1586
          %v1588 = vpop.f32.mrf.mxu0
          %v1589 = vadd.f32 0.0, %v1588
          %1590 = vmatmul.bf16.gmra.mxu0 %v1518
          %v1591 = vpop.f32.mrf.mxu0
          %v1592 = vadd.f32 0.0, %v1591
          %v1593 = vpop.f32.mrf.mxu0
          %v1594 = vadd.f32 0.0, %v1593
          %1595 = vmatmul.bf16.gmra.mxu0 %v1519
          %v1596 = vpop.f32.mrf.mxu0
          %v1597 = vadd.f32 0.0, %v1596
          %v1598 = vpop.f32.mrf.mxu0
          %v1599 = vadd.f32 0.0, %v1598
          %1600 = vdwg.mxu0
          %v1601 = vadd.f32 %v1468, %v1582
          %v1602 = vadd.f32 %v1469, %v1584
          %v1603 = vadd.f32 %v1470, %v1587
          %v1604 = vadd.f32 %v1471, %v1589
          %v1605 = vadd.f32 %v1472, %v1592
          %v1606 = vadd.f32 %v1473, %v1594
          %v1607 = vadd.f32 %v1474, %v1597
          %v1608 = vadd.f32 %v1475, %v1599
          %1609 = vst [vmem:[#allocation2] sm:$0xff] %v1601
          %1610 = vst [vmem:[#allocation2 + $0x8] sm:$0xff] %v1602
          %1611 = vst [vmem:[#allocation2 + $0x10] sm:$0xff] %v1603
          %1612 = vst [vmem:[#allocation2 + $0x18] sm:$0xff] %v1604
          %1613 = vst [vmem:[#allocation2 + $0x20] sm:$0xff] %v1605
          %1614 = vst [vmem:[#allocation2 + $0x28] sm:$0xff] %v1606
          %1615 = vst [vmem:[#allocation2 + $0x30] sm:$0xff] %v1607
          %1616 = vst [vmem:[#allocation2 + $0x38] sm:$0xff] %v1608
        $region84: #{tpu_custom_call.1} parent=55 // pred_fallthru
          _
        %p1617 = scmp.lt.s32.totalorder %s36, 1
        // Predicated region
        $region85: #{tpu_custom_call.1} parent=55 // pred_check
          %p1618 = pneg %p1617
        $region86: #{tpu_custom_call.1} parent=55 // pred_check_branch
          %1620 = sbr.rel (%p1618) target = $region88
        $region87: #{tpu_custom_call.1} parent=55 // pred_region
          %v1621 = vld [vmem:[#allocation2 + $0xc0] sm:$0xff]
          %v1622 = vld [vmem:[#allocation2 + $0xc8] sm:$0xff]
          %v1623 = vld [vmem:[#allocation2 + $0xd0] sm:$0xff]
          %v1624 = vld [vmem:[#allocation2 + $0xd8] sm:$0xff]
          %v1625 = vld [vmem:[#allocation2 + $0xe0] sm:$0xff]
          %v1626 = vld [vmem:[#allocation2 + $0xe8] sm:$0xff]
          %v1627 = vld [vmem:[#allocation2 + $0xf0] sm:$0xff]
          %v1628 = vld [vmem:[#allocation2 + $0xf8] sm:$0xff]
          %v1629 = vld [vmem:[%s473] sm:$0xf]
          %v1630 = vld [vmem:[%s473 + $0x4] sm:$0xf]
          %v1631 = vld [vmem:[%s473 + $0x8] sm:$0xf]
          %v1632 = vld [vmem:[%s473 + $0xc] sm:$0xf]
          %v1633 = vld [vmem:[%s473 + $0x10] sm:$0xf]
          %v1634 = vld [vmem:[%s473 + $0x14] sm:$0xf]
          %v1635 = vld [vmem:[%s473 + $0x18] sm:$0xf]
          %v1636 = vld [vmem:[%s473 + $0x1c] sm:$0xf]
          %v1637 = vld [vmem:[%s1210] sm:$0xf]
          %v1638 = vld [vmem:[%s1210 + $0x4] sm:$0xf]
          %v1639 = vld [vmem:[%s1210 + $0x8] sm:$0xf]
          %v1640 = vld [vmem:[%s1210 + $0xc] sm:$0xf]
          %v1641 = vld [vmem:[%s1210 + $0x10] sm:$0xf]
          %v1642 = vld [vmem:[%s1210 + $0x14] sm:$0xf]
          %v1643 = vld [vmem:[%s1210 + $0x18] sm:$0xf]
          %v1644 = vld [vmem:[%s1210 + $0x1c] sm:$0xf]
          %v1645 = vld [vmem:[%s1210 + $0x20] sm:$0xf]
          %v1646 = vld [vmem:[%s1210 + $0x24] sm:$0xf]
          %v1647 = vld [vmem:[%s1210 + $0x28] sm:$0xf]
          %v1648 = vld [vmem:[%s1210 + $0x2c] sm:$0xf]
          %v1649 = vld [vmem:[%s1210 + $0x30] sm:$0xf]
          %v1650 = vld [vmem:[%s1210 + $0x34] sm:$0xf]
          %v1651 = vld [vmem:[%s1210 + $0x38] sm:$0xf]
          %v1652 = vld [vmem:[%s1210 + $0x3c] sm:$0xf]
          %v1661 = vunpack.c.l.b16 %v1629
          %v1662 = vunpack.c.l.b16 %v1630
          %v1663 = vunpack.c.l.b16 %v1631
          %v1664 = vunpack.c.l.b16 %v1632
          %v1665 = vunpack.c.l.b16 %v1633
          %v1666 = vunpack.c.l.b16 %v1634
          %v1667 = vunpack.c.l.b16 %v1635
          %v1668 = vunpack.c.l.b16 %v1636
          %v1669 = vpack.c.b16 %v1662, %v1661
          %v1670 = vpack.c.b16 %v1664, %v1663
          %v1671 = vpack.c.b16 %v1666, %v1665
          %v1672 = vpack.c.b16 %v1668, %v1667
          %v1693 = vunpack.c.l.b16 %v1637
          %v1694 = vunpack.c.l.b16 %v1638
          %v1695 = vunpack.c.l.b16 %v1639
          %v1696 = vunpack.c.l.b16 %v1640
          %v1697 = vunpack.c.l.b16 %v1641
          %v1698 = vunpack.c.l.b16 %v1642
          %v1699 = vunpack.c.l.b16 %v1643
          %v1700 = vunpack.c.l.b16 %v1644
          %v1701 = vunpack.c.l.b16 %v1645
          %v1702 = vunpack.c.l.b16 %v1646
          %v1703 = vunpack.c.l.b16 %v1647
          %v1704 = vunpack.c.l.b16 %v1648
          %v1705 = vunpack.c.l.b16 %v1649
          %v1706 = vunpack.c.l.b16 %v1650
          %v1707 = vunpack.c.l.b16 %v1651
          %v1708 = vunpack.c.l.b16 %v1652
          %v1709 = vpack.c.b16 %v1694, %v1693
          %v1710 = vpack.c.b16 %v1696, %v1695
          %v1711 = vpack.c.b16 %v1698, %v1697
          %v1712 = vpack.c.b16 %v1700, %v1699
          %v1713 = vpack.c.b16 %v1702, %v1701
          %v1714 = vpack.c.b16 %v1704, %v1703
          %v1715 = vpack.c.b16 %v1706, %v1705
          %v1716 = vpack.c.b16 %v1708, %v1707
          %1725 = vmatpush.bf16.msra.mxu0 %v1716
          %1726 = vmatpush.bf16.msra.mxu0 %v1715
          %1727 = vmatpush.bf16.msra.mxu0 %v1714
          %1728 = vmatpush.bf16.msra.mxu0 %v1713
          %1729 = vmatpush.bf16.msra.mxu0 %v1712
          %1730 = vmatpush.bf16.msra.mxu0 %v1711
          %1731 = vmatpush.bf16.msra.mxu0 %v1710
          %1732 = vmatpush.bf16.msra.mxu0 %v1709
          %1733 = vmatmul.bf16.gmra.mxu0 %v1669
          %v1734 = vpop.f32.mrf.mxu0
          %v1735 = vadd.f32 0.0, %v1734
          %v1736 = vpop.f32.mrf.mxu0
          %v1737 = vadd.f32 0.0, %v1736
          %1738 = vmatmul.bf16.gmra.mxu0 %v1670
          %v1739 = vpop.f32.mrf.mxu0
          %v1740 = vadd.f32 0.0, %v1739
          %v1741 = vpop.f32.mrf.mxu0
          %v1742 = vadd.f32 0.0, %v1741
          %1743 = vmatmul.bf16.gmra.mxu0 %v1671
          %v1744 = vpop.f32.mrf.mxu0
          %v1745 = vadd.f32 0.0, %v1744
          %v1746 = vpop.f32.mrf.mxu0
          %v1747 = vadd.f32 0.0, %v1746
          %1748 = vmatmul.bf16.gmra.mxu0 %v1672
          %v1749 = vpop.f32.mrf.mxu0
          %v1750 = vadd.f32 0.0, %v1749
          %v1751 = vpop.f32.mrf.mxu0
          %v1752 = vadd.f32 0.0, %v1751
          %1753 = vdwg.mxu0
          %v1754 = vadd.f32 %v1621, %v1735
          %v1755 = vadd.f32 %v1622, %v1737
          %v1756 = vadd.f32 %v1623, %v1740
          %v1757 = vadd.f32 %v1624, %v1742
          %v1758 = vadd.f32 %v1625, %v1745
          %v1759 = vadd.f32 %v1626, %v1747
          %v1760 = vadd.f32 %v1627, %v1750
          %v1761 = vadd.f32 %v1628, %v1752
          %1762 = vst [vmem:[#allocation2 + $0xc0] sm:$0xff] %v1754
          %1763 = vst [vmem:[#allocation2 + $0xc8] sm:$0xff] %v1755
          %1764 = vst [vmem:[#allocation2 + $0xd0] sm:$0xff] %v1756
          %1765 = vst [vmem:[#allocation2 + $0xd8] sm:$0xff] %v1757
          %1766 = vst [vmem:[#allocation2 + $0xe0] sm:$0xff] %v1758
          %1767 = vst [vmem:[#allocation2 + $0xe8] sm:$0xff] %v1759
          %1768 = vst [vmem:[#allocation2 + $0xf0] sm:$0xff] %v1760
          %1769 = vst [vmem:[#allocation2 + $0xf8] sm:$0xff] %v1761
        $region88: #{tpu_custom_call.1} parent=55 // pred_fallthru
          _
        %v1770 = vld [vmem:[#allocation2] sm:$0xff]
        %v1771 = vld [vmem:[#allocation2 + $0x8] sm:$0xff]
        %v1772 = vld [vmem:[#allocation2 + $0x10] sm:$0xff]
        %v1773 = vld [vmem:[#allocation2 + $0x18] sm:$0xff]
        %v1774 = vld [vmem:[#allocation2 + $0x20] sm:$0xff]
        %v1775 = vld [vmem:[#allocation2 + $0x28] sm:$0xff]
        %v1776 = vld [vmem:[#allocation2 + $0x30] sm:$0xff]
        %v1777 = vld [vmem:[#allocation2 + $0x38] sm:$0xff]
        %v1778 = vld [vmem:[#allocation2 + $0x40] sm:$0xff]
        %v1779 = vld [vmem:[#allocation2 + $0x48] sm:$0xff]
        %v1780 = vld [vmem:[#allocation2 + $0x50] sm:$0xff]
        %v1781 = vld [vmem:[#allocation2 + $0x58] sm:$0xff]
        %v1782 = vld [vmem:[#allocation2 + $0x60] sm:$0xff]
        %v1783 = vld [vmem:[#allocation2 + $0x68] sm:$0xff]
        %v1784 = vld [vmem:[#allocation2 + $0x70] sm:$0xff]
        %v1785 = vld [vmem:[#allocation2 + $0x78] sm:$0xff]
        %v1786 = vld [vmem:[#allocation2 + $0x80] sm:$0xff]
        %v1787 = vld [vmem:[#allocation2 + $0x88] sm:$0xff]
        %v1788 = vld [vmem:[#allocation2 + $0x90] sm:$0xff]
        %v1789 = vld [vmem:[#allocation2 + $0x98] sm:$0xff]
        %v1790 = vld [vmem:[#allocation2 + $0xa0] sm:$0xff]
        %v1791 = vld [vmem:[#allocation2 + $0xa8] sm:$0xff]
        %v1792 = vld [vmem:[#allocation2 + $0xb0] sm:$0xff]
        %v1793 = vld [vmem:[#allocation2 + $0xb8] sm:$0xff]
        %v1794 = vld [vmem:[#allocation2 + $0xc0] sm:$0xff]
        %v1795 = vld [vmem:[#allocation2 + $0xc8] sm:$0xff]
        %v1796 = vld [vmem:[#allocation2 + $0xd0] sm:$0xff]
        %v1797 = vld [vmem:[#allocation2 + $0xd8] sm:$0xff]
        %v1798 = vld [vmem:[#allocation2 + $0xe0] sm:$0xff]
        %v1799 = vld [vmem:[#allocation2 + $0xe8] sm:$0xff]
        %v1800 = vld [vmem:[#allocation2 + $0xf0] sm:$0xff]
        %v1801 = vld [vmem:[#allocation2 + $0xf8] sm:$0xff]
        %v1802 = vld [vmem:[%s4] sm:$0x1]
        %v1804 = vperm.slane %v1802, 0
        %v1806 = vadd.f32 %v1770, %v1804
        %v1807 = vadd.f32 %v1771, %v1804
        %v1808 = vadd.f32 %v1772, %v1804
        %v1809 = vadd.f32 %v1773, %v1804
        %v1810 = vadd.f32 %v1774, %v1804
        %v1811 = vadd.f32 %v1775, %v1804
        %v1812 = vadd.f32 %v1776, %v1804
        %v1813 = vadd.f32 %v1777, %v1804
        %v1814 = vadd.f32 %v1778, %v1804
        %v1815 = vadd.f32 %v1779, %v1804
        %v1816 = vadd.f32 %v1780, %v1804
        %v1817 = vadd.f32 %v1781, %v1804
        %v1818 = vadd.f32 %v1782, %v1804
        %v1819 = vadd.f32 %v1783, %v1804
        %v1820 = vadd.f32 %v1784, %v1804
        %v1821 = vadd.f32 %v1785, %v1804
        %v1822 = vadd.f32 %v1786, %v1804
        %v1823 = vadd.f32 %v1787, %v1804
        %v1824 = vadd.f32 %v1788, %v1804
        %v1825 = vadd.f32 %v1789, %v1804
        %v1826 = vadd.f32 %v1790, %v1804
        %v1827 = vadd.f32 %v1791, %v1804
        %v1828 = vadd.f32 %v1792, %v1804
        %v1829 = vadd.f32 %v1793, %v1804
        %v1830 = vadd.f32 %v1794, %v1804
        %v1831 = vadd.f32 %v1795, %v1804
        %v1832 = vadd.f32 %v1796, %v1804
        %v1833 = vadd.f32 %v1797, %v1804
        %v1834 = vadd.f32 %v1798, %v1804
        %v1835 = vadd.f32 %v1799, %v1804
        %v1836 = vadd.f32 %v1800, %v1804
        %v1837 = vadd.f32 %v1801, %v1804
        %v1838 = vmax.f32 %v1806, 0.0
        %v1839 = vmax.f32 %v1807, 0.0
        %v1840 = vmax.f32 %v1808, 0.0
        %v1841 = vmax.f32 %v1809, 0.0
        %v1842 = vmax.f32 %v1810, 0.0
        %v1843 = vmax.f32 %v1811, 0.0
        %v1844 = vmax.f32 %v1812, 0.0
        %v1845 = vmax.f32 %v1813, 0.0
        %v1846 = vmax.f32 %v1814, 0.0
        %v1847 = vmax.f32 %v1815, 0.0
        %v1848 = vmax.f32 %v1816, 0.0
        %v1849 = vmax.f32 %v1817, 0.0
        %v1850 = vmax.f32 %v1818, 0.0
        %v1851 = vmax.f32 %v1819, 0.0
        %v1852 = vmax.f32 %v1820, 0.0
        %v1853 = vmax.f32 %v1821, 0.0
        %v1854 = vmax.f32 %v1822, 0.0
        %v1855 = vmax.f32 %v1823, 0.0
        %v1856 = vmax.f32 %v1824, 0.0
        %v1857 = vmax.f32 %v1825, 0.0
        %v1858 = vmax.f32 %v1826, 0.0
        %v1859 = vmax.f32 %v1827, 0.0
        %v1860 = vmax.f32 %v1828, 0.0
        %v1861 = vmax.f32 %v1829, 0.0
        %v1862 = vmax.f32 %v1830, 0.0
        %v1863 = vmax.f32 %v1831, 0.0
        %v1864 = vmax.f32 %v1832, 0.0
        %v1865 = vmax.f32 %v1833, 0.0
        %v1866 = vmax.f32 %v1834, 0.0
        %v1867 = vmax.f32 %v1835, 0.0
        %v1868 = vmax.f32 %v1836, 0.0
        %v1869 = vmax.f32 %v1837, 0.0
        %1870 = vst [vmem:[#allocation3] sm:$0xf] 0
        %1871 = vst [vmem:[#allocation3 + $0x4] sm:$0xf] 0
        %1872 = vst [vmem:[#allocation3 + $0x50] sm:$0xf] 0
        %1873 = vst [vmem:[#allocation3 + $0x54] sm:$0xf] 0
        %1874 = vst [vmem:[#allocation3 + $0xa0] sm:$0xf] 0
        %1875 = vst [vmem:[#allocation3 + $0xa4] sm:$0xf] 0
        %1876 = vst [vmem:[#allocation3 + $0xf0] sm:$0xf] 0
        %1877 = vst [vmem:[#allocation3 + $0xf4] sm:$0xf] 0
        %s1878 = scalar_lea.vmem [#allocation3], 72
        %1879 = vst [vmem:[%s1878] sm:$0xf] 0
        %1880 = vst [vmem:[%s1878 + $0x4] sm:$0xf] 0
        %1881 = vst [vmem:[%s1878 + $0x50] sm:$0xf] 0
        %1882 = vst [vmem:[%s1878 + $0x54] sm:$0xf] 0
        %1883 = vst [vmem:[%s1878 + $0xa0] sm:$0xf] 0
        %1884 = vst [vmem:[%s1878 + $0xa4] sm:$0xf] 0
        %1885 = vst [vmem:[%s1878 + $0xf0] sm:$0xf] 0
        %1886 = vst [vmem:[%s1878 + $0xf4] sm:$0xf] 0
        %vm1887 = vcmask 1040384
        %vm1888 = vsmask.f32 256
        %vm1889 = vmand %vm1887, %vm1888
        %v1890 = vld [vmem:[#allocation3] sm:$0x1]
        %v1891 = vsel %vm1889, 0, %v1890
        %1892 = vst [vmem:[#allocation3] sm:$0x1] %v1891
        %v1893 = vld [vmem:[#allocation3 + $0x8] sm:$0x1]
        %v1894 = vsel %vm1889, 0, %v1893
        %1895 = vst [vmem:[#allocation3 + $0x8] sm:$0x1] %v1894
        %v1896 = vld [vmem:[#allocation3 + $0x10] sm:$0x1]
        %v1897 = vsel %vm1889, 0, %v1896
        %1898 = vst [vmem:[#allocation3 + $0x10] sm:$0x1] %v1897
        %v1899 = vld [vmem:[#allocation3 + $0x18] sm:$0x1]
        %v1900 = vsel %vm1889, 0, %v1899
        %1901 = vst [vmem:[#allocation3 + $0x18] sm:$0x1] %v1900
        %v1902 = vld [vmem:[#allocation3 + $0x20] sm:$0x1]
        %v1903 = vsel %vm1889, 0, %v1902
        %1904 = vst [vmem:[#allocation3 + $0x20] sm:$0x1] %v1903
        %v1905 = vld [vmem:[#allocation3 + $0x28] sm:$0x1]
        %v1906 = vsel %vm1889, 0, %v1905
        %1907 = vst [vmem:[#allocation3 + $0x28] sm:$0x1] %v1906
        %v1908 = vld [vmem:[#allocation3 + $0x30] sm:$0x1]
        %v1909 = vsel %vm1889, 0, %v1908
        %1910 = vst [vmem:[#allocation3 + $0x30] sm:$0x1] %v1909
        %v1911 = vld [vmem:[#allocation3 + $0x38] sm:$0x1]
        %v1912 = vsel %vm1889, 0, %v1911
        %1913 = vst [vmem:[#allocation3 + $0x38] sm:$0x1] %v1912
        %v1914 = vld [vmem:[#allocation3 + $0x40] sm:$0x1]
        %v1915 = vsel %vm1889, 0, %v1914
        %1916 = vst [vmem:[#allocation3 + $0x40] sm:$0x1] %v1915
        %v1917 = vld [vmem:[#allocation3 + $0x48] sm:$0x1]
        %v1918 = vsel %vm1889, 0, %v1917
        %1919 = vst [vmem:[#allocation3 + $0x48] sm:$0x1] %v1918
        %v1920 = vld [vmem:[#allocation3 + $0x50] sm:$0x1]
        %v1921 = vsel %vm1889, 0, %v1920
        %1922 = vst [vmem:[#allocation3 + $0x50] sm:$0x1] %v1921
        %v1923 = vld [vmem:[#allocation3 + $0x58] sm:$0x1]
        %v1924 = vsel %vm1889, 0, %v1923
        %1925 = vst [vmem:[#allocation3 + $0x58] sm:$0x1] %v1924
        %v1926 = vld [vmem:[#allocation3 + $0x60] sm:$0x1]
        %v1927 = vsel %vm1889, 0, %v1926
        %1928 = vst [vmem:[#allocation3 + $0x60] sm:$0x1] %v1927
        %v1929 = vld [vmem:[#allocation3 + $0x68] sm:$0x1]
        %v1930 = vsel %vm1889, 0, %v1929
        %1931 = vst [vmem:[#allocation3 + $0x68] sm:$0x1] %v1930
        %v1932 = vld [vmem:[#allocation3 + $0x70] sm:$0x1]
        %v1933 = vsel %vm1889, 0, %v1932
        %1934 = vst [vmem:[#allocation3 + $0x70] sm:$0x1] %v1933
        %v1935 = vld [vmem:[#allocation3 + $0x78] sm:$0x1]
        %v1936 = vsel %vm1889, 0, %v1935
        %1937 = vst [vmem:[#allocation3 + $0x78] sm:$0x1] %v1936
        %v1938 = vld [vmem:[#allocation3 + $0x80] sm:$0x1]
        %v1939 = vsel %vm1889, 0, %v1938
        %1940 = vst [vmem:[#allocation3 + $0x80] sm:$0x1] %v1939
        %v1941 = vld [vmem:[#allocation3 + $0x88] sm:$0x1]
        %v1942 = vsel %vm1889, 0, %v1941
        %1943 = vst [vmem:[#allocation3 + $0x88] sm:$0x1] %v1942
        %v1944 = vld [vmem:[#allocation3 + $0x90] sm:$0x1]
        %v1945 = vsel %vm1889, 0, %v1944
        %1946 = vst [vmem:[#allocation3 + $0x90] sm:$0x1] %v1945
        %v1947 = vld [vmem:[#allocation3 + $0x98] sm:$0x1]
        %v1948 = vsel %vm1889, 0, %v1947
        %1949 = vst [vmem:[#allocation3 + $0x98] sm:$0x1] %v1948
        %v1950 = vld [vmem:[#allocation3 + $0xa0] sm:$0x1]
        %v1951 = vsel %vm1889, 0, %v1950
        %1952 = vst [vmem:[#allocation3 + $0xa0] sm:$0x1] %v1951
        %v1953 = vld [vmem:[#allocation3 + $0xa8] sm:$0x1]
        %v1954 = vsel %vm1889, 0, %v1953
        %1955 = vst [vmem:[#allocation3 + $0xa8] sm:$0x1] %v1954
        %v1956 = vld [vmem:[#allocation3 + $0xb0] sm:$0x1]
        %v1957 = vsel %vm1889, 0, %v1956
        %1958 = vst [vmem:[#allocation3 + $0xb0] sm:$0x1] %v1957
        %v1959 = vld [vmem:[#allocation3 + $0xb8] sm:$0x1]
        %v1960 = vsel %vm1889, 0, %v1959
        %1961 = vst [vmem:[#allocation3 + $0xb8] sm:$0x1] %v1960
        %v1962 = vld [vmem:[#allocation3 + $0xc0] sm:$0x1]
        %v1963 = vsel %vm1889, 0, %v1962
        %1964 = vst [vmem:[#allocation3 + $0xc0] sm:$0x1] %v1963
        %v1965 = vld [vmem:[#allocation3 + $0xc8] sm:$0x1]
        %v1966 = vsel %vm1889, 0, %v1965
        %1967 = vst [vmem:[#allocation3 + $0xc8] sm:$0x1] %v1966
        %v1968 = vld [vmem:[#allocation3 + $0xd0] sm:$0x1]
        %v1969 = vsel %vm1889, 0, %v1968
        %1970 = vst [vmem:[#allocation3 + $0xd0] sm:$0x1] %v1969
        %v1971 = vld [vmem:[#allocation3 + $0xd8] sm:$0x1]
        %v1972 = vsel %vm1889, 0, %v1971
        %1973 = vst [vmem:[#allocation3 + $0xd8] sm:$0x1] %v1972
        %v1974 = vld [vmem:[#allocation3 + $0xe0] sm:$0x1]
        %v1975 = vsel %vm1889, 0, %v1974
        %1976 = vst [vmem:[#allocation3 + $0xe0] sm:$0x1] %v1975
        %v1977 = vld [vmem:[#allocation3 + $0xe8] sm:$0x1]
        %v1978 = vsel %vm1889, 0, %v1977
        %1979 = vst [vmem:[#allocation3 + $0xe8] sm:$0x1] %v1978
        %v1980 = vld [vmem:[#allocation3 + $0xf0] sm:$0x1]
        %v1981 = vsel %vm1889, 0, %v1980
        %1982 = vst [vmem:[#allocation3 + $0xf0] sm:$0x1] %v1981
        %v1983 = vld [vmem:[#allocation3 + $0xf8] sm:$0x1]
        %v1984 = vsel %vm1889, 0, %v1983
        %1985 = vst [vmem:[#allocation3 + $0xf8] sm:$0x1] %v1984
        %v1986 = vld [vmem:[#allocation3 + $0x100] sm:$0x1]
        %v1987 = vsel %vm1889, 0, %v1986
        %1988 = vst [vmem:[#allocation3 + $0x100] sm:$0x1] %v1987
        %v1989 = vld [vmem:[#allocation3 + $0x108] sm:$0x1]
        %v1990 = vsel %vm1889, 0, %v1989
        %1991 = vst [vmem:[#allocation3 + $0x108] sm:$0x1] %v1990
        %v1992 = vld [vmem:[#allocation3 + $0x110] sm:$0x1]
        %v1993 = vsel %vm1889, 0, %v1992
        %1994 = vst [vmem:[#allocation3 + $0x110] sm:$0x1] %v1993
        %v1995 = vld [vmem:[#allocation3 + $0x118] sm:$0x1]
        %v1996 = vsel %vm1889, 0, %v1995
        %1997 = vst [vmem:[#allocation3 + $0x118] sm:$0x1] %v1996
        %v1998 = vld [vmem:[#allocation3 + $0x120] sm:$0x1]
        %v1999 = vsel %vm1889, 0, %v1998
        %2000 = vst [vmem:[#allocation3 + $0x120] sm:$0x1] %v1999
        %v2001 = vld [vmem:[#allocation3 + $0x128] sm:$0x1]
        %v2002 = vsel %vm1889, 0, %v2001
        %2003 = vst [vmem:[#allocation3 + $0x128] sm:$0x1] %v2002
        %v2004 = vld [vmem:[#allocation3 + $0x130] sm:$0x1]
        %v2005 = vsel %vm1889, 0, %v2004
        %2006 = vst [vmem:[#allocation3 + $0x130] sm:$0x1] %v2005
        %v2007 = vld [vmem:[#allocation3 + $0x138] sm:$0x1]
        %v2008 = vsel %vm1889, 0, %v2007
        %2009 = vst [vmem:[#allocation3 + $0x138] sm:$0x1] %v2008
        %vm2010 = vcmask 1043456
        %vm2011 = vsmask.f32 7938
        %vm2012 = vmand %vm2010, %vm2011
        %v2013 = vld [vmem:[#allocation3 + $0x4] sm:$0xf]
        %v2014 = vsel %vm2012, 0, %v2013
        %2015 = vst [vmem:[#allocation3 + $0x4] sm:$0xf] %v2014
        %v2016 = vld [vmem:[#allocation3 + $0xc] sm:$0xf]
        %v2017 = vsel %vm2012, 0, %v2016
        %2018 = vst [vmem:[#allocation3 + $0xc] sm:$0xf] %v2017
        %v2019 = vld [vmem:[#allocation3 + $0x14] sm:$0xf]
        %v2020 = vsel %vm2012, 0, %v2019
        %2021 = vst [vmem:[#allocation3 + $0x14] sm:$0xf] %v2020
        %v2022 = vld [vmem:[#allocation3 + $0x1c] sm:$0xf]
        %v2023 = vsel %vm2012, 0, %v2022
        %2024 = vst [vmem:[#allocation3 + $0x1c] sm:$0xf] %v2023
        %v2025 = vld [vmem:[#allocation3 + $0x24] sm:$0xf]
        %v2026 = vsel %vm2012, 0, %v2025
        %2027 = vst [vmem:[#allocation3 + $0x24] sm:$0xf] %v2026
        %v2028 = vld [vmem:[#allocation3 + $0x2c] sm:$0xf]
        %v2029 = vsel %vm2012, 0, %v2028
        %2030 = vst [vmem:[#allocation3 + $0x2c] sm:$0xf] %v2029
        %v2031 = vld [vmem:[#allocation3 + $0x34] sm:$0xf]
        %v2032 = vsel %vm2012, 0, %v2031
        %2033 = vst [vmem:[#allocation3 + $0x34] sm:$0xf] %v2032
        %v2034 = vld [vmem:[#allocation3 + $0x3c] sm:$0xf]
        %v2035 = vsel %vm2012, 0, %v2034
        %2036 = vst [vmem:[#allocation3 + $0x3c] sm:$0xf] %v2035
        %v2037 = vld [vmem:[#allocation3 + $0x44] sm:$0xf]
        %v2038 = vsel %vm2012, 0, %v2037
        %2039 = vst [vmem:[#allocation3 + $0x44] sm:$0xf] %v2038
        %v2040 = vld [vmem:[#allocation3 + $0x4c] sm:$0xf]
        %v2041 = vsel %vm2012, 0, %v2040
        %2042 = vst [vmem:[#allocation3 + $0x4c] sm:$0xf] %v2041
        %v2043 = vld [vmem:[#allocation3 + $0x54] sm:$0xf]
        %v2044 = vsel %vm2012, 0, %v2043
        %2045 = vst [vmem:[#allocation3 + $0x54] sm:$0xf] %v2044
        %v2046 = vld [vmem:[#allocation3 + $0x5c] sm:$0xf]
        %v2047 = vsel %vm2012, 0, %v2046
        %2048 = vst [vmem:[#allocation3 + $0x5c] sm:$0xf] %v2047
        %v2049 = vld [vmem:[#allocation3 + $0x64] sm:$0xf]
        %v2050 = vsel %vm2012, 0, %v2049
        %2051 = vst [vmem:[#allocation3 + $0x64] sm:$0xf] %v2050
        %v2052 = vld [vmem:[#allocation3 + $0x6c] sm:$0xf]
        %v2053 = vsel %vm2012, 0, %v2052
        %2054 = vst [vmem:[#allocation3 + $0x6c] sm:$0xf] %v2053
        %v2055 = vld [vmem:[#allocation3 + $0x74] sm:$0xf]
        %v2056 = vsel %vm2012, 0, %v2055
        %2057 = vst [vmem:[#allocation3 + $0x74] sm:$0xf] %v2056
        %v2058 = vld [vmem:[#allocation3 + $0x7c] sm:$0xf]
        %v2059 = vsel %vm2012, 0, %v2058
        %2060 = vst [vmem:[#allocation3 + $0x7c] sm:$0xf] %v2059
        %v2061 = vld [vmem:[#allocation3 + $0x84] sm:$0xf]
        %v2062 = vsel %vm2012, 0, %v2061
        %2063 = vst [vmem:[#allocation3 + $0x84] sm:$0xf] %v2062
        %v2064 = vld [vmem:[#allocation3 + $0x8c] sm:$0xf]
        %v2065 = vsel %vm2012, 0, %v2064
        %2066 = vst [vmem:[#allocation3 + $0x8c] sm:$0xf] %v2065
        %v2067 = vld [vmem:[#allocation3 + $0x94] sm:$0xf]
        %v2068 = vsel %vm2012, 0, %v2067
        %2069 = vst [vmem:[#allocation3 + $0x94] sm:$0xf] %v2068
        %v2070 = vld [vmem:[#allocation3 + $0x9c] sm:$0xf]
        %v2071 = vsel %vm2012, 0, %v2070
        %2072 = vst [vmem:[#allocation3 + $0x9c] sm:$0xf] %v2071
        %v2073 = vld [vmem:[#allocation3 + $0xa4] sm:$0xf]
        %v2074 = vsel %vm2012, 0, %v2073
        %2075 = vst [vmem:[#allocation3 + $0xa4] sm:$0xf] %v2074
        %v2076 = vld [vmem:[#allocation3 + $0xac] sm:$0xf]
        %v2077 = vsel %vm2012, 0, %v2076
        %2078 = vst [vmem:[#allocation3 + $0xac] sm:$0xf] %v2077
        %v2079 = vld [vmem:[#allocation3 + $0xb4] sm:$0xf]
        %v2080 = vsel %vm2012, 0, %v2079
        %2081 = vst [vmem:[#allocation3 + $0xb4] sm:$0xf] %v2080
        %v2082 = vld [vmem:[#allocation3 + $0xbc] sm:$0xf]
        %v2083 = vsel %vm2012, 0, %v2082
        %2084 = vst [vmem:[#allocation3 + $0xbc] sm:$0xf] %v2083
        %v2085 = vld [vmem:[#allocation3 + $0xc4] sm:$0xf]
        %v2086 = vsel %vm2012, 0, %v2085
        %2087 = vst [vmem:[#allocation3 + $0xc4] sm:$0xf] %v2086
        %v2088 = vld [vmem:[#allocation3 + $0xcc] sm:$0xf]
        %v2089 = vsel %vm2012, 0, %v2088
        %2090 = vst [vmem:[#allocation3 + $0xcc] sm:$0xf] %v2089
        %v2091 = vld [vmem:[#allocation3 + $0xd4] sm:$0xf]
        %v2092 = vsel %vm2012, 0, %v2091
        %2093 = vst [vmem:[#allocation3 + $0xd4] sm:$0xf] %v2092
        %v2094 = vld [vmem:[#allocation3 + $0xdc] sm:$0xf]
        %v2095 = vsel %vm2012, 0, %v2094
        %2096 = vst [vmem:[#allocation3 + $0xdc] sm:$0xf] %v2095
        %v2097 = vld [vmem:[#allocation3 + $0xe4] sm:$0xf]
        %v2098 = vsel %vm2012, 0, %v2097
        %2099 = vst [vmem:[#allocation3 + $0xe4] sm:$0xf] %v2098
        %v2100 = vld [vmem:[#allocation3 + $0xec] sm:$0xf]
        %v2101 = vsel %vm2012, 0, %v2100
        %2102 = vst [vmem:[#allocation3 + $0xec] sm:$0xf] %v2101
        %v2103 = vld [vmem:[#allocation3 + $0xf4] sm:$0xf]
        %v2104 = vsel %vm2012, 0, %v2103
        %2105 = vst [vmem:[#allocation3 + $0xf4] sm:$0xf] %v2104
        %v2106 = vld [vmem:[#allocation3 + $0xfc] sm:$0xf]
        %v2107 = vsel %vm2012, 0, %v2106
        %2108 = vst [vmem:[#allocation3 + $0xfc] sm:$0xf] %v2107
        %v2109 = vld [vmem:[#allocation3 + $0x104] sm:$0xf]
        %v2110 = vsel %vm2012, 0, %v2109
        %2111 = vst [vmem:[#allocation3 + $0x104] sm:$0xf] %v2110
        %v2112 = vld [vmem:[#allocation3 + $0x10c] sm:$0xf]
        %v2113 = vsel %vm2012, 0, %v2112
        %2114 = vst [vmem:[#allocation3 + $0x10c] sm:$0xf] %v2113
        %v2115 = vld [vmem:[#allocation3 + $0x114] sm:$0xf]
        %v2116 = vsel %vm2012, 0, %v2115
        %2117 = vst [vmem:[#allocation3 + $0x114] sm:$0xf] %v2116
        %v2118 = vld [vmem:[#allocation3 + $0x11c] sm:$0xf]
        %v2119 = vsel %vm2012, 0, %v2118
        %2120 = vst [vmem:[#allocation3 + $0x11c] sm:$0xf] %v2119
        %v2121 = vld [vmem:[#allocation3 + $0x124] sm:$0xf]
        %v2122 = vsel %vm2012, 0, %v2121
        %2123 = vst [vmem:[#allocation3 + $0x124] sm:$0xf] %v2122
        %v2124 = vld [vmem:[#allocation3 + $0x12c] sm:$0xf]
        %v2125 = vsel %vm2012, 0, %v2124
        %2126 = vst [vmem:[#allocation3 + $0x12c] sm:$0xf] %v2125
        %v2127 = vld [vmem:[#allocation3 + $0x134] sm:$0xf]
        %v2128 = vsel %vm2012, 0, %v2127
        %2129 = vst [vmem:[#allocation3 + $0x134] sm:$0xf] %v2128
        %v2130 = vld [vmem:[#allocation3 + $0x13c] sm:$0xf]
        %v2131 = vsel %vm2012, 0, %v2130
        %2132 = vst [vmem:[#allocation3 + $0x13c] sm:$0xf] %v2131
        %v2133 = vpack.c.bf16 %v1838, %v1838
        %v2134 = vpack.c.bf16 %v1839, %v1839
        %v2135 = vpack.c.bf16 %v1840, %v1840
        %v2136 = vpack.c.bf16 %v1841, %v1841
        %v2137 = vpack.c.bf16 %v1842, %v1842
        %v2138 = vpack.c.bf16 %v1843, %v1843
        %v2139 = vpack.c.bf16 %v1844, %v1844
        %v2140 = vpack.c.bf16 %v1845, %v1845
        %v2141 = vpack.c.bf16 %v1846, %v1846
        %v2142 = vpack.c.bf16 %v1847, %v1847
        %v2143 = vpack.c.bf16 %v1848, %v1848
        %v2144 = vpack.c.bf16 %v1849, %v1849
        %v2145 = vpack.c.bf16 %v1850, %v1850
        %v2146 = vpack.c.bf16 %v1851, %v1851
        %v2147 = vpack.c.bf16 %v1852, %v1852
        %v2148 = vpack.c.bf16 %v1853, %v1853
        %v2149 = vpack.c.bf16 %v1854, %v1854
        %v2150 = vpack.c.bf16 %v1855, %v1855
        %v2151 = vpack.c.bf16 %v1856, %v1856
        %v2152 = vpack.c.bf16 %v1857, %v1857
        %v2153 = vpack.c.bf16 %v1858, %v1858
        %v2154 = vpack.c.bf16 %v1859, %v1859
        %v2155 = vpack.c.bf16 %v1860, %v1860
        %v2156 = vpack.c.bf16 %v1861, %v1861
        %v2157 = vpack.c.bf16 %v1862, %v1862
        %v2158 = vpack.c.bf16 %v1863, %v1863
        %v2159 = vpack.c.bf16 %v1864, %v1864
        %v2160 = vpack.c.bf16 %v1865, %v1865
        %v2161 = vpack.c.bf16 %v1866, %v1866
        %v2162 = vpack.c.bf16 %v1867, %v1867
        %v2163 = vpack.c.bf16 %v1868, %v1868
        %v2164 = vpack.c.bf16 %v1869, %v1869
        %v2166 = vshrl.u32 %v2133, 16
        %v2168 = vrot.slane %v2166, 7
        %v2169 = vshll.u32 %v2133, 16
        %v2171 = vor.u32 %v2168, %v2169
        %v2172 = vrot.slane %v2168, 4
        %v2174 = vshrl.u32 %v2134, 16
        %v2176 = vrot.slane %v2174, 7
        %v2177 = vshll.u32 %v2134, 16
        %v2179 = vor.u32 %v2176, %v2177
        %v2180 = vrot.slane %v2176, 4
        %v2182 = vshrl.u32 %v2135, 16
        %v2184 = vrot.slane %v2182, 7
        %v2185 = vshll.u32 %v2135, 16
        %v2187 = vor.u32 %v2184, %v2185
        %v2188 = vrot.slane %v2184, 4
        %v2190 = vshrl.u32 %v2136, 16
        %v2192 = vrot.slane %v2190, 7
        %v2193 = vshll.u32 %v2136, 16
        %v2195 = vor.u32 %v2192, %v2193
        %v2196 = vrot.slane %v2192, 4
        %v2198 = vshrl.u32 %v2137, 16
        %v2200 = vrot.slane %v2198, 7
        %v2201 = vshll.u32 %v2137, 16
        %v2203 = vor.u32 %v2200, %v2201
        %v2204 = vrot.slane %v2200, 4
        %v2206 = vshrl.u32 %v2138, 16
        %v2208 = vrot.slane %v2206, 7
        %v2209 = vshll.u32 %v2138, 16
        %v2211 = vor.u32 %v2208, %v2209
        %v2212 = vrot.slane %v2208, 4
        %v2214 = vshrl.u32 %v2139, 16
        %v2216 = vrot.slane %v2214, 7
        %v2217 = vshll.u32 %v2139, 16
        %v2219 = vor.u32 %v2216, %v2217
        %v2220 = vrot.slane %v2216, 4
        %v2222 = vshrl.u32 %v2140, 16
        %v2224 = vrot.slane %v2222, 7
        %v2225 = vshll.u32 %v2140, 16
        %v2227 = vor.u32 %v2224, %v2225
        %v2228 = vrot.slane %v2224, 4
        %v2230 = vshrl.u32 %v2141, 16
        %v2232 = vrot.slane %v2230, 7
        %v2233 = vshll.u32 %v2141, 16
        %v2235 = vor.u32 %v2232, %v2233
        %v2236 = vrot.slane %v2232, 4
        %v2238 = vshrl.u32 %v2142, 16
        %v2240 = vrot.slane %v2238, 7
        %v2241 = vshll.u32 %v2142, 16
        %v2243 = vor.u32 %v2240, %v2241
        %v2244 = vrot.slane %v2240, 4
        %v2246 = vshrl.u32 %v2143, 16
        %v2248 = vrot.slane %v2246, 7
        %v2249 = vshll.u32 %v2143, 16
        %v2251 = vor.u32 %v2248, %v2249
        %v2252 = vrot.slane %v2248, 4
        %v2254 = vshrl.u32 %v2144, 16
        %v2256 = vrot.slane %v2254, 7
        %v2257 = vshll.u32 %v2144, 16
        %v2259 = vor.u32 %v2256, %v2257
        %v2260 = vrot.slane %v2256, 4
        %v2262 = vshrl.u32 %v2145, 16
        %v2264 = vrot.slane %v2262, 7
        %v2265 = vshll.u32 %v2145, 16
        %v2267 = vor.u32 %v2264, %v2265
        %v2268 = vrot.slane %v2264, 4
        %v2270 = vshrl.u32 %v2146, 16
        %v2272 = vrot.slane %v2270, 7
        %v2273 = vshll.u32 %v2146, 16
        %v2275 = vor.u32 %v2272, %v2273
        %v2276 = vrot.slane %v2272, 4
        %v2278 = vshrl.u32 %v2147, 16
        %v2280 = vrot.slane %v2278, 7
        %v2281 = vshll.u32 %v2147, 16
        %v2283 = vor.u32 %v2280, %v2281
        %v2284 = vrot.slane %v2280, 4
        %v2286 = vshrl.u32 %v2148, 16
        %v2288 = vrot.slane %v2286, 7
        %v2289 = vshll.u32 %v2148, 16
        %v2291 = vor.u32 %v2288, %v2289
        %v2292 = vrot.slane %v2288, 4
        %v2294 = vshrl.u32 %v2149, 16
        %v2296 = vrot.slane %v2294, 7
        %v2297 = vshll.u32 %v2149, 16
        %v2299 = vor.u32 %v2296, %v2297
        %v2300 = vrot.slane %v2296, 4
        %v2302 = vshrl.u32 %v2150, 16
        %v2304 = vrot.slane %v2302, 7
        %v2305 = vshll.u32 %v2150, 16
        %v2307 = vor.u32 %v2304, %v2305
        %v2308 = vrot.slane %v2304, 4
        %v2310 = vshrl.u32 %v2151, 16
        %v2312 = vrot.slane %v2310, 7
        %v2313 = vshll.u32 %v2151, 16
        %v2315 = vor.u32 %v2312, %v2313
        %v2316 = vrot.slane %v2312, 4
        %v2318 = vshrl.u32 %v2152, 16
        %v2320 = vrot.slane %v2318, 7
        %v2321 = vshll.u32 %v2152, 16
        %v2323 = vor.u32 %v2320, %v2321
        %v2324 = vrot.slane %v2320, 4
        %v2326 = vshrl.u32 %v2153, 16
        %v2328 = vrot.slane %v2326, 7
        %v2329 = vshll.u32 %v2153, 16
        %v2331 = vor.u32 %v2328, %v2329
        %v2332 = vrot.slane %v2328, 4
        %v2334 = vshrl.u32 %v2154, 16
        %v2336 = vrot.slane %v2334, 7
        %v2337 = vshll.u32 %v2154, 16
        %v2339 = vor.u32 %v2336, %v2337
        %v2340 = vrot.slane %v2336, 4
        %v2342 = vshrl.u32 %v2155, 16
        %v2344 = vrot.slane %v2342, 7
        %v2345 = vshll.u32 %v2155, 16
        %v2347 = vor.u32 %v2344, %v2345
        %v2348 = vrot.slane %v2344, 4
        %v2350 = vshrl.u32 %v2156, 16
        %v2352 = vrot.slane %v2350, 7
        %v2353 = vshll.u32 %v2156, 16
        %v2355 = vor.u32 %v2352, %v2353
        %v2356 = vrot.slane %v2352, 4
        %v2358 = vshrl.u32 %v2157, 16
        %v2360 = vrot.slane %v2358, 7
        %v2361 = vshll.u32 %v2157, 16
        %v2363 = vor.u32 %v2360, %v2361
        %v2364 = vrot.slane %v2360, 4
        %v2366 = vshrl.u32 %v2158, 16
        %v2368 = vrot.slane %v2366, 7
        %v2369 = vshll.u32 %v2158, 16
        %v2371 = vor.u32 %v2368, %v2369
        %v2372 = vrot.slane %v2368, 4
        %v2374 = vshrl.u32 %v2159, 16
        %v2376 = vrot.slane %v2374, 7
        %v2377 = vshll.u32 %v2159, 16
        %v2379 = vor.u32 %v2376, %v2377
        %v2380 = vrot.slane %v2376, 4
        %v2382 = vshrl.u32 %v2160, 16
        %v2384 = vrot.slane %v2382, 7
        %v2385 = vshll.u32 %v2160, 16
        %v2387 = vor.u32 %v2384, %v2385
        %v2388 = vrot.slane %v2384, 4
        %v2390 = vshrl.u32 %v2161, 16
        %v2392 = vrot.slane %v2390, 7
        %v2393 = vshll.u32 %v2161, 16
        %v2395 = vor.u32 %v2392, %v2393
        %v2396 = vrot.slane %v2392, 4
        %v2398 = vshrl.u32 %v2162, 16
        %v2400 = vrot.slane %v2398, 7
        %v2401 = vshll.u32 %v2162, 16
        %v2403 = vor.u32 %v2400, %v2401
        %v2404 = vrot.slane %v2400, 4
        %v2406 = vshrl.u32 %v2163, 16
        %v2408 = vrot.slane %v2406, 7
        %v2409 = vshll.u32 %v2163, 16
        %v2411 = vor.u32 %v2408, %v2409
        %v2412 = vrot.slane %v2408, 4
        %v2414 = vshrl.u32 %v2164, 16
        %v2416 = vrot.slane %v2414, 7
        %v2417 = vshll.u32 %v2164, 16
        %v2419 = vor.u32 %v2416, %v2417
        %v2420 = vrot.slane %v2416, 4
        %s2485 = scalar_lea.vmem [#allocation3], 8
        %v2486 = vld [vmem:[%s2485] sm:$0xf]
        %v2487 = vsel %vm2012, %v2171, %v2486
        %2488 = vst [vmem:[%s2485] sm:$0xf] %v2487
        %v2489 = vld [vmem:[%s2485 + $0x4] sm:$0x1]
        %v2490 = vsel %vm1889, %v2172, %v2489
        %2491 = vst [vmem:[%s2485 + $0x4] sm:$0x1] %v2490
        %v2492 = vld [vmem:[%s2485 + $0x8] sm:$0xf]
        %v2493 = vsel %vm2012, %v2179, %v2492
        %2494 = vst [vmem:[%s2485 + $0x8] sm:$0xf] %v2493
        %v2495 = vld [vmem:[%s2485 + $0xc] sm:$0x1]
        %v2496 = vsel %vm1889, %v2180, %v2495
        %2497 = vst [vmem:[%s2485 + $0xc] sm:$0x1] %v2496
        %v2498 = vld [vmem:[%s2485 + $0x10] sm:$0xf]
        %v2499 = vsel %vm2012, %v2187, %v2498
        %2500 = vst [vmem:[%s2485 + $0x10] sm:$0xf] %v2499
        %v2501 = vld [vmem:[%s2485 + $0x14] sm:$0x1]
        %v2502 = vsel %vm1889, %v2188, %v2501
        %2503 = vst [vmem:[%s2485 + $0x14] sm:$0x1] %v2502
        %v2504 = vld [vmem:[%s2485 + $0x18] sm:$0xf]
        %v2505 = vsel %vm2012, %v2195, %v2504
        %2506 = vst [vmem:[%s2485 + $0x18] sm:$0xf] %v2505
        %v2507 = vld [vmem:[%s2485 + $0x1c] sm:$0x1]
        %v2508 = vsel %vm1889, %v2196, %v2507
        %2509 = vst [vmem:[%s2485 + $0x1c] sm:$0x1] %v2508
        %v2510 = vld [vmem:[%s2485 + $0x20] sm:$0xf]
        %v2511 = vsel %vm2012, %v2203, %v2510
        %2512 = vst [vmem:[%s2485 + $0x20] sm:$0xf] %v2511
        %v2513 = vld [vmem:[%s2485 + $0x24] sm:$0x1]
        %v2514 = vsel %vm1889, %v2204, %v2513
        %2515 = vst [vmem:[%s2485 + $0x24] sm:$0x1] %v2514
        %v2516 = vld [vmem:[%s2485 + $0x28] sm:$0xf]
        %v2517 = vsel %vm2012, %v2211, %v2516
        %2518 = vst [vmem:[%s2485 + $0x28] sm:$0xf] %v2517
        %v2519 = vld [vmem:[%s2485 + $0x2c] sm:$0x1]
        %v2520 = vsel %vm1889, %v2212, %v2519
        %2521 = vst [vmem:[%s2485 + $0x2c] sm:$0x1] %v2520
        %v2522 = vld [vmem:[%s2485 + $0x30] sm:$0xf]
        %v2523 = vsel %vm2012, %v2219, %v2522
        %2524 = vst [vmem:[%s2485 + $0x30] sm:$0xf] %v2523
        %v2525 = vld [vmem:[%s2485 + $0x34] sm:$0x1]
        %v2526 = vsel %vm1889, %v2220, %v2525
        %2527 = vst [vmem:[%s2485 + $0x34] sm:$0x1] %v2526
        %v2528 = vld [vmem:[%s2485 + $0x38] sm:$0xf]
        %v2529 = vsel %vm2012, %v2227, %v2528
        %2530 = vst [vmem:[%s2485 + $0x38] sm:$0xf] %v2529
        %v2531 = vld [vmem:[%s2485 + $0x3c] sm:$0x1]
        %v2532 = vsel %vm1889, %v2228, %v2531
        %2533 = vst [vmem:[%s2485 + $0x3c] sm:$0x1] %v2532
        %v2534 = vld [vmem:[%s2485 + $0x50] sm:$0xf]
        %v2535 = vsel %vm2012, %v2235, %v2534
        %2536 = vst [vmem:[%s2485 + $0x50] sm:$0xf] %v2535
        %v2537 = vld [vmem:[%s2485 + $0x54] sm:$0x1]
        %v2538 = vsel %vm1889, %v2236, %v2537
        %2539 = vst [vmem:[%s2485 + $0x54] sm:$0x1] %v2538
        %v2540 = vld [vmem:[%s2485 + $0x58] sm:$0xf]
        %v2541 = vsel %vm2012, %v2243, %v2540
        %2542 = vst [vmem:[%s2485 + $0x58] sm:$0xf] %v2541
        %v2543 = vld [vmem:[%s2485 + $0x5c] sm:$0x1]
        %v2544 = vsel %vm1889, %v2244, %v2543
        %2545 = vst [vmem:[%s2485 + $0x5c] sm:$0x1] %v2544
        %v2546 = vld [vmem:[%s2485 + $0x60] sm:$0xf]
        %v2547 = vsel %vm2012, %v2251, %v2546
        %2548 = vst [vmem:[%s2485 + $0x60] sm:$0xf] %v2547
        %v2549 = vld [vmem:[%s2485 + $0x64] sm:$0x1]
        %v2550 = vsel %vm1889, %v2252, %v2549
        %2551 = vst [vmem:[%s2485 + $0x64] sm:$0x1] %v2550
        %v2552 = vld [vmem:[%s2485 + $0x68] sm:$0xf]
        %v2553 = vsel %vm2012, %v2259, %v2552
        %2554 = vst [vmem:[%s2485 + $0x68] sm:$0xf] %v2553
        %v2555 = vld [vmem:[%s2485 + $0x6c] sm:$0x1]
        %v2556 = vsel %vm1889, %v2260, %v2555
        %2557 = vst [vmem:[%s2485 + $0x6c] sm:$0x1] %v2556
        %v2558 = vld [vmem:[%s2485 + $0x70] sm:$0xf]
        %v2559 = vsel %vm2012, %v2267, %v2558
        %2560 = vst [vmem:[%s2485 + $0x70] sm:$0xf] %v2559
        %v2561 = vld [vmem:[%s2485 + $0x74] sm:$0x1]
        %v2562 = vsel %vm1889, %v2268, %v2561
        %2563 = vst [vmem:[%s2485 + $0x74] sm:$0x1] %v2562
        %v2564 = vld [vmem:[%s2485 + $0x78] sm:$0xf]
        %v2565 = vsel %vm2012, %v2275, %v2564
        %2566 = vst [vmem:[%s2485 + $0x78] sm:$0xf] %v2565
        %v2567 = vld [vmem:[%s2485 + $0x7c] sm:$0x1]
        %v2568 = vsel %vm1889, %v2276, %v2567
        %2569 = vst [vmem:[%s2485 + $0x7c] sm:$0x1] %v2568
        %v2570 = vld [vmem:[%s2485 + $0x80] sm:$0xf]
        %v2571 = vsel %vm2012, %v2283, %v2570
        %2572 = vst [vmem:[%s2485 + $0x80] sm:$0xf] %v2571
        %v2573 = vld [vmem:[%s2485 + $0x84] sm:$0x1]
        %v2574 = vsel %vm1889, %v2284, %v2573
        %2575 = vst [vmem:[%s2485 + $0x84] sm:$0x1] %v2574
        %v2576 = vld [vmem:[%s2485 + $0x88] sm:$0xf]
        %v2577 = vsel %vm2012, %v2291, %v2576
        %2578 = vst [vmem:[%s2485 + $0x88] sm:$0xf] %v2577
        %v2579 = vld [vmem:[%s2485 + $0x8c] sm:$0x1]
        %v2580 = vsel %vm1889, %v2292, %v2579
        %2581 = vst [vmem:[%s2485 + $0x8c] sm:$0x1] %v2580
        %v2582 = vld [vmem:[%s2485 + $0xa0] sm:$0xf]
        %v2583 = vsel %vm2012, %v2299, %v2582
        %2584 = vst [vmem:[%s2485 + $0xa0] sm:$0xf] %v2583
        %v2585 = vld [vmem:[%s2485 + $0xa4] sm:$0x1]
        %v2586 = vsel %vm1889, %v2300, %v2585
        %2587 = vst [vmem:[%s2485 + $0xa4] sm:$0x1] %v2586
        %v2588 = vld [vmem:[%s2485 + $0xa8] sm:$0xf]
        %v2589 = vsel %vm2012, %v2307, %v2588
        %2590 = vst [vmem:[%s2485 + $0xa8] sm:$0xf] %v2589
        %v2591 = vld [vmem:[%s2485 + $0xac] sm:$0x1]
        %v2592 = vsel %vm1889, %v2308, %v2591
        %2593 = vst [vmem:[%s2485 + $0xac] sm:$0x1] %v2592
        %v2594 = vld [vmem:[%s2485 + $0xb0] sm:$0xf]
        %v2595 = vsel %vm2012, %v2315, %v2594
        %2596 = vst [vmem:[%s2485 + $0xb0] sm:$0xf] %v2595
        %v2597 = vld [vmem:[%s2485 + $0xb4] sm:$0x1]
        %v2598 = vsel %vm1889, %v2316, %v2597
        %2599 = vst [vmem:[%s2485 + $0xb4] sm:$0x1] %v2598
        %v2600 = vld [vmem:[%s2485 + $0xb8] sm:$0xf]
        %v2601 = vsel %vm2012, %v2323, %v2600
        %2602 = vst [vmem:[%s2485 + $0xb8] sm:$0xf] %v2601
        %v2603 = vld [vmem:[%s2485 + $0xbc] sm:$0x1]
        %v2604 = vsel %vm1889, %v2324, %v2603
        %2605 = vst [vmem:[%s2485 + $0xbc] sm:$0x1] %v2604
        %v2606 = vld [vmem:[%s2485 + $0xc0] sm:$0xf]
        %v2607 = vsel %vm2012, %v2331, %v2606
        %2608 = vst [vmem:[%s2485 + $0xc0] sm:$0xf] %v2607
        %v2609 = vld [vmem:[%s2485 + $0xc4] sm:$0x1]
        %v2610 = vsel %vm1889, %v2332, %v2609
        %2611 = vst [vmem:[%s2485 + $0xc4] sm:$0x1] %v2610
        %v2612 = vld [vmem:[%s2485 + $0xc8] sm:$0xf]
        %v2613 = vsel %vm2012, %v2339, %v2612
        %2614 = vst [vmem:[%s2485 + $0xc8] sm:$0xf] %v2613
        %v2615 = vld [vmem:[%s2485 + $0xcc] sm:$0x1]
        %v2616 = vsel %vm1889, %v2340, %v2615
        %2617 = vst [vmem:[%s2485 + $0xcc] sm:$0x1] %v2616
        %v2618 = vld [vmem:[%s2485 + $0xd0] sm:$0xf]
        %v2619 = vsel %vm2012, %v2347, %v2618
        %2620 = vst [vmem:[%s2485 + $0xd0] sm:$0xf] %v2619
        %v2621 = vld [vmem:[%s2485 + $0xd4] sm:$0x1]
        %v2622 = vsel %vm1889, %v2348, %v2621
        %2623 = vst [vmem:[%s2485 + $0xd4] sm:$0x1] %v2622
        %v2624 = vld [vmem:[%s2485 + $0xd8] sm:$0xf]
        %v2625 = vsel %vm2012, %v2355, %v2624
        %2626 = vst [vmem:[%s2485 + $0xd8] sm:$0xf] %v2625
        %v2627 = vld [vmem:[%s2485 + $0xdc] sm:$0x1]
        %v2628 = vsel %vm1889, %v2356, %v2627
        %2629 = vst [vmem:[%s2485 + $0xdc] sm:$0x1] %v2628
        %v2630 = vld [vmem:[%s2485 + $0xf0] sm:$0xf]
        %v2631 = vsel %vm2012, %v2363, %v2630
        %2632 = vst [vmem:[%s2485 + $0xf0] sm:$0xf] %v2631
        %v2633 = vld [vmem:[%s2485 + $0xf4] sm:$0x1]
        %v2634 = vsel %vm1889, %v2364, %v2633
        %2635 = vst [vmem:[%s2485 + $0xf4] sm:$0x1] %v2634
        %v2636 = vld [vmem:[%s2485 + $0xf8] sm:$0xf]
        %v2637 = vsel %vm2012, %v2371, %v2636
        %2638 = vst [vmem:[%s2485 + $0xf8] sm:$0xf] %v2637
        %v2639 = vld [vmem:[%s2485 + $0xfc] sm:$0x1]
        %v2640 = vsel %vm1889, %v2372, %v2639
        %2641 = vst [vmem:[%s2485 + $0xfc] sm:$0x1] %v2640
        %v2642 = vld [vmem:[%s2485 + $0x100] sm:$0xf]
        %v2643 = vsel %vm2012, %v2379, %v2642
        %2644 = vst [vmem:[%s2485 + $0x100] sm:$0xf] %v2643
        %v2645 = vld [vmem:[%s2485 + $0x104] sm:$0x1]
        %v2646 = vsel %vm1889, %v2380, %v2645
        %2647 = vst [vmem:[%s2485 + $0x104] sm:$0x1] %v2646
        %v2648 = vld [vmem:[%s2485 + $0x108] sm:$0xf]
        %v2649 = vsel %vm2012, %v2387, %v2648
        %2650 = vst [vmem:[%s2485 + $0x108] sm:$0xf] %v2649
        %v2651 = vld [vmem:[%s2485 + $0x10c] sm:$0x1]
        %v2652 = vsel %vm1889, %v2388, %v2651
        %2653 = vst [vmem:[%s2485 + $0x10c] sm:$0x1] %v2652
        %v2654 = vld [vmem:[%s2485 + $0x110] sm:$0xf]
        %v2655 = vsel %vm2012, %v2395, %v2654
        %2656 = vst [vmem:[%s2485 + $0x110] sm:$0xf] %v2655
        %v2657 = vld [vmem:[%s2485 + $0x114] sm:$0x1]
        %v2658 = vsel %vm1889, %v2396, %v2657
        %2659 = vst [vmem:[%s2485 + $0x114] sm:$0x1] %v2658
        %v2660 = vld [vmem:[%s2485 + $0x118] sm:$0xf]
        %v2661 = vsel %vm2012, %v2403, %v2660
        %2662 = vst [vmem:[%s2485 + $0x118] sm:$0xf] %v2661
        %v2663 = vld [vmem:[%s2485 + $0x11c] sm:$0x1]
        %v2664 = vsel %vm1889, %v2404, %v2663
        %2665 = vst [vmem:[%s2485 + $0x11c] sm:$0x1] %v2664
        %v2666 = vld [vmem:[%s2485 + $0x120] sm:$0xf]
        %v2667 = vsel %vm2012, %v2411, %v2666
        %2668 = vst [vmem:[%s2485 + $0x120] sm:$0xf] %v2667
        %v2669 = vld [vmem:[%s2485 + $0x124] sm:$0x1]
        %v2670 = vsel %vm1889, %v2412, %v2669
        %2671 = vst [vmem:[%s2485 + $0x124] sm:$0x1] %v2670
        %v2672 = vld [vmem:[%s2485 + $0x128] sm:$0xf]
        %v2673 = vsel %vm2012, %v2419, %v2672
        %2674 = vst [vmem:[%s2485 + $0x128] sm:$0xf] %v2673
        %v2675 = vld [vmem:[%s2485 + $0x12c] sm:$0x1]
        %v2676 = vsel %vm1889, %v2420, %v2675
        %2677 = vst [vmem:[%s2485 + $0x12c] sm:$0x1] %v2676
        %v2678 = vld [vmem:[#allocation3] sm:$0xf]
        %v2679 = vld [vmem:[#allocation3 + $0x8] sm:$0xf]
        %v2680 = vld [vmem:[#allocation3 + $0x10] sm:$0xf]
        %v2681 = vld [vmem:[#allocation3 + $0x18] sm:$0xf]
        %v2682 = vld [vmem:[#allocation3 + $0x20] sm:$0xf]
        %v2683 = vld [vmem:[#allocation3 + $0x28] sm:$0xf]
        %v2684 = vld [vmem:[#allocation3 + $0x30] sm:$0xf]
        %v2685 = vld [vmem:[#allocation3 + $0x38] sm:$0xf]
        %v2686 = vld [vmem:[#allocation3 + $0x50] sm:$0xf]
        %v2687 = vld [vmem:[#allocation3 + $0x58] sm:$0xf]
        %v2688 = vld [vmem:[#allocation3 + $0x60] sm:$0xf]
        %v2689 = vld [vmem:[#allocation3 + $0x68] sm:$0xf]
        %v2690 = vld [vmem:[#allocation3 + $0x70] sm:$0xf]
        %v2691 = vld [vmem:[#allocation3 + $0x78] sm:$0xf]
        %v2692 = vld [vmem:[#allocation3 + $0x80] sm:$0xf]
        %v2693 = vld [vmem:[#allocation3 + $0x88] sm:$0xf]
        %v2694 = vld [vmem:[#allocation3 + $0xa0] sm:$0xf]
        %v2695 = vld [vmem:[#allocation3 + $0xa8] sm:$0xf]
        %v2696 = vld [vmem:[#allocation3 + $0xb0] sm:$0xf]
        %v2697 = vld [vmem:[#allocation3 + $0xb8] sm:$0xf]
        %v2698 = vld [vmem:[#allocation3 + $0xc0] sm:$0xf]
        %v2699 = vld [vmem:[#allocation3 + $0xc8] sm:$0xf]
        %v2700 = vld [vmem:[#allocation3 + $0xd0] sm:$0xf]
        %v2701 = vld [vmem:[#allocation3 + $0xd8] sm:$0xf]
        %v2702 = vld [vmem:[#allocation3 + $0xf0] sm:$0xf]
        %v2703 = vld [vmem:[#allocation3 + $0xf8] sm:$0xf]
        %v2704 = vld [vmem:[#allocation3 + $0x100] sm:$0xf]
        %v2705 = vld [vmem:[#allocation3 + $0x108] sm:$0xf]
        %v2706 = vld [vmem:[#allocation3 + $0x110] sm:$0xf]
        %v2707 = vld [vmem:[#allocation3 + $0x118] sm:$0xf]
        %v2708 = vld [vmem:[#allocation3 + $0x120] sm:$0xf]
        %v2709 = vld [vmem:[#allocation3 + $0x128] sm:$0xf]
        %v2710 = vld [vmem:[#allocation12] sm:$0xf]
        %v2711 = vld [vmem:[#allocation12 + $0x4] sm:$0xf]
        %v2712 = vld [vmem:[#allocation12 + $0x8] sm:$0xf]
        %v2713 = vld [vmem:[#allocation12 + $0xc] sm:$0xf]
        %v2714 = vld [vmem:[#allocation12 + $0x10] sm:$0xf]
        %v2715 = vld [vmem:[#allocation12 + $0x14] sm:$0xf]
        %v2716 = vld [vmem:[#allocation12 + $0x18] sm:$0xf]
        %v2717 = vld [vmem:[#allocation12 + $0x1c] sm:$0xf]
        %v2718 = vld [vmem:[#allocation12 + $0x20] sm:$0xf]
        %v2719 = vld [vmem:[#allocation12 + $0x24] sm:$0xf]
        %v2720 = vld [vmem:[#allocation12 + $0x28] sm:$0xf]
        %v2721 = vld [vmem:[#allocation12 + $0x2c] sm:$0xf]
        %v2722 = vld [vmem:[#allocation12 + $0x30] sm:$0xf]
        %v2723 = vld [vmem:[#allocation12 + $0x34] sm:$0xf]
        %v2724 = vld [vmem:[#allocation12 + $0x38] sm:$0xf]
        %v2725 = vld [vmem:[#allocation12 + $0x3c] sm:$0xf]
        %v2726 = vld [vmem:[#allocation3 + $0x4] sm:$0x1]
        %v2727 = vld [vmem:[#allocation3 + $0xc] sm:$0x1]
        %v2728 = vld [vmem:[#allocation3 + $0x14] sm:$0x1]
        %v2729 = vld [vmem:[#allocation3 + $0x1c] sm:$0x1]
        %v2730 = vld [vmem:[#allocation3 + $0x24] sm:$0x1]
        %v2731 = vld [vmem:[#allocation3 + $0x2c] sm:$0x1]
        %v2732 = vld [vmem:[#allocation3 + $0x34] sm:$0x1]
        %v2733 = vld [vmem:[#allocation3 + $0x3c] sm:$0x1]
        %v2734 = vld [vmem:[#allocation3 + $0x54] sm:$0x1]
        %v2735 = vld [vmem:[#allocation3 + $0x5c] sm:$0x1]
        %v2736 = vld [vmem:[#allocation3 + $0x64] sm:$0x1]
        %v2737 = vld [vmem:[#allocation3 + $0x6c] sm:$0x1]
        %v2738 = vld [vmem:[#allocation3 + $0x74] sm:$0x1]
        %v2739 = vld [vmem:[#allocation3 + $0x7c] sm:$0x1]
        %v2740 = vld [vmem:[#allocation3 + $0x84] sm:$0x1]
        %v2741 = vld [vmem:[#allocation3 + $0x8c] sm:$0x1]
        %v2742 = vld [vmem:[#allocation3 + $0xa4] sm:$0x1]
        %v2743 = vld [vmem:[#allocation3 + $0xac] sm:$0x1]
        %v2744 = vld [vmem:[#allocation3 + $0xb4] sm:$0x1]
        %v2745 = vld [vmem:[#allocation3 + $0xbc] sm:$0x1]
        %v2746 = vld [vmem:[#allocation3 + $0xc4] sm:$0x1]
        %v2747 = vld [vmem:[#allocation3 + $0xcc] sm:$0x1]
        %v2748 = vld [vmem:[#allocation3 + $0xd4] sm:$0x1]
        %v2749 = vld [vmem:[#allocation3 + $0xdc] sm:$0x1]
        %v2750 = vld [vmem:[#allocation3 + $0xf4] sm:$0x1]
        %v2751 = vld [vmem:[#allocation3 + $0xfc] sm:$0x1]
        %v2752 = vld [vmem:[#allocation3 + $0x104] sm:$0x1]
        %v2753 = vld [vmem:[#allocation3 + $0x10c] sm:$0x1]
        %v2754 = vld [vmem:[#allocation3 + $0x114] sm:$0x1]
        %v2755 = vld [vmem:[#allocation3 + $0x11c] sm:$0x1]
        %v2756 = vld [vmem:[#allocation3 + $0x124] sm:$0x1]
        %v2757 = vld [vmem:[#allocation3 + $0x12c] sm:$0x1]
        %vm2758 = vsmask.f32 3328
        %vm2759 = vsmask.f32 7440
        %vm2760 = vmor %vm2758, %vm2759
        %v2762 = vshrl.u32 %v2678, 16
        %v2764 = vrot.slane %v2762, 4
        %v2765 = vshll.u32 %v2678, 16
        %v2767 = vrot.slane %v2765, 5
        %v2768 = vor.u32 %v2764, %v2767
        %v2769 = vrot.slane %v2768, 4
        %v2771 = vshll.u32 %v2726, 16
        %v2773 = vrot.slane %v2771, 5
        %v2774 = vsel %vm2760, %v2769, %v2773
        %v2776 = vshrl.u32 %v2679, 16
        %v2778 = vrot.slane %v2776, 4
        %v2779 = vshll.u32 %v2679, 16
        %v2781 = vrot.slane %v2779, 5
        %v2782 = vor.u32 %v2778, %v2781
        %v2783 = vrot.slane %v2782, 4
        %v2785 = vshll.u32 %v2727, 16
        %v2787 = vrot.slane %v2785, 5
        %v2788 = vsel %vm2760, %v2783, %v2787
        %v2790 = vshrl.u32 %v2680, 16
        %v2792 = vrot.slane %v2790, 4
        %v2793 = vshll.u32 %v2680, 16
        %v2795 = vrot.slane %v2793, 5
        %v2796 = vor.u32 %v2792, %v2795
        %v2797 = vrot.slane %v2796, 4
        %v2799 = vshll.u32 %v2728, 16
        %v2801 = vrot.slane %v2799, 5
        %v2802 = vsel %vm2760, %v2797, %v2801
        %v2804 = vshrl.u32 %v2681, 16
        %v2806 = vrot.slane %v2804, 4
        %v2807 = vshll.u32 %v2681, 16
        %v2809 = vrot.slane %v2807, 5
        %v2810 = vor.u32 %v2806, %v2809
        %v2811 = vrot.slane %v2810, 4
        %v2813 = vshll.u32 %v2729, 16
        %v2815 = vrot.slane %v2813, 5
        %v2816 = vsel %vm2760, %v2811, %v2815
        %v2818 = vshrl.u32 %v2682, 16
        %v2820 = vrot.slane %v2818, 4
        %v2821 = vshll.u32 %v2682, 16
        %v2823 = vrot.slane %v2821, 5
        %v2824 = vor.u32 %v2820, %v2823
        %v2825 = vrot.slane %v2824, 4
        %v2827 = vshll.u32 %v2730, 16
        %v2829 = vrot.slane %v2827, 5
        %v2830 = vsel %vm2760, %v2825, %v2829
        %v2832 = vshrl.u32 %v2683, 16
        %v2834 = vrot.slane %v2832, 4
        %v2835 = vshll.u32 %v2683, 16
        %v2837 = vrot.slane %v2835, 5
        %v2838 = vor.u32 %v2834, %v2837
        %v2839 = vrot.slane %v2838, 4
        %v2841 = vshll.u32 %v2731, 16
        %v2843 = vrot.slane %v2841, 5
        %v2844 = vsel %vm2760, %v2839, %v2843
        %v2846 = vshrl.u32 %v2684, 16
        %v2848 = vrot.slane %v2846, 4
        %v2849 = vshll.u32 %v2684, 16
        %v2851 = vrot.slane %v2849, 5
        %v2852 = vor.u32 %v2848, %v2851
        %v2853 = vrot.slane %v2852, 4
        %v2855 = vshll.u32 %v2732, 16
        %v2857 = vrot.slane %v2855, 5
        %v2858 = vsel %vm2760, %v2853, %v2857
        %v2860 = vshrl.u32 %v2685, 16
        %v2862 = vrot.slane %v2860, 4
        %v2863 = vshll.u32 %v2685, 16
        %v2865 = vrot.slane %v2863, 5
        %v2866 = vor.u32 %v2862, %v2865
        %v2867 = vrot.slane %v2866, 4
        %v2869 = vshll.u32 %v2733, 16
        %v2871 = vrot.slane %v2869, 5
        %v2872 = vsel %vm2760, %v2867, %v2871
        %v2874 = vshrl.u32 %v2686, 16
        %v2876 = vrot.slane %v2874, 4
        %v2877 = vshll.u32 %v2686, 16
        %v2879 = vrot.slane %v2877, 5
        %v2880 = vor.u32 %v2876, %v2879
        %v2881 = vrot.slane %v2880, 4
        %v2883 = vshll.u32 %v2734, 16
        %v2885 = vrot.slane %v2883, 5
        %v2886 = vsel %vm2760, %v2881, %v2885
        %v2888 = vshrl.u32 %v2687, 16
        %v2890 = vrot.slane %v2888, 4
        %v2891 = vshll.u32 %v2687, 16
        %v2893 = vrot.slane %v2891, 5
        %v2894 = vor.u32 %v2890, %v2893
        %v2895 = vrot.slane %v2894, 4
        %v2897 = vshll.u32 %v2735, 16
        %v2899 = vrot.slane %v2897, 5
        %v2900 = vsel %vm2760, %v2895, %v2899
        %v2902 = vshrl.u32 %v2688, 16
        %v2904 = vrot.slane %v2902, 4
        %v2905 = vshll.u32 %v2688, 16
        %v2907 = vrot.slane %v2905, 5
        %v2908 = vor.u32 %v2904, %v2907
        %v2909 = vrot.slane %v2908, 4
        %v2911 = vshll.u32 %v2736, 16
        %v2913 = vrot.slane %v2911, 5
        %v2914 = vsel %vm2760, %v2909, %v2913
        %v2916 = vshrl.u32 %v2689, 16
        %v2918 = vrot.slane %v2916, 4
        %v2919 = vshll.u32 %v2689, 16
        %v2921 = vrot.slane %v2919, 5
        %v2922 = vor.u32 %v2918, %v2921
        %v2923 = vrot.slane %v2922, 4
        %v2925 = vshll.u32 %v2737, 16
        %v2927 = vrot.slane %v2925, 5
        %v2928 = vsel %vm2760, %v2923, %v2927
        %v2930 = vshrl.u32 %v2690, 16
        %v2932 = vrot.slane %v2930, 4
        %v2933 = vshll.u32 %v2690, 16
        %v2935 = vrot.slane %v2933, 5
        %v2936 = vor.u32 %v2932, %v2935
        %v2937 = vrot.slane %v2936, 4
        %v2939 = vshll.u32 %v2738, 16
        %v2941 = vrot.slane %v2939, 5
        %v2942 = vsel %vm2760, %v2937, %v2941
        %v2944 = vshrl.u32 %v2691, 16
        %v2946 = vrot.slane %v2944, 4
        %v2947 = vshll.u32 %v2691, 16
        %v2949 = vrot.slane %v2947, 5
        %v2950 = vor.u32 %v2946, %v2949
        %v2951 = vrot.slane %v2950, 4
        %v2953 = vshll.u32 %v2739, 16
        %v2955 = vrot.slane %v2953, 5
        %v2956 = vsel %vm2760, %v2951, %v2955
        %v2958 = vshrl.u32 %v2692, 16
        %v2960 = vrot.slane %v2958, 4
        %v2961 = vshll.u32 %v2692, 16
        %v2963 = vrot.slane %v2961, 5
        %v2964 = vor.u32 %v2960, %v2963
        %v2965 = vrot.slane %v2964, 4
        %v2967 = vshll.u32 %v2740, 16
        %v2969 = vrot.slane %v2967, 5
        %v2970 = vsel %vm2760, %v2965, %v2969
        %v2972 = vshrl.u32 %v2693, 16
        %v2974 = vrot.slane %v2972, 4
        %v2975 = vshll.u32 %v2693, 16
        %v2977 = vrot.slane %v2975, 5
        %v2978 = vor.u32 %v2974, %v2977
        %v2979 = vrot.slane %v2978, 4
        %v2981 = vshll.u32 %v2741, 16
        %v2983 = vrot.slane %v2981, 5
        %v2984 = vsel %vm2760, %v2979, %v2983
        %v2986 = vshrl.u32 %v2694, 16
        %v2988 = vrot.slane %v2986, 4
        %v2989 = vshll.u32 %v2694, 16
        %v2991 = vrot.slane %v2989, 5
        %v2992 = vor.u32 %v2988, %v2991
        %v2993 = vrot.slane %v2992, 4
        %v2995 = vshll.u32 %v2742, 16
        %v2997 = vrot.slane %v2995, 5
        %v2998 = vsel %vm2760, %v2993, %v2997
        %v3000 = vshrl.u32 %v2695, 16
        %v3002 = vrot.slane %v3000, 4
        %v3003 = vshll.u32 %v2695, 16
        %v3005 = vrot.slane %v3003, 5
        %v3006 = vor.u32 %v3002, %v3005
        %v3007 = vrot.slane %v3006, 4
        %v3009 = vshll.u32 %v2743, 16
        %v3011 = vrot.slane %v3009, 5
        %v3012 = vsel %vm2760, %v3007, %v3011
        %v3014 = vshrl.u32 %v2696, 16
        %v3016 = vrot.slane %v3014, 4
        %v3017 = vshll.u32 %v2696, 16
        %v3019 = vrot.slane %v3017, 5
        %v3020 = vor.u32 %v3016, %v3019
        %v3021 = vrot.slane %v3020, 4
        %v3023 = vshll.u32 %v2744, 16
        %v3025 = vrot.slane %v3023, 5
        %v3026 = vsel %vm2760, %v3021, %v3025
        %v3028 = vshrl.u32 %v2697, 16
        %v3030 = vrot.slane %v3028, 4
        %v3031 = vshll.u32 %v2697, 16
        %v3033 = vrot.slane %v3031, 5
        %v3034 = vor.u32 %v3030, %v3033
        %v3035 = vrot.slane %v3034, 4
        %v3037 = vshll.u32 %v2745, 16
        %v3039 = vrot.slane %v3037, 5
        %v3040 = vsel %vm2760, %v3035, %v3039
        %v3042 = vshrl.u32 %v2698, 16
        %v3044 = vrot.slane %v3042, 4
        %v3045 = vshll.u32 %v2698, 16
        %v3047 = vrot.slane %v3045, 5
        %v3048 = vor.u32 %v3044, %v3047
        %v3049 = vrot.slane %v3048, 4
        %v3051 = vshll.u32 %v2746, 16
        %v3053 = vrot.slane %v3051, 5
        %v3054 = vsel %vm2760, %v3049, %v3053
        %v3056 = vshrl.u32 %v2699, 16
        %v3058 = vrot.slane %v3056, 4
        %v3059 = vshll.u32 %v2699, 16
        %v3061 = vrot.slane %v3059, 5
        %v3062 = vor.u32 %v3058, %v3061
        %v3063 = vrot.slane %v3062, 4
        %v3065 = vshll.u32 %v2747, 16
        %v3067 = vrot.slane %v3065, 5
        %v3068 = vsel %vm2760, %v3063, %v3067
        %v3070 = vshrl.u32 %v2700, 16
        %v3072 = vrot.slane %v3070, 4
        %v3073 = vshll.u32 %v2700, 16
        %v3075 = vrot.slane %v3073, 5
        %v3076 = vor.u32 %v3072, %v3075
        %v3077 = vrot.slane %v3076, 4
        %v3079 = vshll.u32 %v2748, 16
        %v3081 = vrot.slane %v3079, 5
        %v3082 = vsel %vm2760, %v3077, %v3081
        %v3084 = vshrl.u32 %v2701, 16
        %v3086 = vrot.slane %v3084, 4
        %v3087 = vshll.u32 %v2701, 16
        %v3089 = vrot.slane %v3087, 5
        %v3090 = vor.u32 %v3086, %v3089
        %v3091 = vrot.slane %v3090, 4
        %v3093 = vshll.u32 %v2749, 16
        %v3095 = vrot.slane %v3093, 5
        %v3096 = vsel %vm2760, %v3091, %v3095
        %v3098 = vshrl.u32 %v2702, 16
        %v3100 = vrot.slane %v3098, 4
        %v3101 = vshll.u32 %v2702, 16
        %v3103 = vrot.slane %v3101, 5
        %v3104 = vor.u32 %v3100, %v3103
        %v3105 = vrot.slane %v3104, 4
        %v3107 = vshll.u32 %v2750, 16
        %v3109 = vrot.slane %v3107, 5
        %v3110 = vsel %vm2760, %v3105, %v3109
        %v3112 = vshrl.u32 %v2703, 16
        %v3114 = vrot.slane %v3112, 4
        %v3115 = vshll.u32 %v2703, 16
        %v3117 = vrot.slane %v3115, 5
        %v3118 = vor.u32 %v3114, %v3117
        %v3119 = vrot.slane %v3118, 4
        %v3121 = vshll.u32 %v2751, 16
        %v3123 = vrot.slane %v3121, 5
        %v3124 = vsel %vm2760, %v3119, %v3123
        %v3126 = vshrl.u32 %v2704, 16
        %v3128 = vrot.slane %v3126, 4
        %v3129 = vshll.u32 %v2704, 16
        %v3131 = vrot.slane %v3129, 5
        %v3132 = vor.u32 %v3128, %v3131
        %v3133 = vrot.slane %v3132, 4
        %v3135 = vshll.u32 %v2752, 16
        %v3137 = vrot.slane %v3135, 5
        %v3138 = vsel %vm2760, %v3133, %v3137
        %v3140 = vshrl.u32 %v2705, 16
        %v3142 = vrot.slane %v3140, 4
        %v3143 = vshll.u32 %v2705, 16
        %v3145 = vrot.slane %v3143, 5
        %v3146 = vor.u32 %v3142, %v3145
        %v3147 = vrot.slane %v3146, 4
        %v3149 = vshll.u32 %v2753, 16
        %v3151 = vrot.slane %v3149, 5
        %v3152 = vsel %vm2760, %v3147, %v3151
        %v3154 = vshrl.u32 %v2706, 16
        %v3156 = vrot.slane %v3154, 4
        %v3157 = vshll.u32 %v2706, 16
        %v3159 = vrot.slane %v3157, 5
        %v3160 = vor.u32 %v3156, %v3159
        %v3161 = vrot.slane %v3160, 4
        %v3163 = vshll.u32 %v2754, 16
        %v3165 = vrot.slane %v3163, 5
        %v3166 = vsel %vm2760, %v3161, %v3165
        %v3168 = vshrl.u32 %v2707, 16
        %v3170 = vrot.slane %v3168, 4
        %v3171 = vshll.u32 %v2707, 16
        %v3173 = vrot.slane %v3171, 5
        %v3174 = vor.u32 %v3170, %v3173
        %v3175 = vrot.slane %v3174, 4
        %v3177 = vshll.u32 %v2755, 16
        %v3179 = vrot.slane %v3177, 5
        %v3180 = vsel %vm2760, %v3175, %v3179
        %v3182 = vshrl.u32 %v2708, 16
        %v3184 = vrot.slane %v3182, 4
        %v3185 = vshll.u32 %v2708, 16
        %v3187 = vrot.slane %v3185, 5
        %v3188 = vor.u32 %v3184, %v3187
        %v3189 = vrot.slane %v3188, 4
        %v3191 = vshll.u32 %v2756, 16
        %v3193 = vrot.slane %v3191, 5
        %v3194 = vsel %vm2760, %v3189, %v3193
        %v3196 = vshrl.u32 %v2709, 16
        %v3198 = vrot.slane %v3196, 4
        %v3199 = vshll.u32 %v2709, 16
        %v3201 = vrot.slane %v3199, 5
        %v3202 = vor.u32 %v3198, %v3201
        %v3203 = vrot.slane %v3202, 4
        %v3205 = vshll.u32 %v2757, 16
        %v3207 = vrot.slane %v3205, 5
        %v3208 = vsel %vm2760, %v3203, %v3207
        %s3209 = scalar_lea.vmem [#allocation12], 64
        %v3210 = vld [vmem:[%s3209] sm:$0xf]
        %v3211 = vld [vmem:[%s3209 + $0x4] sm:$0xf]
        %v3212 = vld [vmem:[%s3209 + $0x8] sm:$0xf]
        %v3213 = vld [vmem:[%s3209 + $0xc] sm:$0xf]
        %v3214 = vld [vmem:[%s3209 + $0x10] sm:$0xf]
        %v3215 = vld [vmem:[%s3209 + $0x14] sm:$0xf]
        %v3216 = vld [vmem:[%s3209 + $0x18] sm:$0xf]
        %v3217 = vld [vmem:[%s3209 + $0x1c] sm:$0xf]
        %v3218 = vld [vmem:[%s3209 + $0x20] sm:$0xf]
        %v3219 = vld [vmem:[%s3209 + $0x24] sm:$0xf]
        %v3220 = vld [vmem:[%s3209 + $0x28] sm:$0xf]
        %v3221 = vld [vmem:[%s3209 + $0x2c] sm:$0xf]
        %v3222 = vld [vmem:[%s3209 + $0x30] sm:$0xf]
        %v3223 = vld [vmem:[%s3209 + $0x34] sm:$0xf]
        %v3224 = vld [vmem:[%s3209 + $0x38] sm:$0xf]
        %v3225 = vld [vmem:[%s3209 + $0x3c] sm:$0xf]
        %v3226 = vunpack.c.l.b16 %v2774
        %v3227 = vunpack.c.l.b16 %v2788
        %v3228 = vunpack.c.l.b16 %v2802
        %v3229 = vunpack.c.l.b16 %v2816
        %v3230 = vunpack.c.l.b16 %v2830
        %v3231 = vunpack.c.l.b16 %v2844
        %v3232 = vunpack.c.l.b16 %v2858
        %v3233 = vunpack.c.l.b16 %v2872
        %v3234 = vunpack.c.l.b16 %v2886
        %v3235 = vunpack.c.l.b16 %v2900
        %v3236 = vunpack.c.l.b16 %v2914
        %v3237 = vunpack.c.l.b16 %v2928
        %v3238 = vunpack.c.l.b16 %v2942
        %v3239 = vunpack.c.l.b16 %v2956
        %v3240 = vunpack.c.l.b16 %v2970
        %v3241 = vunpack.c.l.b16 %v2984
        %v3242 = vunpack.c.l.b16 %v2998
        %v3243 = vunpack.c.l.b16 %v3012
        %v3244 = vunpack.c.l.b16 %v3026
        %v3245 = vunpack.c.l.b16 %v3040
        %v3246 = vunpack.c.l.b16 %v3054
        %v3247 = vunpack.c.l.b16 %v3068
        %v3248 = vunpack.c.l.b16 %v3082
        %v3249 = vunpack.c.l.b16 %v3096
        %v3250 = vunpack.c.l.b16 %v3110
        %v3251 = vunpack.c.l.b16 %v3124
        %v3252 = vunpack.c.l.b16 %v3138
        %v3253 = vunpack.c.l.b16 %v3152
        %v3254 = vunpack.c.l.b16 %v3166
        %v3255 = vunpack.c.l.b16 %v3180
        %v3256 = vunpack.c.l.b16 %v3194
        %v3257 = vunpack.c.l.b16 %v3208
        %v3258 = vpack.c.b16 %v3227, %v3226
        %v3259 = vpack.c.b16 %v3229, %v3228
        %v3260 = vpack.c.b16 %v3231, %v3230
        %v3261 = vpack.c.b16 %v3233, %v3232
        %v3262 = vpack.c.b16 %v3235, %v3234
        %v3263 = vpack.c.b16 %v3237, %v3236
        %v3264 = vpack.c.b16 %v3239, %v3238
        %v3265 = vpack.c.b16 %v3241, %v3240
        %v3266 = vpack.c.b16 %v3243, %v3242
        %v3267 = vpack.c.b16 %v3245, %v3244
        %v3268 = vpack.c.b16 %v3247, %v3246
        %v3269 = vpack.c.b16 %v3249, %v3248
        %v3270 = vpack.c.b16 %v3251, %v3250
        %v3271 = vpack.c.b16 %v3253, %v3252
        %v3272 = vpack.c.b16 %v3255, %v3254
        %v3273 = vpack.c.b16 %v3257, %v3256
        %v3306 = vunpack.c.l.b16 %v3210
        %v3307 = vunpack.c.l.b16 %v3211
        %v3308 = vunpack.c.l.b16 %v3212
        %v3309 = vunpack.c.l.b16 %v3213
        %v3310 = vunpack.c.l.b16 %v3214
        %v3311 = vunpack.c.l.b16 %v3215
        %v3312 = vunpack.c.l.b16 %v3216
        %v3313 = vunpack.c.l.b16 %v3217
        %v3314 = vunpack.c.l.b16 %v3218
        %v3315 = vunpack.c.l.b16 %v3219
        %v3316 = vunpack.c.l.b16 %v3220
        %v3317 = vunpack.c.l.b16 %v3221
        %v3318 = vunpack.c.l.b16 %v3222
        %v3319 = vunpack.c.l.b16 %v3223
        %v3320 = vunpack.c.l.b16 %v3224
        %v3321 = vunpack.c.l.b16 %v3225
        %v3322 = vpack.c.b16 %v3307, %v3306
        %v3323 = vpack.c.b16 %v3309, %v3308
        %v3324 = vpack.c.b16 %v3311, %v3310
        %v3325 = vpack.c.b16 %v3313, %v3312
        %v3326 = vpack.c.b16 %v3315, %v3314
        %v3327 = vpack.c.b16 %v3317, %v3316
        %v3328 = vpack.c.b16 %v3319, %v3318
        %v3329 = vpack.c.b16 %v3321, %v3320
        %3338 = vmatpush.bf16.msra.mxu0 %v3329
        %3339 = vmatpush.bf16.msra.mxu0 %v3328
        %3340 = vmatpush.bf16.msra.mxu0 %v3327
        %3341 = vmatpush.bf16.msra.mxu0 %v3326
        %3342 = vmatpush.bf16.msra.mxu0 %v3325
        %3343 = vmatpush.bf16.msra.mxu0 %v3324
        %3344 = vmatpush.bf16.msra.mxu0 %v3323
        %3345 = vmatpush.bf16.msra.mxu0 %v3322
        %3346 = vmatmul.bf16.gmra.mxu0 %v3258
        %v3347 = vpop.f32.mrf.mxu0
        %v3348 = vadd.f32 0.0, %v3347
        %v3349 = vpop.f32.mrf.mxu0
        %v3350 = vadd.f32 0.0, %v3349
        %3351 = vmatmul.bf16.gmra.mxu0 %v3259
        %v3352 = vpop.f32.mrf.mxu0
        %v3353 = vadd.f32 0.0, %v3352
        %v3354 = vpop.f32.mrf.mxu0
        %v3355 = vadd.f32 0.0, %v3354
        %3356 = vmatmul.bf16.gmra.mxu0 %v3260
        %v3357 = vpop.f32.mrf.mxu0
        %v3358 = vadd.f32 0.0, %v3357
        %v3359 = vpop.f32.mrf.mxu0
        %v3360 = vadd.f32 0.0, %v3359
        %3361 = vmatmul.bf16.gmra.mxu0 %v3261
        %v3362 = vpop.f32.mrf.mxu0
        %v3363 = vadd.f32 0.0, %v3362
        %v3364 = vpop.f32.mrf.mxu0
        %v3365 = vadd.f32 0.0, %v3364
        %3366 = vmatmul.bf16.gmra.mxu0 %v3262
        %v3367 = vpop.f32.mrf.mxu0
        %v3368 = vadd.f32 0.0, %v3367
        %v3369 = vpop.f32.mrf.mxu0
        %v3370 = vadd.f32 0.0, %v3369
        %3371 = vmatmul.bf16.gmra.mxu0 %v3263
        %v3372 = vpop.f32.mrf.mxu0
        %v3373 = vadd.f32 0.0, %v3372
        %v3374 = vpop.f32.mrf.mxu0
        %v3375 = vadd.f32 0.0, %v3374
        %3376 = vmatmul.bf16.gmra.mxu0 %v3264
        %v3377 = vpop.f32.mrf.mxu0
        %v3378 = vadd.f32 0.0, %v3377
        %v3379 = vpop.f32.mrf.mxu0
        %v3380 = vadd.f32 0.0, %v3379
        %3381 = vmatmul.bf16.gmra.mxu0 %v3265
        %v3382 = vpop.f32.mrf.mxu0
        %v3383 = vadd.f32 0.0, %v3382
        %v3384 = vpop.f32.mrf.mxu0
        %v3385 = vadd.f32 0.0, %v3384
        %3386 = vmatmul.bf16.gmra.mxu0 %v3266
        %v3387 = vpop.f32.mrf.mxu0
        %v3388 = vadd.f32 0.0, %v3387
        %v3389 = vpop.f32.mrf.mxu0
        %v3390 = vadd.f32 0.0, %v3389
        %3391 = vmatmul.bf16.gmra.mxu0 %v3267
        %v3392 = vpop.f32.mrf.mxu0
        %v3393 = vadd.f32 0.0, %v3392
        %v3394 = vpop.f32.mrf.mxu0
        %v3395 = vadd.f32 0.0, %v3394
        %3396 = vmatmul.bf16.gmra.mxu0 %v3268
        %v3397 = vpop.f32.mrf.mxu0
        %v3398 = vadd.f32 0.0, %v3397
        %v3399 = vpop.f32.mrf.mxu0
        %v3400 = vadd.f32 0.0, %v3399
        %3401 = vmatmul.bf16.gmra.mxu0 %v3269
        %v3402 = vpop.f32.mrf.mxu0
        %v3403 = vadd.f32 0.0, %v3402
        %v3404 = vpop.f32.mrf.mxu0
        %v3405 = vadd.f32 0.0, %v3404
        %3406 = vmatmul.bf16.gmra.mxu0 %v3270
        %v3407 = vpop.f32.mrf.mxu0
        %v3408 = vadd.f32 0.0, %v3407
        %v3409 = vpop.f32.mrf.mxu0
        %v3410 = vadd.f32 0.0, %v3409
        %3411 = vmatmul.bf16.gmra.mxu0 %v3271
        %v3412 = vpop.f32.mrf.mxu0
        %v3413 = vadd.f32 0.0, %v3412
        %v3414 = vpop.f32.mrf.mxu0
        %v3415 = vadd.f32 0.0, %v3414
        %3416 = vmatmul.bf16.gmra.mxu0 %v3272
        %v3417 = vpop.f32.mrf.mxu0
        %v3418 = vadd.f32 0.0, %v3417
        %v3419 = vpop.f32.mrf.mxu0
        %v3420 = vadd.f32 0.0, %v3419
        %3421 = vmatmul.bf16.gmra.mxu0 %v3273
        %v3422 = vpop.f32.mrf.mxu0
        %v3423 = vadd.f32 0.0, %v3422
        %v3424 = vpop.f32.mrf.mxu0
        %v3425 = vadd.f32 0.0, %v3424
        %3426 = vdwg.mxu0
        %v3459 = vunpack.c.l.b16 %v2678
        %v3460 = vunpack.c.l.b16 %v2679
        %v3461 = vunpack.c.l.b16 %v2680
        %v3462 = vunpack.c.l.b16 %v2681
        %v3463 = vunpack.c.l.b16 %v2682
        %v3464 = vunpack.c.l.b16 %v2683
        %v3465 = vunpack.c.l.b16 %v2684
        %v3466 = vunpack.c.l.b16 %v2685
        %v3467 = vunpack.c.l.b16 %v2686
        %v3468 = vunpack.c.l.b16 %v2687
        %v3469 = vunpack.c.l.b16 %v2688
        %v3470 = vunpack.c.l.b16 %v2689
        %v3471 = vunpack.c.l.b16 %v2690
        %v3472 = vunpack.c.l.b16 %v2691
        %v3473 = vunpack.c.l.b16 %v2692
        %v3474 = vunpack.c.l.b16 %v2693
        %v3475 = vunpack.c.l.b16 %v2694
        %v3476 = vunpack.c.l.b16 %v2695
        %v3477 = vunpack.c.l.b16 %v2696
        %v3478 = vunpack.c.l.b16 %v2697
        %v3479 = vunpack.c.l.b16 %v2698
        %v3480 = vunpack.c.l.b16 %v2699
        %v3481 = vunpack.c.l.b16 %v2700
        %v3482 = vunpack.c.l.b16 %v2701
        %v3483 = vunpack.c.l.b16 %v2702
        %v3484 = vunpack.c.l.b16 %v2703
        %v3485 = vunpack.c.l.b16 %v2704
        %v3486 = vunpack.c.l.b16 %v2705
        %v3487 = vunpack.c.l.b16 %v2706
        %v3488 = vunpack.c.l.b16 %v2707
        %v3489 = vunpack.c.l.b16 %v2708
        %v3490 = vunpack.c.l.b16 %v2709
        %v3491 = vpack.c.b16 %v3460, %v3459
        %v3492 = vpack.c.b16 %v3462, %v3461
        %v3493 = vpack.c.b16 %v3464, %v3463
        %v3494 = vpack.c.b16 %v3466, %v3465
        %v3495 = vpack.c.b16 %v3468, %v3467
        %v3496 = vpack.c.b16 %v3470, %v3469
        %v3497 = vpack.c.b16 %v3472, %v3471
        %v3498 = vpack.c.b16 %v3474, %v3473
        %v3499 = vpack.c.b16 %v3476, %v3475
        %v3500 = vpack.c.b16 %v3478, %v3477
        %v3501 = vpack.c.b16 %v3480, %v3479
        %v3502 = vpack.c.b16 %v3482, %v3481
        %v3503 = vpack.c.b16 %v3484, %v3483
        %v3504 = vpack.c.b16 %v3486, %v3485
        %v3505 = vpack.c.b16 %v3488, %v3487
        %v3506 = vpack.c.b16 %v3490, %v3489
        %v3539 = vunpack.c.l.b16 %v2710
        %v3540 = vunpack.c.l.b16 %v2711
        %v3541 = vunpack.c.l.b16 %v2712
        %v3542 = vunpack.c.l.b16 %v2713
        %v3543 = vunpack.c.l.b16 %v2714
        %v3544 = vunpack.c.l.b16 %v2715
        %v3545 = vunpack.c.l.b16 %v2716
        %v3546 = vunpack.c.l.b16 %v2717
        %v3547 = vunpack.c.l.b16 %v2718
        %v3548 = vunpack.c.l.b16 %v2719
        %v3549 = vunpack.c.l.b16 %v2720
        %v3550 = vunpack.c.l.b16 %v2721
        %v3551 = vunpack.c.l.b16 %v2722
        %v3552 = vunpack.c.l.b16 %v2723
        %v3553 = vunpack.c.l.b16 %v2724
        %v3554 = vunpack.c.l.b16 %v2725
        %v3555 = vpack.c.b16 %v3540, %v3539
        %v3556 = vpack.c.b16 %v3542, %v3541
        %v3557 = vpack.c.b16 %v3544, %v3543
        %v3558 = vpack.c.b16 %v3546, %v3545
        %v3559 = vpack.c.b16 %v3548, %v3547
        %v3560 = vpack.c.b16 %v3550, %v3549
        %v3561 = vpack.c.b16 %v3552, %v3551
        %v3562 = vpack.c.b16 %v3554, %v3553
        %3571 = vmatpush.bf16.msra.mxu0 %v3562
        %3572 = vmatpush.bf16.msra.mxu0 %v3561
        %3573 = vmatpush.bf16.msra.mxu0 %v3560
        %3574 = vmatpush.bf16.msra.mxu0 %v3559
        %3575 = vmatpush.bf16.msra.mxu0 %v3558
        %3576 = vmatpush.bf16.msra.mxu0 %v3557
        %3577 = vmatpush.bf16.msra.mxu0 %v3556
        %3578 = vmatpush.bf16.msra.mxu0 %v3555
        %3579 = vmatmul.bf16.gmra.mxu0 %v3491
        %v3580 = vpop.f32.mrf.mxu0
        %v3581 = vadd.f32 %v3348, %v3580
        %v3582 = vpop.f32.mrf.mxu0
        %v3583 = vadd.f32 %v3350, %v3582
        %3584 = vmatmul.bf16.gmra.mxu0 %v3492
        %v3585 = vpop.f32.mrf.mxu0
        %v3586 = vadd.f32 %v3353, %v3585
        %v3587 = vpop.f32.mrf.mxu0
        %v3588 = vadd.f32 %v3355, %v3587
        %3589 = vmatmul.bf16.gmra.mxu0 %v3493
        %v3590 = vpop.f32.mrf.mxu0
        %v3591 = vadd.f32 %v3358, %v3590
        %v3592 = vpop.f32.mrf.mxu0
        %v3593 = vadd.f32 %v3360, %v3592
        %3594 = vmatmul.bf16.gmra.mxu0 %v3494
        %v3595 = vpop.f32.mrf.mxu0
        %v3596 = vadd.f32 %v3363, %v3595
        %v3597 = vpop.f32.mrf.mxu0
        %v3598 = vadd.f32 %v3365, %v3597
        %3599 = vmatmul.bf16.gmra.mxu0 %v3495
        %v3600 = vpop.f32.mrf.mxu0
        %v3601 = vadd.f32 %v3368, %v3600
        %v3602 = vpop.f32.mrf.mxu0
        %v3603 = vadd.f32 %v3370, %v3602
        %3604 = vmatmul.bf16.gmra.mxu0 %v3496
        %v3605 = vpop.f32.mrf.mxu0
        %v3606 = vadd.f32 %v3373, %v3605
        %v3607 = vpop.f32.mrf.mxu0
        %v3608 = vadd.f32 %v3375, %v3607
        %3609 = vmatmul.bf16.gmra.mxu0 %v3497
        %v3610 = vpop.f32.mrf.mxu0
        %v3611 = vadd.f32 %v3378, %v3610
        %v3612 = vpop.f32.mrf.mxu0
        %v3613 = vadd.f32 %v3380, %v3612
        %3614 = vmatmul.bf16.gmra.mxu0 %v3498
        %v3615 = vpop.f32.mrf.mxu0
        %v3616 = vadd.f32 %v3383, %v3615
        %v3617 = vpop.f32.mrf.mxu0
        %v3618 = vadd.f32 %v3385, %v3617
        %3619 = vmatmul.bf16.gmra.mxu0 %v3499
        %v3620 = vpop.f32.mrf.mxu0
        %v3621 = vadd.f32 %v3388, %v3620
        %v3622 = vpop.f32.mrf.mxu0
        %v3623 = vadd.f32 %v3390, %v3622
        %3624 = vmatmul.bf16.gmra.mxu0 %v3500
        %v3625 = vpop.f32.mrf.mxu0
        %v3626 = vadd.f32 %v3393, %v3625
        %v3627 = vpop.f32.mrf.mxu0
        %v3628 = vadd.f32 %v3395, %v3627
        %3629 = vmatmul.bf16.gmra.mxu0 %v3501
        %v3630 = vpop.f32.mrf.mxu0
        %v3631 = vadd.f32 %v3398, %v3630
        %v3632 = vpop.f32.mrf.mxu0
        %v3633 = vadd.f32 %v3400, %v3632
        %3634 = vmatmul.bf16.gmra.mxu0 %v3502
        %v3635 = vpop.f32.mrf.mxu0
        %v3636 = vadd.f32 %v3403, %v3635
        %v3637 = vpop.f32.mrf.mxu0
        %v3638 = vadd.f32 %v3405, %v3637
        %3639 = vmatmul.bf16.gmra.mxu0 %v3503
        %v3640 = vpop.f32.mrf.mxu0
        %v3641 = vadd.f32 %v3408, %v3640
        %v3642 = vpop.f32.mrf.mxu0
        %v3643 = vadd.f32 %v3410, %v3642
        %3644 = vmatmul.bf16.gmra.mxu0 %v3504
        %v3645 = vpop.f32.mrf.mxu0
        %v3646 = vadd.f32 %v3413, %v3645
        %v3647 = vpop.f32.mrf.mxu0
        %v3648 = vadd.f32 %v3415, %v3647
        %3649 = vmatmul.bf16.gmra.mxu0 %v3505
        %v3650 = vpop.f32.mrf.mxu0
        %v3651 = vadd.f32 %v3418, %v3650
        %v3652 = vpop.f32.mrf.mxu0
        %v3653 = vadd.f32 %v3420, %v3652
        %3654 = vmatmul.bf16.gmra.mxu0 %v3506
        %v3655 = vpop.f32.mrf.mxu0
        %v3656 = vadd.f32 %v3423, %v3655
        %v3657 = vpop.f32.mrf.mxu0
        %v3658 = vadd.f32 %v3425, %v3657
        %3659 = vdwg.mxu0
        %v3660 = vld [vmem:[#allocation3] sm:$0xe]
        %v3661 = vld [vmem:[#allocation3 + $0x8] sm:$0xe]
        %v3662 = vld [vmem:[#allocation3 + $0x10] sm:$0xe]
        %v3663 = vld [vmem:[#allocation3 + $0x18] sm:$0xe]
        %v3664 = vld [vmem:[#allocation3 + $0x20] sm:$0xe]
        %v3665 = vld [vmem:[#allocation3 + $0x28] sm:$0xe]
        %v3666 = vld [vmem:[#allocation3 + $0x30] sm:$0xe]
        %v3667 = vld [vmem:[#allocation3 + $0x38] sm:$0xe]
        %v3668 = vld [vmem:[#allocation3 + $0x50] sm:$0xe]
        %v3669 = vld [vmem:[#allocation3 + $0x58] sm:$0xe]
        %v3670 = vld [vmem:[#allocation3 + $0x60] sm:$0xe]
        %v3671 = vld [vmem:[#allocation3 + $0x68] sm:$0xe]
        %v3672 = vld [vmem:[#allocation3 + $0x70] sm:$0xe]
        %v3673 = vld [vmem:[#allocation3 + $0x78] sm:$0xe]
        %v3674 = vld [vmem:[#allocation3 + $0x80] sm:$0xe]
        %v3675 = vld [vmem:[#allocation3 + $0x88] sm:$0xe]
        %v3676 = vld [vmem:[#allocation3 + $0xa0] sm:$0xe]
        %v3677 = vld [vmem:[#allocation3 + $0xa8] sm:$0xe]
        %v3678 = vld [vmem:[#allocation3 + $0xb0] sm:$0xe]
        %v3679 = vld [vmem:[#allocation3 + $0xb8] sm:$0xe]
        %v3680 = vld [vmem:[#allocation3 + $0xc0] sm:$0xe]
        %v3681 = vld [vmem:[#allocation3 + $0xc8] sm:$0xe]
        %v3682 = vld [vmem:[#allocation3 + $0xd0] sm:$0xe]
        %v3683 = vld [vmem:[#allocation3 + $0xd8] sm:$0xe]
        %v3684 = vld [vmem:[#allocation3 + $0xf0] sm:$0xe]
        %v3685 = vld [vmem:[#allocation3 + $0xf8] sm:$0xe]
        %v3686 = vld [vmem:[#allocation3 + $0x100] sm:$0xe]
        %v3687 = vld [vmem:[#allocation3 + $0x108] sm:$0xe]
        %v3688 = vld [vmem:[#allocation3 + $0x110] sm:$0xe]
        %v3689 = vld [vmem:[#allocation3 + $0x118] sm:$0xe]
        %v3690 = vld [vmem:[#allocation3 + $0x120] sm:$0xe]
        %v3691 = vld [vmem:[#allocation3 + $0x128] sm:$0xe]
        %vm3756 = vcmask 1042432
        %vm3757 = vcmask 1046532
        %vm3758 = vmor %vm3756, %vm3757
        %v3759 = vrot.slane %v3660, 5
        %v3760 = vrot.slane %v3759, 4
        %v3761 = vrot.slane %v2726, 5
        %v3762 = vsel %vm3758, %v3760, %v3761
        %v3763 = vrot.slane %v3661, 5
        %v3764 = vrot.slane %v3763, 4
        %v3765 = vrot.slane %v2727, 5
        %v3766 = vsel %vm3758, %v3764, %v3765
        %v3767 = vrot.slane %v3662, 5
        %v3768 = vrot.slane %v3767, 4
        %v3769 = vrot.slane %v2728, 5
        %v3770 = vsel %vm3758, %v3768, %v3769
        %v3771 = vrot.slane %v3663, 5
        %v3772 = vrot.slane %v3771, 4
        %v3773 = vrot.slane %v2729, 5
        %v3774 = vsel %vm3758, %v3772, %v3773
        %v3775 = vrot.slane %v3664, 5
        %v3776 = vrot.slane %v3775, 4
        %v3777 = vrot.slane %v2730, 5
        %v3778 = vsel %vm3758, %v3776, %v3777
        %v3779 = vrot.slane %v3665, 5
        %v3780 = vrot.slane %v3779, 4
        %v3781 = vrot.slane %v2731, 5
        %v3782 = vsel %vm3758, %v3780, %v3781
        %v3783 = vrot.slane %v3666, 5
        %v3784 = vrot.slane %v3783, 4
        %v3785 = vrot.slane %v2732, 5
        %v3786 = vsel %vm3758, %v3784, %v3785
        %v3787 = vrot.slane %v3667, 5
        %v3788 = vrot.slane %v3787, 4
        %v3789 = vrot.slane %v2733, 5
        %v3790 = vsel %vm3758, %v3788, %v3789
        %v3791 = vrot.slane %v3668, 5
        %v3792 = vrot.slane %v3791, 4
        %v3793 = vrot.slane %v2734, 5
        %v3794 = vsel %vm3758, %v3792, %v3793
        %v3795 = vrot.slane %v3669, 5
        %v3796 = vrot.slane %v3795, 4
        %v3797 = vrot.slane %v2735, 5
        %v3798 = vsel %vm3758, %v3796, %v3797
        %v3799 = vrot.slane %v3670, 5
        %v3800 = vrot.slane %v3799, 4
        %v3801 = vrot.slane %v2736, 5
        %v3802 = vsel %vm3758, %v3800, %v3801
        %v3803 = vrot.slane %v3671, 5
        %v3804 = vrot.slane %v3803, 4
        %v3805 = vrot.slane %v2737, 5
        %v3806 = vsel %vm3758, %v3804, %v3805
        %v3807 = vrot.slane %v3672, 5
        %v3808 = vrot.slane %v3807, 4
        %v3809 = vrot.slane %v2738, 5
        %v3810 = vsel %vm3758, %v3808, %v3809
        %v3811 = vrot.slane %v3673, 5
        %v3812 = vrot.slane %v3811, 4
        %v3813 = vrot.slane %v2739, 5
        %v3814 = vsel %vm3758, %v3812, %v3813
        %v3815 = vrot.slane %v3674, 5
        %v3816 = vrot.slane %v3815, 4
        %v3817 = vrot.slane %v2740, 5
        %v3818 = vsel %vm3758, %v3816, %v3817
        %v3819 = vrot.slane %v3675, 5
        %v3820 = vrot.slane %v3819, 4
        %v3821 = vrot.slane %v2741, 5
        %v3822 = vsel %vm3758, %v3820, %v3821
        %v3823 = vrot.slane %v3676, 5
        %v3824 = vrot.slane %v3823, 4
        %v3825 = vrot.slane %v2742, 5
        %v3826 = vsel %vm3758, %v3824, %v3825
        %v3827 = vrot.slane %v3677, 5
        %v3828 = vrot.slane %v3827, 4
        %v3829 = vrot.slane %v2743, 5
        %v3830 = vsel %vm3758, %v3828, %v3829
        %v3831 = vrot.slane %v3678, 5
        %v3832 = vrot.slane %v3831, 4
        %v3833 = vrot.slane %v2744, 5
        %v3834 = vsel %vm3758, %v3832, %v3833
        %v3835 = vrot.slane %v3679, 5
        %v3836 = vrot.slane %v3835, 4
        %v3837 = vrot.slane %v2745, 5
        %v3838 = vsel %vm3758, %v3836, %v3837
        %v3839 = vrot.slane %v3680, 5
        %v3840 = vrot.slane %v3839, 4
        %v3841 = vrot.slane %v2746, 5
        %v3842 = vsel %vm3758, %v3840, %v3841
        %v3843 = vrot.slane %v3681, 5
        %v3844 = vrot.slane %v3843, 4
        %v3845 = vrot.slane %v2747, 5
        %v3846 = vsel %vm3758, %v3844, %v3845
        %v3847 = vrot.slane %v3682, 5
        %v3848 = vrot.slane %v3847, 4
        %v3849 = vrot.slane %v2748, 5
        %v3850 = vsel %vm3758, %v3848, %v3849
        %v3851 = vrot.slane %v3683, 5
        %v3852 = vrot.slane %v3851, 4
        %v3853 = vrot.slane %v2749, 5
        %v3854 = vsel %vm3758, %v3852, %v3853
        %v3855 = vrot.slane %v3684, 5
        %v3856 = vrot.slane %v3855, 4
        %v3857 = vrot.slane %v2750, 5
        %v3858 = vsel %vm3758, %v3856, %v3857
        %v3859 = vrot.slane %v3685, 5
        %v3860 = vrot.slane %v3859, 4
        %v3861 = vrot.slane %v2751, 5
        %v3862 = vsel %vm3758, %v3860, %v3861
        %v3863 = vrot.slane %v3686, 5
        %v3864 = vrot.slane %v3863, 4
        %v3865 = vrot.slane %v2752, 5
        %v3866 = vsel %vm3758, %v3864, %v3865
        %v3867 = vrot.slane %v3687, 5
        %v3868 = vrot.slane %v3867, 4
        %v3869 = vrot.slane %v2753, 5
        %v3870 = vsel %vm3758, %v3868, %v3869
        %v3871 = vrot.slane %v3688, 5
        %v3872 = vrot.slane %v3871, 4
        %v3873 = vrot.slane %v2754, 5
        %v3874 = vsel %vm3758, %v3872, %v3873
        %v3875 = vrot.slane %v3689, 5
        %v3876 = vrot.slane %v3875, 4
        %v3877 = vrot.slane %v2755, 5
        %v3878 = vsel %vm3758, %v3876, %v3877
        %v3879 = vrot.slane %v3690, 5
        %v3880 = vrot.slane %v3879, 4
        %v3881 = vrot.slane %v2756, 5
        %v3882 = vsel %vm3758, %v3880, %v3881
        %v3883 = vrot.slane %v3691, 5
        %v3884 = vrot.slane %v3883, 4
        %v3885 = vrot.slane %v2757, 5
        %v3886 = vsel %vm3758, %v3884, %v3885
        %s3887 = scalar_lea.vmem [#allocation12], 128
        %v3888 = vld [vmem:[%s3887] sm:$0xf]
        %v3889 = vld [vmem:[%s3887 + $0x4] sm:$0xf]
        %v3890 = vld [vmem:[%s3887 + $0x8] sm:$0xf]
        %v3891 = vld [vmem:[%s3887 + $0xc] sm:$0xf]
        %v3892 = vld [vmem:[%s3887 + $0x10] sm:$0xf]
        %v3893 = vld [vmem:[%s3887 + $0x14] sm:$0xf]
        %v3894 = vld [vmem:[%s3887 + $0x18] sm:$0xf]
        %v3895 = vld [vmem:[%s3887 + $0x1c] sm:$0xf]
        %v3896 = vld [vmem:[%s3887 + $0x20] sm:$0xf]
        %v3897 = vld [vmem:[%s3887 + $0x24] sm:$0xf]
        %v3898 = vld [vmem:[%s3887 + $0x28] sm:$0xf]
        %v3899 = vld [vmem:[%s3887 + $0x2c] sm:$0xf]
        %v3900 = vld [vmem:[%s3887 + $0x30] sm:$0xf]
        %v3901 = vld [vmem:[%s3887 + $0x34] sm:$0xf]
        %v3902 = vld [vmem:[%s3887 + $0x38] sm:$0xf]
        %v3903 = vld [vmem:[%s3887 + $0x3c] sm:$0xf]
        %v3904 = vunpack.c.l.b16 %v3762
        %v3905 = vunpack.c.l.b16 %v3766
        %v3906 = vunpack.c.l.b16 %v3770
        %v3907 = vunpack.c.l.b16 %v3774
        %v3908 = vunpack.c.l.b16 %v3778
        %v3909 = vunpack.c.l.b16 %v3782
        %v3910 = vunpack.c.l.b16 %v3786
        %v3911 = vunpack.c.l.b16 %v3790
        %v3912 = vunpack.c.l.b16 %v3794
        %v3913 = vunpack.c.l.b16 %v3798
        %v3914 = vunpack.c.l.b16 %v3802
        %v3915 = vunpack.c.l.b16 %v3806
        %v3916 = vunpack.c.l.b16 %v3810
        %v3917 = vunpack.c.l.b16 %v3814
        %v3918 = vunpack.c.l.b16 %v3818
        %v3919 = vunpack.c.l.b16 %v3822
        %v3920 = vunpack.c.l.b16 %v3826
        %v3921 = vunpack.c.l.b16 %v3830
        %v3922 = vunpack.c.l.b16 %v3834
        %v3923 = vunpack.c.l.b16 %v3838
        %v3924 = vunpack.c.l.b16 %v3842
        %v3925 = vunpack.c.l.b16 %v3846
        %v3926 = vunpack.c.l.b16 %v3850
        %v3927 = vunpack.c.l.b16 %v3854
        %v3928 = vunpack.c.l.b16 %v3858
        %v3929 = vunpack.c.l.b16 %v3862
        %v3930 = vunpack.c.l.b16 %v3866
        %v3931 = vunpack.c.l.b16 %v3870
        %v3932 = vunpack.c.l.b16 %v3874
        %v3933 = vunpack.c.l.b16 %v3878
        %v3934 = vunpack.c.l.b16 %v3882
        %v3935 = vunpack.c.l.b16 %v3886
        %v3936 = vpack.c.b16 %v3905, %v3904
        %v3937 = vpack.c.b16 %v3907, %v3906
        %v3938 = vpack.c.b16 %v3909, %v3908
        %v3939 = vpack.c.b16 %v3911, %v3910
        %v3940 = vpack.c.b16 %v3913, %v3912
        %v3941 = vpack.c.b16 %v3915, %v3914
        %v3942 = vpack.c.b16 %v3917, %v3916
        %v3943 = vpack.c.b16 %v3919, %v3918
        %v3944 = vpack.c.b16 %v3921, %v3920
        %v3945 = vpack.c.b16 %v3923, %v3922
        %v3946 = vpack.c.b16 %v3925, %v3924
        %v3947 = vpack.c.b16 %v3927, %v3926
        %v3948 = vpack.c.b16 %v3929, %v3928
        %v3949 = vpack.c.b16 %v3931, %v3930
        %v3950 = vpack.c.b16 %v3933, %v3932
        %v3951 = vpack.c.b16 %v3935, %v3934
        %v3984 = vunpack.c.l.b16 %v3888
        %v3985 = vunpack.c.l.b16 %v3889
        %v3986 = vunpack.c.l.b16 %v3890
        %v3987 = vunpack.c.l.b16 %v3891
        %v3988 = vunpack.c.l.b16 %v3892
        %v3989 = vunpack.c.l.b16 %v3893
        %v3990 = vunpack.c.l.b16 %v3894
        %v3991 = vunpack.c.l.b16 %v3895
        %v3992 = vunpack.c.l.b16 %v3896
        %v3993 = vunpack.c.l.b16 %v3897
        %v3994 = vunpack.c.l.b16 %v3898
        %v3995 = vunpack.c.l.b16 %v3899
        %v3996 = vunpack.c.l.b16 %v3900
        %v3997 = vunpack.c.l.b16 %v3901
        %v3998 = vunpack.c.l.b16 %v3902
        %v3999 = vunpack.c.l.b16 %v3903
        %v4000 = vpack.c.b16 %v3985, %v3984
        %v4001 = vpack.c.b16 %v3987, %v3986
        %v4002 = vpack.c.b16 %v3989, %v3988
        %v4003 = vpack.c.b16 %v3991, %v3990
        %v4004 = vpack.c.b16 %v3993, %v3992
        %v4005 = vpack.c.b16 %v3995, %v3994
        %v4006 = vpack.c.b16 %v3997, %v3996
        %v4007 = vpack.c.b16 %v3999, %v3998
        %4016 = vmatpush.bf16.msra.mxu0 %v4007
        %4017 = vmatpush.bf16.msra.mxu0 %v4006
        %4018 = vmatpush.bf16.msra.mxu0 %v4005
        %4019 = vmatpush.bf16.msra.mxu0 %v4004
        %4020 = vmatpush.bf16.msra.mxu0 %v4003
        %4021 = vmatpush.bf16.msra.mxu0 %v4002
        %4022 = vmatpush.bf16.msra.mxu0 %v4001
        %4023 = vmatpush.bf16.msra.mxu0 %v4000
        %4024 = vmatmul.bf16.gmra.mxu0 %v3936
        %v4025 = vpop.f32.mrf.mxu0
        %v4026 = vadd.f32 0.0, %v4025
        %v4027 = vpop.f32.mrf.mxu0
        %v4028 = vadd.f32 0.0, %v4027
        %4029 = vmatmul.bf16.gmra.mxu0 %v3937
        %v4030 = vpop.f32.mrf.mxu0
        %v4031 = vadd.f32 0.0, %v4030
        %v4032 = vpop.f32.mrf.mxu0
        %v4033 = vadd.f32 0.0, %v4032
        %4034 = vmatmul.bf16.gmra.mxu0 %v3938
        %v4035 = vpop.f32.mrf.mxu0
        %v4036 = vadd.f32 0.0, %v4035
        %v4037 = vpop.f32.mrf.mxu0
        %v4038 = vadd.f32 0.0, %v4037
        %4039 = vmatmul.bf16.gmra.mxu0 %v3939
        %v4040 = vpop.f32.mrf.mxu0
        %v4041 = vadd.f32 0.0, %v4040
        %v4042 = vpop.f32.mrf.mxu0
        %v4043 = vadd.f32 0.0, %v4042
        %4044 = vmatmul.bf16.gmra.mxu0 %v3940
        %v4045 = vpop.f32.mrf.mxu0
        %v4046 = vadd.f32 0.0, %v4045
        %v4047 = vpop.f32.mrf.mxu0
        %v4048 = vadd.f32 0.0, %v4047
        %4049 = vmatmul.bf16.gmra.mxu0 %v3941
        %v4050 = vpop.f32.mrf.mxu0
        %v4051 = vadd.f32 0.0, %v4050
        %v4052 = vpop.f32.mrf.mxu0
        %v4053 = vadd.f32 0.0, %v4052
        %4054 = vmatmul.bf16.gmra.mxu0 %v3942
        %v4055 = vpop.f32.mrf.mxu0
        %v4056 = vadd.f32 0.0, %v4055
        %v4057 = vpop.f32.mrf.mxu0
        %v4058 = vadd.f32 0.0, %v4057
        %4059 = vmatmul.bf16.gmra.mxu0 %v3943
        %v4060 = vpop.f32.mrf.mxu0
        %v4061 = vadd.f32 0.0, %v4060
        %v4062 = vpop.f32.mrf.mxu0
        %v4063 = vadd.f32 0.0, %v4062
        %4064 = vmatmul.bf16.gmra.mxu0 %v3944
        %v4065 = vpop.f32.mrf.mxu0
        %v4066 = vadd.f32 0.0, %v4065
        %v4067 = vpop.f32.mrf.mxu0
        %v4068 = vadd.f32 0.0, %v4067
        %4069 = vmatmul.bf16.gmra.mxu0 %v3945
        %v4070 = vpop.f32.mrf.mxu0
        %v4071 = vadd.f32 0.0, %v4070
        %v4072 = vpop.f32.mrf.mxu0
        %v4073 = vadd.f32 0.0, %v4072
        %4074 = vmatmul.bf16.gmra.mxu0 %v3946
        %v4075 = vpop.f32.mrf.mxu0
        %v4076 = vadd.f32 0.0, %v4075
        %v4077 = vpop.f32.mrf.mxu0
        %v4078 = vadd.f32 0.0, %v4077
        %4079 = vmatmul.bf16.gmra.mxu0 %v3947
        %v4080 = vpop.f32.mrf.mxu0
        %v4081 = vadd.f32 0.0, %v4080
        %v4082 = vpop.f32.mrf.mxu0
        %v4083 = vadd.f32 0.0, %v4082
        %4084 = vmatmul.bf16.gmra.mxu0 %v3948
        %v4085 = vpop.f32.mrf.mxu0
        %v4086 = vadd.f32 0.0, %v4085
        %v4087 = vpop.f32.mrf.mxu0
        %v4088 = vadd.f32 0.0, %v4087
        %4089 = vmatmul.bf16.gmra.mxu0 %v3949
        %v4090 = vpop.f32.mrf.mxu0
        %v4091 = vadd.f32 0.0, %v4090
        %v4092 = vpop.f32.mrf.mxu0
        %v4093 = vadd.f32 0.0, %v4092
        %4094 = vmatmul.bf16.gmra.mxu0 %v3950
        %v4095 = vpop.f32.mrf.mxu0
        %v4096 = vadd.f32 0.0, %v4095
        %v4097 = vpop.f32.mrf.mxu0
        %v4098 = vadd.f32 0.0, %v4097
        %4099 = vmatmul.bf16.gmra.mxu0 %v3951
        %v4100 = vpop.f32.mrf.mxu0
        %v4101 = vadd.f32 0.0, %v4100
        %v4102 = vpop.f32.mrf.mxu0
        %v4103 = vadd.f32 0.0, %v4102
        %4104 = vdwg.mxu0
        %v4105 = vadd.f32 %v3581, %v4026
        %v4106 = vadd.f32 %v3583, %v4028
        %v4107 = vadd.f32 %v3586, %v4031
        %v4108 = vadd.f32 %v3588, %v4033
        %v4109 = vadd.f32 %v3591, %v4036
        %v4110 = vadd.f32 %v3593, %v4038
        %v4111 = vadd.f32 %v3596, %v4041
        %v4112 = vadd.f32 %v3598, %v4043
        %v4113 = vadd.f32 %v3601, %v4046
        %v4114 = vadd.f32 %v3603, %v4048
        %v4115 = vadd.f32 %v3606, %v4051
        %v4116 = vadd.f32 %v3608, %v4053
        %v4117 = vadd.f32 %v3611, %v4056
        %v4118 = vadd.f32 %v3613, %v4058
        %v4119 = vadd.f32 %v3616, %v4061
        %v4120 = vadd.f32 %v3618, %v4063
        %v4121 = vadd.f32 %v3621, %v4066
        %v4122 = vadd.f32 %v3623, %v4068
        %v4123 = vadd.f32 %v3626, %v4071
        %v4124 = vadd.f32 %v3628, %v4073
        %v4125 = vadd.f32 %v3631, %v4076
        %v4126 = vadd.f32 %v3633, %v4078
        %v4127 = vadd.f32 %v3636, %v4081
        %v4128 = vadd.f32 %v3638, %v4083
        %v4129 = vadd.f32 %v3641, %v4086
        %v4130 = vadd.f32 %v3643, %v4088
        %v4131 = vadd.f32 %v3646, %v4091
        %v4132 = vadd.f32 %v3648, %v4093
        %v4133 = vadd.f32 %v3651, %v4096
        %v4134 = vadd.f32 %v3653, %v4098
        %v4135 = vadd.f32 %v3656, %v4101
        %v4136 = vadd.f32 %v3658, %v4103
        %v4137 = vld [vmem:[%s2485] sm:$0xf]
        %v4138 = vld [vmem:[%s2485 + $0x8] sm:$0xf]
        %v4139 = vld [vmem:[%s2485 + $0x10] sm:$0xf]
        %v4140 = vld [vmem:[%s2485 + $0x18] sm:$0xf]
        %v4141 = vld [vmem:[%s2485 + $0x20] sm:$0xf]
        %v4142 = vld [vmem:[%s2485 + $0x28] sm:$0xf]
        %v4143 = vld [vmem:[%s2485 + $0x30] sm:$0xf]
        %v4144 = vld [vmem:[%s2485 + $0x38] sm:$0xf]
        %v4145 = vld [vmem:[%s2485 + $0x50] sm:$0xf]
        %v4146 = vld [vmem:[%s2485 + $0x58] sm:$0xf]
        %v4147 = vld [vmem:[%s2485 + $0x60] sm:$0xf]
        %v4148 = vld [vmem:[%s2485 + $0x68] sm:$0xf]
        %v4149 = vld [vmem:[%s2485 + $0x70] sm:$0xf]
        %v4150 = vld [vmem:[%s2485 + $0x78] sm:$0xf]
        %v4151 = vld [vmem:[%s2485 + $0x80] sm:$0xf]
        %v4152 = vld [vmem:[%s2485 + $0x88] sm:$0xf]
        %v4153 = vld [vmem:[%s2485 + $0xa0] sm:$0xf]
        %v4154 = vld [vmem:[%s2485 + $0xa8] sm:$0xf]
        %v4155 = vld [vmem:[%s2485 + $0xb0] sm:$0xf]
        %v4156 = vld [vmem:[%s2485 + $0xb8] sm:$0xf]
        %v4157 = vld [vmem:[%s2485 + $0xc0] sm:$0xf]
        %v4158 = vld [vmem:[%s2485 + $0xc8] sm:$0xf]
        %v4159 = vld [vmem:[%s2485 + $0xd0] sm:$0xf]
        %v4160 = vld [vmem:[%s2485 + $0xd8] sm:$0xf]
        %v4161 = vld [vmem:[%s2485 + $0xf0] sm:$0xf]
        %v4162 = vld [vmem:[%s2485 + $0xf8] sm:$0xf]
        %v4163 = vld [vmem:[%s2485 + $0x100] sm:$0xf]
        %v4164 = vld [vmem:[%s2485 + $0x108] sm:$0xf]
        %v4165 = vld [vmem:[%s2485 + $0x110] sm:$0xf]
        %v4166 = vld [vmem:[%s2485 + $0x118] sm:$0xf]
        %v4167 = vld [vmem:[%s2485 + $0x120] sm:$0xf]
        %v4168 = vld [vmem:[%s2485 + $0x128] sm:$0xf]
        %s4169 = scalar_lea.vmem [#allocation12], 192
        %v4170 = vld [vmem:[%s4169] sm:$0xf]
        %v4171 = vld [vmem:[%s4169 + $0x4] sm:$0xf]
        %v4172 = vld [vmem:[%s4169 + $0x8] sm:$0xf]
        %v4173 = vld [vmem:[%s4169 + $0xc] sm:$0xf]
        %v4174 = vld [vmem:[%s4169 + $0x10] sm:$0xf]
        %v4175 = vld [vmem:[%s4169 + $0x14] sm:$0xf]
        %v4176 = vld [vmem:[%s4169 + $0x18] sm:$0xf]
        %v4177 = vld [vmem:[%s4169 + $0x1c] sm:$0xf]
        %v4178 = vld [vmem:[%s4169 + $0x20] sm:$0xf]
        %v4179 = vld [vmem:[%s4169 + $0x24] sm:$0xf]
        %v4180 = vld [vmem:[%s4169 + $0x28] sm:$0xf]
        %v4181 = vld [vmem:[%s4169 + $0x2c] sm:$0xf]
        %v4182 = vld [vmem:[%s4169 + $0x30] sm:$0xf]
        %v4183 = vld [vmem:[%s4169 + $0x34] sm:$0xf]
        %v4184 = vld [vmem:[%s4169 + $0x38] sm:$0xf]
        %v4185 = vld [vmem:[%s4169 + $0x3c] sm:$0xf]
        %v4218 = vunpack.c.l.b16 %v4137
        %v4219 = vunpack.c.l.b16 %v4138
        %v4220 = vunpack.c.l.b16 %v4139
        %v4221 = vunpack.c.l.b16 %v4140
        %v4222 = vunpack.c.l.b16 %v4141
        %v4223 = vunpack.c.l.b16 %v4142
        %v4224 = vunpack.c.l.b16 %v4143
        %v4225 = vunpack.c.l.b16 %v4144
        %v4226 = vunpack.c.l.b16 %v4145
        %v4227 = vunpack.c.l.b16 %v4146
        %v4228 = vunpack.c.l.b16 %v4147
        %v4229 = vunpack.c.l.b16 %v4148
        %v4230 = vunpack.c.l.b16 %v4149
        %v4231 = vunpack.c.l.b16 %v4150
        %v4232 = vunpack.c.l.b16 %v4151
        %v4233 = vunpack.c.l.b16 %v4152
        %v4234 = vunpack.c.l.b16 %v4153
        %v4235 = vunpack.c.l.b16 %v4154
        %v4236 = vunpack.c.l.b16 %v4155
        %v4237 = vunpack.c.l.b16 %v4156
        %v4238 = vunpack.c.l.b16 %v4157
        %v4239 = vunpack.c.l.b16 %v4158
        %v4240 = vunpack.c.l.b16 %v4159
        %v4241 = vunpack.c.l.b16 %v4160
        %v4242 = vunpack.c.l.b16 %v4161
        %v4243 = vunpack.c.l.b16 %v4162
        %v4244 = vunpack.c.l.b16 %v4163
        %v4245 = vunpack.c.l.b16 %v4164
        %v4246 = vunpack.c.l.b16 %v4165
        %v4247 = vunpack.c.l.b16 %v4166
        %v4248 = vunpack.c.l.b16 %v4167
        %v4249 = vunpack.c.l.b16 %v4168
        %v4250 = vpack.c.b16 %v4219, %v4218
        %v4251 = vpack.c.b16 %v4221, %v4220
        %v4252 = vpack.c.b16 %v4223, %v4222
        %v4253 = vpack.c.b16 %v4225, %v4224
        %v4254 = vpack.c.b16 %v4227, %v4226
        %v4255 = vpack.c.b16 %v4229, %v4228
        %v4256 = vpack.c.b16 %v4231, %v4230
        %v4257 = vpack.c.b16 %v4233, %v4232
        %v4258 = vpack.c.b16 %v4235, %v4234
        %v4259 = vpack.c.b16 %v4237, %v4236
        %v4260 = vpack.c.b16 %v4239, %v4238
        %v4261 = vpack.c.b16 %v4241, %v4240
        %v4262 = vpack.c.b16 %v4243, %v4242
        %v4263 = vpack.c.b16 %v4245, %v4244
        %v4264 = vpack.c.b16 %v4247, %v4246
        %v4265 = vpack.c.b16 %v4249, %v4248
        %v4298 = vunpack.c.l.b16 %v4170
        %v4299 = vunpack.c.l.b16 %v4171
        %v4300 = vunpack.c.l.b16 %v4172
        %v4301 = vunpack.c.l.b16 %v4173
        %v4302 = vunpack.c.l.b16 %v4174
        %v4303 = vunpack.c.l.b16 %v4175
        %v4304 = vunpack.c.l.b16 %v4176
        %v4305 = vunpack.c.l.b16 %v4177
        %v4306 = vunpack.c.l.b16 %v4178
        %v4307 = vunpack.c.l.b16 %v4179
        %v4308 = vunpack.c.l.b16 %v4180
        %v4309 = vunpack.c.l.b16 %v4181
        %v4310 = vunpack.c.l.b16 %v4182
        %v4311 = vunpack.c.l.b16 %v4183
        %v4312 = vunpack.c.l.b16 %v4184
        %v4313 = vunpack.c.l.b16 %v4185
        %v4314 = vpack.c.b16 %v4299, %v4298
        %v4315 = vpack.c.b16 %v4301, %v4300
        %v4316 = vpack.c.b16 %v4303, %v4302
        %v4317 = vpack.c.b16 %v4305, %v4304
        %v4318 = vpack.c.b16 %v4307, %v4306
        %v4319 = vpack.c.b16 %v4309, %v4308
        %v4320 = vpack.c.b16 %v4311, %v4310
        %v4321 = vpack.c.b16 %v4313, %v4312
        %4330 = vmatpush.bf16.msra.mxu0 %v4321
        %4331 = vmatpush.bf16.msra.mxu0 %v4320
        %4332 = vmatpush.bf16.msra.mxu0 %v4319
        %4333 = vmatpush.bf16.msra.mxu0 %v4318
        %4334 = vmatpush.bf16.msra.mxu0 %v4317
        %4335 = vmatpush.bf16.msra.mxu0 %v4316
        %4336 = vmatpush.bf16.msra.mxu0 %v4315
        %4337 = vmatpush.bf16.msra.mxu0 %v4314
        %4338 = vmatmul.bf16.gmra.mxu0 %v4250
        %v4339 = vpop.f32.mrf.mxu0
        %v4340 = vadd.f32 0.0, %v4339
        %v4341 = vpop.f32.mrf.mxu0
        %v4342 = vadd.f32 0.0, %v4341
        %4343 = vmatmul.bf16.gmra.mxu0 %v4251
        %v4344 = vpop.f32.mrf.mxu0
        %v4345 = vadd.f32 0.0, %v4344
        %v4346 = vpop.f32.mrf.mxu0
        %v4347 = vadd.f32 0.0, %v4346
        %4348 = vmatmul.bf16.gmra.mxu0 %v4252
        %v4349 = vpop.f32.mrf.mxu0
        %v4350 = vadd.f32 0.0, %v4349
        %v4351 = vpop.f32.mrf.mxu0
        %v4352 = vadd.f32 0.0, %v4351
        %4353 = vmatmul.bf16.gmra.mxu0 %v4253
        %v4354 = vpop.f32.mrf.mxu0
        %v4355 = vadd.f32 0.0, %v4354
        %v4356 = vpop.f32.mrf.mxu0
        %v4357 = vadd.f32 0.0, %v4356
        %4358 = vmatmul.bf16.gmra.mxu0 %v4254
        %v4359 = vpop.f32.mrf.mxu0
        %v4360 = vadd.f32 0.0, %v4359
        %v4361 = vpop.f32.mrf.mxu0
        %v4362 = vadd.f32 0.0, %v4361
        %4363 = vmatmul.bf16.gmra.mxu0 %v4255
        %v4364 = vpop.f32.mrf.mxu0
        %v4365 = vadd.f32 0.0, %v4364
        %v4366 = vpop.f32.mrf.mxu0
        %v4367 = vadd.f32 0.0, %v4366
        %4368 = vmatmul.bf16.gmra.mxu0 %v4256
        %v4369 = vpop.f32.mrf.mxu0
        %v4370 = vadd.f32 0.0, %v4369
        %v4371 = vpop.f32.mrf.mxu0
        %v4372 = vadd.f32 0.0, %v4371
        %4373 = vmatmul.bf16.gmra.mxu0 %v4257
        %v4374 = vpop.f32.mrf.mxu0
        %v4375 = vadd.f32 0.0, %v4374
        %v4376 = vpop.f32.mrf.mxu0
        %v4377 = vadd.f32 0.0, %v4376
        %4378 = vmatmul.bf16.gmra.mxu0 %v4258
        %v4379 = vpop.f32.mrf.mxu0
        %v4380 = vadd.f32 0.0, %v4379
        %v4381 = vpop.f32.mrf.mxu0
        %v4382 = vadd.f32 0.0, %v4381
        %4383 = vmatmul.bf16.gmra.mxu0 %v4259
        %v4384 = vpop.f32.mrf.mxu0
        %v4385 = vadd.f32 0.0, %v4384
        %v4386 = vpop.f32.mrf.mxu0
        %v4387 = vadd.f32 0.0, %v4386
        %4388 = vmatmul.bf16.gmra.mxu0 %v4260
        %v4389 = vpop.f32.mrf.mxu0
        %v4390 = vadd.f32 0.0, %v4389
        %v4391 = vpop.f32.mrf.mxu0
        %v4392 = vadd.f32 0.0, %v4391
        %4393 = vmatmul.bf16.gmra.mxu0 %v4261
        %v4394 = vpop.f32.mrf.mxu0
        %v4395 = vadd.f32 0.0, %v4394
        %v4396 = vpop.f32.mrf.mxu0
        %v4397 = vadd.f32 0.0, %v4396
        %4398 = vmatmul.bf16.gmra.mxu0 %v4262
        %v4399 = vpop.f32.mrf.mxu0
        %v4400 = vadd.f32 0.0, %v4399
        %v4401 = vpop.f32.mrf.mxu0
        %v4402 = vadd.f32 0.0, %v4401
        %4403 = vmatmul.bf16.gmra.mxu0 %v4263
        %v4404 = vpop.f32.mrf.mxu0
        %v4405 = vadd.f32 0.0, %v4404
        %v4406 = vpop.f32.mrf.mxu0
        %v4407 = vadd.f32 0.0, %v4406
        %4408 = vmatmul.bf16.gmra.mxu0 %v4264
        %v4409 = vpop.f32.mrf.mxu0
        %v4410 = vadd.f32 0.0, %v4409
        %v4411 = vpop.f32.mrf.mxu0
        %v4412 = vadd.f32 0.0, %v4411
        %4413 = vmatmul.bf16.gmra.mxu0 %v4265
        %v4414 = vpop.f32.mrf.mxu0
        %v4415 = vadd.f32 0.0, %v4414
        %v4416 = vpop.f32.mrf.mxu0
        %v4417 = vadd.f32 0.0, %v4416
        %4418 = vdwg.mxu0
        %v4419 = vadd.f32 %v4105, %v4340
        %v4420 = vadd.f32 %v4106, %v4342
        %v4421 = vadd.f32 %v4107, %v4345
        %v4422 = vadd.f32 %v4108, %v4347
        %v4423 = vadd.f32 %v4109, %v4350
        %v4424 = vadd.f32 %v4110, %v4352
        %v4425 = vadd.f32 %v4111, %v4355
        %v4426 = vadd.f32 %v4112, %v4357
        %v4427 = vadd.f32 %v4113, %v4360
        %v4428 = vadd.f32 %v4114, %v4362
        %v4429 = vadd.f32 %v4115, %v4365
        %v4430 = vadd.f32 %v4116, %v4367
        %v4431 = vadd.f32 %v4117, %v4370
        %v4432 = vadd.f32 %v4118, %v4372
        %v4433 = vadd.f32 %v4119, %v4375
        %v4434 = vadd.f32 %v4120, %v4377
        %v4435 = vadd.f32 %v4121, %v4380
        %v4436 = vadd.f32 %v4122, %v4382
        %v4437 = vadd.f32 %v4123, %v4385
        %v4438 = vadd.f32 %v4124, %v4387
        %v4439 = vadd.f32 %v4125, %v4390
        %v4440 = vadd.f32 %v4126, %v4392
        %v4441 = vadd.f32 %v4127, %v4395
        %v4442 = vadd.f32 %v4128, %v4397
        %v4443 = vadd.f32 %v4129, %v4400
        %v4444 = vadd.f32 %v4130, %v4402
        %v4445 = vadd.f32 %v4131, %v4405
        %v4446 = vadd.f32 %v4132, %v4407
        %v4447 = vadd.f32 %v4133, %v4410
        %v4448 = vadd.f32 %v4134, %v4412
        %v4449 = vadd.f32 %v4135, %v4415
        %v4450 = vadd.f32 %v4136, %v4417
        %v4451 = vld [vmem:[%s2485] sm:$0xf]
        %v4452 = vld [vmem:[%s2485 + $0x4] sm:$0x1]
        %v4453 = vld [vmem:[%s2485 + $0x8] sm:$0xf]
        %v4454 = vld [vmem:[%s2485 + $0xc] sm:$0x1]
        %v4455 = vld [vmem:[%s2485 + $0x10] sm:$0xf]
        %v4456 = vld [vmem:[%s2485 + $0x14] sm:$0x1]
        %v4457 = vld [vmem:[%s2485 + $0x18] sm:$0xf]
        %v4458 = vld [vmem:[%s2485 + $0x1c] sm:$0x1]
        %v4459 = vld [vmem:[%s2485 + $0x20] sm:$0xf]
        %v4460 = vld [vmem:[%s2485 + $0x24] sm:$0x1]
        %v4461 = vld [vmem:[%s2485 + $0x28] sm:$0xf]
        %v4462 = vld [vmem:[%s2485 + $0x2c] sm:$0x1]
        %v4463 = vld [vmem:[%s2485 + $0x30] sm:$0xf]
        %v4464 = vld [vmem:[%s2485 + $0x34] sm:$0x1]
        %v4465 = vld [vmem:[%s2485 + $0x38] sm:$0xf]
        %v4466 = vld [vmem:[%s2485 + $0x3c] sm:$0x1]
        %v4467 = vld [vmem:[%s2485 + $0x50] sm:$0xf]
        %v4468 = vld [vmem:[%s2485 + $0x54] sm:$0x1]
        %v4469 = vld [vmem:[%s2485 + $0x58] sm:$0xf]
        %v4470 = vld [vmem:[%s2485 + $0x5c] sm:$0x1]
        %v4471 = vld [vmem:[%s2485 + $0x60] sm:$0xf]
        %v4472 = vld [vmem:[%s2485 + $0x64] sm:$0x1]
        %v4473 = vld [vmem:[%s2485 + $0x68] sm:$0xf]
        %v4474 = vld [vmem:[%s2485 + $0x6c] sm:$0x1]
        %v4475 = vld [vmem:[%s2485 + $0x70] sm:$0xf]
        %v4476 = vld [vmem:[%s2485 + $0x74] sm:$0x1]
        %v4477 = vld [vmem:[%s2485 + $0x78] sm:$0xf]
        %v4478 = vld [vmem:[%s2485 + $0x7c] sm:$0x1]
        %v4479 = vld [vmem:[%s2485 + $0x80] sm:$0xf]
        %v4480 = vld [vmem:[%s2485 + $0x84] sm:$0x1]
        %v4481 = vld [vmem:[%s2485 + $0x88] sm:$0xf]
        %v4482 = vld [vmem:[%s2485 + $0x8c] sm:$0x1]
        %v4483 = vld [vmem:[%s2485 + $0xa0] sm:$0xf]
        %v4484 = vld [vmem:[%s2485 + $0xa4] sm:$0x1]
        %v4485 = vld [vmem:[%s2485 + $0xa8] sm:$0xf]
        %v4486 = vld [vmem:[%s2485 + $0xac] sm:$0x1]
        %v4487 = vld [vmem:[%s2485 + $0xb0] sm:$0xf]
        %v4488 = vld [vmem:[%s2485 + $0xb4] sm:$0x1]
        %v4489 = vld [vmem:[%s2485 + $0xb8] sm:$0xf]
        %v4490 = vld [vmem:[%s2485 + $0xbc] sm:$0x1]
        %v4491 = vld [vmem:[%s2485 + $0xc0] sm:$0xf]
        %v4492 = vld [vmem:[%s2485 + $0xc4] sm:$0x1]
        %v4493 = vld [vmem:[%s2485 + $0xc8] sm:$0xf]
        %v4494 = vld [vmem:[%s2485 + $0xcc] sm:$0x1]
        %v4495 = vld [vmem:[%s2485 + $0xd0] sm:$0xf]
        %v4496 = vld [vmem:[%s2485 + $0xd4] sm:$0x1]
        %v4497 = vld [vmem:[%s2485 + $0xd8] sm:$0xf]
        %v4498 = vld [vmem:[%s2485 + $0xdc] sm:$0x1]
        %v4499 = vld [vmem:[%s2485 + $0xf0] sm:$0xf]
        %v4500 = vld [vmem:[%s2485 + $0xf4] sm:$0x1]
        %v4501 = vld [vmem:[%s2485 + $0xf8] sm:$0xf]
        %v4502 = vld [vmem:[%s2485 + $0xfc] sm:$0x1]
        %v4503 = vld [vmem:[%s2485 + $0x100] sm:$0xf]
        %v4504 = vld [vmem:[%s2485 + $0x104] sm:$0x1]
        %v4505 = vld [vmem:[%s2485 + $0x108] sm:$0xf]
        %v4506 = vld [vmem:[%s2485 + $0x10c] sm:$0x1]
        %v4507 = vld [vmem:[%s2485 + $0x110] sm:$0xf]
        %v4508 = vld [vmem:[%s2485 + $0x114] sm:$0x1]
        %v4509 = vld [vmem:[%s2485 + $0x118] sm:$0xf]
        %v4510 = vld [vmem:[%s2485 + $0x11c] sm:$0x1]
        %v4511 = vld [vmem:[%s2485 + $0x120] sm:$0xf]
        %v4512 = vld [vmem:[%s2485 + $0x124] sm:$0x1]
        %v4513 = vld [vmem:[%s2485 + $0x128] sm:$0xf]
        %v4514 = vld [vmem:[%s2485 + $0x12c] sm:$0x1]
        %v4516 = vshrl.u32 %v4451, 16
        %v4518 = vrot.slane %v4516, 4
        %v4519 = vshll.u32 %v4451, 16
        %v4521 = vrot.slane %v4519, 5
        %v4522 = vor.u32 %v4518, %v4521
        %v4523 = vrot.slane %v4522, 4
        %v4525 = vshll.u32 %v4452, 16
        %v4527 = vrot.slane %v4525, 5
        %v4528 = vsel %vm2760, %v4523, %v4527
        %v4530 = vshrl.u32 %v4453, 16
        %v4532 = vrot.slane %v4530, 4
        %v4533 = vshll.u32 %v4453, 16
        %v4535 = vrot.slane %v4533, 5
        %v4536 = vor.u32 %v4532, %v4535
        %v4537 = vrot.slane %v4536, 4
        %v4539 = vshll.u32 %v4454, 16
        %v4541 = vrot.slane %v4539, 5
        %v4542 = vsel %vm2760, %v4537, %v4541
        %v4544 = vshrl.u32 %v4455, 16
        %v4546 = vrot.slane %v4544, 4
        %v4547 = vshll.u32 %v4455, 16
        %v4549 = vrot.slane %v4547, 5
        %v4550 = vor.u32 %v4546, %v4549
        %v4551 = vrot.slane %v4550, 4
        %v4553 = vshll.u32 %v4456, 16
        %v4555 = vrot.slane %v4553, 5
        %v4556 = vsel %vm2760, %v4551, %v4555
        %v4558 = vshrl.u32 %v4457, 16
        %v4560 = vrot.slane %v4558, 4
        %v4561 = vshll.u32 %v4457, 16
        %v4563 = vrot.slane %v4561, 5
        %v4564 = vor.u32 %v4560, %v4563
        %v4565 = vrot.slane %v4564, 4
        %v4567 = vshll.u32 %v4458, 16
        %v4569 = vrot.slane %v4567, 5
        %v4570 = vsel %vm2760, %v4565, %v4569
        %v4572 = vshrl.u32 %v4459, 16
        %v4574 = vrot.slane %v4572, 4
        %v4575 = vshll.u32 %v4459, 16
        %v4577 = vrot.slane %v4575, 5
        %v4578 = vor.u32 %v4574, %v4577
        %v4579 = vrot.slane %v4578, 4
        %v4581 = vshll.u32 %v4460, 16
        %v4583 = vrot.slane %v4581, 5
        %v4584 = vsel %vm2760, %v4579, %v4583
        %v4586 = vshrl.u32 %v4461, 16
        %v4588 = vrot.slane %v4586, 4
        %v4589 = vshll.u32 %v4461, 16
        %v4591 = vrot.slane %v4589, 5
        %v4592 = vor.u32 %v4588, %v4591
        %v4593 = vrot.slane %v4592, 4
        %v4595 = vshll.u32 %v4462, 16
        %v4597 = vrot.slane %v4595, 5
        %v4598 = vsel %vm2760, %v4593, %v4597
        %v4600 = vshrl.u32 %v4463, 16
        %v4602 = vrot.slane %v4600, 4
        %v4603 = vshll.u32 %v4463, 16
        %v4605 = vrot.slane %v4603, 5
        %v4606 = vor.u32 %v4602, %v4605
        %v4607 = vrot.slane %v4606, 4
        %v4609 = vshll.u32 %v4464, 16
        %v4611 = vrot.slane %v4609, 5
        %v4612 = vsel %vm2760, %v4607, %v4611
        %v4614 = vshrl.u32 %v4465, 16
        %v4616 = vrot.slane %v4614, 4
        %v4617 = vshll.u32 %v4465, 16
        %v4619 = vrot.slane %v4617, 5
        %v4620 = vor.u32 %v4616, %v4619
        %v4621 = vrot.slane %v4620, 4
        %v4623 = vshll.u32 %v4466, 16
        %v4625 = vrot.slane %v4623, 5
        %v4626 = vsel %vm2760, %v4621, %v4625
        %v4628 = vshrl.u32 %v4467, 16
        %v4630 = vrot.slane %v4628, 4
        %v4631 = vshll.u32 %v4467, 16
        %v4633 = vrot.slane %v4631, 5
        %v4634 = vor.u32 %v4630, %v4633
        %v4635 = vrot.slane %v4634, 4
        %v4637 = vshll.u32 %v4468, 16
        %v4639 = vrot.slane %v4637, 5
        %v4640 = vsel %vm2760, %v4635, %v4639
        %v4642 = vshrl.u32 %v4469, 16
        %v4644 = vrot.slane %v4642, 4
        %v4645 = vshll.u32 %v4469, 16
        %v4647 = vrot.slane %v4645, 5
        %v4648 = vor.u32 %v4644, %v4647
        %v4649 = vrot.slane %v4648, 4
        %v4651 = vshll.u32 %v4470, 16
        %v4653 = vrot.slane %v4651, 5
        %v4654 = vsel %vm2760, %v4649, %v4653
        %v4656 = vshrl.u32 %v4471, 16
        %v4658 = vrot.slane %v4656, 4
        %v4659 = vshll.u32 %v4471, 16
        %v4661 = vrot.slane %v4659, 5
        %v4662 = vor.u32 %v4658, %v4661
        %v4663 = vrot.slane %v4662, 4
        %v4665 = vshll.u32 %v4472, 16
        %v4667 = vrot.slane %v4665, 5
        %v4668 = vsel %vm2760, %v4663, %v4667
        %v4670 = vshrl.u32 %v4473, 16
        %v4672 = vrot.slane %v4670, 4
        %v4673 = vshll.u32 %v4473, 16
        %v4675 = vrot.slane %v4673, 5
        %v4676 = vor.u32 %v4672, %v4675
        %v4677 = vrot.slane %v4676, 4
        %v4679 = vshll.u32 %v4474, 16
        %v4681 = vrot.slane %v4679, 5
        %v4682 = vsel %vm2760, %v4677, %v4681
        %v4684 = vshrl.u32 %v4475, 16
        %v4686 = vrot.slane %v4684, 4
        %v4687 = vshll.u32 %v4475, 16
        %v4689 = vrot.slane %v4687, 5
        %v4690 = vor.u32 %v4686, %v4689
        %v4691 = vrot.slane %v4690, 4
        %v4693 = vshll.u32 %v4476, 16
        %v4695 = vrot.slane %v4693, 5
        %v4696 = vsel %vm2760, %v4691, %v4695
        %v4698 = vshrl.u32 %v4477, 16
        %v4700 = vrot.slane %v4698, 4
        %v4701 = vshll.u32 %v4477, 16
        %v4703 = vrot.slane %v4701, 5
        %v4704 = vor.u32 %v4700, %v4703
        %v4705 = vrot.slane %v4704, 4
        %v4707 = vshll.u32 %v4478, 16
        %v4709 = vrot.slane %v4707, 5
        %v4710 = vsel %vm2760, %v4705, %v4709
        %v4712 = vshrl.u32 %v4479, 16
        %v4714 = vrot.slane %v4712, 4
        %v4715 = vshll.u32 %v4479, 16
        %v4717 = vrot.slane %v4715, 5
        %v4718 = vor.u32 %v4714, %v4717
        %v4719 = vrot.slane %v4718, 4
        %v4721 = vshll.u32 %v4480, 16
        %v4723 = vrot.slane %v4721, 5
        %v4724 = vsel %vm2760, %v4719, %v4723
        %v4726 = vshrl.u32 %v4481, 16
        %v4728 = vrot.slane %v4726, 4
        %v4729 = vshll.u32 %v4481, 16
        %v4731 = vrot.slane %v4729, 5
        %v4732 = vor.u32 %v4728, %v4731
        %v4733 = vrot.slane %v4732, 4
        %v4735 = vshll.u32 %v4482, 16
        %v4737 = vrot.slane %v4735, 5
        %v4738 = vsel %vm2760, %v4733, %v4737
        %v4740 = vshrl.u32 %v4483, 16
        %v4742 = vrot.slane %v4740, 4
        %v4743 = vshll.u32 %v4483, 16
        %v4745 = vrot.slane %v4743, 5
        %v4746 = vor.u32 %v4742, %v4745
        %v4747 = vrot.slane %v4746, 4
        %v4749 = vshll.u32 %v4484, 16
        %v4751 = vrot.slane %v4749, 5
        %v4752 = vsel %vm2760, %v4747, %v4751
        %v4754 = vshrl.u32 %v4485, 16
        %v4756 = vrot.slane %v4754, 4
        %v4757 = vshll.u32 %v4485, 16
        %v4759 = vrot.slane %v4757, 5
        %v4760 = vor.u32 %v4756, %v4759
        %v4761 = vrot.slane %v4760, 4
        %v4763 = vshll.u32 %v4486, 16
        %v4765 = vrot.slane %v4763, 5
        %v4766 = vsel %vm2760, %v4761, %v4765
        %v4768 = vshrl.u32 %v4487, 16
        %v4770 = vrot.slane %v4768, 4
        %v4771 = vshll.u32 %v4487, 16
        %v4773 = vrot.slane %v4771, 5
        %v4774 = vor.u32 %v4770, %v4773
        %v4775 = vrot.slane %v4774, 4
        %v4777 = vshll.u32 %v4488, 16
        %v4779 = vrot.slane %v4777, 5
        %v4780 = vsel %vm2760, %v4775, %v4779
        %v4782 = vshrl.u32 %v4489, 16
        %v4784 = vrot.slane %v4782, 4
        %v4785 = vshll.u32 %v4489, 16
        %v4787 = vrot.slane %v4785, 5
        %v4788 = vor.u32 %v4784, %v4787
        %v4789 = vrot.slane %v4788, 4
        %v4791 = vshll.u32 %v4490, 16
        %v4793 = vrot.slane %v4791, 5
        %v4794 = vsel %vm2760, %v4789, %v4793
        %v4796 = vshrl.u32 %v4491, 16
        %v4798 = vrot.slane %v4796, 4
        %v4799 = vshll.u32 %v4491, 16
        %v4801 = vrot.slane %v4799, 5
        %v4802 = vor.u32 %v4798, %v4801
        %v4803 = vrot.slane %v4802, 4
        %v4805 = vshll.u32 %v4492, 16
        %v4807 = vrot.slane %v4805, 5
        %v4808 = vsel %vm2760, %v4803, %v4807
        %v4810 = vshrl.u32 %v4493, 16
        %v4812 = vrot.slane %v4810, 4
        %v4813 = vshll.u32 %v4493, 16
        %v4815 = vrot.slane %v4813, 5
        %v4816 = vor.u32 %v4812, %v4815
        %v4817 = vrot.slane %v4816, 4
        %v4819 = vshll.u32 %v4494, 16
        %v4821 = vrot.slane %v4819, 5
        %v4822 = vsel %vm2760, %v4817, %v4821
        %v4824 = vshrl.u32 %v4495, 16
        %v4826 = vrot.slane %v4824, 4
        %v4827 = vshll.u32 %v4495, 16
        %v4829 = vrot.slane %v4827, 5
        %v4830 = vor.u32 %v4826, %v4829
        %v4831 = vrot.slane %v4830, 4
        %v4833 = vshll.u32 %v4496, 16
        %v4835 = vrot.slane %v4833, 5
        %v4836 = vsel %vm2760, %v4831, %v4835
        %v4838 = vshrl.u32 %v4497, 16
        %v4840 = vrot.slane %v4838, 4
        %v4841 = vshll.u32 %v4497, 16
        %v4843 = vrot.slane %v4841, 5
        %v4844 = vor.u32 %v4840, %v4843
        %v4845 = vrot.slane %v4844, 4
        %v4847 = vshll.u32 %v4498, 16
        %v4849 = vrot.slane %v4847, 5
        %v4850 = vsel %vm2760, %v4845, %v4849
        %v4852 = vshrl.u32 %v4499, 16
        %v4854 = vrot.slane %v4852, 4
        %v4855 = vshll.u32 %v4499, 16
        %v4857 = vrot.slane %v4855, 5
        %v4858 = vor.u32 %v4854, %v4857
        %v4859 = vrot.slane %v4858, 4
        %v4861 = vshll.u32 %v4500, 16
        %v4863 = vrot.slane %v4861, 5
        %v4864 = vsel %vm2760, %v4859, %v4863
        %v4866 = vshrl.u32 %v4501, 16
        %v4868 = vrot.slane %v4866, 4
        %v4869 = vshll.u32 %v4501, 16
        %v4871 = vrot.slane %v4869, 5
        %v4872 = vor.u32 %v4868, %v4871
        %v4873 = vrot.slane %v4872, 4
        %v4875 = vshll.u32 %v4502, 16
        %v4877 = vrot.slane %v4875, 5
        %v4878 = vsel %vm2760, %v4873, %v4877
        %v4880 = vshrl.u32 %v4503, 16
        %v4882 = vrot.slane %v4880, 4
        %v4883 = vshll.u32 %v4503, 16
        %v4885 = vrot.slane %v4883, 5
        %v4886 = vor.u32 %v4882, %v4885
        %v4887 = vrot.slane %v4886, 4
        %v4889 = vshll.u32 %v4504, 16
        %v4891 = vrot.slane %v4889, 5
        %v4892 = vsel %vm2760, %v4887, %v4891
        %v4894 = vshrl.u32 %v4505, 16
        %v4896 = vrot.slane %v4894, 4
        %v4897 = vshll.u32 %v4505, 16
        %v4899 = vrot.slane %v4897, 5
        %v4900 = vor.u32 %v4896, %v4899
        %v4901 = vrot.slane %v4900, 4
        %v4903 = vshll.u32 %v4506, 16
        %v4905 = vrot.slane %v4903, 5
        %v4906 = vsel %vm2760, %v4901, %v4905
        %v4908 = vshrl.u32 %v4507, 16
        %v4910 = vrot.slane %v4908, 4
        %v4911 = vshll.u32 %v4507, 16
        %v4913 = vrot.slane %v4911, 5
        %v4914 = vor.u32 %v4910, %v4913
        %v4915 = vrot.slane %v4914, 4
        %v4917 = vshll.u32 %v4508, 16
        %v4919 = vrot.slane %v4917, 5
        %v4920 = vsel %vm2760, %v4915, %v4919
        %v4922 = vshrl.u32 %v4509, 16
        %v4924 = vrot.slane %v4922, 4
        %v4925 = vshll.u32 %v4509, 16
        %v4927 = vrot.slane %v4925, 5
        %v4928 = vor.u32 %v4924, %v4927
        %v4929 = vrot.slane %v4928, 4
        %v4931 = vshll.u32 %v4510, 16
        %v4933 = vrot.slane %v4931, 5
        %v4934 = vsel %vm2760, %v4929, %v4933
        %v4936 = vshrl.u32 %v4511, 16
        %v4938 = vrot.slane %v4936, 4
        %v4939 = vshll.u32 %v4511, 16
        %v4941 = vrot.slane %v4939, 5
        %v4942 = vor.u32 %v4938, %v4941
        %v4943 = vrot.slane %v4942, 4
        %v4945 = vshll.u32 %v4512, 16
        %v4947 = vrot.slane %v4945, 5
        %v4948 = vsel %vm2760, %v4943, %v4947
        %v4950 = vshrl.u32 %v4513, 16
        %v4952 = vrot.slane %v4950, 4
        %v4953 = vshll.u32 %v4513, 16
        %v4955 = vrot.slane %v4953, 5
        %v4956 = vor.u32 %v4952, %v4955
        %v4957 = vrot.slane %v4956, 4
        %v4959 = vshll.u32 %v4514, 16
        %v4961 = vrot.slane %v4959, 5
        %v4962 = vsel %vm2760, %v4957, %v4961
        %s4963 = scalar_lea.vmem [#allocation12], 256
        %v4964 = vld [vmem:[%s4963] sm:$0xf]
        %v4965 = vld [vmem:[%s4963 + $0x4] sm:$0xf]
        %v4966 = vld [vmem:[%s4963 + $0x8] sm:$0xf]
        %v4967 = vld [vmem:[%s4963 + $0xc] sm:$0xf]
        %v4968 = vld [vmem:[%s4963 + $0x10] sm:$0xf]
        %v4969 = vld [vmem:[%s4963 + $0x14] sm:$0xf]
        %v4970 = vld [vmem:[%s4963 + $0x18] sm:$0xf]
        %v4971 = vld [vmem:[%s4963 + $0x1c] sm:$0xf]
        %v4972 = vld [vmem:[%s4963 + $0x20] sm:$0xf]
        %v4973 = vld [vmem:[%s4963 + $0x24] sm:$0xf]
        %v4974 = vld [vmem:[%s4963 + $0x28] sm:$0xf]
        %v4975 = vld [vmem:[%s4963 + $0x2c] sm:$0xf]
        %v4976 = vld [vmem:[%s4963 + $0x30] sm:$0xf]
        %v4977 = vld [vmem:[%s4963 + $0x34] sm:$0xf]
        %v4978 = vld [vmem:[%s4963 + $0x38] sm:$0xf]
        %v4979 = vld [vmem:[%s4963 + $0x3c] sm:$0xf]
        %v4980 = vunpack.c.l.b16 %v4528
        %v4981 = vunpack.c.l.b16 %v4542
        %v4982 = vunpack.c.l.b16 %v4556
        %v4983 = vunpack.c.l.b16 %v4570
        %v4984 = vunpack.c.l.b16 %v4584
        %v4985 = vunpack.c.l.b16 %v4598
        %v4986 = vunpack.c.l.b16 %v4612
        %v4987 = vunpack.c.l.b16 %v4626
        %v4988 = vunpack.c.l.b16 %v4640
        %v4989 = vunpack.c.l.b16 %v4654
        %v4990 = vunpack.c.l.b16 %v4668
        %v4991 = vunpack.c.l.b16 %v4682
        %v4992 = vunpack.c.l.b16 %v4696
        %v4993 = vunpack.c.l.b16 %v4710
        %v4994 = vunpack.c.l.b16 %v4724
        %v4995 = vunpack.c.l.b16 %v4738
        %v4996 = vunpack.c.l.b16 %v4752
        %v4997 = vunpack.c.l.b16 %v4766
        %v4998 = vunpack.c.l.b16 %v4780
        %v4999 = vunpack.c.l.b16 %v4794
        %v5000 = vunpack.c.l.b16 %v4808
        %v5001 = vunpack.c.l.b16 %v4822
        %v5002 = vunpack.c.l.b16 %v4836
        %v5003 = vunpack.c.l.b16 %v4850
        %v5004 = vunpack.c.l.b16 %v4864
        %v5005 = vunpack.c.l.b16 %v4878
        %v5006 = vunpack.c.l.b16 %v4892
        %v5007 = vunpack.c.l.b16 %v4906
        %v5008 = vunpack.c.l.b16 %v4920
        %v5009 = vunpack.c.l.b16 %v4934
        %v5010 = vunpack.c.l.b16 %v4948
        %v5011 = vunpack.c.l.b16 %v4962
        %v5012 = vpack.c.b16 %v4981, %v4980
        %v5013 = vpack.c.b16 %v4983, %v4982
        %v5014 = vpack.c.b16 %v4985, %v4984
        %v5015 = vpack.c.b16 %v4987, %v4986
        %v5016 = vpack.c.b16 %v4989, %v4988
        %v5017 = vpack.c.b16 %v4991, %v4990
        %v5018 = vpack.c.b16 %v4993, %v4992
        %v5019 = vpack.c.b16 %v4995, %v4994
        %v5020 = vpack.c.b16 %v4997, %v4996
        %v5021 = vpack.c.b16 %v4999, %v4998
        %v5022 = vpack.c.b16 %v5001, %v5000
        %v5023 = vpack.c.b16 %v5003, %v5002
        %v5024 = vpack.c.b16 %v5005, %v5004
        %v5025 = vpack.c.b16 %v5007, %v5006
        %v5026 = vpack.c.b16 %v5009, %v5008
        %v5027 = vpack.c.b16 %v5011, %v5010
        %v5060 = vunpack.c.l.b16 %v4964
        %v5061 = vunpack.c.l.b16 %v4965
        %v5062 = vunpack.c.l.b16 %v4966
        %v5063 = vunpack.c.l.b16 %v4967
        %v5064 = vunpack.c.l.b16 %v4968
        %v5065 = vunpack.c.l.b16 %v4969
        %v5066 = vunpack.c.l.b16 %v4970
        %v5067 = vunpack.c.l.b16 %v4971
        %v5068 = vunpack.c.l.b16 %v4972
        %v5069 = vunpack.c.l.b16 %v4973
        %v5070 = vunpack.c.l.b16 %v4974
        %v5071 = vunpack.c.l.b16 %v4975
        %v5072 = vunpack.c.l.b16 %v4976
        %v5073 = vunpack.c.l.b16 %v4977
        %v5074 = vunpack.c.l.b16 %v4978
        %v5075 = vunpack.c.l.b16 %v4979
        %v5076 = vpack.c.b16 %v5061, %v5060
        %v5077 = vpack.c.b16 %v5063, %v5062
        %v5078 = vpack.c.b16 %v5065, %v5064
        %v5079 = vpack.c.b16 %v5067, %v5066
        %v5080 = vpack.c.b16 %v5069, %v5068
        %v5081 = vpack.c.b16 %v5071, %v5070
        %v5082 = vpack.c.b16 %v5073, %v5072
        %v5083 = vpack.c.b16 %v5075, %v5074
        %5092 = vmatpush.bf16.msra.mxu0 %v5083
        %5093 = vmatpush.bf16.msra.mxu0 %v5082
        %5094 = vmatpush.bf16.msra.mxu0 %v5081
        %5095 = vmatpush.bf16.msra.mxu0 %v5080
        %5096 = vmatpush.bf16.msra.mxu0 %v5079
        %5097 = vmatpush.bf16.msra.mxu0 %v5078
        %5098 = vmatpush.bf16.msra.mxu0 %v5077
        %5099 = vmatpush.bf16.msra.mxu0 %v5076
        %5100 = vmatmul.bf16.gmra.mxu0 %v5012
        %v5101 = vpop.f32.mrf.mxu0
        %v5102 = vadd.f32 0.0, %v5101
        %v5103 = vpop.f32.mrf.mxu0
        %v5104 = vadd.f32 0.0, %v5103
        %5105 = vmatmul.bf16.gmra.mxu0 %v5013
        %v5106 = vpop.f32.mrf.mxu0
        %v5107 = vadd.f32 0.0, %v5106
        %v5108 = vpop.f32.mrf.mxu0
        %v5109 = vadd.f32 0.0, %v5108
        %5110 = vmatmul.bf16.gmra.mxu0 %v5014
        %v5111 = vpop.f32.mrf.mxu0
        %v5112 = vadd.f32 0.0, %v5111
        %v5113 = vpop.f32.mrf.mxu0
        %v5114 = vadd.f32 0.0, %v5113
        %5115 = vmatmul.bf16.gmra.mxu0 %v5015
        %v5116 = vpop.f32.mrf.mxu0
        %v5117 = vadd.f32 0.0, %v5116
        %v5118 = vpop.f32.mrf.mxu0
        %v5119 = vadd.f32 0.0, %v5118
        %5120 = vmatmul.bf16.gmra.mxu0 %v5016
        %v5121 = vpop.f32.mrf.mxu0
        %v5122 = vadd.f32 0.0, %v5121
        %v5123 = vpop.f32.mrf.mxu0
        %v5124 = vadd.f32 0.0, %v5123
        %5125 = vmatmul.bf16.gmra.mxu0 %v5017
        %v5126 = vpop.f32.mrf.mxu0
        %v5127 = vadd.f32 0.0, %v5126
        %v5128 = vpop.f32.mrf.mxu0
        %v5129 = vadd.f32 0.0, %v5128
        %5130 = vmatmul.bf16.gmra.mxu0 %v5018
        %v5131 = vpop.f32.mrf.mxu0
        %v5132 = vadd.f32 0.0, %v5131
        %v5133 = vpop.f32.mrf.mxu0
        %v5134 = vadd.f32 0.0, %v5133
        %5135 = vmatmul.bf16.gmra.mxu0 %v5019
        %v5136 = vpop.f32.mrf.mxu0
        %v5137 = vadd.f32 0.0, %v5136
        %v5138 = vpop.f32.mrf.mxu0
        %v5139 = vadd.f32 0.0, %v5138
        %5140 = vmatmul.bf16.gmra.mxu0 %v5020
        %v5141 = vpop.f32.mrf.mxu0
        %v5142 = vadd.f32 0.0, %v5141
        %v5143 = vpop.f32.mrf.mxu0
        %v5144 = vadd.f32 0.0, %v5143
        %5145 = vmatmul.bf16.gmra.mxu0 %v5021
        %v5146 = vpop.f32.mrf.mxu0
        %v5147 = vadd.f32 0.0, %v5146
        %v5148 = vpop.f32.mrf.mxu0
        %v5149 = vadd.f32 0.0, %v5148
        %5150 = vmatmul.bf16.gmra.mxu0 %v5022
        %v5151 = vpop.f32.mrf.mxu0
        %v5152 = vadd.f32 0.0, %v5151
        %v5153 = vpop.f32.mrf.mxu0
        %v5154 = vadd.f32 0.0, %v5153
        %5155 = vmatmul.bf16.gmra.mxu0 %v5023
        %v5156 = vpop.f32.mrf.mxu0
        %v5157 = vadd.f32 0.0, %v5156
        %v5158 = vpop.f32.mrf.mxu0
        %v5159 = vadd.f32 0.0, %v5158
        %5160 = vmatmul.bf16.gmra.mxu0 %v5024
        %v5161 = vpop.f32.mrf.mxu0
        %v5162 = vadd.f32 0.0, %v5161
        %v5163 = vpop.f32.mrf.mxu0
        %v5164 = vadd.f32 0.0, %v5163
        %5165 = vmatmul.bf16.gmra.mxu0 %v5025
        %v5166 = vpop.f32.mrf.mxu0
        %v5167 = vadd.f32 0.0, %v5166
        %v5168 = vpop.f32.mrf.mxu0
        %v5169 = vadd.f32 0.0, %v5168
        %5170 = vmatmul.bf16.gmra.mxu0 %v5026
        %v5171 = vpop.f32.mrf.mxu0
        %v5172 = vadd.f32 0.0, %v5171
        %v5173 = vpop.f32.mrf.mxu0
        %v5174 = vadd.f32 0.0, %v5173
        %5175 = vmatmul.bf16.gmra.mxu0 %v5027
        %v5176 = vpop.f32.mrf.mxu0
        %v5177 = vadd.f32 0.0, %v5176
        %v5178 = vpop.f32.mrf.mxu0
        %v5179 = vadd.f32 0.0, %v5178
        %5180 = vdwg.mxu0
        %v5181 = vadd.f32 %v4419, %v5102
        %v5182 = vadd.f32 %v4420, %v5104
        %v5183 = vadd.f32 %v4421, %v5107
        %v5184 = vadd.f32 %v4422, %v5109
        %v5185 = vadd.f32 %v4423, %v5112
        %v5186 = vadd.f32 %v4424, %v5114
        %v5187 = vadd.f32 %v4425, %v5117
        %v5188 = vadd.f32 %v4426, %v5119
        %v5189 = vadd.f32 %v4427, %v5122
        %v5190 = vadd.f32 %v4428, %v5124
        %v5191 = vadd.f32 %v4429, %v5127
        %v5192 = vadd.f32 %v4430, %v5129
        %v5193 = vadd.f32 %v4431, %v5132
        %v5194 = vadd.f32 %v4432, %v5134
        %v5195 = vadd.f32 %v4433, %v5137
        %v5196 = vadd.f32 %v4434, %v5139
        %v5197 = vadd.f32 %v4435, %v5142
        %v5198 = vadd.f32 %v4436, %v5144
        %v5199 = vadd.f32 %v4437, %v5147
        %v5200 = vadd.f32 %v4438, %v5149
        %v5201 = vadd.f32 %v4439, %v5152
        %v5202 = vadd.f32 %v4440, %v5154
        %v5203 = vadd.f32 %v4441, %v5157
        %v5204 = vadd.f32 %v4442, %v5159
        %v5205 = vadd.f32 %v4443, %v5162
        %v5206 = vadd.f32 %v4444, %v5164
        %v5207 = vadd.f32 %v4445, %v5167
        %v5208 = vadd.f32 %v4446, %v5169
        %v5209 = vadd.f32 %v4447, %v5172
        %v5210 = vadd.f32 %v4448, %v5174
        %v5211 = vadd.f32 %v4449, %v5177
        %v5212 = vadd.f32 %v4450, %v5179
        %v5213 = vld [vmem:[%s2485] sm:$0xe]
        %v5214 = vld [vmem:[%s2485 + $0x8] sm:$0xe]
        %v5215 = vld [vmem:[%s2485 + $0x10] sm:$0xe]
        %v5216 = vld [vmem:[%s2485 + $0x18] sm:$0xe]
        %v5217 = vld [vmem:[%s2485 + $0x20] sm:$0xe]
        %v5218 = vld [vmem:[%s2485 + $0x28] sm:$0xe]
        %v5219 = vld [vmem:[%s2485 + $0x30] sm:$0xe]
        %v5220 = vld [vmem:[%s2485 + $0x38] sm:$0xe]
        %v5221 = vld [vmem:[%s2485 + $0x50] sm:$0xe]
        %v5222 = vld [vmem:[%s2485 + $0x58] sm:$0xe]
        %v5223 = vld [vmem:[%s2485 + $0x60] sm:$0xe]
        %v5224 = vld [vmem:[%s2485 + $0x68] sm:$0xe]
        %v5225 = vld [vmem:[%s2485 + $0x70] sm:$0xe]
        %v5226 = vld [vmem:[%s2485 + $0x78] sm:$0xe]
        %v5227 = vld [vmem:[%s2485 + $0x80] sm:$0xe]
        %v5228 = vld [vmem:[%s2485 + $0x88] sm:$0xe]
        %v5229 = vld [vmem:[%s2485 + $0xa0] sm:$0xe]
        %v5230 = vld [vmem:[%s2485 + $0xa8] sm:$0xe]
        %v5231 = vld [vmem:[%s2485 + $0xb0] sm:$0xe]
        %v5232 = vld [vmem:[%s2485 + $0xb8] sm:$0xe]
        %v5233 = vld [vmem:[%s2485 + $0xc0] sm:$0xe]
        %v5234 = vld [vmem:[%s2485 + $0xc8] sm:$0xe]
        %v5235 = vld [vmem:[%s2485 + $0xd0] sm:$0xe]
        %v5236 = vld [vmem:[%s2485 + $0xd8] sm:$0xe]
        %v5237 = vld [vmem:[%s2485 + $0xf0] sm:$0xe]
        %v5238 = vld [vmem:[%s2485 + $0xf8] sm:$0xe]
        %v5239 = vld [vmem:[%s2485 + $0x100] sm:$0xe]
        %v5240 = vld [vmem:[%s2485 + $0x108] sm:$0xe]
        %v5241 = vld [vmem:[%s2485 + $0x110] sm:$0xe]
        %v5242 = vld [vmem:[%s2485 + $0x118] sm:$0xe]
        %v5243 = vld [vmem:[%s2485 + $0x120] sm:$0xe]
        %v5244 = vld [vmem:[%s2485 + $0x128] sm:$0xe]
        %v5309 = vrot.slane %v5213, 5
        %v5310 = vrot.slane %v5309, 4
        %v5311 = vrot.slane %v4452, 5
        %v5312 = vsel %vm3758, %v5310, %v5311
        %v5313 = vrot.slane %v5214, 5
        %v5314 = vrot.slane %v5313, 4
        %v5315 = vrot.slane %v4454, 5
        %v5316 = vsel %vm3758, %v5314, %v5315
        %v5317 = vrot.slane %v5215, 5
        %v5318 = vrot.slane %v5317, 4
        %v5319 = vrot.slane %v4456, 5
        %v5320 = vsel %vm3758, %v5318, %v5319
        %v5321 = vrot.slane %v5216, 5
        %v5322 = vrot.slane %v5321, 4
        %v5323 = vrot.slane %v4458, 5
        %v5324 = vsel %vm3758, %v5322, %v5323
        %v5325 = vrot.slane %v5217, 5
        %v5326 = vrot.slane %v5325, 4
        %v5327 = vrot.slane %v4460, 5
        %v5328 = vsel %vm3758, %v5326, %v5327
        %v5329 = vrot.slane %v5218, 5
        %v5330 = vrot.slane %v5329, 4
        %v5331 = vrot.slane %v4462, 5
        %v5332 = vsel %vm3758, %v5330, %v5331
        %v5333 = vrot.slane %v5219, 5
        %v5334 = vrot.slane %v5333, 4
        %v5335 = vrot.slane %v4464, 5
        %v5336 = vsel %vm3758, %v5334, %v5335
        %v5337 = vrot.slane %v5220, 5
        %v5338 = vrot.slane %v5337, 4
        %v5339 = vrot.slane %v4466, 5
        %v5340 = vsel %vm3758, %v5338, %v5339
        %v5341 = vrot.slane %v5221, 5
        %v5342 = vrot.slane %v5341, 4
        %v5343 = vrot.slane %v4468, 5
        %v5344 = vsel %vm3758, %v5342, %v5343
        %v5345 = vrot.slane %v5222, 5
        %v5346 = vrot.slane %v5345, 4
        %v5347 = vrot.slane %v4470, 5
        %v5348 = vsel %vm3758, %v5346, %v5347
        %v5349 = vrot.slane %v5223, 5
        %v5350 = vrot.slane %v5349, 4
        %v5351 = vrot.slane %v4472, 5
        %v5352 = vsel %vm3758, %v5350, %v5351
        %v5353 = vrot.slane %v5224, 5
        %v5354 = vrot.slane %v5353, 4
        %v5355 = vrot.slane %v4474, 5
        %v5356 = vsel %vm3758, %v5354, %v5355
        %v5357 = vrot.slane %v5225, 5
        %v5358 = vrot.slane %v5357, 4
        %v5359 = vrot.slane %v4476, 5
        %v5360 = vsel %vm3758, %v5358, %v5359
        %v5361 = vrot.slane %v5226, 5
        %v5362 = vrot.slane %v5361, 4
        %v5363 = vrot.slane %v4478, 5
        %v5364 = vsel %vm3758, %v5362, %v5363
        %v5365 = vrot.slane %v5227, 5
        %v5366 = vrot.slane %v5365, 4
        %v5367 = vrot.slane %v4480, 5
        %v5368 = vsel %vm3758, %v5366, %v5367
        %v5369 = vrot.slane %v5228, 5
        %v5370 = vrot.slane %v5369, 4
        %v5371 = vrot.slane %v4482, 5
        %v5372 = vsel %vm3758, %v5370, %v5371
        %v5373 = vrot.slane %v5229, 5
        %v5374 = vrot.slane %v5373, 4
        %v5375 = vrot.slane %v4484, 5
        %v5376 = vsel %vm3758, %v5374, %v5375
        %v5377 = vrot.slane %v5230, 5
        %v5378 = vrot.slane %v5377, 4
        %v5379 = vrot.slane %v4486, 5
        %v5380 = vsel %vm3758, %v5378, %v5379
        %v5381 = vrot.slane %v5231, 5
        %v5382 = vrot.slane %v5381, 4
        %v5383 = vrot.slane %v4488, 5
        %v5384 = vsel %vm3758, %v5382, %v5383
        %v5385 = vrot.slane %v5232, 5
        %v5386 = vrot.slane %v5385, 4
        %v5387 = vrot.slane %v4490, 5
        %v5388 = vsel %vm3758, %v5386, %v5387
        %v5389 = vrot.slane %v5233, 5
        %v5390 = vrot.slane %v5389, 4
        %v5391 = vrot.slane %v4492, 5
        %v5392 = vsel %vm3758, %v5390, %v5391
        %v5393 = vrot.slane %v5234, 5
        %v5394 = vrot.slane %v5393, 4
        %v5395 = vrot.slane %v4494, 5
        %v5396 = vsel %vm3758, %v5394, %v5395
        %v5397 = vrot.slane %v5235, 5
        %v5398 = vrot.slane %v5397, 4
        %v5399 = vrot.slane %v4496, 5
        %v5400 = vsel %vm3758, %v5398, %v5399
        %v5401 = vrot.slane %v5236, 5
        %v5402 = vrot.slane %v5401, 4
        %v5403 = vrot.slane %v4498, 5
        %v5404 = vsel %vm3758, %v5402, %v5403
        %v5405 = vrot.slane %v5237, 5
        %v5406 = vrot.slane %v5405, 4
        %v5407 = vrot.slane %v4500, 5
        %v5408 = vsel %vm3758, %v5406, %v5407
        %v5409 = vrot.slane %v5238, 5
        %v5410 = vrot.slane %v5409, 4
        %v5411 = vrot.slane %v4502, 5
        %v5412 = vsel %vm3758, %v5410, %v5411
        %v5413 = vrot.slane %v5239, 5
        %v5414 = vrot.slane %v5413, 4
        %v5415 = vrot.slane %v4504, 5
        %v5416 = vsel %vm3758, %v5414, %v5415
        %v5417 = vrot.slane %v5240, 5
        %v5418 = vrot.slane %v5417, 4
        %v5419 = vrot.slane %v4506, 5
        %v5420 = vsel %vm3758, %v5418, %v5419
        %v5421 = vrot.slane %v5241, 5
        %v5422 = vrot.slane %v5421, 4
        %v5423 = vrot.slane %v4508, 5
        %v5424 = vsel %vm3758, %v5422, %v5423
        %v5425 = vrot.slane %v5242, 5
        %v5426 = vrot.slane %v5425, 4
        %v5427 = vrot.slane %v4510, 5
        %v5428 = vsel %vm3758, %v5426, %v5427
        %v5429 = vrot.slane %v5243, 5
        %v5430 = vrot.slane %v5429, 4
        %v5431 = vrot.slane %v4512, 5
        %v5432 = vsel %vm3758, %v5430, %v5431
        %v5433 = vrot.slane %v5244, 5
        %v5434 = vrot.slane %v5433, 4
        %v5435 = vrot.slane %v4514, 5
        %v5436 = vsel %vm3758, %v5434, %v5435
        %s5437 = scalar_lea.vmem [#allocation12], 320
        %v5438 = vld [vmem:[%s5437] sm:$0xf]
        %v5439 = vld [vmem:[%s5437 + $0x4] sm:$0xf]
        %v5440 = vld [vmem:[%s5437 + $0x8] sm:$0xf]
        %v5441 = vld [vmem:[%s5437 + $0xc] sm:$0xf]
        %v5442 = vld [vmem:[%s5437 + $0x10] sm:$0xf]
        %v5443 = vld [vmem:[%s5437 + $0x14] sm:$0xf]
        %v5444 = vld [vmem:[%s5437 + $0x18] sm:$0xf]
        %v5445 = vld [vmem:[%s5437 + $0x1c] sm:$0xf]
        %v5446 = vld [vmem:[%s5437 + $0x20] sm:$0xf]
        %v5447 = vld [vmem:[%s5437 + $0x24] sm:$0xf]
        %v5448 = vld [vmem:[%s5437 + $0x28] sm:$0xf]
        %v5449 = vld [vmem:[%s5437 + $0x2c] sm:$0xf]
        %v5450 = vld [vmem:[%s5437 + $0x30] sm:$0xf]
        %v5451 = vld [vmem:[%s5437 + $0x34] sm:$0xf]
        %v5452 = vld [vmem:[%s5437 + $0x38] sm:$0xf]
        %v5453 = vld [vmem:[%s5437 + $0x3c] sm:$0xf]
        %v5454 = vunpack.c.l.b16 %v5312
        %v5455 = vunpack.c.l.b16 %v5316
        %v5456 = vunpack.c.l.b16 %v5320
        %v5457 = vunpack.c.l.b16 %v5324
        %v5458 = vunpack.c.l.b16 %v5328
        %v5459 = vunpack.c.l.b16 %v5332
        %v5460 = vunpack.c.l.b16 %v5336
        %v5461 = vunpack.c.l.b16 %v5340
        %v5462 = vunpack.c.l.b16 %v5344
        %v5463 = vunpack.c.l.b16 %v5348
        %v5464 = vunpack.c.l.b16 %v5352
        %v5465 = vunpack.c.l.b16 %v5356
        %v5466 = vunpack.c.l.b16 %v5360
        %v5467 = vunpack.c.l.b16 %v5364
        %v5468 = vunpack.c.l.b16 %v5368
        %v5469 = vunpack.c.l.b16 %v5372
        %v5470 = vunpack.c.l.b16 %v5376
        %v5471 = vunpack.c.l.b16 %v5380
        %v5472 = vunpack.c.l.b16 %v5384
        %v5473 = vunpack.c.l.b16 %v5388
        %v5474 = vunpack.c.l.b16 %v5392
        %v5475 = vunpack.c.l.b16 %v5396
        %v5476 = vunpack.c.l.b16 %v5400
        %v5477 = vunpack.c.l.b16 %v5404
        %v5478 = vunpack.c.l.b16 %v5408
        %v5479 = vunpack.c.l.b16 %v5412
        %v5480 = vunpack.c.l.b16 %v5416
        %v5481 = vunpack.c.l.b16 %v5420
        %v5482 = vunpack.c.l.b16 %v5424
        %v5483 = vunpack.c.l.b16 %v5428
        %v5484 = vunpack.c.l.b16 %v5432
        %v5485 = vunpack.c.l.b16 %v5436
        %v5486 = vpack.c.b16 %v5455, %v5454
        %v5487 = vpack.c.b16 %v5457, %v5456
        %v5488 = vpack.c.b16 %v5459, %v5458
        %v5489 = vpack.c.b16 %v5461, %v5460
        %v5490 = vpack.c.b16 %v5463, %v5462
        %v5491 = vpack.c.b16 %v5465, %v5464
        %v5492 = vpack.c.b16 %v5467, %v5466
        %v5493 = vpack.c.b16 %v5469, %v5468
        %v5494 = vpack.c.b16 %v5471, %v5470
        %v5495 = vpack.c.b16 %v5473, %v5472
        %v5496 = vpack.c.b16 %v5475, %v5474
        %v5497 = vpack.c.b16 %v5477, %v5476
        %v5498 = vpack.c.b16 %v5479, %v5478
        %v5499 = vpack.c.b16 %v5481, %v5480
        %v5500 = vpack.c.b16 %v5483, %v5482
        %v5501 = vpack.c.b16 %v5485, %v5484
        %v5534 = vunpack.c.l.b16 %v5438
        %v5535 = vunpack.c.l.b16 %v5439
        %v5536 = vunpack.c.l.b16 %v5440
        %v5537 = vunpack.c.l.b16 %v5441
        %v5538 = vunpack.c.l.b16 %v5442
        %v5539 = vunpack.c.l.b16 %v5443
        %v5540 = vunpack.c.l.b16 %v5444
        %v5541 = vunpack.c.l.b16 %v5445
        %v5542 = vunpack.c.l.b16 %v5446
        %v5543 = vunpack.c.l.b16 %v5447
        %v5544 = vunpack.c.l.b16 %v5448
        %v5545 = vunpack.c.l.b16 %v5449
        %v5546 = vunpack.c.l.b16 %v5450
        %v5547 = vunpack.c.l.b16 %v5451
        %v5548 = vunpack.c.l.b16 %v5452
        %v5549 = vunpack.c.l.b16 %v5453
        %v5550 = vpack.c.b16 %v5535, %v5534
        %v5551 = vpack.c.b16 %v5537, %v5536
        %v5552 = vpack.c.b16 %v5539, %v5538
        %v5553 = vpack.c.b16 %v5541, %v5540
        %v5554 = vpack.c.b16 %v5543, %v5542
        %v5555 = vpack.c.b16 %v5545, %v5544
        %v5556 = vpack.c.b16 %v5547, %v5546
        %v5557 = vpack.c.b16 %v5549, %v5548
        %5566 = vmatpush.bf16.msra.mxu0 %v5557
        %5567 = vmatpush.bf16.msra.mxu0 %v5556
        %5568 = vmatpush.bf16.msra.mxu0 %v5555
        %5569 = vmatpush.bf16.msra.mxu0 %v5554
        %5570 = vmatpush.bf16.msra.mxu0 %v5553
        %5571 = vmatpush.bf16.msra.mxu0 %v5552
        %5572 = vmatpush.bf16.msra.mxu0 %v5551
        %5573 = vmatpush.bf16.msra.mxu0 %v5550
        %5574 = vmatmul.bf16.gmra.mxu0 %v5486
        %v5575 = vpop.f32.mrf.mxu0
        %v5576 = vadd.f32 0.0, %v5575
        %v5577 = vpop.f32.mrf.mxu0
        %v5578 = vadd.f32 0.0, %v5577
        %5579 = vmatmul.bf16.gmra.mxu0 %v5487
        %v5580 = vpop.f32.mrf.mxu0
        %v5581 = vadd.f32 0.0, %v5580
        %v5582 = vpop.f32.mrf.mxu0
        %v5583 = vadd.f32 0.0, %v5582
        %5584 = vmatmul.bf16.gmra.mxu0 %v5488
        %v5585 = vpop.f32.mrf.mxu0
        %v5586 = vadd.f32 0.0, %v5585
        %v5587 = vpop.f32.mrf.mxu0
        %v5588 = vadd.f32 0.0, %v5587
        %5589 = vmatmul.bf16.gmra.mxu0 %v5489
        %v5590 = vpop.f32.mrf.mxu0
        %v5591 = vadd.f32 0.0, %v5590
        %v5592 = vpop.f32.mrf.mxu0
        %v5593 = vadd.f32 0.0, %v5592
        %5594 = vmatmul.bf16.gmra.mxu0 %v5490
        %v5595 = vpop.f32.mrf.mxu0
        %v5596 = vadd.f32 0.0, %v5595
        %v5597 = vpop.f32.mrf.mxu0
        %v5598 = vadd.f32 0.0, %v5597
        %5599 = vmatmul.bf16.gmra.mxu0 %v5491
        %v5600 = vpop.f32.mrf.mxu0
        %v5601 = vadd.f32 0.0, %v5600
        %v5602 = vpop.f32.mrf.mxu0
        %v5603 = vadd.f32 0.0, %v5602
        %5604 = vmatmul.bf16.gmra.mxu0 %v5492
        %v5605 = vpop.f32.mrf.mxu0
        %v5606 = vadd.f32 0.0, %v5605
        %v5607 = vpop.f32.mrf.mxu0
        %v5608 = vadd.f32 0.0, %v5607
        %5609 = vmatmul.bf16.gmra.mxu0 %v5493
        %v5610 = vpop.f32.mrf.mxu0
        %v5611 = vadd.f32 0.0, %v5610
        %v5612 = vpop.f32.mrf.mxu0
        %v5613 = vadd.f32 0.0, %v5612
        %5614 = vmatmul.bf16.gmra.mxu0 %v5494
        %v5615 = vpop.f32.mrf.mxu0
        %v5616 = vadd.f32 0.0, %v5615
        %v5617 = vpop.f32.mrf.mxu0
        %v5618 = vadd.f32 0.0, %v5617
        %5619 = vmatmul.bf16.gmra.mxu0 %v5495
        %v5620 = vpop.f32.mrf.mxu0
        %v5621 = vadd.f32 0.0, %v5620
        %v5622 = vpop.f32.mrf.mxu0
        %v5623 = vadd.f32 0.0, %v5622
        %5624 = vmatmul.bf16.gmra.mxu0 %v5496
        %v5625 = vpop.f32.mrf.mxu0
        %v5626 = vadd.f32 0.0, %v5625
        %v5627 = vpop.f32.mrf.mxu0
        %v5628 = vadd.f32 0.0, %v5627
        %5629 = vmatmul.bf16.gmra.mxu0 %v5497
        %v5630 = vpop.f32.mrf.mxu0
        %v5631 = vadd.f32 0.0, %v5630
        %v5632 = vpop.f32.mrf.mxu0
        %v5633 = vadd.f32 0.0, %v5632
        %5634 = vmatmul.bf16.gmra.mxu0 %v5498
        %v5635 = vpop.f32.mrf.mxu0
        %v5636 = vadd.f32 0.0, %v5635
        %v5637 = vpop.f32.mrf.mxu0
        %v5638 = vadd.f32 0.0, %v5637
        %5639 = vmatmul.bf16.gmra.mxu0 %v5499
        %v5640 = vpop.f32.mrf.mxu0
        %v5641 = vadd.f32 0.0, %v5640
        %v5642 = vpop.f32.mrf.mxu0
        %v5643 = vadd.f32 0.0, %v5642
        %5644 = vmatmul.bf16.gmra.mxu0 %v5500
        %v5645 = vpop.f32.mrf.mxu0
        %v5646 = vadd.f32 0.0, %v5645
        %v5647 = vpop.f32.mrf.mxu0
        %v5648 = vadd.f32 0.0, %v5647
        %5649 = vmatmul.bf16.gmra.mxu0 %v5501
        %v5650 = vpop.f32.mrf.mxu0
        %v5651 = vadd.f32 0.0, %v5650
        %v5652 = vpop.f32.mrf.mxu0
        %v5653 = vadd.f32 0.0, %v5652
        %5654 = vdwg.mxu0
        %v5655 = vadd.f32 %v5181, %v5576
        %v5656 = vadd.f32 %v5182, %v5578
        %v5657 = vadd.f32 %v5183, %v5581
        %v5658 = vadd.f32 %v5184, %v5583
        %v5659 = vadd.f32 %v5185, %v5586
        %v5660 = vadd.f32 %v5186, %v5588
        %v5661 = vadd.f32 %v5187, %v5591
        %v5662 = vadd.f32 %v5188, %v5593
        %v5663 = vadd.f32 %v5189, %v5596
        %v5664 = vadd.f32 %v5190, %v5598
        %v5665 = vadd.f32 %v5191, %v5601
        %v5666 = vadd.f32 %v5192, %v5603
        %v5667 = vadd.f32 %v5193, %v5606
        %v5668 = vadd.f32 %v5194, %v5608
        %v5669 = vadd.f32 %v5195, %v5611
        %v5670 = vadd.f32 %v5196, %v5613
        %v5671 = vadd.f32 %v5197, %v5616
        %v5672 = vadd.f32 %v5198, %v5618
        %v5673 = vadd.f32 %v5199, %v5621
        %v5674 = vadd.f32 %v5200, %v5623
        %v5675 = vadd.f32 %v5201, %v5626
        %v5676 = vadd.f32 %v5202, %v5628
        %v5677 = vadd.f32 %v5203, %v5631
        %v5678 = vadd.f32 %v5204, %v5633
        %v5679 = vadd.f32 %v5205, %v5636
        %v5680 = vadd.f32 %v5206, %v5638
        %v5681 = vadd.f32 %v5207, %v5641
        %v5682 = vadd.f32 %v5208, %v5643
        %v5683 = vadd.f32 %v5209, %v5646
        %v5684 = vadd.f32 %v5210, %v5648
        %v5685 = vadd.f32 %v5211, %v5651
        %v5686 = vadd.f32 %v5212, %v5653
        %s5687 = scalar_lea.vmem [#allocation3], 16
        %v5688 = vld [vmem:[%s5687] sm:$0xf]
        %v5689 = vld [vmem:[%s5687 + $0x8] sm:$0xf]
        %v5690 = vld [vmem:[%s5687 + $0x10] sm:$0xf]
        %v5691 = vld [vmem:[%s5687 + $0x18] sm:$0xf]
        %v5692 = vld [vmem:[%s5687 + $0x20] sm:$0xf]
        %v5693 = vld [vmem:[%s5687 + $0x28] sm:$0xf]
        %v5694 = vld [vmem:[%s5687 + $0x30] sm:$0xf]
        %v5695 = vld [vmem:[%s5687 + $0x38] sm:$0xf]
        %v5696 = vld [vmem:[%s5687 + $0x50] sm:$0xf]
        %v5697 = vld [vmem:[%s5687 + $0x58] sm:$0xf]
        %v5698 = vld [vmem:[%s5687 + $0x60] sm:$0xf]
        %v5699 = vld [vmem:[%s5687 + $0x68] sm:$0xf]
        %v5700 = vld [vmem:[%s5687 + $0x70] sm:$0xf]
        %v5701 = vld [vmem:[%s5687 + $0x78] sm:$0xf]
        %v5702 = vld [vmem:[%s5687 + $0x80] sm:$0xf]
        %v5703 = vld [vmem:[%s5687 + $0x88] sm:$0xf]
        %v5704 = vld [vmem:[%s5687 + $0xa0] sm:$0xf]
        %v5705 = vld [vmem:[%s5687 + $0xa8] sm:$0xf]
        %v5706 = vld [vmem:[%s5687 + $0xb0] sm:$0xf]
        %v5707 = vld [vmem:[%s5687 + $0xb8] sm:$0xf]
        %v5708 = vld [vmem:[%s5687 + $0xc0] sm:$0xf]
        %v5709 = vld [vmem:[%s5687 + $0xc8] sm:$0xf]
        %v5710 = vld [vmem:[%s5687 + $0xd0] sm:$0xf]
        %v5711 = vld [vmem:[%s5687 + $0xd8] sm:$0xf]
        %v5712 = vld [vmem:[%s5687 + $0xf0] sm:$0xf]
        %v5713 = vld [vmem:[%s5687 + $0xf8] sm:$0xf]
        %v5714 = vld [vmem:[%s5687 + $0x100] sm:$0xf]
        %v5715 = vld [vmem:[%s5687 + $0x108] sm:$0xf]
        %v5716 = vld [vmem:[%s5687 + $0x110] sm:$0xf]
        %v5717 = vld [vmem:[%s5687 + $0x118] sm:$0xf]
        %v5718 = vld [vmem:[%s5687 + $0x120] sm:$0xf]
        %v5719 = vld [vmem:[%s5687 + $0x128] sm:$0xf]
        %s5720 = scalar_lea.vmem [#allocation12], 384
        %v5721 = vld [vmem:[%s5720] sm:$0xf]
        %v5722 = vld [vmem:[%s5720 + $0x4] sm:$0xf]
        %v5723 = vld [vmem:[%s5720 + $0x8] sm:$0xf]
        %v5724 = vld [vmem:[%s5720 + $0xc] sm:$0xf]
        %v5725 = vld [vmem:[%s5720 + $0x10] sm:$0xf]
        %v5726 = vld [vmem:[%s5720 + $0x14] sm:$0xf]
        %v5727 = vld [vmem:[%s5720 + $0x18] sm:$0xf]
        %v5728 = vld [vmem:[%s5720 + $0x1c] sm:$0xf]
        %v5729 = vld [vmem:[%s5720 + $0x20] sm:$0xf]
        %v5730 = vld [vmem:[%s5720 + $0x24] sm:$0xf]
        %v5731 = vld [vmem:[%s5720 + $0x28] sm:$0xf]
        %v5732 = vld [vmem:[%s5720 + $0x2c] sm:$0xf]
        %v5733 = vld [vmem:[%s5720 + $0x30] sm:$0xf]
        %v5734 = vld [vmem:[%s5720 + $0x34] sm:$0xf]
        %v5735 = vld [vmem:[%s5720 + $0x38] sm:$0xf]
        %v5736 = vld [vmem:[%s5720 + $0x3c] sm:$0xf]
        %v5769 = vunpack.c.l.b16 %v5688
        %v5770 = vunpack.c.l.b16 %v5689
        %v5771 = vunpack.c.l.b16 %v5690
        %v5772 = vunpack.c.l.b16 %v5691
        %v5773 = vunpack.c.l.b16 %v5692
        %v5774 = vunpack.c.l.b16 %v5693
        %v5775 = vunpack.c.l.b16 %v5694
        %v5776 = vunpack.c.l.b16 %v5695
        %v5777 = vunpack.c.l.b16 %v5696
        %v5778 = vunpack.c.l.b16 %v5697
        %v5779 = vunpack.c.l.b16 %v5698
        %v5780 = vunpack.c.l.b16 %v5699
        %v5781 = vunpack.c.l.b16 %v5700
        %v5782 = vunpack.c.l.b16 %v5701
        %v5783 = vunpack.c.l.b16 %v5702
        %v5784 = vunpack.c.l.b16 %v5703
        %v5785 = vunpack.c.l.b16 %v5704
        %v5786 = vunpack.c.l.b16 %v5705
        %v5787 = vunpack.c.l.b16 %v5706
        %v5788 = vunpack.c.l.b16 %v5707
        %v5789 = vunpack.c.l.b16 %v5708
        %v5790 = vunpack.c.l.b16 %v5709
        %v5791 = vunpack.c.l.b16 %v5710
        %v5792 = vunpack.c.l.b16 %v5711
        %v5793 = vunpack.c.l.b16 %v5712
        %v5794 = vunpack.c.l.b16 %v5713
        %v5795 = vunpack.c.l.b16 %v5714
        %v5796 = vunpack.c.l.b16 %v5715
        %v5797 = vunpack.c.l.b16 %v5716
        %v5798 = vunpack.c.l.b16 %v5717
        %v5799 = vunpack.c.l.b16 %v5718
        %v5800 = vunpack.c.l.b16 %v5719
        %v5801 = vpack.c.b16 %v5770, %v5769
        %v5802 = vpack.c.b16 %v5772, %v5771
        %v5803 = vpack.c.b16 %v5774, %v5773
        %v5804 = vpack.c.b16 %v5776, %v5775
        %v5805 = vpack.c.b16 %v5778, %v5777
        %v5806 = vpack.c.b16 %v5780, %v5779
        %v5807 = vpack.c.b16 %v5782, %v5781
        %v5808 = vpack.c.b16 %v5784, %v5783
        %v5809 = vpack.c.b16 %v5786, %v5785
        %v5810 = vpack.c.b16 %v5788, %v5787
        %v5811 = vpack.c.b16 %v5790, %v5789
        %v5812 = vpack.c.b16 %v5792, %v5791
        %v5813 = vpack.c.b16 %v5794, %v5793
        %v5814 = vpack.c.b16 %v5796, %v5795
        %v5815 = vpack.c.b16 %v5798, %v5797
        %v5816 = vpack.c.b16 %v5800, %v5799
        %v5849 = vunpack.c.l.b16 %v5721
        %v5850 = vunpack.c.l.b16 %v5722
        %v5851 = vunpack.c.l.b16 %v5723
        %v5852 = vunpack.c.l.b16 %v5724
        %v5853 = vunpack.c.l.b16 %v5725
        %v5854 = vunpack.c.l.b16 %v5726
        %v5855 = vunpack.c.l.b16 %v5727
        %v5856 = vunpack.c.l.b16 %v5728
        %v5857 = vunpack.c.l.b16 %v5729
        %v5858 = vunpack.c.l.b16 %v5730
        %v5859 = vunpack.c.l.b16 %v5731
        %v5860 = vunpack.c.l.b16 %v5732
        %v5861 = vunpack.c.l.b16 %v5733
        %v5862 = vunpack.c.l.b16 %v5734
        %v5863 = vunpack.c.l.b16 %v5735
        %v5864 = vunpack.c.l.b16 %v5736
        %v5865 = vpack.c.b16 %v5850, %v5849
        %v5866 = vpack.c.b16 %v5852, %v5851
        %v5867 = vpack.c.b16 %v5854, %v5853
        %v5868 = vpack.c.b16 %v5856, %v5855
        %v5869 = vpack.c.b16 %v5858, %v5857
        %v5870 = vpack.c.b16 %v5860, %v5859
        %v5871 = vpack.c.b16 %v5862, %v5861
        %v5872 = vpack.c.b16 %v5864, %v5863
        %5881 = vmatpush.bf16.msra.mxu0 %v5872
        %5882 = vmatpush.bf16.msra.mxu0 %v5871
        %5883 = vmatpush.bf16.msra.mxu0 %v5870
        %5884 = vmatpush.bf16.msra.mxu0 %v5869
        %5885 = vmatpush.bf16.msra.mxu0 %v5868
        %5886 = vmatpush.bf16.msra.mxu0 %v5867
        %5887 = vmatpush.bf16.msra.mxu0 %v5866
        %5888 = vmatpush.bf16.msra.mxu0 %v5865
        %5889 = vmatmul.bf16.gmra.mxu0 %v5801
        %v5890 = vpop.f32.mrf.mxu0
        %v5891 = vadd.f32 0.0, %v5890
        %v5892 = vpop.f32.mrf.mxu0
        %v5893 = vadd.f32 0.0, %v5892
        %5894 = vmatmul.bf16.gmra.mxu0 %v5802
        %v5895 = vpop.f32.mrf.mxu0
        %v5896 = vadd.f32 0.0, %v5895
        %v5897 = vpop.f32.mrf.mxu0
        %v5898 = vadd.f32 0.0, %v5897
        %5899 = vmatmul.bf16.gmra.mxu0 %v5803
        %v5900 = vpop.f32.mrf.mxu0
        %v5901 = vadd.f32 0.0, %v5900
        %v5902 = vpop.f32.mrf.mxu0
        %v5903 = vadd.f32 0.0, %v5902
        %5904 = vmatmul.bf16.gmra.mxu0 %v5804
        %v5905 = vpop.f32.mrf.mxu0
        %v5906 = vadd.f32 0.0, %v5905
        %v5907 = vpop.f32.mrf.mxu0
        %v5908 = vadd.f32 0.0, %v5907
        %5909 = vmatmul.bf16.gmra.mxu0 %v5805
        %v5910 = vpop.f32.mrf.mxu0
        %v5911 = vadd.f32 0.0, %v5910
        %v5912 = vpop.f32.mrf.mxu0
        %v5913 = vadd.f32 0.0, %v5912
        %5914 = vmatmul.bf16.gmra.mxu0 %v5806
        %v5915 = vpop.f32.mrf.mxu0
        %v5916 = vadd.f32 0.0, %v5915
        %v5917 = vpop.f32.mrf.mxu0
        %v5918 = vadd.f32 0.0, %v5917
        %5919 = vmatmul.bf16.gmra.mxu0 %v5807
        %v5920 = vpop.f32.mrf.mxu0
        %v5921 = vadd.f32 0.0, %v5920
        %v5922 = vpop.f32.mrf.mxu0
        %v5923 = vadd.f32 0.0, %v5922
        %5924 = vmatmul.bf16.gmra.mxu0 %v5808
        %v5925 = vpop.f32.mrf.mxu0
        %v5926 = vadd.f32 0.0, %v5925
        %v5927 = vpop.f32.mrf.mxu0
        %v5928 = vadd.f32 0.0, %v5927
        %5929 = vmatmul.bf16.gmra.mxu0 %v5809
        %v5930 = vpop.f32.mrf.mxu0
        %v5931 = vadd.f32 0.0, %v5930
        %v5932 = vpop.f32.mrf.mxu0
        %v5933 = vadd.f32 0.0, %v5932
        %5934 = vmatmul.bf16.gmra.mxu0 %v5810
        %v5935 = vpop.f32.mrf.mxu0
        %v5936 = vadd.f32 0.0, %v5935
        %v5937 = vpop.f32.mrf.mxu0
        %v5938 = vadd.f32 0.0, %v5937
        %5939 = vmatmul.bf16.gmra.mxu0 %v5811
        %v5940 = vpop.f32.mrf.mxu0
        %v5941 = vadd.f32 0.0, %v5940
        %v5942 = vpop.f32.mrf.mxu0
        %v5943 = vadd.f32 0.0, %v5942
        %5944 = vmatmul.bf16.gmra.mxu0 %v5812
        %v5945 = vpop.f32.mrf.mxu0
        %v5946 = vadd.f32 0.0, %v5945
        %v5947 = vpop.f32.mrf.mxu0
        %v5948 = vadd.f32 0.0, %v5947
        %5949 = vmatmul.bf16.gmra.mxu0 %v5813
        %v5950 = vpop.f32.mrf.mxu0
        %v5951 = vadd.f32 0.0, %v5950
        %v5952 = vpop.f32.mrf.mxu0
        %v5953 = vadd.f32 0.0, %v5952
        %5954 = vmatmul.bf16.gmra.mxu0 %v5814
        %v5955 = vpop.f32.mrf.mxu0
        %v5956 = vadd.f32 0.0, %v5955
        %v5957 = vpop.f32.mrf.mxu0
        %v5958 = vadd.f32 0.0, %v5957
        %5959 = vmatmul.bf16.gmra.mxu0 %v5815
        %v5960 = vpop.f32.mrf.mxu0
        %v5961 = vadd.f32 0.0, %v5960
        %v5962 = vpop.f32.mrf.mxu0
        %v5963 = vadd.f32 0.0, %v5962
        %5964 = vmatmul.bf16.gmra.mxu0 %v5816
        %v5965 = vpop.f32.mrf.mxu0
        %v5966 = vadd.f32 0.0, %v5965
        %v5967 = vpop.f32.mrf.mxu0
        %v5968 = vadd.f32 0.0, %v5967
        %5969 = vdwg.mxu0
        %v5970 = vadd.f32 %v5655, %v5891
        %v5971 = vadd.f32 %v5656, %v5893
        %v5972 = vadd.f32 %v5657, %v5896
        %v5973 = vadd.f32 %v5658, %v5898
        %v5974 = vadd.f32 %v5659, %v5901
        %v5975 = vadd.f32 %v5660, %v5903
        %v5976 = vadd.f32 %v5661, %v5906
        %v5977 = vadd.f32 %v5662, %v5908
        %v5978 = vadd.f32 %v5663, %v5911
        %v5979 = vadd.f32 %v5664, %v5913
        %v5980 = vadd.f32 %v5665, %v5916
        %v5981 = vadd.f32 %v5666, %v5918
        %v5982 = vadd.f32 %v5667, %v5921
        %v5983 = vadd.f32 %v5668, %v5923
        %v5984 = vadd.f32 %v5669, %v5926
        %v5985 = vadd.f32 %v5670, %v5928
        %v5986 = vadd.f32 %v5671, %v5931
        %v5987 = vadd.f32 %v5672, %v5933
        %v5988 = vadd.f32 %v5673, %v5936
        %v5989 = vadd.f32 %v5674, %v5938
        %v5990 = vadd.f32 %v5675, %v5941
        %v5991 = vadd.f32 %v5676, %v5943
        %v5992 = vadd.f32 %v5677, %v5946
        %v5993 = vadd.f32 %v5678, %v5948
        %v5994 = vadd.f32 %v5679, %v5951
        %v5995 = vadd.f32 %v5680, %v5953
        %v5996 = vadd.f32 %v5681, %v5956
        %v5997 = vadd.f32 %v5682, %v5958
        %v5998 = vadd.f32 %v5683, %v5961
        %v5999 = vadd.f32 %v5684, %v5963
        %v6000 = vadd.f32 %v5685, %v5966
        %v6001 = vadd.f32 %v5686, %v5968
        %v6002 = vld [vmem:[%s5687] sm:$0xf]
        %v6003 = vld [vmem:[%s5687 + $0x4] sm:$0x1]
        %v6004 = vld [vmem:[%s5687 + $0x8] sm:$0xf]
        %v6005 = vld [vmem:[%s5687 + $0xc] sm:$0x1]
        %v6006 = vld [vmem:[%s5687 + $0x10] sm:$0xf]
        %v6007 = vld [vmem:[%s5687 + $0x14] sm:$0x1]
        %v6008 = vld [vmem:[%s5687 + $0x18] sm:$0xf]
        %v6009 = vld [vmem:[%s5687 + $0x1c] sm:$0x1]
        %v6010 = vld [vmem:[%s5687 + $0x20] sm:$0xf]
        %v6011 = vld [vmem:[%s5687 + $0x24] sm:$0x1]
        %v6012 = vld [vmem:[%s5687 + $0x28] sm:$0xf]
        %v6013 = vld [vmem:[%s5687 + $0x2c] sm:$0x1]
        %v6014 = vld [vmem:[%s5687 + $0x30] sm:$0xf]
        %v6015 = vld [vmem:[%s5687 + $0x34] sm:$0x1]
        %v6016 = vld [vmem:[%s5687 + $0x38] sm:$0xf]
        %v6017 = vld [vmem:[%s5687 + $0x3c] sm:$0x1]
        %v6018 = vld [vmem:[%s5687 + $0x50] sm:$0xf]
        %v6019 = vld [vmem:[%s5687 + $0x54] sm:$0x1]
        %v6020 = vld [vmem:[%s5687 + $0x58] sm:$0xf]
        %v6021 = vld [vmem:[%s5687 + $0x5c] sm:$0x1]
        %v6022 = vld [vmem:[%s5687 + $0x60] sm:$0xf]
        %v6023 = vld [vmem:[%s5687 + $0x64] sm:$0x1]
        %v6024 = vld [vmem:[%s5687 + $0x68] sm:$0xf]
        %v6025 = vld [vmem:[%s5687 + $0x6c] sm:$0x1]
        %v6026 = vld [vmem:[%s5687 + $0x70] sm:$0xf]
        %v6027 = vld [vmem:[%s5687 + $0x74] sm:$0x1]
        %v6028 = vld [vmem:[%s5687 + $0x78] sm:$0xf]
        %v6029 = vld [vmem:[%s5687 + $0x7c] sm:$0x1]
        %v6030 = vld [vmem:[%s5687 + $0x80] sm:$0xf]
        %v6031 = vld [vmem:[%s5687 + $0x84] sm:$0x1]
        %v6032 = vld [vmem:[%s5687 + $0x88] sm:$0xf]
        %v6033 = vld [vmem:[%s5687 + $0x8c] sm:$0x1]
        %v6034 = vld [vmem:[%s5687 + $0xa0] sm:$0xf]
        %v6035 = vld [vmem:[%s5687 + $0xa4] sm:$0x1]
        %v6036 = vld [vmem:[%s5687 + $0xa8] sm:$0xf]
        %v6037 = vld [vmem:[%s5687 + $0xac] sm:$0x1]
        %v6038 = vld [vmem:[%s5687 + $0xb0] sm:$0xf]
        %v6039 = vld [vmem:[%s5687 + $0xb4] sm:$0x1]
        %v6040 = vld [vmem:[%s5687 + $0xb8] sm:$0xf]
        %v6041 = vld [vmem:[%s5687 + $0xbc] sm:$0x1]
        %v6042 = vld [vmem:[%s5687 + $0xc0] sm:$0xf]
        %v6043 = vld [vmem:[%s5687 + $0xc4] sm:$0x1]
        %v6044 = vld [vmem:[%s5687 + $0xc8] sm:$0xf]
        %v6045 = vld [vmem:[%s5687 + $0xcc] sm:$0x1]
        %v6046 = vld [vmem:[%s5687 + $0xd0] sm:$0xf]
        %v6047 = vld [vmem:[%s5687 + $0xd4] sm:$0x1]
        %v6048 = vld [vmem:[%s5687 + $0xd8] sm:$0xf]
        %v6049 = vld [vmem:[%s5687 + $0xdc] sm:$0x1]
        %v6050 = vld [vmem:[%s5687 + $0xf0] sm:$0xf]
        %v6051 = vld [vmem:[%s5687 + $0xf4] sm:$0x1]
        %v6052 = vld [vmem:[%s5687 + $0xf8] sm:$0xf]
        %v6053 = vld [vmem:[%s5687 + $0xfc] sm:$0x1]
        %v6054 = vld [vmem:[%s5687 + $0x100] sm:$0xf]
        %v6055 = vld [vmem:[%s5687 + $0x104] sm:$0x1]
        %v6056 = vld [vmem:[%s5687 + $0x108] sm:$0xf]
        %v6057 = vld [vmem:[%s5687 + $0x10c] sm:$0x1]
        %v6058 = vld [vmem:[%s5687 + $0x110] sm:$0xf]
        %v6059 = vld [vmem:[%s5687 + $0x114] sm:$0x1]
        %v6060 = vld [vmem:[%s5687 + $0x118] sm:$0xf]
        %v6061 = vld [vmem:[%s5687 + $0x11c] sm:$0x1]
        %v6062 = vld [vmem:[%s5687 + $0x120] sm:$0xf]
        %v6063 = vld [vmem:[%s5687 + $0x124] sm:$0x1]
        %v6064 = vld [vmem:[%s5687 + $0x128] sm:$0xf]
        %v6065 = vld [vmem:[%s5687 + $0x12c] sm:$0x1]
        %v6067 = vshrl.u32 %v6002, 16
        %v6069 = vrot.slane %v6067, 4
        %v6070 = vshll.u32 %v6002, 16
        %v6072 = vrot.slane %v6070, 5
        %v6073 = vor.u32 %v6069, %v6072
        %v6074 = vrot.slane %v6073, 4
        %v6076 = vshll.u32 %v6003, 16
        %v6078 = vrot.slane %v6076, 5
        %v6079 = vsel %vm2760, %v6074, %v6078
        %v6081 = vshrl.u32 %v6004, 16
        %v6083 = vrot.slane %v6081, 4
        %v6084 = vshll.u32 %v6004, 16
        %v6086 = vrot.slane %v6084, 5
        %v6087 = vor.u32 %v6083, %v6086
        %v6088 = vrot.slane %v6087, 4
        %v6090 = vshll.u32 %v6005, 16
        %v6092 = vrot.slane %v6090, 5
        %v6093 = vsel %vm2760, %v6088, %v6092
        %v6095 = vshrl.u32 %v6006, 16
        %v6097 = vrot.slane %v6095, 4
        %v6098 = vshll.u32 %v6006, 16
        %v6100 = vrot.slane %v6098, 5
        %v6101 = vor.u32 %v6097, %v6100
        %v6102 = vrot.slane %v6101, 4
        %v6104 = vshll.u32 %v6007, 16
        %v6106 = vrot.slane %v6104, 5
        %v6107 = vsel %vm2760, %v6102, %v6106
        %v6109 = vshrl.u32 %v6008, 16
        %v6111 = vrot.slane %v6109, 4
        %v6112 = vshll.u32 %v6008, 16
        %v6114 = vrot.slane %v6112, 5
        %v6115 = vor.u32 %v6111, %v6114
        %v6116 = vrot.slane %v6115, 4
        %v6118 = vshll.u32 %v6009, 16
        %v6120 = vrot.slane %v6118, 5
        %v6121 = vsel %vm2760, %v6116, %v6120
        %v6123 = vshrl.u32 %v6010, 16
        %v6125 = vrot.slane %v6123, 4
        %v6126 = vshll.u32 %v6010, 16
        %v6128 = vrot.slane %v6126, 5
        %v6129 = vor.u32 %v6125, %v6128
        %v6130 = vrot.slane %v6129, 4
        %v6132 = vshll.u32 %v6011, 16
        %v6134 = vrot.slane %v6132, 5
        %v6135 = vsel %vm2760, %v6130, %v6134
        %v6137 = vshrl.u32 %v6012, 16
        %v6139 = vrot.slane %v6137, 4
        %v6140 = vshll.u32 %v6012, 16
        %v6142 = vrot.slane %v6140, 5
        %v6143 = vor.u32 %v6139, %v6142
        %v6144 = vrot.slane %v6143, 4
        %v6146 = vshll.u32 %v6013, 16
        %v6148 = vrot.slane %v6146, 5
        %v6149 = vsel %vm2760, %v6144, %v6148
        %v6151 = vshrl.u32 %v6014, 16
        %v6153 = vrot.slane %v6151, 4
        %v6154 = vshll.u32 %v6014, 16
        %v6156 = vrot.slane %v6154, 5
        %v6157 = vor.u32 %v6153, %v6156
        %v6158 = vrot.slane %v6157, 4
        %v6160 = vshll.u32 %v6015, 16
        %v6162 = vrot.slane %v6160, 5
        %v6163 = vsel %vm2760, %v6158, %v6162
        %v6165 = vshrl.u32 %v6016, 16
        %v6167 = vrot.slane %v6165, 4
        %v6168 = vshll.u32 %v6016, 16
        %v6170 = vrot.slane %v6168, 5
        %v6171 = vor.u32 %v6167, %v6170
        %v6172 = vrot.slane %v6171, 4
        %v6174 = vshll.u32 %v6017, 16
        %v6176 = vrot.slane %v6174, 5
        %v6177 = vsel %vm2760, %v6172, %v6176
        %v6179 = vshrl.u32 %v6018, 16
        %v6181 = vrot.slane %v6179, 4
        %v6182 = vshll.u32 %v6018, 16
        %v6184 = vrot.slane %v6182, 5
        %v6185 = vor.u32 %v6181, %v6184
        %v6186 = vrot.slane %v6185, 4
        %v6188 = vshll.u32 %v6019, 16
        %v6190 = vrot.slane %v6188, 5
        %v6191 = vsel %vm2760, %v6186, %v6190
        %v6193 = vshrl.u32 %v6020, 16
        %v6195 = vrot.slane %v6193, 4
        %v6196 = vshll.u32 %v6020, 16
        %v6198 = vrot.slane %v6196, 5
        %v6199 = vor.u32 %v6195, %v6198
        %v6200 = vrot.slane %v6199, 4
        %v6202 = vshll.u32 %v6021, 16
        %v6204 = vrot.slane %v6202, 5
        %v6205 = vsel %vm2760, %v6200, %v6204
        %v6207 = vshrl.u32 %v6022, 16
        %v6209 = vrot.slane %v6207, 4
        %v6210 = vshll.u32 %v6022, 16
        %v6212 = vrot.slane %v6210, 5
        %v6213 = vor.u32 %v6209, %v6212
        %v6214 = vrot.slane %v6213, 4
        %v6216 = vshll.u32 %v6023, 16
        %v6218 = vrot.slane %v6216, 5
        %v6219 = vsel %vm2760, %v6214, %v6218
        %v6221 = vshrl.u32 %v6024, 16
        %v6223 = vrot.slane %v6221, 4
        %v6224 = vshll.u32 %v6024, 16
        %v6226 = vrot.slane %v6224, 5
        %v6227 = vor.u32 %v6223, %v6226
        %v6228 = vrot.slane %v6227, 4
        %v6230 = vshll.u32 %v6025, 16
        %v6232 = vrot.slane %v6230, 5
        %v6233 = vsel %vm2760, %v6228, %v6232
        %v6235 = vshrl.u32 %v6026, 16
        %v6237 = vrot.slane %v6235, 4
        %v6238 = vshll.u32 %v6026, 16
        %v6240 = vrot.slane %v6238, 5
        %v6241 = vor.u32 %v6237, %v6240
        %v6242 = vrot.slane %v6241, 4
        %v6244 = vshll.u32 %v6027, 16
        %v6246 = vrot.slane %v6244, 5
        %v6247 = vsel %vm2760, %v6242, %v6246
        %v6249 = vshrl.u32 %v6028, 16
        %v6251 = vrot.slane %v6249, 4
        %v6252 = vshll.u32 %v6028, 16
        %v6254 = vrot.slane %v6252, 5
        %v6255 = vor.u32 %v6251, %v6254
        %v6256 = vrot.slane %v6255, 4
        %v6258 = vshll.u32 %v6029, 16
        %v6260 = vrot.slane %v6258, 5
        %v6261 = vsel %vm2760, %v6256, %v6260
        %v6263 = vshrl.u32 %v6030, 16
        %v6265 = vrot.slane %v6263, 4
        %v6266 = vshll.u32 %v6030, 16
        %v6268 = vrot.slane %v6266, 5
        %v6269 = vor.u32 %v6265, %v6268
        %v6270 = vrot.slane %v6269, 4
        %v6272 = vshll.u32 %v6031, 16
        %v6274 = vrot.slane %v6272, 5
        %v6275 = vsel %vm2760, %v6270, %v6274
        %v6277 = vshrl.u32 %v6032, 16
        %v6279 = vrot.slane %v6277, 4
        %v6280 = vshll.u32 %v6032, 16
        %v6282 = vrot.slane %v6280, 5
        %v6283 = vor.u32 %v6279, %v6282
        %v6284 = vrot.slane %v6283, 4
        %v6286 = vshll.u32 %v6033, 16
        %v6288 = vrot.slane %v6286, 5
        %v6289 = vsel %vm2760, %v6284, %v6288
        %v6291 = vshrl.u32 %v6034, 16
        %v6293 = vrot.slane %v6291, 4
        %v6294 = vshll.u32 %v6034, 16
        %v6296 = vrot.slane %v6294, 5
        %v6297 = vor.u32 %v6293, %v6296
        %v6298 = vrot.slane %v6297, 4
        %v6300 = vshll.u32 %v6035, 16
        %v6302 = vrot.slane %v6300, 5
        %v6303 = vsel %vm2760, %v6298, %v6302
        %v6305 = vshrl.u32 %v6036, 16
        %v6307 = vrot.slane %v6305, 4
        %v6308 = vshll.u32 %v6036, 16
        %v6310 = vrot.slane %v6308, 5
        %v6311 = vor.u32 %v6307, %v6310
        %v6312 = vrot.slane %v6311, 4
        %v6314 = vshll.u32 %v6037, 16
        %v6316 = vrot.slane %v6314, 5
        %v6317 = vsel %vm2760, %v6312, %v6316
        %v6319 = vshrl.u32 %v6038, 16
        %v6321 = vrot.slane %v6319, 4
        %v6322 = vshll.u32 %v6038, 16
        %v6324 = vrot.slane %v6322, 5
        %v6325 = vor.u32 %v6321, %v6324
        %v6326 = vrot.slane %v6325, 4
        %v6328 = vshll.u32 %v6039, 16
        %v6330 = vrot.slane %v6328, 5
        %v6331 = vsel %vm2760, %v6326, %v6330
        %v6333 = vshrl.u32 %v6040, 16
        %v6335 = vrot.slane %v6333, 4
        %v6336 = vshll.u32 %v6040, 16
        %v6338 = vrot.slane %v6336, 5
        %v6339 = vor.u32 %v6335, %v6338
        %v6340 = vrot.slane %v6339, 4
        %v6342 = vshll.u32 %v6041, 16
        %v6344 = vrot.slane %v6342, 5
        %v6345 = vsel %vm2760, %v6340, %v6344
        %v6347 = vshrl.u32 %v6042, 16
        %v6349 = vrot.slane %v6347, 4
        %v6350 = vshll.u32 %v6042, 16
        %v6352 = vrot.slane %v6350, 5
        %v6353 = vor.u32 %v6349, %v6352
        %v6354 = vrot.slane %v6353, 4
        %v6356 = vshll.u32 %v6043, 16
        %v6358 = vrot.slane %v6356, 5
        %v6359 = vsel %vm2760, %v6354, %v6358
        %v6361 = vshrl.u32 %v6044, 16
        %v6363 = vrot.slane %v6361, 4
        %v6364 = vshll.u32 %v6044, 16
        %v6366 = vrot.slane %v6364, 5
        %v6367 = vor.u32 %v6363, %v6366
        %v6368 = vrot.slane %v6367, 4
        %v6370 = vshll.u32 %v6045, 16
        %v6372 = vrot.slane %v6370, 5
        %v6373 = vsel %vm2760, %v6368, %v6372
        %v6375 = vshrl.u32 %v6046, 16
        %v6377 = vrot.slane %v6375, 4
        %v6378 = vshll.u32 %v6046, 16
        %v6380 = vrot.slane %v6378, 5
        %v6381 = vor.u32 %v6377, %v6380
        %v6382 = vrot.slane %v6381, 4
        %v6384 = vshll.u32 %v6047, 16
        %v6386 = vrot.slane %v6384, 5
        %v6387 = vsel %vm2760, %v6382, %v6386
        %v6389 = vshrl.u32 %v6048, 16
        %v6391 = vrot.slane %v6389, 4
        %v6392 = vshll.u32 %v6048, 16
        %v6394 = vrot.slane %v6392, 5
        %v6395 = vor.u32 %v6391, %v6394
        %v6396 = vrot.slane %v6395, 4
        %v6398 = vshll.u32 %v6049, 16
        %v6400 = vrot.slane %v6398, 5
        %v6401 = vsel %vm2760, %v6396, %v6400
        %v6403 = vshrl.u32 %v6050, 16
        %v6405 = vrot.slane %v6403, 4
        %v6406 = vshll.u32 %v6050, 16
        %v6408 = vrot.slane %v6406, 5
        %v6409 = vor.u32 %v6405, %v6408
        %v6410 = vrot.slane %v6409, 4
        %v6412 = vshll.u32 %v6051, 16
        %v6414 = vrot.slane %v6412, 5
        %v6415 = vsel %vm2760, %v6410, %v6414
        %v6417 = vshrl.u32 %v6052, 16
        %v6419 = vrot.slane %v6417, 4
        %v6420 = vshll.u32 %v6052, 16
        %v6422 = vrot.slane %v6420, 5
        %v6423 = vor.u32 %v6419, %v6422
        %v6424 = vrot.slane %v6423, 4
        %v6426 = vshll.u32 %v6053, 16
        %v6428 = vrot.slane %v6426, 5
        %v6429 = vsel %vm2760, %v6424, %v6428
        %v6431 = vshrl.u32 %v6054, 16
        %v6433 = vrot.slane %v6431, 4
        %v6434 = vshll.u32 %v6054, 16
        %v6436 = vrot.slane %v6434, 5
        %v6437 = vor.u32 %v6433, %v6436
        %v6438 = vrot.slane %v6437, 4
        %v6440 = vshll.u32 %v6055, 16
        %v6442 = vrot.slane %v6440, 5
        %v6443 = vsel %vm2760, %v6438, %v6442
        %v6445 = vshrl.u32 %v6056, 16
        %v6447 = vrot.slane %v6445, 4
        %v6448 = vshll.u32 %v6056, 16
        %v6450 = vrot.slane %v6448, 5
        %v6451 = vor.u32 %v6447, %v6450
        %v6452 = vrot.slane %v6451, 4
        %v6454 = vshll.u32 %v6057, 16
        %v6456 = vrot.slane %v6454, 5
        %v6457 = vsel %vm2760, %v6452, %v6456
        %v6459 = vshrl.u32 %v6058, 16
        %v6461 = vrot.slane %v6459, 4
        %v6462 = vshll.u32 %v6058, 16
        %v6464 = vrot.slane %v6462, 5
        %v6465 = vor.u32 %v6461, %v6464
        %v6466 = vrot.slane %v6465, 4
        %v6468 = vshll.u32 %v6059, 16
        %v6470 = vrot.slane %v6468, 5
        %v6471 = vsel %vm2760, %v6466, %v6470
        %v6473 = vshrl.u32 %v6060, 16
        %v6475 = vrot.slane %v6473, 4
        %v6476 = vshll.u32 %v6060, 16
        %v6478 = vrot.slane %v6476, 5
        %v6479 = vor.u32 %v6475, %v6478
        %v6480 = vrot.slane %v6479, 4
        %v6482 = vshll.u32 %v6061, 16
        %v6484 = vrot.slane %v6482, 5
        %v6485 = vsel %vm2760, %v6480, %v6484
        %v6487 = vshrl.u32 %v6062, 16
        %v6489 = vrot.slane %v6487, 4
        %v6490 = vshll.u32 %v6062, 16
        %v6492 = vrot.slane %v6490, 5
        %v6493 = vor.u32 %v6489, %v6492
        %v6494 = vrot.slane %v6493, 4
        %v6496 = vshll.u32 %v6063, 16
        %v6498 = vrot.slane %v6496, 5
        %v6499 = vsel %vm2760, %v6494, %v6498
        %v6501 = vshrl.u32 %v6064, 16
        %v6503 = vrot.slane %v6501, 4
        %v6504 = vshll.u32 %v6064, 16
        %v6506 = vrot.slane %v6504, 5
        %v6507 = vor.u32 %v6503, %v6506
        %v6508 = vrot.slane %v6507, 4
        %v6510 = vshll.u32 %v6065, 16
        %v6512 = vrot.slane %v6510, 5
        %v6513 = vsel %vm2760, %v6508, %v6512
        %s6514 = scalar_lea.vmem [#allocation12], 448
        %v6515 = vld [vmem:[%s6514] sm:$0xf]
        %v6516 = vld [vmem:[%s6514 + $0x4] sm:$0xf]
        %v6517 = vld [vmem:[%s6514 + $0x8] sm:$0xf]
        %v6518 = vld [vmem:[%s6514 + $0xc] sm:$0xf]
        %v6519 = vld [vmem:[%s6514 + $0x10] sm:$0xf]
        %v6520 = vld [vmem:[%s6514 + $0x14] sm:$0xf]
        %v6521 = vld [vmem:[%s6514 + $0x18] sm:$0xf]
        %v6522 = vld [vmem:[%s6514 + $0x1c] sm:$0xf]
        %v6523 = vld [vmem:[%s6514 + $0x20] sm:$0xf]
        %v6524 = vld [vmem:[%s6514 + $0x24] sm:$0xf]
        %v6525 = vld [vmem:[%s6514 + $0x28] sm:$0xf]
        %v6526 = vld [vmem:[%s6514 + $0x2c] sm:$0xf]
        %v6527 = vld [vmem:[%s6514 + $0x30] sm:$0xf]
        %v6528 = vld [vmem:[%s6514 + $0x34] sm:$0xf]
        %v6529 = vld [vmem:[%s6514 + $0x38] sm:$0xf]
        %v6530 = vld [vmem:[%s6514 + $0x3c] sm:$0xf]
        %v6531 = vunpack.c.l.b16 %v6079
        %v6532 = vunpack.c.l.b16 %v6093
        %v6533 = vunpack.c.l.b16 %v6107
        %v6534 = vunpack.c.l.b16 %v6121
        %v6535 = vunpack.c.l.b16 %v6135
        %v6536 = vunpack.c.l.b16 %v6149
        %v6537 = vunpack.c.l.b16 %v6163
        %v6538 = vunpack.c.l.b16 %v6177
        %v6539 = vunpack.c.l.b16 %v6191
        %v6540 = vunpack.c.l.b16 %v6205
        %v6541 = vunpack.c.l.b16 %v6219
        %v6542 = vunpack.c.l.b16 %v6233
        %v6543 = vunpack.c.l.b16 %v6247
        %v6544 = vunpack.c.l.b16 %v6261
        %v6545 = vunpack.c.l.b16 %v6275
        %v6546 = vunpack.c.l.b16 %v6289
        %v6547 = vunpack.c.l.b16 %v6303
        %v6548 = vunpack.c.l.b16 %v6317
        %v6549 = vunpack.c.l.b16 %v6331
        %v6550 = vunpack.c.l.b16 %v6345
        %v6551 = vunpack.c.l.b16 %v6359
        %v6552 = vunpack.c.l.b16 %v6373
        %v6553 = vunpack.c.l.b16 %v6387
        %v6554 = vunpack.c.l.b16 %v6401
        %v6555 = vunpack.c.l.b16 %v6415
        %v6556 = vunpack.c.l.b16 %v6429
        %v6557 = vunpack.c.l.b16 %v6443
        %v6558 = vunpack.c.l.b16 %v6457
        %v6559 = vunpack.c.l.b16 %v6471
        %v6560 = vunpack.c.l.b16 %v6485
        %v6561 = vunpack.c.l.b16 %v6499
        %v6562 = vunpack.c.l.b16 %v6513
        %v6563 = vpack.c.b16 %v6532, %v6531
        %v6564 = vpack.c.b16 %v6534, %v6533
        %v6565 = vpack.c.b16 %v6536, %v6535
        %v6566 = vpack.c.b16 %v6538, %v6537
        %v6567 = vpack.c.b16 %v6540, %v6539
        %v6568 = vpack.c.b16 %v6542, %v6541
        %v6569 = vpack.c.b16 %v6544, %v6543
        %v6570 = vpack.c.b16 %v6546, %v6545
        %v6571 = vpack.c.b16 %v6548, %v6547
        %v6572 = vpack.c.b16 %v6550, %v6549
        %v6573 = vpack.c.b16 %v6552, %v6551
        %v6574 = vpack.c.b16 %v6554, %v6553
        %v6575 = vpack.c.b16 %v6556, %v6555
        %v6576 = vpack.c.b16 %v6558, %v6557
        %v6577 = vpack.c.b16 %v6560, %v6559
        %v6578 = vpack.c.b16 %v6562, %v6561
        %v6611 = vunpack.c.l.b16 %v6515
        %v6612 = vunpack.c.l.b16 %v6516
        %v6613 = vunpack.c.l.b16 %v6517
        %v6614 = vunpack.c.l.b16 %v6518
        %v6615 = vunpack.c.l.b16 %v6519
        %v6616 = vunpack.c.l.b16 %v6520
        %v6617 = vunpack.c.l.b16 %v6521
        %v6618 = vunpack.c.l.b16 %v6522
        %v6619 = vunpack.c.l.b16 %v6523
        %v6620 = vunpack.c.l.b16 %v6524
        %v6621 = vunpack.c.l.b16 %v6525
        %v6622 = vunpack.c.l.b16 %v6526
        %v6623 = vunpack.c.l.b16 %v6527
        %v6624 = vunpack.c.l.b16 %v6528
        %v6625 = vunpack.c.l.b16 %v6529
        %v6626 = vunpack.c.l.b16 %v6530
        %v6627 = vpack.c.b16 %v6612, %v6611
        %v6628 = vpack.c.b16 %v6614, %v6613
        %v6629 = vpack.c.b16 %v6616, %v6615
        %v6630 = vpack.c.b16 %v6618, %v6617
        %v6631 = vpack.c.b16 %v6620, %v6619
        %v6632 = vpack.c.b16 %v6622, %v6621
        %v6633 = vpack.c.b16 %v6624, %v6623
        %v6634 = vpack.c.b16 %v6626, %v6625
        %6643 = vmatpush.bf16.msra.mxu0 %v6634
        %6644 = vmatpush.bf16.msra.mxu0 %v6633
        %6645 = vmatpush.bf16.msra.mxu0 %v6632
        %6646 = vmatpush.bf16.msra.mxu0 %v6631
        %6647 = vmatpush.bf16.msra.mxu0 %v6630
        %6648 = vmatpush.bf16.msra.mxu0 %v6629
        %6649 = vmatpush.bf16.msra.mxu0 %v6628
        %6650 = vmatpush.bf16.msra.mxu0 %v6627
        %6651 = vmatmul.bf16.gmra.mxu0 %v6563
        %v6652 = vpop.f32.mrf.mxu0
        %v6653 = vadd.f32 0.0, %v6652
        %v6654 = vpop.f32.mrf.mxu0
        %v6655 = vadd.f32 0.0, %v6654
        %6656 = vmatmul.bf16.gmra.mxu0 %v6564
        %v6657 = vpop.f32.mrf.mxu0
        %v6658 = vadd.f32 0.0, %v6657
        %v6659 = vpop.f32.mrf.mxu0
        %v6660 = vadd.f32 0.0, %v6659
        %6661 = vmatmul.bf16.gmra.mxu0 %v6565
        %v6662 = vpop.f32.mrf.mxu0
        %v6663 = vadd.f32 0.0, %v6662
        %v6664 = vpop.f32.mrf.mxu0
        %v6665 = vadd.f32 0.0, %v6664
        %6666 = vmatmul.bf16.gmra.mxu0 %v6566
        %v6667 = vpop.f32.mrf.mxu0
        %v6668 = vadd.f32 0.0, %v6667
        %v6669 = vpop.f32.mrf.mxu0
        %v6670 = vadd.f32 0.0, %v6669
        %6671 = vmatmul.bf16.gmra.mxu0 %v6567
        %v6672 = vpop.f32.mrf.mxu0
        %v6673 = vadd.f32 0.0, %v6672
        %v6674 = vpop.f32.mrf.mxu0
        %v6675 = vadd.f32 0.0, %v6674
        %6676 = vmatmul.bf16.gmra.mxu0 %v6568
        %v6677 = vpop.f32.mrf.mxu0
        %v6678 = vadd.f32 0.0, %v6677
        %v6679 = vpop.f32.mrf.mxu0
        %v6680 = vadd.f32 0.0, %v6679
        %6681 = vmatmul.bf16.gmra.mxu0 %v6569
        %v6682 = vpop.f32.mrf.mxu0
        %v6683 = vadd.f32 0.0, %v6682
        %v6684 = vpop.f32.mrf.mxu0
        %v6685 = vadd.f32 0.0, %v6684
        %6686 = vmatmul.bf16.gmra.mxu0 %v6570
        %v6687 = vpop.f32.mrf.mxu0
        %v6688 = vadd.f32 0.0, %v6687
        %v6689 = vpop.f32.mrf.mxu0
        %v6690 = vadd.f32 0.0, %v6689
        %6691 = vmatmul.bf16.gmra.mxu0 %v6571
        %v6692 = vpop.f32.mrf.mxu0
        %v6693 = vadd.f32 0.0, %v6692
        %v6694 = vpop.f32.mrf.mxu0
        %v6695 = vadd.f32 0.0, %v6694
        %6696 = vmatmul.bf16.gmra.mxu0 %v6572
        %v6697 = vpop.f32.mrf.mxu0
        %v6698 = vadd.f32 0.0, %v6697
        %v6699 = vpop.f32.mrf.mxu0
        %v6700 = vadd.f32 0.0, %v6699
        %6701 = vmatmul.bf16.gmra.mxu0 %v6573
        %v6702 = vpop.f32.mrf.mxu0
        %v6703 = vadd.f32 0.0, %v6702
        %v6704 = vpop.f32.mrf.mxu0
        %v6705 = vadd.f32 0.0, %v6704
        %6706 = vmatmul.bf16.gmra.mxu0 %v6574
        %v6707 = vpop.f32.mrf.mxu0
        %v6708 = vadd.f32 0.0, %v6707
        %v6709 = vpop.f32.mrf.mxu0
        %v6710 = vadd.f32 0.0, %v6709
        %6711 = vmatmul.bf16.gmra.mxu0 %v6575
        %v6712 = vpop.f32.mrf.mxu0
        %v6713 = vadd.f32 0.0, %v6712
        %v6714 = vpop.f32.mrf.mxu0
        %v6715 = vadd.f32 0.0, %v6714
        %6716 = vmatmul.bf16.gmra.mxu0 %v6576
        %v6717 = vpop.f32.mrf.mxu0
        %v6718 = vadd.f32 0.0, %v6717
        %v6719 = vpop.f32.mrf.mxu0
        %v6720 = vadd.f32 0.0, %v6719
        %6721 = vmatmul.bf16.gmra.mxu0 %v6577
        %v6722 = vpop.f32.mrf.mxu0
        %v6723 = vadd.f32 0.0, %v6722
        %v6724 = vpop.f32.mrf.mxu0
        %v6725 = vadd.f32 0.0, %v6724
        %6726 = vmatmul.bf16.gmra.mxu0 %v6578
        %v6727 = vpop.f32.mrf.mxu0
        %v6728 = vadd.f32 0.0, %v6727
        %v6729 = vpop.f32.mrf.mxu0
        %v6730 = vadd.f32 0.0, %v6729
        %6731 = vdwg.mxu0
        %v6732 = vadd.f32 %v5970, %v6653
        %v6733 = vadd.f32 %v5971, %v6655
        %v6734 = vadd.f32 %v5972, %v6658
        %v6735 = vadd.f32 %v5973, %v6660
        %v6736 = vadd.f32 %v5974, %v6663
        %v6737 = vadd.f32 %v5975, %v6665
        %v6738 = vadd.f32 %v5976, %v6668
        %v6739 = vadd.f32 %v5977, %v6670
        %v6740 = vadd.f32 %v5978, %v6673
        %v6741 = vadd.f32 %v5979, %v6675
        %v6742 = vadd.f32 %v5980, %v6678
        %v6743 = vadd.f32 %v5981, %v6680
        %v6744 = vadd.f32 %v5982, %v6683
        %v6745 = vadd.f32 %v5983, %v6685
        %v6746 = vadd.f32 %v5984, %v6688
        %v6747 = vadd.f32 %v5985, %v6690
        %v6748 = vadd.f32 %v5986, %v6693
        %v6749 = vadd.f32 %v5987, %v6695
        %v6750 = vadd.f32 %v5988, %v6698
        %v6751 = vadd.f32 %v5989, %v6700
        %v6752 = vadd.f32 %v5990, %v6703
        %v6753 = vadd.f32 %v5991, %v6705
        %v6754 = vadd.f32 %v5992, %v6708
        %v6755 = vadd.f32 %v5993, %v6710
        %v6756 = vadd.f32 %v5994, %v6713
        %v6757 = vadd.f32 %v5995, %v6715
        %v6758 = vadd.f32 %v5996, %v6718
        %v6759 = vadd.f32 %v5997, %v6720
        %v6760 = vadd.f32 %v5998, %v6723
        %v6761 = vadd.f32 %v5999, %v6725
        %v6762 = vadd.f32 %v6000, %v6728
        %v6763 = vadd.f32 %v6001, %v6730
        %v6764 = vld [vmem:[%s5687] sm:$0xe]
        %v6765 = vld [vmem:[%s5687 + $0x8] sm:$0xe]
        %v6766 = vld [vmem:[%s5687 + $0x10] sm:$0xe]
        %v6767 = vld [vmem:[%s5687 + $0x18] sm:$0xe]
        %v6768 = vld [vmem:[%s5687 + $0x20] sm:$0xe]
        %v6769 = vld [vmem:[%s5687 + $0x28] sm:$0xe]
        %v6770 = vld [vmem:[%s5687 + $0x30] sm:$0xe]
        %v6771 = vld [vmem:[%s5687 + $0x38] sm:$0xe]
        %v6772 = vld [vmem:[%s5687 + $0x50] sm:$0xe]
        %v6773 = vld [vmem:[%s5687 + $0x58] sm:$0xe]
        %v6774 = vld [vmem:[%s5687 + $0x60] sm:$0xe]
        %v6775 = vld [vmem:[%s5687 + $0x68] sm:$0xe]
        %v6776 = vld [vmem:[%s5687 + $0x70] sm:$0xe]
        %v6777 = vld [vmem:[%s5687 + $0x78] sm:$0xe]
        %v6778 = vld [vmem:[%s5687 + $0x80] sm:$0xe]
        %v6779 = vld [vmem:[%s5687 + $0x88] sm:$0xe]
        %v6780 = vld [vmem:[%s5687 + $0xa0] sm:$0xe]
        %v6781 = vld [vmem:[%s5687 + $0xa8] sm:$0xe]
        %v6782 = vld [vmem:[%s5687 + $0xb0] sm:$0xe]
        %v6783 = vld [vmem:[%s5687 + $0xb8] sm:$0xe]
        %v6784 = vld [vmem:[%s5687 + $0xc0] sm:$0xe]
        %v6785 = vld [vmem:[%s5687 + $0xc8] sm:$0xe]
        %v6786 = vld [vmem:[%s5687 + $0xd0] sm:$0xe]
        %v6787 = vld [vmem:[%s5687 + $0xd8] sm:$0xe]
        %v6788 = vld [vmem:[%s5687 + $0xf0] sm:$0xe]
        %v6789 = vld [vmem:[%s5687 + $0xf8] sm:$0xe]
        %v6790 = vld [vmem:[%s5687 + $0x100] sm:$0xe]
        %v6791 = vld [vmem:[%s5687 + $0x108] sm:$0xe]
        %v6792 = vld [vmem:[%s5687 + $0x110] sm:$0xe]
        %v6793 = vld [vmem:[%s5687 + $0x118] sm:$0xe]
        %v6794 = vld [vmem:[%s5687 + $0x120] sm:$0xe]
        %v6795 = vld [vmem:[%s5687 + $0x128] sm:$0xe]
        %v6860 = vrot.slane %v6764, 5
        %v6861 = vrot.slane %v6860, 4
        %v6862 = vrot.slane %v6003, 5
        %v6863 = vsel %vm3758, %v6861, %v6862
        %v6864 = vrot.slane %v6765, 5
        %v6865 = vrot.slane %v6864, 4
        %v6866 = vrot.slane %v6005, 5
        %v6867 = vsel %vm3758, %v6865, %v6866
        %v6868 = vrot.slane %v6766, 5
        %v6869 = vrot.slane %v6868, 4
        %v6870 = vrot.slane %v6007, 5
        %v6871 = vsel %vm3758, %v6869, %v6870
        %v6872 = vrot.slane %v6767, 5
        %v6873 = vrot.slane %v6872, 4
        %v6874 = vrot.slane %v6009, 5
        %v6875 = vsel %vm3758, %v6873, %v6874
        %v6876 = vrot.slane %v6768, 5
        %v6877 = vrot.slane %v6876, 4
        %v6878 = vrot.slane %v6011, 5
        %v6879 = vsel %vm3758, %v6877, %v6878
        %v6880 = vrot.slane %v6769, 5
        %v6881 = vrot.slane %v6880, 4
        %v6882 = vrot.slane %v6013, 5
        %v6883 = vsel %vm3758, %v6881, %v6882
        %v6884 = vrot.slane %v6770, 5
        %v6885 = vrot.slane %v6884, 4
        %v6886 = vrot.slane %v6015, 5
        %v6887 = vsel %vm3758, %v6885, %v6886
        %v6888 = vrot.slane %v6771, 5
        %v6889 = vrot.slane %v6888, 4
        %v6890 = vrot.slane %v6017, 5
        %v6891 = vsel %vm3758, %v6889, %v6890
        %v6892 = vrot.slane %v6772, 5
        %v6893 = vrot.slane %v6892, 4
        %v6894 = vrot.slane %v6019, 5
        %v6895 = vsel %vm3758, %v6893, %v6894
        %v6896 = vrot.slane %v6773, 5
        %v6897 = vrot.slane %v6896, 4
        %v6898 = vrot.slane %v6021, 5
        %v6899 = vsel %vm3758, %v6897, %v6898
        %v6900 = vrot.slane %v6774, 5
        %v6901 = vrot.slane %v6900, 4
        %v6902 = vrot.slane %v6023, 5
        %v6903 = vsel %vm3758, %v6901, %v6902
        %v6904 = vrot.slane %v6775, 5
        %v6905 = vrot.slane %v6904, 4
        %v6906 = vrot.slane %v6025, 5
        %v6907 = vsel %vm3758, %v6905, %v6906
        %v6908 = vrot.slane %v6776, 5
        %v6909 = vrot.slane %v6908, 4
        %v6910 = vrot.slane %v6027, 5
        %v6911 = vsel %vm3758, %v6909, %v6910
        %v6912 = vrot.slane %v6777, 5
        %v6913 = vrot.slane %v6912, 4
        %v6914 = vrot.slane %v6029, 5
        %v6915 = vsel %vm3758, %v6913, %v6914
        %v6916 = vrot.slane %v6778, 5
        %v6917 = vrot.slane %v6916, 4
        %v6918 = vrot.slane %v6031, 5
        %v6919 = vsel %vm3758, %v6917, %v6918
        %v6920 = vrot.slane %v6779, 5
        %v6921 = vrot.slane %v6920, 4
        %v6922 = vrot.slane %v6033, 5
        %v6923 = vsel %vm3758, %v6921, %v6922
        %v6924 = vrot.slane %v6780, 5
        %v6925 = vrot.slane %v6924, 4
        %v6926 = vrot.slane %v6035, 5
        %v6927 = vsel %vm3758, %v6925, %v6926
        %v6928 = vrot.slane %v6781, 5
        %v6929 = vrot.slane %v6928, 4
        %v6930 = vrot.slane %v6037, 5
        %v6931 = vsel %vm3758, %v6929, %v6930
        %v6932 = vrot.slane %v6782, 5
        %v6933 = vrot.slane %v6932, 4
        %v6934 = vrot.slane %v6039, 5
        %v6935 = vsel %vm3758, %v6933, %v6934
        %v6936 = vrot.slane %v6783, 5
        %v6937 = vrot.slane %v6936, 4
        %v6938 = vrot.slane %v6041, 5
        %v6939 = vsel %vm3758, %v6937, %v6938
        %v6940 = vrot.slane %v6784, 5
        %v6941 = vrot.slane %v6940, 4
        %v6942 = vrot.slane %v6043, 5
        %v6943 = vsel %vm3758, %v6941, %v6942
        %v6944 = vrot.slane %v6785, 5
        %v6945 = vrot.slane %v6944, 4
        %v6946 = vrot.slane %v6045, 5
        %v6947 = vsel %vm3758, %v6945, %v6946
        %v6948 = vrot.slane %v6786, 5
        %v6949 = vrot.slane %v6948, 4
        %v6950 = vrot.slane %v6047, 5
        %v6951 = vsel %vm3758, %v6949, %v6950
        %v6952 = vrot.slane %v6787, 5
        %v6953 = vrot.slane %v6952, 4
        %v6954 = vrot.slane %v6049, 5
        %v6955 = vsel %vm3758, %v6953, %v6954
        %v6956 = vrot.slane %v6788, 5
        %v6957 = vrot.slane %v6956, 4
        %v6958 = vrot.slane %v6051, 5
        %v6959 = vsel %vm3758, %v6957, %v6958
        %v6960 = vrot.slane %v6789, 5
        %v6961 = vrot.slane %v6960, 4
        %v6962 = vrot.slane %v6053, 5
        %v6963 = vsel %vm3758, %v6961, %v6962
        %v6964 = vrot.slane %v6790, 5
        %v6965 = vrot.slane %v6964, 4
        %v6966 = vrot.slane %v6055, 5
        %v6967 = vsel %vm3758, %v6965, %v6966
        %v6968 = vrot.slane %v6791, 5
        %v6969 = vrot.slane %v6968, 4
        %v6970 = vrot.slane %v6057, 5
        %v6971 = vsel %vm3758, %v6969, %v6970
        %v6972 = vrot.slane %v6792, 5
        %v6973 = vrot.slane %v6972, 4
        %v6974 = vrot.slane %v6059, 5
        %v6975 = vsel %vm3758, %v6973, %v6974
        %v6976 = vrot.slane %v6793, 5
        %v6977 = vrot.slane %v6976, 4
        %v6978 = vrot.slane %v6061, 5
        %v6979 = vsel %vm3758, %v6977, %v6978
        %v6980 = vrot.slane %v6794, 5
        %v6981 = vrot.slane %v6980, 4
        %v6982 = vrot.slane %v6063, 5
        %v6983 = vsel %vm3758, %v6981, %v6982
        %v6984 = vrot.slane %v6795, 5
        %v6985 = vrot.slane %v6984, 4
        %v6986 = vrot.slane %v6065, 5
        %v6987 = vsel %vm3758, %v6985, %v6986
        %s6988 = scalar_lea.vmem [#allocation12], 512
        %v6989 = vld [vmem:[%s6988] sm:$0xf]
        %v6990 = vld [vmem:[%s6988 + $0x4] sm:$0xf]
        %v6991 = vld [vmem:[%s6988 + $0x8] sm:$0xf]
        %v6992 = vld [vmem:[%s6988 + $0xc] sm:$0xf]
        %v6993 = vld [vmem:[%s6988 + $0x10] sm:$0xf]
        %v6994 = vld [vmem:[%s6988 + $0x14] sm:$0xf]
        %v6995 = vld [vmem:[%s6988 + $0x18] sm:$0xf]
        %v6996 = vld [vmem:[%s6988 + $0x1c] sm:$0xf]
        %v6997 = vld [vmem:[%s6988 + $0x20] sm:$0xf]
        %v6998 = vld [vmem:[%s6988 + $0x24] sm:$0xf]
        %v6999 = vld [vmem:[%s6988 + $0x28] sm:$0xf]
        %v7000 = vld [vmem:[%s6988 + $0x2c] sm:$0xf]
        %v7001 = vld [vmem:[%s6988 + $0x30] sm:$0xf]
        %v7002 = vld [vmem:[%s6988 + $0x34] sm:$0xf]
        %v7003 = vld [vmem:[%s6988 + $0x38] sm:$0xf]
        %v7004 = vld [vmem:[%s6988 + $0x3c] sm:$0xf]
        %v7005 = vunpack.c.l.b16 %v6863
        %v7006 = vunpack.c.l.b16 %v6867
        %v7007 = vunpack.c.l.b16 %v6871
        %v7008 = vunpack.c.l.b16 %v6875
        %v7009 = vunpack.c.l.b16 %v6879
        %v7010 = vunpack.c.l.b16 %v6883
        %v7011 = vunpack.c.l.b16 %v6887
        %v7012 = vunpack.c.l.b16 %v6891
        %v7013 = vunpack.c.l.b16 %v6895
        %v7014 = vunpack.c.l.b16 %v6899
        %v7015 = vunpack.c.l.b16 %v6903
        %v7016 = vunpack.c.l.b16 %v6907
        %v7017 = vunpack.c.l.b16 %v6911
        %v7018 = vunpack.c.l.b16 %v6915
        %v7019 = vunpack.c.l.b16 %v6919
        %v7020 = vunpack.c.l.b16 %v6923
        %v7021 = vunpack.c.l.b16 %v6927
        %v7022 = vunpack.c.l.b16 %v6931
        %v7023 = vunpack.c.l.b16 %v6935
        %v7024 = vunpack.c.l.b16 %v6939
        %v7025 = vunpack.c.l.b16 %v6943
        %v7026 = vunpack.c.l.b16 %v6947
        %v7027 = vunpack.c.l.b16 %v6951
        %v7028 = vunpack.c.l.b16 %v6955
        %v7029 = vunpack.c.l.b16 %v6959
        %v7030 = vunpack.c.l.b16 %v6963
        %v7031 = vunpack.c.l.b16 %v6967
        %v7032 = vunpack.c.l.b16 %v6971
        %v7033 = vunpack.c.l.b16 %v6975
        %v7034 = vunpack.c.l.b16 %v6979
        %v7035 = vunpack.c.l.b16 %v6983
        %v7036 = vunpack.c.l.b16 %v6987
        %v7037 = vpack.c.b16 %v7006, %v7005
        %v7038 = vpack.c.b16 %v7008, %v7007
        %v7039 = vpack.c.b16 %v7010, %v7009
        %v7040 = vpack.c.b16 %v7012, %v7011
        %v7041 = vpack.c.b16 %v7014, %v7013
        %v7042 = vpack.c.b16 %v7016, %v7015
        %v7043 = vpack.c.b16 %v7018, %v7017
        %v7044 = vpack.c.b16 %v7020, %v7019
        %v7045 = vpack.c.b16 %v7022, %v7021
        %v7046 = vpack.c.b16 %v7024, %v7023
        %v7047 = vpack.c.b16 %v7026, %v7025
        %v7048 = vpack.c.b16 %v7028, %v7027
        %v7049 = vpack.c.b16 %v7030, %v7029
        %v7050 = vpack.c.b16 %v7032, %v7031
        %v7051 = vpack.c.b16 %v7034, %v7033
        %v7052 = vpack.c.b16 %v7036, %v7035
        %v7085 = vunpack.c.l.b16 %v6989
        %v7086 = vunpack.c.l.b16 %v6990
        %v7087 = vunpack.c.l.b16 %v6991
        %v7088 = vunpack.c.l.b16 %v6992
        %v7089 = vunpack.c.l.b16 %v6993
        %v7090 = vunpack.c.l.b16 %v6994
        %v7091 = vunpack.c.l.b16 %v6995
        %v7092 = vunpack.c.l.b16 %v6996
        %v7093 = vunpack.c.l.b16 %v6997
        %v7094 = vunpack.c.l.b16 %v6998
        %v7095 = vunpack.c.l.b16 %v6999
        %v7096 = vunpack.c.l.b16 %v7000
        %v7097 = vunpack.c.l.b16 %v7001
        %v7098 = vunpack.c.l.b16 %v7002
        %v7099 = vunpack.c.l.b16 %v7003
        %v7100 = vunpack.c.l.b16 %v7004
        %v7101 = vpack.c.b16 %v7086, %v7085
        %v7102 = vpack.c.b16 %v7088, %v7087
        %v7103 = vpack.c.b16 %v7090, %v7089
        %v7104 = vpack.c.b16 %v7092, %v7091
        %v7105 = vpack.c.b16 %v7094, %v7093
        %v7106 = vpack.c.b16 %v7096, %v7095
        %v7107 = vpack.c.b16 %v7098, %v7097
        %v7108 = vpack.c.b16 %v7100, %v7099
        %7117 = vmatpush.bf16.msra.mxu0 %v7108
        %7118 = vmatpush.bf16.msra.mxu0 %v7107
        %7119 = vmatpush.bf16.msra.mxu0 %v7106
        %7120 = vmatpush.bf16.msra.mxu0 %v7105
        %7121 = vmatpush.bf16.msra.mxu0 %v7104
        %7122 = vmatpush.bf16.msra.mxu0 %v7103
        %7123 = vmatpush.bf16.msra.mxu0 %v7102
        %7124 = vmatpush.bf16.msra.mxu0 %v7101
        %7125 = vmatmul.bf16.gmra.mxu0 %v7037
        %v7126 = vpop.f32.mrf.mxu0
        %v7127 = vadd.f32 0.0, %v7126
        %v7128 = vpop.f32.mrf.mxu0
        %v7129 = vadd.f32 0.0, %v7128
        %7130 = vmatmul.bf16.gmra.mxu0 %v7038
        %v7131 = vpop.f32.mrf.mxu0
        %v7132 = vadd.f32 0.0, %v7131
        %v7133 = vpop.f32.mrf.mxu0
        %v7134 = vadd.f32 0.0, %v7133
        %7135 = vmatmul.bf16.gmra.mxu0 %v7039
        %v7136 = vpop.f32.mrf.mxu0
        %v7137 = vadd.f32 0.0, %v7136
        %v7138 = vpop.f32.mrf.mxu0
        %v7139 = vadd.f32 0.0, %v7138
        %7140 = vmatmul.bf16.gmra.mxu0 %v7040
        %v7141 = vpop.f32.mrf.mxu0
        %v7142 = vadd.f32 0.0, %v7141
        %v7143 = vpop.f32.mrf.mxu0
        %v7144 = vadd.f32 0.0, %v7143
        %7145 = vmatmul.bf16.gmra.mxu0 %v7041
        %v7146 = vpop.f32.mrf.mxu0
        %v7147 = vadd.f32 0.0, %v7146
        %v7148 = vpop.f32.mrf.mxu0
        %v7149 = vadd.f32 0.0, %v7148
        %7150 = vmatmul.bf16.gmra.mxu0 %v7042
        %v7151 = vpop.f32.mrf.mxu0
        %v7152 = vadd.f32 0.0, %v7151
        %v7153 = vpop.f32.mrf.mxu0
        %v7154 = vadd.f32 0.0, %v7153
        %7155 = vmatmul.bf16.gmra.mxu0 %v7043
        %v7156 = vpop.f32.mrf.mxu0
        %v7157 = vadd.f32 0.0, %v7156
        %v7158 = vpop.f32.mrf.mxu0
        %v7159 = vadd.f32 0.0, %v7158
        %7160 = vmatmul.bf16.gmra.mxu0 %v7044
        %v7161 = vpop.f32.mrf.mxu0
        %v7162 = vadd.f32 0.0, %v7161
        %v7163 = vpop.f32.mrf.mxu0
        %v7164 = vadd.f32 0.0, %v7163
        %7165 = vmatmul.bf16.gmra.mxu0 %v7045
        %v7166 = vpop.f32.mrf.mxu0
        %v7167 = vadd.f32 0.0, %v7166
        %v7168 = vpop.f32.mrf.mxu0
        %v7169 = vadd.f32 0.0, %v7168
        %7170 = vmatmul.bf16.gmra.mxu0 %v7046
        %v7171 = vpop.f32.mrf.mxu0
        %v7172 = vadd.f32 0.0, %v7171
        %v7173 = vpop.f32.mrf.mxu0
        %v7174 = vadd.f32 0.0, %v7173
        %7175 = vmatmul.bf16.gmra.mxu0 %v7047
        %v7176 = vpop.f32.mrf.mxu0
        %v7177 = vadd.f32 0.0, %v7176
        %v7178 = vpop.f32.mrf.mxu0
        %v7179 = vadd.f32 0.0, %v7178
        %7180 = vmatmul.bf16.gmra.mxu0 %v7048
        %v7181 = vpop.f32.mrf.mxu0
        %v7182 = vadd.f32 0.0, %v7181
        %v7183 = vpop.f32.mrf.mxu0
        %v7184 = vadd.f32 0.0, %v7183
        %7185 = vmatmul.bf16.gmra.mxu0 %v7049
        %v7186 = vpop.f32.mrf.mxu0
        %v7187 = vadd.f32 0.0, %v7186
        %v7188 = vpop.f32.mrf.mxu0
        %v7189 = vadd.f32 0.0, %v7188
        %7190 = vmatmul.bf16.gmra.mxu0 %v7050
        %v7191 = vpop.f32.mrf.mxu0
        %v7192 = vadd.f32 0.0, %v7191
        %v7193 = vpop.f32.mrf.mxu0
        %v7194 = vadd.f32 0.0, %v7193
        %7195 = vmatmul.bf16.gmra.mxu0 %v7051
        %v7196 = vpop.f32.mrf.mxu0
        %v7197 = vadd.f32 0.0, %v7196
        %v7198 = vpop.f32.mrf.mxu0
        %v7199 = vadd.f32 0.0, %v7198
        %7200 = vmatmul.bf16.gmra.mxu0 %v7052
        %v7201 = vpop.f32.mrf.mxu0
        %v7202 = vadd.f32 0.0, %v7201
        %v7203 = vpop.f32.mrf.mxu0
        %v7204 = vadd.f32 0.0, %v7203
        %7205 = vdwg.mxu0
        %v7206 = vadd.f32 %v6732, %v7127
        %v7207 = vadd.f32 %v6733, %v7129
        %v7208 = vadd.f32 %v6734, %v7132
        %v7209 = vadd.f32 %v6735, %v7134
        %v7210 = vadd.f32 %v6736, %v7137
        %v7211 = vadd.f32 %v6737, %v7139
        %v7212 = vadd.f32 %v6738, %v7142
        %v7213 = vadd.f32 %v6739, %v7144
        %v7214 = vadd.f32 %v6740, %v7147
        %v7215 = vadd.f32 %v6741, %v7149
        %v7216 = vadd.f32 %v6742, %v7152
        %v7217 = vadd.f32 %v6743, %v7154
        %v7218 = vadd.f32 %v6744, %v7157
        %v7219 = vadd.f32 %v6745, %v7159
        %v7220 = vadd.f32 %v6746, %v7162
        %v7221 = vadd.f32 %v6747, %v7164
        %v7222 = vadd.f32 %v6748, %v7167
        %v7223 = vadd.f32 %v6749, %v7169
        %v7224 = vadd.f32 %v6750, %v7172
        %v7225 = vadd.f32 %v6751, %v7174
        %v7226 = vadd.f32 %v6752, %v7177
        %v7227 = vadd.f32 %v6753, %v7179
        %v7228 = vadd.f32 %v6754, %v7182
        %v7229 = vadd.f32 %v6755, %v7184
        %v7230 = vadd.f32 %v6756, %v7187
        %v7231 = vadd.f32 %v6757, %v7189
        %v7232 = vadd.f32 %v6758, %v7192
        %v7233 = vadd.f32 %v6759, %v7194
        %v7234 = vadd.f32 %v6760, %v7197
        %v7235 = vadd.f32 %v6761, %v7199
        %v7236 = vadd.f32 %v6762, %v7202
        %v7237 = vadd.f32 %v6763, %v7204
        %v7238 = vld [vmem:[%s6] sm:$0x1]
        %v7240 = vperm.slane %v7238, 0
        %v7242 = vadd.f32 %v7206, %v7240
        %v7243 = vadd.f32 %v7207, %v7240
        %v7244 = vadd.f32 %v7208, %v7240
        %v7245 = vadd.f32 %v7209, %v7240
        %v7246 = vadd.f32 %v7210, %v7240
        %v7247 = vadd.f32 %v7211, %v7240
        %v7248 = vadd.f32 %v7212, %v7240
        %v7249 = vadd.f32 %v7213, %v7240
        %v7250 = vadd.f32 %v7214, %v7240
        %v7251 = vadd.f32 %v7215, %v7240
        %v7252 = vadd.f32 %v7216, %v7240
        %v7253 = vadd.f32 %v7217, %v7240
        %v7254 = vadd.f32 %v7218, %v7240
        %v7255 = vadd.f32 %v7219, %v7240
        %v7256 = vadd.f32 %v7220, %v7240
        %v7257 = vadd.f32 %v7221, %v7240
        %v7258 = vadd.f32 %v7222, %v7240
        %v7259 = vadd.f32 %v7223, %v7240
        %v7260 = vadd.f32 %v7224, %v7240
        %v7261 = vadd.f32 %v7225, %v7240
        %v7262 = vadd.f32 %v7226, %v7240
        %v7263 = vadd.f32 %v7227, %v7240
        %v7264 = vadd.f32 %v7228, %v7240
        %v7265 = vadd.f32 %v7229, %v7240
        %v7266 = vadd.f32 %v7230, %v7240
        %v7267 = vadd.f32 %v7231, %v7240
        %v7268 = vadd.f32 %v7232, %v7240
        %v7269 = vadd.f32 %v7233, %v7240
        %v7270 = vadd.f32 %v7234, %v7240
        %v7271 = vadd.f32 %v7235, %v7240
        %v7272 = vadd.f32 %v7236, %v7240
        %v7273 = vadd.f32 %v7237, %v7240
        %v7274 = vmax.f32 %v7242, 0.0
        %v7275 = vmax.f32 %v7243, 0.0
        %v7276 = vmax.f32 %v7244, 0.0
        %v7277 = vmax.f32 %v7245, 0.0
        %v7278 = vmax.f32 %v7246, 0.0
        %v7279 = vmax.f32 %v7247, 0.0
        %v7280 = vmax.f32 %v7248, 0.0
        %v7281 = vmax.f32 %v7249, 0.0
        %v7282 = vmax.f32 %v7250, 0.0
        %v7283 = vmax.f32 %v7251, 0.0
        %v7284 = vmax.f32 %v7252, 0.0
        %v7285 = vmax.f32 %v7253, 0.0
        %v7286 = vmax.f32 %v7254, 0.0
        %v7287 = vmax.f32 %v7255, 0.0
        %v7288 = vmax.f32 %v7256, 0.0
        %v7289 = vmax.f32 %v7257, 0.0
        %v7290 = vmax.f32 %v7258, 0.0
        %v7291 = vmax.f32 %v7259, 0.0
        %v7292 = vmax.f32 %v7260, 0.0
        %v7293 = vmax.f32 %v7261, 0.0
        %v7294 = vmax.f32 %v7262, 0.0
        %v7295 = vmax.f32 %v7263, 0.0
        %v7296 = vmax.f32 %v7264, 0.0
        %v7297 = vmax.f32 %v7265, 0.0
        %v7298 = vmax.f32 %v7266, 0.0
        %v7299 = vmax.f32 %v7267, 0.0
        %v7300 = vmax.f32 %v7268, 0.0
        %v7301 = vmax.f32 %v7269, 0.0
        %v7302 = vmax.f32 %v7270, 0.0
        %v7303 = vmax.f32 %v7271, 0.0
        %v7304 = vmax.f32 %v7272, 0.0
        %v7305 = vmax.f32 %v7273, 0.0
        %v7306 = vpack.c.bf16 %v7275, %v7274
        %v7307 = vpack.c.bf16 %v7277, %v7276
        %v7308 = vpack.c.bf16 %v7279, %v7278
        %v7309 = vpack.c.bf16 %v7281, %v7280
        %v7310 = vpack.c.bf16 %v7283, %v7282
        %v7311 = vpack.c.bf16 %v7285, %v7284
        %v7312 = vpack.c.bf16 %v7287, %v7286
        %v7313 = vpack.c.bf16 %v7289, %v7288
        %v7314 = vpack.c.bf16 %v7291, %v7290
        %v7315 = vpack.c.bf16 %v7293, %v7292
        %v7316 = vpack.c.bf16 %v7295, %v7294
        %v7317 = vpack.c.bf16 %v7297, %v7296
        %v7318 = vpack.c.bf16 %v7299, %v7298
        %v7319 = vpack.c.bf16 %v7301, %v7300
        %v7320 = vpack.c.bf16 %v7303, %v7302
        %v7321 = vpack.c.bf16 %v7305, %v7304
        %v7322 = vld [vmem:[#allocation13] sm:$0xf]
        %v7323 = vld [vmem:[#allocation13 + $0x4] sm:$0xf]
        %v7324 = vld [vmem:[#allocation13 + $0x8] sm:$0xf]
        %v7325 = vld [vmem:[#allocation13 + $0xc] sm:$0xf]
        %v7326 = vld [vmem:[#allocation13 + $0x10] sm:$0xf]
        %v7327 = vld [vmem:[#allocation13 + $0x14] sm:$0xf]
        %v7328 = vld [vmem:[#allocation13 + $0x18] sm:$0xf]
        %v7329 = vld [vmem:[#allocation13 + $0x1c] sm:$0xf]
        %v7330 = vld [vmem:[#allocation13 + $0x20] sm:$0xf]
        %v7331 = vld [vmem:[#allocation13 + $0x24] sm:$0xf]
        %v7332 = vld [vmem:[#allocation13 + $0x28] sm:$0xf]
        %v7333 = vld [vmem:[#allocation13 + $0x2c] sm:$0xf]
        %v7334 = vld [vmem:[#allocation13 + $0x30] sm:$0xf]
        %v7335 = vld [vmem:[#allocation13 + $0x34] sm:$0xf]
        %v7336 = vld [vmem:[#allocation13 + $0x38] sm:$0xf]
        %v7337 = vld [vmem:[#allocation13 + $0x3c] sm:$0xf]
        %v7338 = vld [vmem:[%s8] sm:$0x1]
        %v7340 = vperm.slane %v7338, 0
        %v7358 = vunpack.c.l.b16 %v7322
        %v7359 = vunpack.c.l.b16 %v7323
        %v7360 = vunpack.c.l.b16 %v7324
        %v7361 = vunpack.c.l.b16 %v7325
        %v7362 = vunpack.c.l.b16 %v7326
        %v7363 = vunpack.c.l.b16 %v7327
        %v7364 = vunpack.c.l.b16 %v7328
        %v7365 = vunpack.c.l.b16 %v7329
        %v7366 = vunpack.c.l.b16 %v7330
        %v7367 = vunpack.c.l.b16 %v7331
        %v7368 = vunpack.c.l.b16 %v7332
        %v7369 = vunpack.c.l.b16 %v7333
        %v7370 = vunpack.c.l.b16 %v7334
        %v7371 = vunpack.c.l.b16 %v7335
        %v7372 = vunpack.c.l.b16 %v7336
        %v7373 = vunpack.c.l.b16 %v7337
        %v7374 = vpack.c.b16 %v7359, %v7358
        %v7375 = vpack.c.b16 %v7361, %v7360
        %v7376 = vpack.c.b16 %v7363, %v7362
        %v7377 = vpack.c.b16 %v7365, %v7364
        %v7378 = vpack.c.b16 %v7367, %v7366
        %v7379 = vpack.c.b16 %v7369, %v7368
        %v7380 = vpack.c.b16 %v7371, %v7370
        %v7381 = vpack.c.b16 %v7373, %v7372
        %7390 = vmatpush.bf16.msra.mxu0 %v7381
        %7391 = vmatpush.bf16.msra.mxu0 %v7380
        %7392 = vmatpush.bf16.msra.mxu0 %v7379
        %7393 = vmatpush.bf16.msra.mxu0 %v7378
        %7394 = vmatpush.bf16.msra.mxu0 %v7377
        %7395 = vmatpush.bf16.msra.mxu0 %v7376
        %7396 = vmatpush.bf16.msra.mxu0 %v7375
        %7397 = vmatpush.bf16.msra.mxu0 %v7374
        %7398 = vmatmul.bf16.gmra.mxu0 %v7306
        %v7399 = vpop.f32.mrf.mxu0
        %v7400 = vadd.f32 %v7340, %v7399
        %v7401 = vpop.f32.mrf.mxu0
        %v7402 = vadd.f32 %v7340, %v7401
        %7403 = vmatmul.bf16.gmra.mxu0 %v7307
        %v7404 = vpop.f32.mrf.mxu0
        %v7405 = vadd.f32 %v7340, %v7404
        %v7406 = vpop.f32.mrf.mxu0
        %v7407 = vadd.f32 %v7340, %v7406
        %7408 = vmatmul.bf16.gmra.mxu0 %v7308
        %v7409 = vpop.f32.mrf.mxu0
        %v7410 = vadd.f32 %v7340, %v7409
        %v7411 = vpop.f32.mrf.mxu0
        %v7412 = vadd.f32 %v7340, %v7411
        %7413 = vmatmul.bf16.gmra.mxu0 %v7309
        %v7414 = vpop.f32.mrf.mxu0
        %v7415 = vadd.f32 %v7340, %v7414
        %v7416 = vpop.f32.mrf.mxu0
        %v7417 = vadd.f32 %v7340, %v7416
        %7418 = vmatmul.bf16.gmra.mxu0 %v7310
        %v7419 = vpop.f32.mrf.mxu0
        %v7420 = vadd.f32 %v7340, %v7419
        %v7421 = vpop.f32.mrf.mxu0
        %v7422 = vadd.f32 %v7340, %v7421
        %7423 = vmatmul.bf16.gmra.mxu0 %v7311
        %v7424 = vpop.f32.mrf.mxu0
        %v7425 = vadd.f32 %v7340, %v7424
        %v7426 = vpop.f32.mrf.mxu0
        %v7427 = vadd.f32 %v7340, %v7426
        %7428 = vmatmul.bf16.gmra.mxu0 %v7312
        %v7429 = vpop.f32.mrf.mxu0
        %v7430 = vadd.f32 %v7340, %v7429
        %v7431 = vpop.f32.mrf.mxu0
        %v7432 = vadd.f32 %v7340, %v7431
        %7433 = vmatmul.bf16.gmra.mxu0 %v7313
        %v7434 = vpop.f32.mrf.mxu0
        %v7435 = vadd.f32 %v7340, %v7434
        %v7436 = vpop.f32.mrf.mxu0
        %v7437 = vadd.f32 %v7340, %v7436
        %7438 = vmatmul.bf16.gmra.mxu0 %v7314
        %v7439 = vpop.f32.mrf.mxu0
        %v7440 = vadd.f32 %v7340, %v7439
        %v7441 = vpop.f32.mrf.mxu0
        %v7442 = vadd.f32 %v7340, %v7441
        %7443 = vmatmul.bf16.gmra.mxu0 %v7315
        %v7444 = vpop.f32.mrf.mxu0
        %v7445 = vadd.f32 %v7340, %v7444
        %v7446 = vpop.f32.mrf.mxu0
        %v7447 = vadd.f32 %v7340, %v7446
        %7448 = vmatmul.bf16.gmra.mxu0 %v7316
        %v7449 = vpop.f32.mrf.mxu0
        %v7450 = vadd.f32 %v7340, %v7449
        %v7451 = vpop.f32.mrf.mxu0
        %v7452 = vadd.f32 %v7340, %v7451
        %7453 = vmatmul.bf16.gmra.mxu0 %v7317
        %v7454 = vpop.f32.mrf.mxu0
        %v7455 = vadd.f32 %v7340, %v7454
        %v7456 = vpop.f32.mrf.mxu0
        %v7457 = vadd.f32 %v7340, %v7456
        %7458 = vmatmul.bf16.gmra.mxu0 %v7318
        %v7459 = vpop.f32.mrf.mxu0
        %v7460 = vadd.f32 %v7340, %v7459
        %v7461 = vpop.f32.mrf.mxu0
        %v7462 = vadd.f32 %v7340, %v7461
        %7463 = vmatmul.bf16.gmra.mxu0 %v7319
        %v7464 = vpop.f32.mrf.mxu0
        %v7465 = vadd.f32 %v7340, %v7464
        %v7466 = vpop.f32.mrf.mxu0
        %v7467 = vadd.f32 %v7340, %v7466
        %7468 = vmatmul.bf16.gmra.mxu0 %v7320
        %v7469 = vpop.f32.mrf.mxu0
        %v7470 = vadd.f32 %v7340, %v7469
        %v7471 = vpop.f32.mrf.mxu0
        %v7472 = vadd.f32 %v7340, %v7471
        %7473 = vmatmul.bf16.gmra.mxu0 %v7321
        %v7474 = vpop.f32.mrf.mxu0
        %v7475 = vadd.f32 %v7340, %v7474
        %v7476 = vpop.f32.mrf.mxu0
        %v7477 = vadd.f32 %v7340, %v7476
        %7478 = vdwg.mxu0
        %v7479 = vld [vmem:[%s453] sm:$0xf]
        %v7480 = vld [vmem:[%s453 + $0x4] sm:$0xf]
        %v7481 = vld [vmem:[%s453 + $0x8] sm:$0xf]
        %v7482 = vld [vmem:[%s453 + $0xc] sm:$0xf]
        %v7483 = vld [vmem:[%s453 + $0x10] sm:$0xf]
        %v7484 = vld [vmem:[%s453 + $0x14] sm:$0xf]
        %v7485 = vld [vmem:[%s453 + $0x18] sm:$0xf]
        %v7486 = vld [vmem:[%s453 + $0x1c] sm:$0xf]
        %v7487 = vld [vmem:[%s453 + $0x20] sm:$0xf]
        %v7488 = vld [vmem:[%s453 + $0x24] sm:$0xf]
        %v7489 = vld [vmem:[%s453 + $0x28] sm:$0xf]
        %v7490 = vld [vmem:[%s453 + $0x2c] sm:$0xf]
        %v7491 = vld [vmem:[%s453 + $0x30] sm:$0xf]
        %v7492 = vld [vmem:[%s453 + $0x34] sm:$0xf]
        %v7493 = vld [vmem:[%s453 + $0x38] sm:$0xf]
        %v7494 = vld [vmem:[%s453 + $0x3c] sm:$0xf]
        %v7495 = vld [vmem:[%s453 + $0x40] sm:$0xf]
        %v7496 = vld [vmem:[%s453 + $0x44] sm:$0xf]
        %v7497 = vld [vmem:[%s453 + $0x48] sm:$0xf]
        %v7498 = vld [vmem:[%s453 + $0x4c] sm:$0xf]
        %v7499 = vld [vmem:[%s453 + $0x50] sm:$0xf]
        %v7500 = vld [vmem:[%s453 + $0x54] sm:$0xf]
        %v7501 = vld [vmem:[%s453 + $0x58] sm:$0xf]
        %v7502 = vld [vmem:[%s453 + $0x5c] sm:$0xf]
        %v7503 = vld [vmem:[%s453 + $0x60] sm:$0xf]
        %v7504 = vld [vmem:[%s453 + $0x64] sm:$0xf]
        %v7505 = vld [vmem:[%s453 + $0x68] sm:$0xf]
        %v7506 = vld [vmem:[%s453 + $0x6c] sm:$0xf]
        %v7507 = vld [vmem:[%s453 + $0x70] sm:$0xf]
        %v7508 = vld [vmem:[%s453 + $0x74] sm:$0xf]
        %v7509 = vld [vmem:[%s453 + $0x78] sm:$0xf]
        %v7510 = vld [vmem:[%s453 + $0x7c] sm:$0xf]
        %v7511 = vunpack.c.l.bf16 %v7479
        %v7512 = vunpack.c.l.bf16 %v7480
        %v7513 = vunpack.c.l.bf16 %v7481
        %v7514 = vunpack.c.l.bf16 %v7482
        %v7515 = vunpack.c.l.bf16 %v7483
        %v7516 = vunpack.c.l.bf16 %v7484
        %v7517 = vunpack.c.l.bf16 %v7485
        %v7518 = vunpack.c.l.bf16 %v7486
        %v7519 = vunpack.c.l.bf16 %v7487
        %v7520 = vunpack.c.l.bf16 %v7488
        %v7521 = vunpack.c.l.bf16 %v7489
        %v7522 = vunpack.c.l.bf16 %v7490
        %v7523 = vunpack.c.l.bf16 %v7491
        %v7524 = vunpack.c.l.bf16 %v7492
        %v7525 = vunpack.c.l.bf16 %v7493
        %v7526 = vunpack.c.l.bf16 %v7494
        %v7527 = vunpack.c.l.bf16 %v7495
        %v7528 = vunpack.c.l.bf16 %v7496
        %v7529 = vunpack.c.l.bf16 %v7497
        %v7530 = vunpack.c.l.bf16 %v7498
        %v7531 = vunpack.c.l.bf16 %v7499
        %v7532 = vunpack.c.l.bf16 %v7500
        %v7533 = vunpack.c.l.bf16 %v7501
        %v7534 = vunpack.c.l.bf16 %v7502
        %v7535 = vunpack.c.l.bf16 %v7503
        %v7536 = vunpack.c.l.bf16 %v7504
        %v7537 = vunpack.c.l.bf16 %v7505
        %v7538 = vunpack.c.l.bf16 %v7506
        %v7539 = vunpack.c.l.bf16 %v7507
        %v7540 = vunpack.c.l.bf16 %v7508
        %v7541 = vunpack.c.l.bf16 %v7509
        %v7542 = vunpack.c.l.bf16 %v7510
        %v7543 = vadd.f32 %v7400, %v7511
        %v7544 = vadd.f32 %v7402, %v7512
        %v7545 = vadd.f32 %v7405, %v7513
        %v7546 = vadd.f32 %v7407, %v7514
        %v7547 = vadd.f32 %v7410, %v7515
        %v7548 = vadd.f32 %v7412, %v7516
        %v7549 = vadd.f32 %v7415, %v7517
        %v7550 = vadd.f32 %v7417, %v7518
        %v7551 = vadd.f32 %v7420, %v7519
        %v7552 = vadd.f32 %v7422, %v7520
        %v7553 = vadd.f32 %v7425, %v7521
        %v7554 = vadd.f32 %v7427, %v7522
        %v7555 = vadd.f32 %v7430, %v7523
        %v7556 = vadd.f32 %v7432, %v7524
        %v7557 = vadd.f32 %v7435, %v7525
        %v7558 = vadd.f32 %v7437, %v7526
        %v7559 = vadd.f32 %v7440, %v7527
        %v7560 = vadd.f32 %v7442, %v7528
        %v7561 = vadd.f32 %v7445, %v7529
        %v7562 = vadd.f32 %v7447, %v7530
        %v7563 = vadd.f32 %v7450, %v7531
        %v7564 = vadd.f32 %v7452, %v7532
        %v7565 = vadd.f32 %v7455, %v7533
        %v7566 = vadd.f32 %v7457, %v7534
        %v7567 = vadd.f32 %v7460, %v7535
        %v7568 = vadd.f32 %v7462, %v7536
        %v7569 = vadd.f32 %v7465, %v7537
        %v7570 = vadd.f32 %v7467, %v7538
        %v7571 = vadd.f32 %v7470, %v7539
        %v7572 = vadd.f32 %v7472, %v7540
        %v7573 = vadd.f32 %v7475, %v7541
        %v7574 = vadd.f32 %v7477, %v7542
        %v7575 = vmax.f32 %v7543, 0.0
        %v7576 = vmax.f32 %v7544, 0.0
        %v7577 = vmax.f32 %v7545, 0.0
        %v7578 = vmax.f32 %v7546, 0.0
        %v7579 = vmax.f32 %v7547, 0.0
        %v7580 = vmax.f32 %v7548, 0.0
        %v7581 = vmax.f32 %v7549, 0.0
        %v7582 = vmax.f32 %v7550, 0.0
        %v7583 = vmax.f32 %v7551, 0.0
        %v7584 = vmax.f32 %v7552, 0.0
        %v7585 = vmax.f32 %v7553, 0.0
        %v7586 = vmax.f32 %v7554, 0.0
        %v7587 = vmax.f32 %v7555, 0.0
        %v7588 = vmax.f32 %v7556, 0.0
        %v7589 = vmax.f32 %v7557, 0.0
        %v7590 = vmax.f32 %v7558, 0.0
        %v7591 = vmax.f32 %v7559, 0.0
        %v7592 = vmax.f32 %v7560, 0.0
        %v7593 = vmax.f32 %v7561, 0.0
        %v7594 = vmax.f32 %v7562, 0.0
        %v7595 = vmax.f32 %v7563, 0.0
        %v7596 = vmax.f32 %v7564, 0.0
        %v7597 = vmax.f32 %v7565, 0.0
        %v7598 = vmax.f32 %v7566, 0.0
        %v7599 = vmax.f32 %v7567, 0.0
        %v7600 = vmax.f32 %v7568, 0.0
        %v7601 = vmax.f32 %v7569, 0.0
        %v7602 = vmax.f32 %v7570, 0.0
        %v7603 = vmax.f32 %v7571, 0.0
        %v7604 = vmax.f32 %v7572, 0.0
        %v7605 = vmax.f32 %v7573, 0.0
        %v7606 = vmax.f32 %v7574, 0.0
        %7607 = vst [vmem:[%s533] sm:$0xff] %v7575
        %7608 = vst [vmem:[%s533 + $0x8] sm:$0xff] %v7576
        %7609 = vst [vmem:[%s533 + $0x10] sm:$0xff] %v7577
        %7610 = vst [vmem:[%s533 + $0x18] sm:$0xff] %v7578
        %7611 = vst [vmem:[%s533 + $0x20] sm:$0xff] %v7579
        %7612 = vst [vmem:[%s533 + $0x28] sm:$0xff] %v7580
        %7613 = vst [vmem:[%s533 + $0x30] sm:$0xff] %v7581
        %7614 = vst [vmem:[%s533 + $0x38] sm:$0xff] %v7582
        %7615 = vst [vmem:[%s533 + $0x40] sm:$0xff] %v7583
        %7616 = vst [vmem:[%s533 + $0x48] sm:$0xff] %v7584
        %7617 = vst [vmem:[%s533 + $0x50] sm:$0xff] %v7585
        %7618 = vst [vmem:[%s533 + $0x58] sm:$0xff] %v7586
        %7619 = vst [vmem:[%s533 + $0x60] sm:$0xff] %v7587
        %7620 = vst [vmem:[%s533 + $0x68] sm:$0xff] %v7588
        %7621 = vst [vmem:[%s533 + $0x70] sm:$0xff] %v7589
        %7622 = vst [vmem:[%s533 + $0x78] sm:$0xff] %v7590
        %7623 = vst [vmem:[%s533 + $0x80] sm:$0xff] %v7591
        %7624 = vst [vmem:[%s533 + $0x88] sm:$0xff] %v7592
        %7625 = vst [vmem:[%s533 + $0x90] sm:$0xff] %v7593
        %7626 = vst [vmem:[%s533 + $0x98] sm:$0xff] %v7594
        %7627 = vst [vmem:[%s533 + $0xa0] sm:$0xff] %v7595
        %7628 = vst [vmem:[%s533 + $0xa8] sm:$0xff] %v7596
        %7629 = vst [vmem:[%s533 + $0xb0] sm:$0xff] %v7597
        %7630 = vst [vmem:[%s533 + $0xb8] sm:$0xff] %v7598
        %7631 = vst [vmem:[%s533 + $0xc0] sm:$0xff] %v7599
        %7632 = vst [vmem:[%s533 + $0xc8] sm:$0xff] %v7600
        %7633 = vst [vmem:[%s533 + $0xd0] sm:$0xff] %v7601
        %7634 = vst [vmem:[%s533 + $0xd8] sm:$0xff] %v7602
        %7635 = vst [vmem:[%s533 + $0xe0] sm:$0xff] %v7603
        %7636 = vst [vmem:[%s533 + $0xe8] sm:$0xff] %v7604
        %7637 = vst [vmem:[%s533 + $0xf0] sm:$0xff] %v7605
        %7638 = vst [vmem:[%s533 + $0xf8] sm:$0xff] %v7606
        %s7639 = sand.u32 %s279, 1
        %s7640 = scalar_lea.sflag [#allocation6], %s7639
        %s7641 = sand.u32 %s279, 1
        %s7642 = smul.addr %s7641, 256
        %s7643 = scalar_lea.vmem [#allocation15], %s7642
        // Predicated region
        $region89: #{tpu_custom_call.1} parent=55 // pred_check
          %p7644 = pneg %p289
        $region90: #{tpu_custom_call.1} parent=55 // pred_check_branch
          %7646 = sbr.rel (%p7644) target = $region92
        $region91: #{tpu_custom_call.1} parent=55 // pred_region
          %s7647 = smul.u32 32, %s36
          %7649 = vsyncadd %s7640, 0
          %s7650 = smul.addr %s35, 64
          %s7651 = sadd.s32 %s7647, %s7650
          %s7652 = smul.addr %s7651, 8
          %s7653 = scalar_lea.hbm %s9, %s7652
          %s7654 = sshll.u32 %s7643, 4
          %s7655 = int_to_ptr.vmem [resolvable:$true] %s7654
          %s7656 = sshll.u32 %s7653, 4
          %s7657 = int_to_ptr.hbm [resolvable:$true] %s7656
          %7662 = dma.vmem_to_hbm [thread:$0]  %s7655, 4096, %s7657, %s7640, 128, 128, 8
        $region92: #{tpu_custom_call.1} parent=55 // pred_fallthru
          _
      $region56: #{tpu_custom_call.1} parent=5 // pred_fallthru
        _
      %p7663 = scmp.le.s32.totalorder 2, %s26
      // Predicated region
      $region93: #{tpu_custom_call.1} parent=5 // pred_check
        %p7664 = pneg %p7663
      $region94: #{tpu_custom_call.1} parent=5 // pred_check_branch
        %7666 = sbr.rel (%p7664) target = $region96
      $region95: #{tpu_custom_call.1} parent=5 // pred_region
        %s7667 = ssub.s32 %s26, 2
        // Predicated region
        $region97: #{tpu_custom_call.1} parent=95 // pred_check
          %p7668 = pneg %p295
        $region98: #{tpu_custom_call.1} parent=95 // pred_check_branch
          %7670 = sbr.rel (%p7668) target = $region100
        $region99: #{tpu_custom_call.1} parent=95 // pred_region
          %s7671 = sand.u32 %s280, 1
          %s7672 = scalar_lea.sflag [#allocation6], %s7671
          %s7673 = sand.u32 %s280, 1
          %s7674 = smul.addr %s7673, 256
          %s7675 = scalar_lea.vmem [#allocation15], %s7674
          %7677 = dma.done %s7672, 4096
        $region100: #{tpu_custom_call.1} parent=95 // pred_fallthru
          _
      $region96: #{tpu_custom_call.1} parent=5 // pred_fallthru
        _
    $region6: #{tpu_custom_call.1} parent=1 // loop_footer
      %s30 = sadd.s32 1, %s26
    $region7: #{tpu_custom_call.1} parent=1 // loop_footer_branch
      %25 = sbr.rel target = $region3
    $region8: #{tpu_custom_call.1} parent=1 // loop_exit
      _
    %7678 = vsyncpa [#allocation5], 1
    %s7679 = scalar_lea.sflag [#allocation5], 1
    %7680 = vsyncpa %s7679, 1
    %7681 = vsyncpa [#allocation8], 1
    %s7682 = scalar_lea.sflag [#allocation8], 1
    %7683 = vsyncpa %s7682, 1
    %7684 = vsyncpa [#allocation11], 1
    %7685 = vsyncpa [#allocation14], 1
    %7686 = vsyncpa [#allocation6], 1
    %s7687 = scalar_lea.sflag [#allocation6], 1
    %7688 = vsyncpa %s7687, 1

</llo_original>
